<compile_context>
chip_gen: v5e
topology: v5e:2x2
jax: 0.10.0
libtpu: 0.0.40
codegen_flags: <defaults>
</compile_context>

<pallas_src>
import numpy as np
import jax
import jax.numpy as jnp
from jax.experimental import pallas as pl
from jax.experimental.pallas import tpu as pltpu

# ----------------------- small synthetic configuration ----------------------
N = 16           # batch (folded into matmul M; R-2 = 158 rows per conv matmul)
BX = BY = 8      # board_x, board_y
C_IN = 6         # input channels (fixed by the module)
F = 32           # block_filters
BLOCKS = 3       # => BLOCKS - 1 = 2 residual blocks
PF = 8           # policy_filters
VF = 8           # value_filters
VH = 32          # value_hidden
A = 64           # action_size
EPS = 1e-5       # BatchNorm eps
KH = KW = 3
HIGH = jax.lax.Precision.HIGHEST

WC = BY * C_IN          # 48   input lanes, (w, c) channel-minor
WF = BY * F             # 256  trunk lanes
WHD = BY * (PF + VF)    # 128  merged [policy | value] head lanes
TW = 128                # packed tail / output lane width: [A | VH | pad]


# ================================ fused kernel ===============================
def _conv3x3(x_ref, band_ref):
    """3x3 'same' conv over slab rows as KH shifted banded bf16 matmuls.

    x_ref:    (R, Cin_lanes) bf16 ref with zero pad rows built in.
    band_ref: (KH, Cin_lanes, Cout_lanes) bf16 ref.
    Returns (R-2, Cout_lanes) f32; row o is the conv output centered at slab
    row o+1.
    """
    rows = x_ref.shape[0] - 2
    acc = None
    for ky in range(KH):
        d = jnp.dot(x_ref[pl.ds(ky, rows), :], band_ref[ky],
                    preferred_element_type=jnp.float32)
        acc = d if acc is None else acc + d
    return acc


def _tail_band(feat_b, wtail_ref):
    """Per-board-row linear tail as BX shifted matmuls (banded, like the conv).

    feat_b:    (R, WHD) bf16 merged head features.
    wtail_ref: (BX, WHD, TW) bf16; cols [:A] policy, [A:A+VH] value, rest 0.
    Returns (R-BX+1, TW) f32; row img*(BX+2)+1 holds image img's flattened
    head linear outputs (pre-bias).
    """
    rows = feat_b.shape[0] - (BX - 1)
    acc = None
    for h in range(BX):
        d = jnp.dot(feat_b[h:h + rows, :], wtail_ref[h],
                    preferred_element_type=jnp.float32)
        acc = d if acc is None else acc + d
    return acc


def fused_resnet_kernel(
        xpad_ref, mask_ref, sel_ref, adjust_ref,
        band0_ref, s0_ref, t0_ref,
        band1_ref, band2_ref, s1_ref, t1_ref, s2_ref, t2_ref, bo_ref,
        wht_ref, hsc_ref, hsh_ref, wtail_ref, vo_w_ref, vo_b_ref,
        out_ref,
        slab_x, slab_h):
    b = pl.program_id(0)
    nb = pl.num_programs(0)
    R = slab_x.shape[0]                       # n * (BX + 2)
    mask = mask_ref[...]                      # (R-2, 1); 0 at pad-center rows

    # ---- grid step 0: zero slabs (pad rows stay 0 forever) + stem conv ------
    @pl.when(b == 0)
    def _():
        slab_x[...] = jnp.zeros_like(slab_x)
        slab_h[...] = jnp.zeros_like(slab_h)
        acc0 = _conv3x3(xpad_ref, band0_ref)                      # (R-2, WF)
        slab_x[pl.ds(1, R - 2), :] = jnp.maximum(
            acc0 * s0_ref[...] + t0_ref[...], 0.0) * mask

    # ---- residual block `b` (its band weights are streamed by BlockSpec) ----
    h1 = jnp.maximum(
        slab_x[pl.ds(1, R - 2), :] * s1_ref[...] + t1_ref[...], 0.0) * mask
    slab_h[pl.ds(1, R - 2), :] = h1.astype(slab_h.dtype)          # bf16 store
    c1 = _conv3x3(slab_h, band1_ref)
    h2 = jnp.maximum(c1 * s2_ref[...] + t2_ref[...], 0.0) * mask
    slab_h[pl.ds(1, R - 2), :] = h2.astype(slab_h.dtype)
    c2 = _conv3x3(slab_h, band2_ref)
    # Re-read the residual input from slab_x instead of holding it in vregs
    # across both conv matmuls.
    slab_x[pl.ds(1, R - 2), :] = (
        c2 + bo_ref[...] + slab_x[pl.ds(1, R - 2), :]) * mask

    # ---- last grid step: fused heads + batched tails + packed output --------
    @pl.when(b == nb - 1)
    def _():
        trunk = slab_x[...].astype(jnp.bfloat16)                  # cast once
        feat = jnp.maximum(
            jnp.dot(trunk, wht_ref[...], preferred_element_type=jnp.float32)
            * hsc_ref[...] + hsh_ref[...], 0.0)                   # (R, WHD)
        total = _tail_band(feat.astype(jnp.bfloat16), wtail_ref)  # (R-7, TW)
        # one-hot row selection (one small matmul) + folded biases / valid mask
        pre = jnp.dot(sel_ref[...], total,
                      preferred_element_type=jnp.float32) + adjust_ref[...]
        logits = pre[:, :A]                                       # (N, A)
        m = jnp.max(logits, axis=1, keepdims=True)
        lse = m + jnp.log(jnp.sum(jnp.exp(logits - m), axis=1, keepdims=True))
        pi = logits - lse
        vhid = jnp.maximum(pre[:, A:A + VH], 0.0)                 # (N, VH)
        val = jnp.tanh(
            jnp.sum(vhid * vo_w_ref[...], axis=1, keepdims=True)
            + vo_b_ref[...])                                      # (N, 1)
        out_ref[...] = jnp.concatenate(
            [pi, jnp.broadcast_to(val, (pi.shape[0], A))], axis=1)


# ============================ pallas_call wrapper ============================
def _row_mask(n, h):
    """(n*(h+2)-2, 1) f32; 1 where the conv center row is a real board row."""
    centers = np.arange(1, n * (h + 2) - 1)
    within = centers % (h + 2)
    return ((within >= 1) & (within <= h)).astype(np.float32).reshape(-1, 1)


def _sel_matrix(n, h):
    """(n, n*(h+2)-h+1) one-hot picking row img*(h+2)+1 of the tail output."""
    rt = n * (h + 2) - (h - 1)
    sel = np.zeros((n, rt), np.float32)
    sel[np.arange(n), np.arange(n) * (h + 2) + 1] = 1.0
    return sel


def _resident(shape):
    """Full-array BlockSpec with a constant index map (resident across grid)."""
    nd = len(shape)
    return pl.BlockSpec(tuple(shape), lambda b, _nd=nd: (0,) * _nd)


@jax.jit
def forward_pallas(s, valids, pp):
    n = s.shape[0]
    s = s.reshape(-1, C_IN, BX, BY)                      # s.view(-1, 6, H, W)
    # NCHW -> (n, H, W*C) channel-minor, then one zero-row-padded bf16 slab.
    x = jnp.transpose(s, (0, 2, 3, 1)).reshape(n, BX, WC)
    xpad = jnp.pad(x, ((0, 0), (1, 1), (0, 0))).reshape(
        n * (BX + 2), WC).astype(jnp.bfloat16)
    R = n * (BX + 2)
    RT = R - (BX - 1)
    mask = jnp.asarray(_row_mask(n, BX))
    sel = jnp.asarray(_sel_matrix(n, BX))
    # Fold policy bias + (1-valids)*1000 masking and value-hidden bias into one
    # per-image additive adjustment applied right after the selection matmul.
    adjust = jnp.concatenate(
        [pp['plin_b'] - (1.0 - valids) * 1000.0,
         jnp.broadcast_to(pp['vh_b'], (n, VH)),
         jnp.zeros((n, TW - A - VH), jnp.float32)], axis=1)

    nb = pp['band1'].shape[0]
    per_blk_band = pl.BlockSpec((None, KH, WF, WF), lambda b: (b, 0, 0, 0))
    per_blk_vec = pl.BlockSpec((None, 1, WF), lambda b: (b, 0, 0))

    args = (xpad, mask, sel, adjust,
            pp['band0'], pp['s0'], pp['t0'],
            pp['band1'], pp['band2'], pp['s1'], pp['t1'], pp['s2'], pp['t2'],
            pp['bo'],
            pp['wht'], pp['hsc'], pp['hsh'], pp['wtail'],
            pp['vo_w'], pp['vo_b'])

    in_specs = [
        _resident(xpad.shape), _resident(mask.shape), _resident(sel.shape),
        _resident(adjust.shape),
        _resident(pp['band0'].shape), _resident(pp['s0'].shape),
        _resident(pp['t0'].shape),
        per_blk_band, per_blk_band,
        per_blk_vec, per_blk_vec, per_blk_vec, per_blk_vec, per_blk_vec,
        _resident(pp['wht'].shape), _resident(pp['hsc'].shape),
        _resident(pp['hsh'].shape), _resident(pp['wtail'].shape),
        _resident(pp['vo_w'].shape), _resident(pp['vo_b'].shape),
    ]

    flops = (2 * (R - 2) * WC * WF * KH
             + nb * 2 * 2 * (R - 2) * WF * WF * KH
             + 2 * R * WF * WHD
             + 2 * BX * RT * WHD * TW
             + 2 * n * RT * TW)
    bytes_accessed = int(sum(int(np.prod(a.shape)) * a.dtype.itemsize
                             for a in args) + n * TW * 4)
    cost = pl.CostEstimate(flops=int(flops), transcendentals=int(n * (A + 2)),
                           bytes_accessed=bytes_accessed)

    out = pl.pallas_call(
        fused_resnet_kernel,
        out_shape=jax.ShapeDtypeStruct((n, TW), jnp.float32),
        grid=(nb,),
        in_specs=in_specs,
        out_specs=pl.BlockSpec((n, TW), lambda b: (0, 0)),
        scratch_shapes=[pltpu.VMEM((R, WF), jnp.float32),    # trunk slab
                        pltpu.VMEM((R, WF), jnp.bfloat16)],  # conv-input slab
        compiler_params=pltpu.CompilerParams(
            dimension_semantics=("arbitrary",),
            vmem_limit_bytes=32 * 1024 * 1024),
        cost_estimate=cost,
    )(*args)
    return out[:, :A], out[:, A:A + 1]


# ====================== parameters (deterministic init) ======================
def init_params(key):
    ks = iter(jax.random.split(key, 64))

    def nrm(shape, scale=0.1):
        return scale * jax.random.normal(next(ks), shape, jnp.float32)

    def bn_params(c):
        return dict(g=1.0 + nrm((c,)), b=nrm((c,)), m=nrm((c,)),
                    v=1.0 + 0.1 * jnp.abs(
                        jax.random.normal(next(ks), (c,), jnp.float32)))

    P = dict(
        conv_w=nrm((F, C_IN, KH, KW)), conv_b=nrm((F,)), bn0=bn_params(F),
        res=[dict(w1=nrm((F, F, KH, KW)), b1=nrm((F,)), bn1=bn_params(F),
                  w2=nrm((F, F, KH, KW)), b2=nrm((F,)), bn2=bn_params(F))
             for _ in range(BLOCKS - 1)],
        pw=nrm((PF, F, 1, 1)), pb=nrm((PF,)), pbn=bn_params(PF),
        plin_w=nrm((A, PF * BX * BY)), plin_b=nrm((A,)),
        vw=nrm((VF, F, 1, 1)), vb=nrm((VF,)), vbn=bn_params(VF),
        vh_w=nrm((VH, VF * BX * BY)), vh_b=nrm((VH,)),
        vo_w=nrm((1, VH)), vo_b=nrm((1,)),
    )
    return P


def bn_fold(bn):
    k = bn['g'] / jnp.sqrt(bn['v'] + EPS)
    return k, bn['b'] - bn['m'] * k          # y = x * k + shift


def make_band(w_pt, W):
    """OIHW conv weight -> (KH, W*Cin, W*Cout) banded matrices (x pad built in)."""
    cout, cin, kh, kw = w_pt.shape
    w = np.asarray(jnp.transpose(w_pt, (2, 3, 1, 0)))  # (ky, kx, Cin, Cout)
    band = np.zeros((kh, W * cin, W * cout), np.float32)
    for ky in range(kh):
        for xo in range(W):
            for kx in range(kw):
                xi = xo + kx - (kw // 2)
                if 0 <= xi < W:
                    band[ky, xi * cin:(xi + 1) * cin,
                         xo * cout:(xo + 1) * cout] = w[ky, kx]
    return band


def make_blockdiag(w_pt, W):
    """1x1 conv weight (Cout, Cin, 1, 1) -> block-diagonal (W*Cin, W*Cout)."""
    wmat = np.asarray(w_pt)[:, :, 0, 0].T              # (Cin, Cout)
    cin, cout = wmat.shape
    out = np.zeros((W * cin, W * cout), np.float32)
    for w in range(W):
        out[w * cin:(w + 1) * cin, w * cout:(w + 1) * cout] = wmat
    return out


def tile_w(v, W):
    # per-channel vector -> per-lane vector for the (w, c) channel-minor layout
    return jnp.tile(v, W).reshape(1, -1)


def _bf16(x):
    return jnp.asarray(x).astype(jnp.bfloat16)


def prepare_pallas_params(P):
    Wd = BY
    k0, sh0 = bn_fold(P['bn0'])
    pp = {
        'band0': _bf16(make_band(P['conv_w'], Wd)),
        's0': tile_w(k0, Wd),
        't0': tile_w(P['conv_b'] * k0 + sh0, Wd),
    }
    b1s, b2s, s1s, t1s, s2s, t2s, bos = [], [], [], [], [], [], []
    for blk in P['res']:
        k1, sh1 = bn_fold(blk['bn1'])
        k2, sh2 = bn_fold(blk['bn2'])
        b1s.append(make_band(blk['w1'], Wd))
        b2s.append(make_band(blk['w2'], Wd))
        s1s.append(tile_w(k1, Wd))
        t1s.append(tile_w(sh1, Wd))
        s2s.append(tile_w(k2, Wd))
        t2s.append(tile_w(blk['b1'] * k2 + sh2, Wd))
        bos.append(tile_w(blk['b2'], Wd))
    pp['band1'] = _bf16(np.stack(b1s))
    pp['band2'] = _bf16(np.stack(b2s))
    pp['s1'] = jnp.stack(s1s)
    pp['t1'] = jnp.stack(t1s)
    pp['s2'] = jnp.stack(s2s)
    pp['t2'] = jnp.stack(t2s)
    pp['bo'] = jnp.stack(bos)

    # merged policy|value 1x1 head: one lane-dense (WF, WHD) block-diag matmul
    kp, sp = bn_fold(P['pbn'])
    kv, sv = bn_fold(P['vbn'])
    pp['wht'] = _bf16(np.concatenate(
        [make_blockdiag(P['pw'], Wd), make_blockdiag(P['vw'], Wd)], axis=1))
    pp['hsc'] = jnp.concatenate([tile_w(kp, Wd), tile_w(kv, Wd)], axis=1)
    pp['hsh'] = jnp.concatenate(
        [tile_w(P['pb'] * kp + sp, Wd), tile_w(P['vb'] * kv + sv, Wd)], axis=1)

    # merged per-board-row linear tail: (BX, WHD, TW) block-diagonal stack.
    # PyTorch flattens heads in (C, H, W) order; our lanes are (W, C) per row H.
    wp_stack = np.asarray(jnp.transpose(
        P['plin_w'].reshape(A, PF, BX, BY), (2, 3, 1, 0)).reshape(
            BX, BY * PF, A))
    wv_stack = np.asarray(jnp.transpose(
        P['vh_w'].reshape(VH, VF, BX, BY), (2, 3, 1, 0)).reshape(
            BX, BY * VF, VH))
    wtail = np.zeros((BX, WHD, TW), np.float32)
    wtail[:, :BY * PF, :A] = wp_stack
    wtail[:, BY * PF:, A:A + VH] = wv_stack
    pp['wtail'] = _bf16(wtail)

    pp['plin_b'] = P['plin_b'].reshape(1, -1)
    pp['vh_b'] = P['vh_b'].reshape(1, -1)
    pp['vo_w'] = P['vo_w'].reshape(1, VH)
    pp['vo_b'] = P['vo_b'].reshape(1, 1)
    return pp


# ============================== pure-JAX reference ===========================
def forward_ref(s, valids, P):
    """Pure-JAX reference mirroring the PyTorch module (BN in eval mode)."""
    def conv2d(x, w, b, pad):
        y = jax.lax.conv_general_dilated(
            x, w, (1, 1), [(pad, pad), (pad, pad)],
            dimension_numbers=('NCHW', 'OIHW', 'NCHW'), precision=HIGH)
        return y + b[None, :, None, None]

    def bn(x, d):
        return ((x - d['m'][None, :, None, None])
                / jnp.sqrt(d['v'][None, :, None, None] + EPS)
                * d['g'][None, :, None, None] + d['b'][None, :, None, None])

    n = s.shape[0]
    s = s.reshape(-1, C_IN, BX, BY)
    x = jax.nn.relu(bn(conv2d(s, P['conv_w'], P['conv_b'], 1), P['bn0']))
    for blk in P['res']:
        inp = x
        h = jax.nn.relu(bn(x, blk['bn1']))
        h = conv2d(h, blk['w1'], blk['b1'], 1)
        h = jax.nn.relu(bn(h, blk['bn2']))
        h = conv2d(h, blk['w2'], blk['b2'], 1)
        x = h + inp
    pi = bn(conv2d(x, P['pw'], P['pb'], 0), P['pbn'])
    pi = jax.nn.relu(pi.reshape(n, -1))
    pi = jnp.dot(pi, P['plin_w'].T, precision=HIGH) + P['plin_b']
    pi = pi - (1.0 - valids) * 1000.0
    pi = jax.nn.log_softmax(pi, axis=1)
    v = jax.nn.relu(bn(conv2d(x, P['vw'], P['vb'], 0), P['vbn']))
    v = v.reshape(n, -1)
    v = jax.nn.relu(jnp.dot(v, P['vh_w'].T, precision=HIGH) + P['vh_b'])
    v = jnp.tanh(jnp.dot(v, P['vo_w'].T, precision=HIGH) + P['vo_b'])
    return pi, v


# ==================================== main ===================================
if __name__ == "__main__":
    key = jax.random.PRNGKey(0)
    kparam, kstate, kvalid = jax.random.split(key, 3)
    P = init_params(kparam)
    pp = prepare_pallas_params(P)

    s = jax.random.normal(kstate, (N, C_IN, BX, BY), jnp.float32)
    valids = (jax.random.uniform(kvalid, (N, A)) > 0.5).astype(jnp.float32)

    pi, v = forward_pallas(s, valids, pp)
    pi, v = jax.block_until_ready((pi, v))

    pi_ref, v_ref = forward_ref(s, valids, P)
    # Kernel matmuls use bf16 operands with f32 accumulation => relaxed
    # tolerance vs. the f32/HIGHEST reference.
    np.testing.assert_allclose(np.asarray(pi), np.asarray(pi_ref),
                               atol=6e-2, rtol=6e-2)
    np.testing.assert_allclose(np.asarray(v), np.asarray(v_ref),
                               atol=6e-2, rtol=6e-2)
    assert pi.shape == (N, A) and v.shape == (N, 1)

    print("KERNEL_OK")
</pallas_src>

<mosaic_0001>
module attributes {stable_mosaic.version = 11 : i64} {
  func.func @fused_resnet_kernel(%arg0: i32, %arg1: memref<160x48xbf16, #tpu.memory_space<vmem>>, %arg2: memref<158x1xf32, #tpu.memory_space<vmem>>, %arg3: memref<16x153xf32, #tpu.memory_space<vmem>>, %arg4: memref<16x128xf32, #tpu.memory_space<vmem>>, %arg5: memref<3x48x256xbf16, #tpu.memory_space<vmem>>, %arg6: memref<1x256xf32, #tpu.memory_space<vmem>>, %arg7: memref<1x256xf32, #tpu.memory_space<vmem>>, %arg8: memref<1x3x256x256xbf16, #tpu.memory_space<vmem>>, %arg9: memref<1x3x256x256xbf16, #tpu.memory_space<vmem>>, %arg10: memref<1x1x256xf32, #tpu.memory_space<vmem>>, %arg11: memref<1x1x256xf32, #tpu.memory_space<vmem>>, %arg12: memref<1x1x256xf32, #tpu.memory_space<vmem>>, %arg13: memref<1x1x256xf32, #tpu.memory_space<vmem>>, %arg14: memref<1x1x256xf32, #tpu.memory_space<vmem>>, %arg15: memref<256x128xbf16, #tpu.memory_space<vmem>>, %arg16: memref<1x128xf32, #tpu.memory_space<vmem>>, %arg17: memref<1x128xf32, #tpu.memory_space<vmem>>, %arg18: memref<8x128x128xbf16, #tpu.memory_space<vmem>>, %arg19: memref<1x32xf32, #tpu.memory_space<vmem>>, %arg20: memref<1x1xf32, #tpu.memory_space<vmem>>, %arg21: memref<16x128xf32, #tpu.memory_space<vmem>>, %arg22: memref<160x256xf32, #tpu.memory_space<vmem>>, %arg23: memref<160x256xbf16, #tpu.memory_space<vmem>>) attributes {dimension_semantics = [#tpu.dimension_semantics<arbitrary>], iteration_bounds = array<i64: 2>, scalar_prefetch = 0 : i64, scratch_operands = 2 : i64, tpu.core_type = #tpu.core_type<tc>, window_params = [{pipeline_mode = #tpu.pipeline_mode<synchronous>, transform_indices = @transform_0, window_bounds = array<i64: 160, 48>}, {pipeline_mode = #tpu.pipeline_mode<synchronous>, transform_indices = @transform_1, window_bounds = array<i64: 158, 1>}, {pipeline_mode = #tpu.pipeline_mode<synchronous>, transform_indices = @transform_2, window_bounds = array<i64: 16, 153>}, {pipeline_mode = #tpu.pipeline_mode<synchronous>, transform_indices = @transform_3, window_bounds = array<i64: 16, 128>}, {pipeline_mode = #tpu.pipeline_mode<synchronous>, transform_indices = @transform_4, window_bounds = array<i64: 3, 48, 256>}, {pipeline_mode = #tpu.pipeline_mode<synchronous>, transform_indices = @transform_5, window_bounds = array<i64: 1, 256>}, {pipeline_mode = #tpu.pipeline_mode<synchronous>, transform_indices = @transform_6, window_bounds = array<i64: 1, 256>}, {transform_indices = @transform_7, window_bounds = array<i64: 1, 3, 256, 256>}, {transform_indices = @transform_8, window_bounds = array<i64: 1, 3, 256, 256>}, {transform_indices = @transform_9, window_bounds = array<i64: 1, 1, 256>}, {transform_indices = @transform_10, window_bounds = array<i64: 1, 1, 256>}, {transform_indices = @transform_11, window_bounds = array<i64: 1, 1, 256>}, {transform_indices = @transform_12, window_bounds = array<i64: 1, 1, 256>}, {transform_indices = @transform_13, window_bounds = array<i64: 1, 1, 256>}, {pipeline_mode = #tpu.pipeline_mode<synchronous>, transform_indices = @transform_14, window_bounds = array<i64: 256, 128>}, {pipeline_mode = #tpu.pipeline_mode<synchronous>, transform_indices = @transform_15, window_bounds = array<i64: 1, 128>}, {pipeline_mode = #tpu.pipeline_mode<synchronous>, transform_indices = @transform_16, window_bounds = array<i64: 1, 128>}, {pipeline_mode = #tpu.pipeline_mode<synchronous>, transform_indices = @transform_17, window_bounds = array<i64: 8, 128, 128>}, {pipeline_mode = #tpu.pipeline_mode<synchronous>, transform_indices = @transform_18, window_bounds = array<i64: 1, 32>}, {pipeline_mode = #tpu.pipeline_mode<synchronous>, transform_indices = @transform_19, window_bounds = array<i64: 1, 1>}, {pipeline_mode = #tpu.pipeline_mode<synchronous>, transform_indices = @transform_20, window_bounds = array<i64: 16, 128>}]} {
    %c0 = arith.constant 0 : index
    %c0_0 = arith.constant 0 : index
    %0 = vector.load %arg2[%c0, %c0_0] : memref<158x1xf32, #tpu.memory_space<vmem>>, vector<158x1xf32>
    %c0_i32 = arith.constant 0 : i32
    %1 = arith.cmpi eq, %arg0, %c0_i32 : i32
    %2 = arith.extui %1 : i1 to i32
    %c0_i32_1 = arith.constant 0 : i32
    %3 = arith.cmpi ne, %2, %c0_i32_1 : i32
    scf.if %3 {
      %cst_69 = arith.constant 0.000000e+00 : f32
      %73 = vector.broadcast %cst_69 : f32 to vector<160x256xf32>
      %c0_70 = arith.constant 0 : index
      %c0_71 = arith.constant 0 : index
      %74 = vector.load %arg22[%c0_70, %c0_71] : memref<160x256xf32, #tpu.memory_space<vmem>>, vector<160x256xf32>
      tpu.vector_store %arg22[%c0_70, %c0_71], %73 {strides = array<i32>} : memref<160x256xf32, #tpu.memory_space<vmem>>, vector<160x256xf32>,
      %cst_72 = arith.constant 0.000000e+00 : bf16
      %75 = vector.broadcast %cst_72 : bf16 to vector<160x256xbf16>
      %c0_73 = arith.constant 0 : index
      %c0_74 = arith.constant 0 : index
      %76 = vector.load %arg23[%c0_73, %c0_74] : memref<160x256xbf16, #tpu.memory_space<vmem>>, vector<160x256xbf16>
      tpu.vector_store %arg23[%c0_73, %c0_74], %75 {strides = array<i32>} : memref<160x256xbf16, #tpu.memory_space<vmem>>, vector<160x256xbf16>,
      %c0_75 = arith.constant 0 : index
      %c0_76 = arith.constant 0 : index
      %77 = vector.load %arg1[%c0_75, %c0_76] : memref<160x48xbf16, #tpu.memory_space<vmem>>, vector<158x48xbf16>
      %c0_77 = arith.constant 0 : index
      %c0_78 = arith.constant 0 : index
      %c0_79 = arith.constant 0 : index
      %78 = vector.load %arg5[%c0_77, %c0_78, %c0_79] : memref<3x48x256xbf16, #tpu.memory_space<vmem>>, vector<1x48x256xbf16>
      %79 = vector.shape_cast %78 : vector<1x48x256xbf16> to vector<48x256xbf16>
      %cst_80 = arith.constant dense<0.000000e+00> : vector<158x256xf32>
      %80 = tpu.matmul %77, %79, %cst_80 {dimension_numbers = #tpu.dot_dimension_numbers<[1], [0], [0], [1], [0, 0, 1, 1], [], []>} : vector<158x48xbf16>, vector<48x256xbf16>, vector<158x256xf32> -> vector<158x256xf32>
      %c1_81 = arith.constant 1 : index
      %c0_82 = arith.constant 0 : index
      %81 = vector.load %arg1[%c1_81, %c0_82] : memref<160x48xbf16, #tpu.memory_space<vmem>>, vector<158x48xbf16>
      %c1_83 = arith.constant 1 : index
      %c0_84 = arith.constant 0 : index
      %c0_85 = arith.constant 0 : index
      %82 = vector.load %arg5[%c1_83, %c0_84, %c0_85] : memref<3x48x256xbf16, #tpu.memory_space<vmem>>, vector<1x48x256xbf16>
      %83 = vector.shape_cast %82 : vector<1x48x256xbf16> to vector<48x256xbf16>
      %cst_86 = arith.constant dense<0.000000e+00> : vector<158x256xf32>
      %84 = tpu.matmul %81, %83, %cst_86 {dimension_numbers = #tpu.dot_dimension_numbers<[1], [0], [0], [1], [0, 0, 1, 1], [], []>} : vector<158x48xbf16>, vector<48x256xbf16>, vector<158x256xf32> -> vector<158x256xf32>
      %85 = arith.addf %80, %84 : vector<158x256xf32>
      %c2_87 = arith.constant 2 : index
      %c0_88 = arith.constant 0 : index
      %86 = vector.load %arg1[%c2_87, %c0_88] : memref<160x48xbf16, #tpu.memory_space<vmem>>, vector<158x48xbf16>
      %c2_89 = arith.constant 2 : index
      %c0_90 = arith.constant 0 : index
      %c0_91 = arith.constant 0 : index
      %87 = vector.load %arg5[%c2_89, %c0_90, %c0_91] : memref<3x48x256xbf16, #tpu.memory_space<vmem>>, vector<1x48x256xbf16>
      %88 = vector.shape_cast %87 : vector<1x48x256xbf16> to vector<48x256xbf16>
      %cst_92 = arith.constant dense<0.000000e+00> : vector<158x256xf32>
      %89 = tpu.matmul %86, %88, %cst_92 {dimension_numbers = #tpu.dot_dimension_numbers<[1], [0], [0], [1], [0, 0, 1, 1], [], []>} : vector<158x48xbf16>, vector<48x256xbf16>, vector<158x256xf32> -> vector<158x256xf32>
      %90 = arith.addf %85, %89 : vector<158x256xf32>
      %c0_93 = arith.constant 0 : index
      %c0_94 = arith.constant 0 : index
      %91 = vector.load %arg6[%c0_93, %c0_94] : memref<1x256xf32, #tpu.memory_space<vmem>>, vector<1x256xf32>
      %92 = vector.broadcast %91 : vector<1x256xf32> to vector<158x256xf32>
      %93 = arith.mulf %90, %92 : vector<158x256xf32>
      %c0_95 = arith.constant 0 : index
      %c0_96 = arith.constant 0 : index
      %94 = vector.load %arg7[%c0_95, %c0_96] : memref<1x256xf32, #tpu.memory_space<vmem>>, vector<1x256xf32>
      %95 = vector.broadcast %94 : vector<1x256xf32> to vector<158x256xf32>
      %96 = arith.addf %93, %95 : vector<158x256xf32>
      %cst_97 = arith.constant 0.000000e+00 : f32
      %97 = vector.broadcast %cst_97 : f32 to vector<158x256xf32>
      %98 = arith.maximumf %96, %97 : vector<158x256xf32>
      %99 = vector.broadcast %0 : vector<158x1xf32> to vector<158x256xf32>
      %100 = arith.mulf %98, %99 : vector<158x256xf32>
      %c1_98 = arith.constant 1 : index
      %c0_99 = arith.constant 0 : index
      %101 = vector.load %arg22[%c1_98, %c0_99] : memref<160x256xf32, #tpu.memory_space<vmem>>, vector<158x256xf32>
      tpu.vector_store %arg22[%c1_98, %c0_99], %100 {strides = array<i32>} : memref<160x256xf32, #tpu.memory_space<vmem>>, vector<158x256xf32>,
    } else {
    }
    %c1 = arith.constant 1 : index
    %c0_2 = arith.constant 0 : index
    %4 = vector.load %arg22[%c1, %c0_2] : memref<160x256xf32, #tpu.memory_space<vmem>>, vector<158x256xf32>
    %c0_3 = arith.constant 0 : index
    %c0_4 = arith.constant 0 : index
    %c0_5 = arith.constant 0 : index
    %5 = vector.load %arg10[%c0_3, %c0_4, %c0_5] : memref<1x1x256xf32, #tpu.memory_space<vmem>>, vector<1x1x256xf32>
    %6 = vector.shape_cast %5 : vector<1x1x256xf32> to vector<1x256xf32>
    %7 = vector.broadcast %6 : vector<1x256xf32> to vector<158x256xf32>
    %8 = arith.mulf %4, %7 : vector<158x256xf32>
    %c0_6 = arith.constant 0 : index
    %c0_7 = arith.constant 0 : index
    %c0_8 = arith.constant 0 : index
    %9 = vector.load %arg11[%c0_6, %c0_7, %c0_8] : memref<1x1x256xf32, #tpu.memory_space<vmem>>, vector<1x1x256xf32>
    %10 = vector.shape_cast %9 : vector<1x1x256xf32> to vector<1x256xf32>
    %11 = vector.broadcast %10 : vector<1x256xf32> to vector<158x256xf32>
    %12 = arith.addf %8, %11 : vector<158x256xf32>
    %cst = arith.constant 0.000000e+00 : f32
    %13 = vector.broadcast %cst : f32 to vector<158x256xf32>
    %14 = arith.maximumf %12, %13 : vector<158x256xf32>
    %15 = vector.broadcast %0 : vector<158x1xf32> to vector<158x256xf32>
    %16 = arith.mulf %14, %15 : vector<158x256xf32>
    %17 = arith.truncf %16 : vector<158x256xf32> to vector<158x256xbf16>
    %c1_9 = arith.constant 1 : index
    %c0_10 = arith.constant 0 : index
    %18 = vector.load %arg23[%c1_9, %c0_10] : memref<160x256xbf16, #tpu.memory_space<vmem>>, vector<158x256xbf16>
    tpu.vector_store %arg23[%c1_9, %c0_10], %17 {strides = array<i32>} : memref<160x256xbf16, #tpu.memory_space<vmem>>, vector<158x256xbf16>,
    %c0_11 = arith.constant 0 : index
    %c0_12 = arith.constant 0 : index
    %19 = vector.load %arg23[%c0_11, %c0_12] : memref<160x256xbf16, #tpu.memory_space<vmem>>, vector<158x256xbf16>
    %c0_13 = arith.constant 0 : index
    %c0_14 = arith.constant 0 : index
    %c0_15 = arith.constant 0 : index
    %c0_16 = arith.constant 0 : index
    %20 = vector.load %arg8[%c0_13, %c0_14, %c0_15, %c0_16] : memref<1x3x256x256xbf16, #tpu.memory_space<vmem>>, vector<1x1x256x256xbf16>
    %21 = vector.shape_cast %20 : vector<1x1x256x256xbf16> to vector<256x256xbf16>
    %cst_17 = arith.constant dense<0.000000e+00> : vector<158x256xf32>
    %22 = tpu.matmul %19, %21, %cst_17 {dimension_numbers = #tpu.dot_dimension_numbers<[1], [0], [0], [1], [0, 0, 1, 1], [], []>} : vector<158x256xbf16>, vector<256x256xbf16>, vector<158x256xf32> -> vector<158x256xf32>
    %c1_18 = arith.constant 1 : index
    %c0_19 = arith.constant 0 : index
    %23 = vector.load %arg23[%c1_18, %c0_19] : memref<160x256xbf16, #tpu.memory_space<vmem>>, vector<158x256xbf16>
    %c0_20 = arith.constant 0 : index
    %c1_21 = arith.constant 1 : index
    %c0_22 = arith.constant 0 : index
    %c0_23 = arith.constant 0 : index
    %24 = vector.load %arg8[%c0_20, %c1_21, %c0_22, %c0_23] : memref<1x3x256x256xbf16, #tpu.memory_space<vmem>>, vector<1x1x256x256xbf16>
    %25 = vector.shape_cast %24 : vector<1x1x256x256xbf16> to vector<256x256xbf16>
    %cst_24 = arith.constant dense<0.000000e+00> : vector<158x256xf32>
    %26 = tpu.matmul %23, %25, %cst_24 {dimension_numbers = #tpu.dot_dimension_numbers<[1], [0], [0], [1], [0, 0, 1, 1], [], []>} : vector<158x256xbf16>, vector<256x256xbf16>, vector<158x256xf32> -> vector<158x256xf32>
    %27 = arith.addf %22, %26 : vector<158x256xf32>
    %c2 = arith.constant 2 : index
    %c0_25 = arith.constant 0 : index
    %28 = vector.load %arg23[%c2, %c0_25] : memref<160x256xbf16, #tpu.memory_space<vmem>>, vector<158x256xbf16>
    %c0_26 = arith.constant 0 : index
    %c2_27 = arith.constant 2 : index
    %c0_28 = arith.constant 0 : index
    %c0_29 = arith.constant 0 : index
    %29 = vector.load %arg8[%c0_26, %c2_27, %c0_28, %c0_29] : memref<1x3x256x256xbf16, #tpu.memory_space<vmem>>, vector<1x1x256x256xbf16>
    %30 = vector.shape_cast %29 : vector<1x1x256x256xbf16> to vector<256x256xbf16>
    %cst_30 = arith.constant dense<0.000000e+00> : vector<158x256xf32>
    %31 = tpu.matmul %28, %30, %cst_30 {dimension_numbers = #tpu.dot_dimension_numbers<[1], [0], [0], [1], [0, 0, 1, 1], [], []>} : vector<158x256xbf16>, vector<256x256xbf16>, vector<158x256xf32> -> vector<158x256xf32>
    %32 = arith.addf %27, %31 : vector<158x256xf32>
    %c0_31 = arith.constant 0 : index
    %c0_32 = arith.constant 0 : index
    %c0_33 = arith.constant 0 : index
    %33 = vector.load %arg12[%c0_31, %c0_32, %c0_33] : memref<1x1x256xf32, #tpu.memory_space<vmem>>, vector<1x1x256xf32>
    %34 = vector.shape_cast %33 : vector<1x1x256xf32> to vector<1x256xf32>
    %35 = vector.broadcast %34 : vector<1x256xf32> to vector<158x256xf32>
    %36 = arith.mulf %32, %35 : vector<158x256xf32>
    %c0_34 = arith.constant 0 : index
    %c0_35 = arith.constant 0 : index
    %c0_36 = arith.constant 0 : index
    %37 = vector.load %arg13[%c0_34, %c0_35, %c0_36] : memref<1x1x256xf32, #tpu.memory_space<vmem>>, vector<1x1x256xf32>
    %38 = vector.shape_cast %37 : vector<1x1x256xf32> to vector<1x256xf32>
    %39 = vector.broadcast %38 : vector<1x256xf32> to vector<158x256xf32>
    %40 = arith.addf %36, %39 : vector<158x256xf32>
    %cst_37 = arith.constant 0.000000e+00 : f32
    %41 = vector.broadcast %cst_37 : f32 to vector<158x256xf32>
    %42 = arith.maximumf %40, %41 : vector<158x256xf32>
    %43 = vector.broadcast %0 : vector<158x1xf32> to vector<158x256xf32>
    %44 = arith.mulf %42, %43 : vector<158x256xf32>
    %45 = arith.truncf %44 : vector<158x256xf32> to vector<158x256xbf16>
    %c1_38 = arith.constant 1 : index
    %c0_39 = arith.constant 0 : index
    %46 = vector.load %arg23[%c1_38, %c0_39] : memref<160x256xbf16, #tpu.memory_space<vmem>>, vector<158x256xbf16>
    tpu.vector_store %arg23[%c1_38, %c0_39], %45 {strides = array<i32>} : memref<160x256xbf16, #tpu.memory_space<vmem>>, vector<158x256xbf16>,
    %c0_40 = arith.constant 0 : index
    %c0_41 = arith.constant 0 : index
    %47 = vector.load %arg23[%c0_40, %c0_41] : memref<160x256xbf16, #tpu.memory_space<vmem>>, vector<158x256xbf16>
    %c0_42 = arith.constant 0 : index
    %c0_43 = arith.constant 0 : index
    %c0_44 = arith.constant 0 : index
    %c0_45 = arith.constant 0 : index
    %48 = vector.load %arg9[%c0_42, %c0_43, %c0_44, %c0_45] : memref<1x3x256x256xbf16, #tpu.memory_space<vmem>>, vector<1x1x256x256xbf16>
    %49 = vector.shape_cast %48 : vector<1x1x256x256xbf16> to vector<256x256xbf16>
    %cst_46 = arith.constant dense<0.000000e+00> : vector<158x256xf32>
    %50 = tpu.matmul %47, %49, %cst_46 {dimension_numbers = #tpu.dot_dimension_numbers<[1], [0], [0], [1], [0, 0, 1, 1], [], []>} : vector<158x256xbf16>, vector<256x256xbf16>, vector<158x256xf32> -> vector<158x256xf32>
    %c1_47 = arith.constant 1 : index
    %c0_48 = arith.constant 0 : index
    %51 = vector.load %arg23[%c1_47, %c0_48] : memref<160x256xbf16, #tpu.memory_space<vmem>>, vector<158x256xbf16>
    %c0_49 = arith.constant 0 : index
    %c1_50 = arith.constant 1 : index
    %c0_51 = arith.constant 0 : index
    %c0_52 = arith.constant 0 : index
    %52 = vector.load %arg9[%c0_49, %c1_50, %c0_51, %c0_52] : memref<1x3x256x256xbf16, #tpu.memory_space<vmem>>, vector<1x1x256x256xbf16>
    %53 = vector.shape_cast %52 : vector<1x1x256x256xbf16> to vector<256x256xbf16>
    %cst_53 = arith.constant dense<0.000000e+00> : vector<158x256xf32>
    %54 = tpu.matmul %51, %53, %cst_53 {dimension_numbers = #tpu.dot_dimension_numbers<[1], [0], [0], [1], [0, 0, 1, 1], [], []>} : vector<158x256xbf16>, vector<256x256xbf16>, vector<158x256xf32> -> vector<158x256xf32>
    %55 = arith.addf %50, %54 : vector<158x256xf32>
    %c2_54 = arith.constant 2 : index
    %c0_55 = arith.constant 0 : index
    %56 = vector.load %arg23[%c2_54, %c0_55] : memref<160x256xbf16, #tpu.memory_space<vmem>>, vector<158x256xbf16>
    %c0_56 = arith.constant 0 : index
    %c2_57 = arith.constant 2 : index
    %c0_58 = arith.constant 0 : index
    %c0_59 = arith.constant 0 : index
    %57 = vector.load %arg9[%c0_56, %c2_57, %c0_58, %c0_59] : memref<1x3x256x256xbf16, #tpu.memory_space<vmem>>, vector<1x1x256x256xbf16>
    %58 = vector.shape_cast %57 : vector<1x1x256x256xbf16> to vector<256x256xbf16>
    %cst_60 = arith.constant dense<0.000000e+00> : vector<158x256xf32>
    %59 = tpu.matmul %56, %58, %cst_60 {dimension_numbers = #tpu.dot_dimension_numbers<[1], [0], [0], [1], [0, 0, 1, 1], [], []>} : vector<158x256xbf16>, vector<256x256xbf16>, vector<158x256xf32> -> vector<158x256xf32>
    %60 = arith.addf %55, %59 : vector<158x256xf32>
    %c0_61 = arith.constant 0 : index
    %c0_62 = arith.constant 0 : index
    %c0_63 = arith.constant 0 : index
    %61 = vector.load %arg14[%c0_61, %c0_62, %c0_63] : memref<1x1x256xf32, #tpu.memory_space<vmem>>, vector<1x1x256xf32>
    %62 = vector.shape_cast %61 : vector<1x1x256xf32> to vector<1x256xf32>
    %63 = vector.broadcast %62 : vector<1x256xf32> to vector<158x256xf32>
    %64 = arith.addf %60, %63 : vector<158x256xf32>
    %c1_64 = arith.constant 1 : index
    %c0_65 = arith.constant 0 : index
    %65 = vector.load %arg22[%c1_64, %c0_65] : memref<160x256xf32, #tpu.memory_space<vmem>>, vector<158x256xf32>
    %66 = arith.addf %64, %65 : vector<158x256xf32>
    %67 = vector.broadcast %0 : vector<158x1xf32> to vector<158x256xf32>
    %68 = arith.mulf %66, %67 : vector<158x256xf32>
    %c1_66 = arith.constant 1 : index
    %c0_67 = arith.constant 0 : index
    %69 = vector.load %arg22[%c1_66, %c0_67] : memref<160x256xf32, #tpu.memory_space<vmem>>, vector<158x256xf32>
    tpu.vector_store %arg22[%c1_66, %c0_67], %68 {strides = array<i32>} : memref<160x256xf32, #tpu.memory_space<vmem>>, vector<158x256xf32>,
    %c1_i32 = arith.constant 1 : i32
    %70 = arith.cmpi eq, %arg0, %c1_i32 : i32
    %71 = arith.extui %70 : i1 to i32
    %c0_i32_68 = arith.constant 0 : i32
    %72 = arith.cmpi ne, %71, %c0_i32_68 : i32
    scf.if %72 {
      %c0_69 = arith.constant 0 : index
      %c0_70 = arith.constant 0 : index
      %73 = vector.load %arg22[%c0_69, %c0_70] : memref<160x256xf32, #tpu.memory_space<vmem>>, vector<160x256xf32>
      %74 = arith.truncf %73 : vector<160x256xf32> to vector<160x256xbf16>
      %c0_71 = arith.constant 0 : index
      %c0_72 = arith.constant 0 : index
      %75 = vector.load %arg15[%c0_71, %c0_72] : memref<256x128xbf16, #tpu.memory_space<vmem>>, vector<256x128xbf16>
      %cst_73 = arith.constant dense<0.000000e+00> : vector<160x128xf32>
      %76 = tpu.matmul %74, %75, %cst_73 {dimension_numbers = #tpu.dot_dimension_numbers<[1], [0], [0], [1], [0, 0, 1, 1], [], []>} : vector<160x256xbf16>, vector<256x128xbf16>, vector<160x128xf32> -> vector<160x128xf32>
      %c0_74 = arith.constant 0 : index
      %c0_75 = arith.constant 0 : index
      %77 = vector.load %arg16[%c0_74, %c0_75] : memref<1x128xf32, #tpu.memory_space<vmem>>, vector<1x128xf32>
      %78 = vector.broadcast %77 : vector<1x128xf32> to vector<160x128xf32>
      %79 = arith.mulf %76, %78 : vector<160x128xf32>
      %c0_76 = arith.constant 0 : index
      %c0_77 = arith.constant 0 : index
      %80 = vector.load %arg17[%c0_76, %c0_77] : memref<1x128xf32, #tpu.memory_space<vmem>>, vector<1x128xf32>
      %81 = vector.broadcast %80 : vector<1x128xf32> to vector<160x128xf32>
      %82 = arith.addf %79, %81 : vector<160x128xf32>
      %cst_78 = arith.constant 0.000000e+00 : f32
      %83 = vector.broadcast %cst_78 : f32 to vector<160x128xf32>
      %84 = arith.maximumf %82, %83 : vector<160x128xf32>
      %85 = arith.truncf %84 : vector<160x128xf32> to vector<160x128xbf16>
      %86 = vector.extract_strided_slice %85 {offsets = [0, 0], sizes = [153, 128], strides = [1, 1]} : vector<160x128xbf16> to vector<153x128xbf16>
      %c0_79 = arith.constant 0 : index
      %c0_80 = arith.constant 0 : index
      %c0_81 = arith.constant 0 : index
      %87 = vector.load %arg18[%c0_79, %c0_80, %c0_81] : memref<8x128x128xbf16, #tpu.memory_space<vmem>>, vector<1x128x128xbf16>
      %88 = vector.shape_cast %87 : vector<1x128x128xbf16> to vector<128x128xbf16>
      %cst_82 = arith.constant dense<0.000000e+00> : vector<153x128xf32>
      %89 = tpu.matmul %86, %88, %cst_82 {dimension_numbers = #tpu.dot_dimension_numbers<[1], [0], [0], [1], [0, 0, 1, 1], [], []>} : vector<153x128xbf16>, vector<128x128xbf16>, vector<153x128xf32> -> vector<153x128xf32>
      %90 = vector.extract_strided_slice %85 {offsets = [1, 0], sizes = [153, 128], strides = [1, 1]} : vector<160x128xbf16> to vector<153x128xbf16>
      %c1_83 = arith.constant 1 : index
      %c0_84 = arith.constant 0 : index
      %c0_85 = arith.constant 0 : index
      %91 = vector.load %arg18[%c1_83, %c0_84, %c0_85] : memref<8x128x128xbf16, #tpu.memory_space<vmem>>, vector<1x128x128xbf16>
      %92 = vector.shape_cast %91 : vector<1x128x128xbf16> to vector<128x128xbf16>
      %cst_86 = arith.constant dense<0.000000e+00> : vector<153x128xf32>
      %93 = tpu.matmul %90, %92, %cst_86 {dimension_numbers = #tpu.dot_dimension_numbers<[1], [0], [0], [1], [0, 0, 1, 1], [], []>} : vector<153x128xbf16>, vector<128x128xbf16>, vector<153x128xf32> -> vector<153x128xf32>
      %94 = arith.addf %89, %93 : vector<153x128xf32>
      %95 = vector.extract_strided_slice %85 {offsets = [2, 0], sizes = [153, 128], strides = [1, 1]} : vector<160x128xbf16> to vector<153x128xbf16>
      %c2_87 = arith.constant 2 : index
      %c0_88 = arith.constant 0 : index
      %c0_89 = arith.constant 0 : index
      %96 = vector.load %arg18[%c2_87, %c0_88, %c0_89] : memref<8x128x128xbf16, #tpu.memory_space<vmem>>, vector<1x128x128xbf16>
      %97 = vector.shape_cast %96 : vector<1x128x128xbf16> to vector<128x128xbf16>
      %cst_90 = arith.constant dense<0.000000e+00> : vector<153x128xf32>
      %98 = tpu.matmul %95, %97, %cst_90 {dimension_numbers = #tpu.dot_dimension_numbers<[1], [0], [0], [1], [0, 0, 1, 1], [], []>} : vector<153x128xbf16>, vector<128x128xbf16>, vector<153x128xf32> -> vector<153x128xf32>
      %99 = arith.addf %94, %98 : vector<153x128xf32>
      %100 = vector.extract_strided_slice %85 {offsets = [3, 0], sizes = [153, 128], strides = [1, 1]} : vector<160x128xbf16> to vector<153x128xbf16>
      %c3 = arith.constant 3 : index
      %c0_91 = arith.constant 0 : index
      %c0_92 = arith.constant 0 : index
      %101 = vector.load %arg18[%c3, %c0_91, %c0_92] : memref<8x128x128xbf16, #tpu.memory_space<vmem>>, vector<1x128x128xbf16>
      %102 = vector.shape_cast %101 : vector<1x128x128xbf16> to vector<128x128xbf16>
      %cst_93 = arith.constant dense<0.000000e+00> : vector<153x128xf32>
      %103 = tpu.matmul %100, %102, %cst_93 {dimension_numbers = #tpu.dot_dimension_numbers<[1], [0], [0], [1], [0, 0, 1, 1], [], []>} : vector<153x128xbf16>, vector<128x128xbf16>, vector<153x128xf32> -> vector<153x128xf32>
      %104 = arith.addf %99, %103 : vector<153x128xf32>
      %105 = vector.extract_strided_slice %85 {offsets = [4, 0], sizes = [153, 128], strides = [1, 1]} : vector<160x128xbf16> to vector<153x128xbf16>
      %c4 = arith.constant 4 : index
      %c0_94 = arith.constant 0 : index
      %c0_95 = arith.constant 0 : index
      %106 = vector.load %arg18[%c4, %c0_94, %c0_95] : memref<8x128x128xbf16, #tpu.memory_space<vmem>>, vector<1x128x128xbf16>
      %107 = vector.shape_cast %106 : vector<1x128x128xbf16> to vector<128x128xbf16>
      %cst_96 = arith.constant dense<0.000000e+00> : vector<153x128xf32>
      %108 = tpu.matmul %105, %107, %cst_96 {dimension_numbers = #tpu.dot_dimension_numbers<[1], [0], [0], [1], [0, 0, 1, 1], [], []>} : vector<153x128xbf16>, vector<128x128xbf16>, vector<153x128xf32> -> vector<153x128xf32>
      %109 = arith.addf %104, %108 : vector<153x128xf32>
      %110 = vector.extract_strided_slice %85 {offsets = [5, 0], sizes = [153, 128], strides = [1, 1]} : vector<160x128xbf16> to vector<153x128xbf16>
      %c5 = arith.constant 5 : index
      %c0_97 = arith.constant 0 : index
      %c0_98 = arith.constant 0 : index
      %111 = vector.load %arg18[%c5, %c0_97, %c0_98] : memref<8x128x128xbf16, #tpu.memory_space<vmem>>, vector<1x128x128xbf16>
      %112 = vector.shape_cast %111 : vector<1x128x128xbf16> to vector<128x128xbf16>
      %cst_99 = arith.constant dense<0.000000e+00> : vector<153x128xf32>
      %113 = tpu.matmul %110, %112, %cst_99 {dimension_numbers = #tpu.dot_dimension_numbers<[1], [0], [0], [1], [0, 0, 1, 1], [], []>} : vector<153x128xbf16>, vector<128x128xbf16>, vector<153x128xf32> -> vector<153x128xf32>
      %114 = arith.addf %109, %113 : vector<153x128xf32>
      %115 = vector.extract_strided_slice %85 {offsets = [6, 0], sizes = [153, 128], strides = [1, 1]} : vector<160x128xbf16> to vector<153x128xbf16>
      %c6 = arith.constant 6 : index
      %c0_100 = arith.constant 0 : index
      %c0_101 = arith.constant 0 : index
      %116 = vector.load %arg18[%c6, %c0_100, %c0_101] : memref<8x128x128xbf16, #tpu.memory_space<vmem>>, vector<1x128x128xbf16>
      %117 = vector.shape_cast %116 : vector<1x128x128xbf16> to vector<128x128xbf16>
      %cst_102 = arith.constant dense<0.000000e+00> : vector<153x128xf32>
      %118 = tpu.matmul %115, %117, %cst_102 {dimension_numbers = #tpu.dot_dimension_numbers<[1], [0], [0], [1], [0, 0, 1, 1], [], []>} : vector<153x128xbf16>, vector<128x128xbf16>, vector<153x128xf32> -> vector<153x128xf32>
      %119 = arith.addf %114, %118 : vector<153x128xf32>
      %120 = vector.extract_strided_slice %85 {offsets = [7, 0], sizes = [153, 128], strides = [1, 1]} : vector<160x128xbf16> to vector<153x128xbf16>
      %c7 = arith.constant 7 : index
      %c0_103 = arith.constant 0 : index
      %c0_104 = arith.constant 0 : index
      %121 = vector.load %arg18[%c7, %c0_103, %c0_104] : memref<8x128x128xbf16, #tpu.memory_space<vmem>>, vector<1x128x128xbf16>
      %122 = vector.shape_cast %121 : vector<1x128x128xbf16> to vector<128x128xbf16>
      %cst_105 = arith.constant dense<0.000000e+00> : vector<153x128xf32>
      %123 = tpu.matmul %120, %122, %cst_105 {dimension_numbers = #tpu.dot_dimension_numbers<[1], [0], [0], [1], [0, 0, 1, 1], [], []>} : vector<153x128xbf16>, vector<128x128xbf16>, vector<153x128xf32> -> vector<153x128xf32>
      %124 = arith.addf %119, %123 : vector<153x128xf32>
      %c0_106 = arith.constant 0 : index
      %c0_107 = arith.constant 0 : index
      %125 = vector.load %arg3[%c0_106, %c0_107] : memref<16x153xf32, #tpu.memory_space<vmem>>, vector<16x153xf32>
      %cst_108 = arith.constant dense<0.000000e+00> : vector<16x128xf32>
      %126 = tpu.matmul %125, %124, %cst_108 {dimension_numbers = #tpu.dot_dimension_numbers<[1], [0], [0], [1], [0, 0, 1, 1], [], []>} : vector<16x153xf32>, vector<153x128xf32>, vector<16x128xf32> -> vector<16x128xf32>
      %c0_109 = arith.constant 0 : index
      %c0_110 = arith.constant 0 : index
      %127 = vector.load %arg4[%c0_109, %c0_110] : memref<16x128xf32, #tpu.memory_space<vmem>>, vector<16x128xf32>
      %128 = arith.addf %126, %127 : vector<16x128xf32>
      %129 = vector.extract_strided_slice %128 {offsets = [0, 0], sizes = [16, 64], strides = [1, 1]} : vector<16x128xf32> to vector<16x64xf32>
      %cst_111 = arith.constant dense<0xFF800000> : vector<16xf32>
      %130 = vector.multi_reduction <maximumf>, %129, %cst_111 [1] : vector<16x64xf32> to vector<16xf32>
      %131 = vector.shape_cast %130 : vector<16xf32> to vector<16x1xf32>
      %132 = vector.broadcast %131 : vector<16x1xf32> to vector<16x64xf32>
      %133 = arith.subf %129, %132 : vector<16x64xf32>
      %134 = math.exp %133 : vector<16x64xf32>
      %cst_112 = arith.constant dense<0.000000e+00> : vector<16xf32>
      %135 = vector.multi_reduction <add>, %134, %cst_112 [1] : vector<16x64xf32> to vector<16xf32>
      %136 = vector.shape_cast %135 : vector<16xf32> to vector<16x1xf32>
      %137 = math.log %136 : vector<16x1xf32>
      %138 = arith.addf %131, %137 : vector<16x1xf32>
      %139 = vector.broadcast %138 : vector<16x1xf32> to vector<16x64xf32>
      %140 = arith.subf %129, %139 : vector<16x64xf32>
      %141 = vector.extract_strided_slice %128 {offsets = [0, 64], sizes = [16, 32], strides = [1, 1]} : vector<16x128xf32> to vector<16x32xf32>
      %cst_113 = arith.constant 0.000000e+00 : f32
      %142 = vector.broadcast %cst_113 : f32 to vector<16x32xf32>
      %143 = arith.maximumf %141, %142 : vector<16x32xf32>
      %c0_114 = arith.constant 0 : index
      %c0_115 = arith.constant 0 : index
      %144 = vector.load %arg19[%c0_114, %c0_115] : memref<1x32xf32, #tpu.memory_space<vmem>>, vector<1x32xf32>
      %145 = vector.broadcast %144 : vector<1x32xf32> to vector<16x32xf32>
      %146 = arith.mulf %143, %145 : vector<16x32xf32>
      %cst_116 = arith.constant dense<0.000000e+00> : vector<16xf32>
      %147 = vector.multi_reduction <add>, %146, %cst_116 [1] : vector<16x32xf32> to vector<16xf32>
      %148 = vector.shape_cast %147 : vector<16xf32> to vector<16x1xf32>
      %c0_117 = arith.constant 0 : index
      %c0_118 = arith.constant 0 : index
      %149 = vector.load %arg20[%c0_117, %c0_118] : memref<1x1xf32, #tpu.memory_space<vmem>>, vector<1x1xf32>
      %150 = vector.broadcast %149 : vector<1x1xf32> to vector<16x1xf32>
      %151 = arith.addf %148, %150 : vector<16x1xf32>
      %152 = math.tanh %151 : vector<16x1xf32>
      %153 = vector.shape_cast %152 : vector<16x1xf32> to vector<16x1xf32>
      %154 = vector.broadcast %153 : vector<16x1xf32> to vector<16x64xf32>
      %155 = tpu.concatenate %140, %154 in 1 : vector<16x64xf32>, vector<16x64xf32> -> vector<16x128xf32>
      %c0_119 = arith.constant 0 : index
      %c0_120 = arith.constant 0 : index
      %156 = vector.load %arg21[%c0_119, %c0_120] : memref<16x128xf32, #tpu.memory_space<vmem>>, vector<16x128xf32>
      tpu.vector_store %arg21[%c0_119, %c0_120], %155 {strides = array<i32>} : memref<16x128xf32, #tpu.memory_space<vmem>>, vector<16x128xf32>,
    } else {
    }
    return
  }
  func.func @transform_0(%arg0: i32) -> (i32, i32) {
    %c0_i32 = arith.constant 0 : i32
    %c0_i32_0 = arith.constant 0 : i32
    %c0_i32_1 = arith.constant 0 : i32
    return %c0_i32, %c0_i32_0 : i32, i32
  }
  func.func @transform_1(%arg0: i32) -> (i32, i32) {
    %c0_i32 = arith.constant 0 : i32
    %c0_i32_0 = arith.constant 0 : i32
    %c0_i32_1 = arith.constant 0 : i32
    return %c0_i32, %c0_i32_0 : i32, i32
  }
  func.func @transform_2(%arg0: i32) -> (i32, i32) {
    %c0_i32 = arith.constant 0 : i32
    %c0_i32_0 = arith.constant 0 : i32
    %c0_i32_1 = arith.constant 0 : i32
    return %c0_i32, %c0_i32_0 : i32, i32
  }
  func.func @transform_3(%arg0: i32) -> (i32, i32) {
    %c0_i32 = arith.constant 0 : i32
    %c0_i32_0 = arith.constant 0 : i32
    %c0_i32_1 = arith.constant 0 : i32
    return %c0_i32, %c0_i32_0 : i32, i32
  }
  func.func @transform_4(%arg0: i32) -> (i32, i32, i32) {
    %c0_i32 = arith.constant 0 : i32
    %c0_i32_0 = arith.constant 0 : i32
    %c0_i32_1 = arith.constant 0 : i32
    %c0_i32_2 = arith.constant 0 : i32
    return %c0_i32, %c0_i32_0, %c0_i32_1 : i32, i32, i32
  }
  func.func @transform_5(%arg0: i32) -> (i32, i32) {
    %c0_i32 = arith.constant 0 : i32
    %c0_i32_0 = arith.constant 0 : i32
    %c0_i32_1 = arith.constant 0 : i32
    return %c0_i32, %c0_i32_0 : i32, i32
  }
  func.func @transform_6(%arg0: i32) -> (i32, i32) {
    %c0_i32 = arith.constant 0 : i32
    %c0_i32_0 = arith.constant 0 : i32
    %c0_i32_1 = arith.constant 0 : i32
    return %c0_i32, %c0_i32_0 : i32, i32
  }
  func.func @transform_7(%arg0: i32) -> (i32, i32, i32, i32) {
    %c0_i32 = arith.constant 0 : i32
    %c0_i32_0 = arith.constant 0 : i32
    %c0_i32_1 = arith.constant 0 : i32
    %c0_i32_2 = arith.constant 0 : i32
    return %arg0, %c0_i32, %c0_i32_0, %c0_i32_1 : i32, i32, i32, i32
  }
  func.func @transform_8(%arg0: i32) -> (i32, i32, i32, i32) {
    %c0_i32 = arith.constant 0 : i32
    %c0_i32_0 = arith.constant 0 : i32
    %c0_i32_1 = arith.constant 0 : i32
    %c0_i32_2 = arith.constant 0 : i32
    return %arg0, %c0_i32, %c0_i32_0, %c0_i32_1 : i32, i32, i32, i32
  }
  func.func @transform_9(%arg0: i32) -> (i32, i32, i32) {
    %c0_i32 = arith.constant 0 : i32
    %c0_i32_0 = arith.constant 0 : i32
    %c0_i32_1 = arith.constant 0 : i32
    return %arg0, %c0_i32, %c0_i32_0 : i32, i32, i32
  }
  func.func @transform_10(%arg0: i32) -> (i32, i32, i32) {
    %c0_i32 = arith.constant 0 : i32
    %c0_i32_0 = arith.constant 0 : i32
    %c0_i32_1 = arith.constant 0 : i32
    return %arg0, %c0_i32, %c0_i32_0 : i32, i32, i32
  }
  func.func @transform_11(%arg0: i32) -> (i32, i32, i32) {
    %c0_i32 = arith.constant 0 : i32
    %c0_i32_0 = arith.constant 0 : i32
    %c0_i32_1 = arith.constant 0 : i32
    return %arg0, %c0_i32, %c0_i32_0 : i32, i32, i32
  }
  func.func @transform_12(%arg0: i32) -> (i32, i32, i32) {
    %c0_i32 = arith.constant 0 : i32
    %c0_i32_0 = arith.constant 0 : i32
    %c0_i32_1 = arith.constant 0 : i32
    return %arg0, %c0_i32, %c0_i32_0 : i32, i32, i32
  }
  func.func @transform_13(%arg0: i32) -> (i32, i32, i32) {
    %c0_i32 = arith.constant 0 : i32
    %c0_i32_0 = arith.constant 0 : i32
    %c0_i32_1 = arith.constant 0 : i32
    return %arg0, %c0_i32, %c0_i32_0 : i32, i32, i32
  }
  func.func @transform_14(%arg0: i32) -> (i32, i32) {
    %c0_i32 = arith.constant 0 : i32
    %c0_i32_0 = arith.constant 0 : i32
    %c0_i32_1 = arith.constant 0 : i32
    return %c0_i32, %c0_i32_0 : i32, i32
  }
  func.func @transform_15(%arg0: i32) -> (i32, i32) {
    %c0_i32 = arith.constant 0 : i32
    %c0_i32_0 = arith.constant 0 : i32
    %c0_i32_1 = arith.constant 0 : i32
    return %c0_i32, %c0_i32_0 : i32, i32
  }
  func.func @transform_16(%arg0: i32) -> (i32, i32) {
    %c0_i32 = arith.constant 0 : i32
    %c0_i32_0 = arith.constant 0 : i32
    %c0_i32_1 = arith.constant 0 : i32
    return %c0_i32, %c0_i32_0 : i32, i32
  }
  func.func @transform_17(%arg0: i32) -> (i32, i32, i32) {
    %c0_i32 = arith.constant 0 : i32
    %c0_i32_0 = arith.constant 0 : i32
    %c0_i32_1 = arith.constant 0 : i32
    %c0_i32_2 = arith.constant 0 : i32
    return %c0_i32, %c0_i32_0, %c0_i32_1 : i32, i32, i32
  }
  func.func @transform_18(%arg0: i32) -> (i32, i32) {
    %c0_i32 = arith.constant 0 : i32
    %c0_i32_0 = arith.constant 0 : i32
    %c0_i32_1 = arith.constant 0 : i32
    return %c0_i32, %c0_i32_0 : i32, i32
  }
  func.func @transform_19(%arg0: i32) -> (i32, i32) {
    %c0_i32 = arith.constant 0 : i32
    %c0_i32_0 = arith.constant 0 : i32
    %c0_i32_1 = arith.constant 0 : i32
    return %c0_i32, %c0_i32_0 : i32, i32
  }
  func.func @transform_20(%arg0: i32) -> (i32, i32) {
    %c0_i32 = arith.constant 0 : i32
    %c0_i32_0 = arith.constant 0 : i32
    %c0_i32_1 = arith.constant 0 : i32
    return %c0_i32, %c0_i32_0 : i32, i32
  }
}

</mosaic_0001>

<llo_original>
// kernel: forward_pallas.1
$region0: #{forward_pallas.1}
  #allocation0 [shape = 'u32[]', space=smem, size = 0x4, offset = 0x4, fixed_abs, tag = 'smem constant byte address 0x4 - core index']
  #allocation1 [shape = 'u32[72,128]{1,0:T(1,128)}', space=vmem, size = 0x9000, scoped, tag = 'internal scratch']
  #allocation2 [shape = 'f32[160,256]{1,0:T(8,128)}', space=vmem, size = 0x28000, scoped, tag = 'scratch operand']
  #allocation3 [shape = 'bf16[160,256]{1,0:T(8,128)(2,1)}', space=vmem, size = 0x14000, scoped, tag = 'scratch operand']
  #allocation4 [shape = 'f32[1,1]{1,0:T(1,128)S(1)}', space=vmem, size = 0x200, scoped, tag = 'scoped memory for forward_pallas.1']
  %s0 = inlined_call_operand.vmem [shape: bf16[160,48], index: 0, kind: input, shape index: {}]
  %s1 = inlined_call_operand.vmem [shape: f32[158,1], index: 1, kind: input, shape index: {}]
  %s2 = inlined_call_operand.hbm [shape: f32[16,153], index: 2, kind: input, shape index: {}]
  %s3 = inlined_call_operand.vmem [shape: f32[16,128], index: 3, kind: input, shape index: {}]
  %s4 = inlined_call_operand.hbm [shape: bf16[3,48,256], index: 4, kind: input, shape index: {}]
  %s5 = inlined_call_operand.hbm [shape: f32[1,256], index: 5, kind: input, shape index: {}]
  %s6 = inlined_call_operand.hbm [shape: f32[1,256], index: 6, kind: input, shape index: {}]
  %s7 = inlined_call_operand.vmem [shape: bf16[2,3,256,256], index: 7, kind: input, shape index: {}]
  %s8 = inlined_call_operand.hbm [shape: bf16[2,3,256,256], index: 8, kind: input, shape index: {}]
  %s9 = inlined_call_operand.vmem [shape: f32[2,1,256], index: 9, kind: input, shape index: {}]
  %s10 = inlined_call_operand.vmem [shape: f32[2,1,256], index: 10, kind: input, shape index: {}]
  %s11 = inlined_call_operand.vmem [shape: f32[2,1,256], index: 11, kind: input, shape index: {}]
  %s12 = inlined_call_operand.hbm [shape: f32[2,1,256], index: 12, kind: input, shape index: {}]
  %s13 = inlined_call_operand.hbm [shape: f32[2,1,256], index: 13, kind: input, shape index: {}]
  %s14 = inlined_call_operand.hbm [shape: bf16[256,128], index: 14, kind: input, shape index: {}]
  %s15 = inlined_call_operand.vmem [shape: f32[1,128], index: 15, kind: input, shape index: {}]
  %s16 = inlined_call_operand.hbm [shape: f32[1,128], index: 16, kind: input, shape index: {}]
  %s17 = inlined_call_operand.hbm [shape: bf16[8,128,128], index: 17, kind: input, shape index: {}]
  %s18 = inlined_call_operand.hbm [shape: f32[1,32], index: 18, kind: input, shape index: {}]
  %s19 = inlined_call_operand.<no memory space> [shape: f32[1,1], index: 19, kind: input, shape index: {}]
  %s20 = inlined_call_operand.vmem [shape: f32[16,128], index: 20, kind: output, shape index: {}]
  %s21 = sld [smem:[#allocation0]]
  $region165: #{forward_pallas.1} parent=0
    _
  %s23 = ssub.s32 1, %s21
  %s24 = scalar_select 0, %s23, %s21
  %v25 = vstv %s19
  %26 = vst [vmem:[#allocation4] sm:$0x1] %v25
  $region1: #{forward_pallas.1} parent=0
    #allocation5 [shape = 'u8[16384]{0}', space=vmem, size = 0x4000, scoped, tag = 'input window, operand 2, single buffered']
    #allocation6 [shape = 's32[2]{0}', space=sflag, size = 0x8, scoped, tag = 'scoped memory for forward_pallas.1']
    #allocation7 [shape = 'u8[73728]{0}', space=vmem, size = 0x12000, scoped, tag = 'input window, operand 4, single buffered']
    #allocation8 [shape = 's32[1]{0}', space=sflag, size = 0x4, scoped, tag = 'scoped memory for forward_pallas.1']
    #allocation9 [shape = 'u8[1024]{0}', space=vmem, size = 0x400, scoped, tag = 'input window, operand 5, single buffered']
    #allocation10 [shape = 'u8[1024]{0}', space=vmem, size = 0x400, scoped, tag = 'input window, operand 6, single buffered']
    #allocation11 [shape = 's32[1]{0}', space=sflag, size = 0x4, scoped, tag = 'scoped memory for forward_pallas.1']
    #allocation12 [shape = 'u8[786432]{0}', space=vmem, size = 0xc0000, scoped, tag = 'input window, operand 8']
    #allocation13 [shape = 'u8[2048]{0}', space=vmem, size = 0x800, scoped, tag = 'input window, operand 12']
    #allocation14 [shape = 'u8[2048]{0}', space=vmem, size = 0x800, scoped, tag = 'input window, operand 13']
    #allocation15 [shape = 'u8[65536]{0}', space=vmem, size = 0x10000, scoped, tag = 'input window, operand 14, single buffered']
    #allocation16 [shape = 'u8[512]{0}', space=vmem, size = 0x400, scoped, tag = 'input window, operand 16, single buffered']
    #allocation17 [shape = 'u8[262144]{0}', space=vmem, size = 0x40000, scoped, tag = 'input window, operand 17, single buffered']
    #allocation18 [shape = 's32[1]{0}', space=sflag, size = 0x4, scoped, tag = 'scoped memory for forward_pallas.1']
    #allocation19 [shape = 'u8[512]{0}', space=vmem, size = 0x400, scoped, tag = 'input window, operand 18, single buffered']
    %27 = vsyncpa [#allocation6], 0
    %28 = vsyncpa [#allocation8], 0
    %29 = vsyncpa [#allocation11], 0
    %30 = vsyncpa [#allocation18], 0
    loop: start=0, step=1, limit=4
    $region2: #{forward_pallas.1} parent=1 // loop_pre_header
      _
    $region3: #{forward_pallas.1} parent=1 // loop_header
      %s32 = sphi 0, %s36
      %p33 = scmp.ge.s32.totalorder %s32, 4
      %s40 = sphi 0, %s40
      %s42 = sphi 0, %s40
      %s43 = sphi 0, %s42
      %s57 = sphi 0, %s43
      %s61 = sphi 0, %s61
      %s63 = sphi 0, %s61
      %s64 = sphi 0, %s63
      %s78 = sphi 0, %s64
      %s82 = sphi 0, %s82
      %s84 = sphi 0, %s82
      %s85 = sphi 0, %s84
      %s99 = sphi 0, %s85
      %s103 = sphi 0, %s103
      %s105 = sphi 0, %s103
      %s106 = sphi 0, %s105
      %s120 = sphi 0, %s106
      %s124 = sphi 0, %s124
      %s126 = sphi 0, %s124
      %s127 = sphi 0, %s126
      %s141 = sphi 0, %s127
      %s145 = sphi 0, %s145
      %s147 = sphi 0, %s145
      %s148 = sphi 0, %s147
      %s162 = sphi 0, %s148
      %s166 = sphi 0, %s166
      %s168 = sphi 0, %s166
      %s169 = sphi 0, %s168
      %s183 = sphi 0, %s169
      %s189 = sphi 0, %s191
      %s192 = sphi 0, %s189
      %s193 = sphi 0, %s192
      %s209 = sphi 0, %s193
      %s215 = sphi 0, %s217
      %s218 = sphi 0, %s215
      %s219 = sphi 0, %s218
      %s235 = sphi 0, %s219
      %s241 = sphi 0, %s243
      %s244 = sphi 0, %s241
      %s245 = sphi 0, %s244
      %s261 = sphi 0, %s245
      %s267 = sphi 0, %s269
      %s270 = sphi 0, %s267
      %s271 = sphi 0, %s270
      %s287 = sphi 0, %s271
      %s293 = sphi 0, %s295
      %s296 = sphi 0, %s293
      %s297 = sphi 0, %s296
      %s313 = sphi 0, %s297
      %s319 = sphi 0, %s321
      %s322 = sphi 0, %s319
      %s323 = sphi 0, %s322
      %s339 = sphi 0, %s323
      %s345 = sphi 0, %s347
      %s348 = sphi 0, %s345
      %s349 = sphi 0, %s348
      %s365 = sphi 0, %s349
      %s369 = sphi 0, %s369
      %s371 = sphi 0, %s369
      %s372 = sphi 0, %s371
      %s386 = sphi 0, %s372
      %s390 = sphi 0, %s390
      %s392 = sphi 0, %s390
      %s393 = sphi 0, %s392
      %s407 = sphi 0, %s393
      %s411 = sphi 0, %s411
      %s413 = sphi 0, %s411
      %s414 = sphi 0, %s413
      %s428 = sphi 0, %s414
      %s432 = sphi 0, %s432
      %s434 = sphi 0, %s432
      %s435 = sphi 0, %s434
      %s449 = sphi 0, %s435
      %s453 = sphi 0, %s453
      %s455 = sphi 0, %s453
      %s456 = sphi 0, %s455
      %s470 = sphi 0, %s456
      %s474 = sphi 0, %s474
      %s476 = sphi 0, %s474
      %s477 = sphi 0, %s476
      %s491 = sphi 0, %s477
      %s495 = sphi 0, %s495
      %s497 = sphi 0, %s495
      %s498 = sphi 0, %s497
      %s512 = sphi 0, %s498
    $region4: #{forward_pallas.1} parent=1 // loop_header_branch
      %35 = sbr.rel (%p33) target = $region8
    $region5: #{forward_pallas.1} parent=1 // loop_body
      %s37 = ssub.s32 %s32, 1
      %s38 = ssub.s32 %s32, 2
      %s39 = sadd.s32 %s32, 1
      %s41 = sadd.s32 %s40, 1
      %p44 = scmp.eq.s32.totalorder %s32, 1
      %p45 = scmp.ne.s32.totalorder %s40, %s42
      %p46 = scmp.eq.s32.totalorder %s32, 0
      %p47 = por %p45, %p46
      %p48 = scmp.ne.s32.totalorder %s40, %s42
      %p49 = scmp.eq.s32.totalorder %s37, 1
      %p50 = por %p48, %p49
      %p51 = scmp.ne.s32.totalorder %s42, %s43
      %p52 = scmp.eq.s32.totalorder %s37, 0
      %p53 = por %p51, %p52
      %p54 = scmp.ne.s32.totalorder %s42, %s43
      %p55 = scmp.eq.s32.totalorder %s38, 1
      %p56 = por %p54, %p55
      %p58 = scmp.ne.s32.totalorder %s43, %s57
      %p59 = scmp.eq.s32.totalorder %s38, 0
      %p60 = por %p58, %p59
      %s62 = sadd.s32 %s61, 1
      %p65 = scmp.eq.s32.totalorder %s32, 1
      %p66 = scmp.ne.s32.totalorder %s61, %s63
      %p67 = scmp.eq.s32.totalorder %s32, 0
      %p68 = por %p66, %p67
      %p69 = scmp.ne.s32.totalorder %s61, %s63
      %p70 = scmp.eq.s32.totalorder %s37, 1
      %p71 = por %p69, %p70
      %p72 = scmp.ne.s32.totalorder %s63, %s64
      %p73 = scmp.eq.s32.totalorder %s37, 0
      %p74 = por %p72, %p73
      %p75 = scmp.ne.s32.totalorder %s63, %s64
      %p76 = scmp.eq.s32.totalorder %s38, 1
      %p77 = por %p75, %p76
      %p79 = scmp.ne.s32.totalorder %s64, %s78
      %p80 = scmp.eq.s32.totalorder %s38, 0
      %p81 = por %p79, %p80
      %s83 = sadd.s32 %s82, 1
      %p86 = scmp.eq.s32.totalorder %s32, 1
      %p87 = scmp.ne.s32.totalorder %s82, %s84
      %p88 = scmp.eq.s32.totalorder %s32, 0
      %p89 = por %p87, %p88
      %p90 = scmp.ne.s32.totalorder %s82, %s84
      %p91 = scmp.eq.s32.totalorder %s37, 1
      %p92 = por %p90, %p91
      %p93 = scmp.ne.s32.totalorder %s84, %s85
      %p94 = scmp.eq.s32.totalorder %s37, 0
      %p95 = por %p93, %p94
      %p96 = scmp.ne.s32.totalorder %s84, %s85
      %p97 = scmp.eq.s32.totalorder %s38, 1
      %p98 = por %p96, %p97
      %p100 = scmp.ne.s32.totalorder %s85, %s99
      %p101 = scmp.eq.s32.totalorder %s38, 0
      %p102 = por %p100, %p101
      %s104 = sadd.s32 %s103, 1
      %p107 = scmp.eq.s32.totalorder %s32, 1
      %p108 = scmp.ne.s32.totalorder %s103, %s105
      %p109 = scmp.eq.s32.totalorder %s32, 0
      %p110 = por %p108, %p109
      %p111 = scmp.ne.s32.totalorder %s103, %s105
      %p112 = scmp.eq.s32.totalorder %s37, 1
      %p113 = por %p111, %p112
      %p114 = scmp.ne.s32.totalorder %s105, %s106
      %p115 = scmp.eq.s32.totalorder %s37, 0
      %p116 = por %p114, %p115
      %p117 = scmp.ne.s32.totalorder %s105, %s106
      %p118 = scmp.eq.s32.totalorder %s38, 1
      %p119 = por %p117, %p118
      %p121 = scmp.ne.s32.totalorder %s106, %s120
      %p122 = scmp.eq.s32.totalorder %s38, 0
      %p123 = por %p121, %p122
      %s125 = sadd.s32 %s124, 1
      %p128 = scmp.eq.s32.totalorder %s32, 1
      %p129 = scmp.ne.s32.totalorder %s124, %s126
      %p130 = scmp.eq.s32.totalorder %s32, 0
      %p131 = por %p129, %p130
      %p132 = scmp.ne.s32.totalorder %s124, %s126
      %p133 = scmp.eq.s32.totalorder %s37, 1
      %p134 = por %p132, %p133
      %p135 = scmp.ne.s32.totalorder %s126, %s127
      %p136 = scmp.eq.s32.totalorder %s37, 0
      %p137 = por %p135, %p136
      %p138 = scmp.ne.s32.totalorder %s126, %s127
      %p139 = scmp.eq.s32.totalorder %s38, 1
      %p140 = por %p138, %p139
      %p142 = scmp.ne.s32.totalorder %s127, %s141
      %p143 = scmp.eq.s32.totalorder %s38, 0
      %p144 = por %p142, %p143
      %s146 = sadd.s32 %s145, 1
      %p149 = scmp.eq.s32.totalorder %s32, 1
      %p150 = scmp.ne.s32.totalorder %s145, %s147
      %p151 = scmp.eq.s32.totalorder %s32, 0
      %p152 = por %p150, %p151
      %p153 = scmp.ne.s32.totalorder %s145, %s147
      %p154 = scmp.eq.s32.totalorder %s37, 1
      %p155 = por %p153, %p154
      %p156 = scmp.ne.s32.totalorder %s147, %s148
      %p157 = scmp.eq.s32.totalorder %s37, 0
      %p158 = por %p156, %p157
      %p159 = scmp.ne.s32.totalorder %s147, %s148
      %p160 = scmp.eq.s32.totalorder %s38, 1
      %p161 = por %p159, %p160
      %p163 = scmp.ne.s32.totalorder %s148, %s162
      %p164 = scmp.eq.s32.totalorder %s38, 0
      %p165 = por %p163, %p164
      %s167 = sadd.s32 %s166, 1
      %p170 = scmp.eq.s32.totalorder %s32, 1
      %p171 = scmp.ne.s32.totalorder %s166, %s168
      %p172 = scmp.eq.s32.totalorder %s32, 0
      %p173 = por %p171, %p172
      %p174 = scmp.ne.s32.totalorder %s166, %s168
      %p175 = scmp.eq.s32.totalorder %s37, 1
      %p176 = por %p174, %p175
      %p177 = scmp.ne.s32.totalorder %s168, %s169
      %p178 = scmp.eq.s32.totalorder %s37, 0
      %p179 = por %p177, %p178
      %p180 = scmp.ne.s32.totalorder %s168, %s169
      %p181 = scmp.eq.s32.totalorder %s38, 1
      %p182 = por %p180, %p181
      %p184 = scmp.ne.s32.totalorder %s169, %s183
      %p185 = scmp.eq.s32.totalorder %s38, 0
      %p186 = por %p184, %p185
      %s187 = ssub.s32 %s32, %s39
      %p188 = scmp.eq.s32.totalorder %s187, 0
      %s190 = sadd.s32 %s189, 1
      %s191 = scalar_select %p188, %s189, %s190
      %p194 = pneg %p188
      %p195 = scmp.eq.s32.totalorder %s32, 1
      %p196 = por %p194, %p195
      %p197 = scmp.ne.s32.totalorder %s189, %s192
      %p198 = scmp.eq.s32.totalorder %s32, 0
      %p199 = por %p197, %p198
      %p200 = scmp.ne.s32.totalorder %s189, %s192
      %p201 = scmp.eq.s32.totalorder %s37, 1
      %p202 = por %p200, %p201
      %p203 = scmp.ne.s32.totalorder %s192, %s193
      %p204 = scmp.eq.s32.totalorder %s37, 0
      %p205 = por %p203, %p204
      %p206 = scmp.ne.s32.totalorder %s192, %s193
      %p207 = scmp.eq.s32.totalorder %s38, 1
      %p208 = por %p206, %p207
      %p210 = scmp.ne.s32.totalorder %s193, %s209
      %p211 = scmp.eq.s32.totalorder %s38, 0
      %p212 = por %p210, %p211
      %s213 = ssub.s32 %s32, %s39
      %p214 = scmp.eq.s32.totalorder %s213, 0
      %s216 = sadd.s32 %s215, 1
      %s217 = scalar_select %p214, %s215, %s216
      %p220 = pneg %p214
      %p221 = scmp.eq.s32.totalorder %s32, 1
      %p222 = por %p220, %p221
      %p223 = scmp.ne.s32.totalorder %s215, %s218
      %p224 = scmp.eq.s32.totalorder %s32, 0
      %p225 = por %p223, %p224
      %p226 = scmp.ne.s32.totalorder %s215, %s218
      %p227 = scmp.eq.s32.totalorder %s37, 1
      %p228 = por %p226, %p227
      %p229 = scmp.ne.s32.totalorder %s218, %s219
      %p230 = scmp.eq.s32.totalorder %s37, 0
      %p231 = por %p229, %p230
      %p232 = scmp.ne.s32.totalorder %s218, %s219
      %p233 = scmp.eq.s32.totalorder %s38, 1
      %p234 = por %p232, %p233
      %p236 = scmp.ne.s32.totalorder %s219, %s235
      %p237 = scmp.eq.s32.totalorder %s38, 0
      %p238 = por %p236, %p237
      %s239 = ssub.s32 %s32, %s39
      %p240 = scmp.eq.s32.totalorder %s239, 0
      %s242 = sadd.s32 %s241, 1
      %s243 = scalar_select %p240, %s241, %s242
      %p246 = pneg %p240
      %p247 = scmp.eq.s32.totalorder %s32, 1
      %p248 = por %p246, %p247
      %p249 = scmp.ne.s32.totalorder %s241, %s244
      %p250 = scmp.eq.s32.totalorder %s32, 0
      %p251 = por %p249, %p250
      %p252 = scmp.ne.s32.totalorder %s241, %s244
      %p253 = scmp.eq.s32.totalorder %s37, 1
      %p254 = por %p252, %p253
      %p255 = scmp.ne.s32.totalorder %s244, %s245
      %p256 = scmp.eq.s32.totalorder %s37, 0
      %p257 = por %p255, %p256
      %p258 = scmp.ne.s32.totalorder %s244, %s245
      %p259 = scmp.eq.s32.totalorder %s38, 1
      %p260 = por %p258, %p259
      %p262 = scmp.ne.s32.totalorder %s245, %s261
      %p263 = scmp.eq.s32.totalorder %s38, 0
      %p264 = por %p262, %p263
      %s265 = ssub.s32 %s32, %s39
      %p266 = scmp.eq.s32.totalorder %s265, 0
      %s268 = sadd.s32 %s267, 1
      %s269 = scalar_select %p266, %s267, %s268
      %p272 = pneg %p266
      %p273 = scmp.eq.s32.totalorder %s32, 1
      %p274 = por %p272, %p273
      %p275 = scmp.ne.s32.totalorder %s267, %s270
      %p276 = scmp.eq.s32.totalorder %s32, 0
      %p277 = por %p275, %p276
      %p278 = scmp.ne.s32.totalorder %s267, %s270
      %p279 = scmp.eq.s32.totalorder %s37, 1
      %p280 = por %p278, %p279
      %p281 = scmp.ne.s32.totalorder %s270, %s271
      %p282 = scmp.eq.s32.totalorder %s37, 0
      %p283 = por %p281, %p282
      %p284 = scmp.ne.s32.totalorder %s270, %s271
      %p285 = scmp.eq.s32.totalorder %s38, 1
      %p286 = por %p284, %p285
      %p288 = scmp.ne.s32.totalorder %s271, %s287
      %p289 = scmp.eq.s32.totalorder %s38, 0
      %p290 = por %p288, %p289
      %s291 = ssub.s32 %s32, %s39
      %p292 = scmp.eq.s32.totalorder %s291, 0
      %s294 = sadd.s32 %s293, 1
      %s295 = scalar_select %p292, %s293, %s294
      %p298 = pneg %p292
      %p299 = scmp.eq.s32.totalorder %s32, 1
      %p300 = por %p298, %p299
      %p301 = scmp.ne.s32.totalorder %s293, %s296
      %p302 = scmp.eq.s32.totalorder %s32, 0
      %p303 = por %p301, %p302
      %p304 = scmp.ne.s32.totalorder %s293, %s296
      %p305 = scmp.eq.s32.totalorder %s37, 1
      %p306 = por %p304, %p305
      %p307 = scmp.ne.s32.totalorder %s296, %s297
      %p308 = scmp.eq.s32.totalorder %s37, 0
      %p309 = por %p307, %p308
      %p310 = scmp.ne.s32.totalorder %s296, %s297
      %p311 = scmp.eq.s32.totalorder %s38, 1
      %p312 = por %p310, %p311
      %p314 = scmp.ne.s32.totalorder %s297, %s313
      %p315 = scmp.eq.s32.totalorder %s38, 0
      %p316 = por %p314, %p315
      %s317 = ssub.s32 %s32, %s39
      %p318 = scmp.eq.s32.totalorder %s317, 0
      %s320 = sadd.s32 %s319, 1
      %s321 = scalar_select %p318, %s319, %s320
      %p324 = pneg %p318
      %p325 = scmp.eq.s32.totalorder %s32, 1
      %p326 = por %p324, %p325
      %p327 = scmp.ne.s32.totalorder %s319, %s322
      %p328 = scmp.eq.s32.totalorder %s32, 0
      %p329 = por %p327, %p328
      %p330 = scmp.ne.s32.totalorder %s319, %s322
      %p331 = scmp.eq.s32.totalorder %s37, 1
      %p332 = por %p330, %p331
      %p333 = scmp.ne.s32.totalorder %s322, %s323
      %p334 = scmp.eq.s32.totalorder %s37, 0
      %p335 = por %p333, %p334
      %p336 = scmp.ne.s32.totalorder %s322, %s323
      %p337 = scmp.eq.s32.totalorder %s38, 1
      %p338 = por %p336, %p337
      %p340 = scmp.ne.s32.totalorder %s323, %s339
      %p341 = scmp.eq.s32.totalorder %s38, 0
      %p342 = por %p340, %p341
      %s343 = ssub.s32 %s32, %s39
      %p344 = scmp.eq.s32.totalorder %s343, 0
      %s346 = sadd.s32 %s345, 1
      %s347 = scalar_select %p344, %s345, %s346
      %p350 = pneg %p344
      %p351 = scmp.eq.s32.totalorder %s32, 1
      %p352 = por %p350, %p351
      %p353 = scmp.ne.s32.totalorder %s345, %s348
      %p354 = scmp.eq.s32.totalorder %s32, 0
      %p355 = por %p353, %p354
      %p356 = scmp.ne.s32.totalorder %s345, %s348
      %p357 = scmp.eq.s32.totalorder %s37, 1
      %p358 = por %p356, %p357
      %p359 = scmp.ne.s32.totalorder %s348, %s349
      %p360 = scmp.eq.s32.totalorder %s37, 0
      %p361 = por %p359, %p360
      %p362 = scmp.ne.s32.totalorder %s348, %s349
      %p363 = scmp.eq.s32.totalorder %s38, 1
      %p364 = por %p362, %p363
      %p366 = scmp.ne.s32.totalorder %s349, %s365
      %p367 = scmp.eq.s32.totalorder %s38, 0
      %p368 = por %p366, %p367
      %s370 = sadd.s32 %s369, 1
      %p373 = scmp.eq.s32.totalorder %s32, 1
      %p374 = scmp.ne.s32.totalorder %s369, %s371
      %p375 = scmp.eq.s32.totalorder %s32, 0
      %p376 = por %p374, %p375
      %p377 = scmp.ne.s32.totalorder %s369, %s371
      %p378 = scmp.eq.s32.totalorder %s37, 1
      %p379 = por %p377, %p378
      %p380 = scmp.ne.s32.totalorder %s371, %s372
      %p381 = scmp.eq.s32.totalorder %s37, 0
      %p382 = por %p380, %p381
      %p383 = scmp.ne.s32.totalorder %s371, %s372
      %p384 = scmp.eq.s32.totalorder %s38, 1
      %p385 = por %p383, %p384
      %p387 = scmp.ne.s32.totalorder %s372, %s386
      %p388 = scmp.eq.s32.totalorder %s38, 0
      %p389 = por %p387, %p388
      %s391 = sadd.s32 %s390, 1
      %p394 = scmp.eq.s32.totalorder %s32, 1
      %p395 = scmp.ne.s32.totalorder %s390, %s392
      %p396 = scmp.eq.s32.totalorder %s32, 0
      %p397 = por %p395, %p396
      %p398 = scmp.ne.s32.totalorder %s390, %s392
      %p399 = scmp.eq.s32.totalorder %s37, 1
      %p400 = por %p398, %p399
      %p401 = scmp.ne.s32.totalorder %s392, %s393
      %p402 = scmp.eq.s32.totalorder %s37, 0
      %p403 = por %p401, %p402
      %p404 = scmp.ne.s32.totalorder %s392, %s393
      %p405 = scmp.eq.s32.totalorder %s38, 1
      %p406 = por %p404, %p405
      %p408 = scmp.ne.s32.totalorder %s393, %s407
      %p409 = scmp.eq.s32.totalorder %s38, 0
      %p410 = por %p408, %p409
      %s412 = sadd.s32 %s411, 1
      %p415 = scmp.eq.s32.totalorder %s32, 1
      %p416 = scmp.ne.s32.totalorder %s411, %s413
      %p417 = scmp.eq.s32.totalorder %s32, 0
      %p418 = por %p416, %p417
      %p419 = scmp.ne.s32.totalorder %s411, %s413
      %p420 = scmp.eq.s32.totalorder %s37, 1
      %p421 = por %p419, %p420
      %p422 = scmp.ne.s32.totalorder %s413, %s414
      %p423 = scmp.eq.s32.totalorder %s37, 0
      %p424 = por %p422, %p423
      %p425 = scmp.ne.s32.totalorder %s413, %s414
      %p426 = scmp.eq.s32.totalorder %s38, 1
      %p427 = por %p425, %p426
      %p429 = scmp.ne.s32.totalorder %s414, %s428
      %p430 = scmp.eq.s32.totalorder %s38, 0
      %p431 = por %p429, %p430
      %s433 = sadd.s32 %s432, 1
      %p436 = scmp.eq.s32.totalorder %s32, 1
      %p437 = scmp.ne.s32.totalorder %s432, %s434
      %p438 = scmp.eq.s32.totalorder %s32, 0
      %p439 = por %p437, %p438
      %p440 = scmp.ne.s32.totalorder %s432, %s434
      %p441 = scmp.eq.s32.totalorder %s37, 1
      %p442 = por %p440, %p441
      %p443 = scmp.ne.s32.totalorder %s434, %s435
      %p444 = scmp.eq.s32.totalorder %s37, 0
      %p445 = por %p443, %p444
      %p446 = scmp.ne.s32.totalorder %s434, %s435
      %p447 = scmp.eq.s32.totalorder %s38, 1
      %p448 = por %p446, %p447
      %p450 = scmp.ne.s32.totalorder %s435, %s449
      %p451 = scmp.eq.s32.totalorder %s38, 0
      %p452 = por %p450, %p451
      %s454 = sadd.s32 %s453, 1
      %p457 = scmp.eq.s32.totalorder %s32, 1
      %p458 = scmp.ne.s32.totalorder %s453, %s455
      %p459 = scmp.eq.s32.totalorder %s32, 0
      %p460 = por %p458, %p459
      %p461 = scmp.ne.s32.totalorder %s453, %s455
      %p462 = scmp.eq.s32.totalorder %s37, 1
      %p463 = por %p461, %p462
      %p464 = scmp.ne.s32.totalorder %s455, %s456
      %p465 = scmp.eq.s32.totalorder %s37, 0
      %p466 = por %p464, %p465
      %p467 = scmp.ne.s32.totalorder %s455, %s456
      %p468 = scmp.eq.s32.totalorder %s38, 1
      %p469 = por %p467, %p468
      %p471 = scmp.ne.s32.totalorder %s456, %s470
      %p472 = scmp.eq.s32.totalorder %s38, 0
      %p473 = por %p471, %p472
      %s475 = sadd.s32 %s474, 1
      %p478 = scmp.eq.s32.totalorder %s32, 1
      %p479 = scmp.ne.s32.totalorder %s474, %s476
      %p480 = scmp.eq.s32.totalorder %s32, 0
      %p481 = por %p479, %p480
      %p482 = scmp.ne.s32.totalorder %s474, %s476
      %p483 = scmp.eq.s32.totalorder %s37, 1
      %p484 = por %p482, %p483
      %p485 = scmp.ne.s32.totalorder %s476, %s477
      %p486 = scmp.eq.s32.totalorder %s37, 0
      %p487 = por %p485, %p486
      %p488 = scmp.ne.s32.totalorder %s476, %s477
      %p489 = scmp.eq.s32.totalorder %s38, 1
      %p490 = por %p488, %p489
      %p492 = scmp.ne.s32.totalorder %s477, %s491
      %p493 = scmp.eq.s32.totalorder %s38, 0
      %p494 = por %p492, %p493
      %s496 = sadd.s32 %s495, 1
      %p499 = scmp.eq.s32.totalorder %s32, 1
      %p500 = scmp.ne.s32.totalorder %s495, %s497
      %p501 = scmp.eq.s32.totalorder %s32, 0
      %p502 = por %p500, %p501
      %p503 = scmp.ne.s32.totalorder %s495, %s497
      %p504 = scmp.eq.s32.totalorder %s37, 1
      %p505 = por %p503, %p504
      %p506 = scmp.ne.s32.totalorder %s497, %s498
      %p507 = scmp.eq.s32.totalorder %s37, 0
      %p508 = por %p506, %p507
      %p509 = scmp.ne.s32.totalorder %s497, %s498
      %p510 = scmp.eq.s32.totalorder %s38, 1
      %p511 = por %p509, %p510
      %p513 = scmp.ne.s32.totalorder %s498, %s512
      %p514 = scmp.eq.s32.totalorder %s38, 0
      %p515 = por %p513, %p514
      %p516 = scmp.le.s32.totalorder 1, %s32
      %p517 = scmp.lt.s32.totalorder %s32, 3
      %p518 = pnand %p516, %p517
      %p519 = pneg %p518
      // Predicated region
      $region9: #{forward_pallas.1} parent=5 // pred_check
        _
      $region10: #{forward_pallas.1} parent=5 // pred_check_branch
        %521 = sbr.rel (%p518) target = $region12
      $region11: #{forward_pallas.1} parent=5 // pred_region
        %s522 = ssub.s32 %s32, 1
        // Predicated region
        $region13: #{forward_pallas.1} parent=11 // pred_check
          %p523 = pneg %p53
        $region14: #{forward_pallas.1} parent=11 // pred_check_branch
          %525 = sbr.rel (%p523) target = $region16
        $region15: #{forward_pallas.1} parent=11 // pred_region
          _
        $region16: #{forward_pallas.1} parent=11 // pred_fallthru
          _
        // Predicated region
        $region17: #{forward_pallas.1} parent=11 // pred_check
          %p526 = pneg %p74
        $region18: #{forward_pallas.1} parent=11 // pred_check_branch
          %528 = sbr.rel (%p526) target = $region20
        $region19: #{forward_pallas.1} parent=11 // pred_region
          _
        $region20: #{forward_pallas.1} parent=11 // pred_fallthru
          _
        // Predicated region
        $region21: #{forward_pallas.1} parent=11 // pred_check
          %p529 = pneg %p95
        $region22: #{forward_pallas.1} parent=11 // pred_check_branch
          %531 = sbr.rel (%p529) target = $region24
        $region23: #{forward_pallas.1} parent=11 // pred_region
          %533 = vsyncadd [#allocation6], 0
          %s534 = sshll.u32 %s2, 4
          %s535 = int_to_ptr.hbm [resolvable:$true] %s534
          %s536 = sshll.u32 [#allocation5], 4
          %s537 = int_to_ptr.vmem [resolvable:$true] %s536
          %542 = dma.hbm_to_vmem [thread:$0]  %s535, 512, %s537, [#allocation6], 256, 256, 16
        $region24: #{forward_pallas.1} parent=11 // pred_fallthru
          _
        // Predicated region
        $region25: #{forward_pallas.1} parent=11 // pred_check
          %p543 = pneg %p116
        $region26: #{forward_pallas.1} parent=11 // pred_check_branch
          %545 = sbr.rel (%p543) target = $region28
        $region27: #{forward_pallas.1} parent=11 // pred_region
          _
        $region28: #{forward_pallas.1} parent=11 // pred_fallthru
          _
        // Predicated region
        $region29: #{forward_pallas.1} parent=11 // pred_check
          %p546 = pneg %p137
        $region30: #{forward_pallas.1} parent=11 // pred_check_branch
          %548 = sbr.rel (%p546) target = $region32
        $region31: #{forward_pallas.1} parent=11 // pred_region
          %550 = vsyncadd [#allocation8], 0
          %s551 = sshll.u32 %s4, 4
          %s552 = int_to_ptr.hbm [resolvable:$true] %s551
          %s553 = sshll.u32 [#allocation7], 4
          %s554 = int_to_ptr.vmem [resolvable:$true] %s553
          %559 = dma.hbm_to_vmem [thread:$0]  %s552, 2304, %s554, [#allocation8], 128, 128, 8
        $region32: #{forward_pallas.1} parent=11 // pred_fallthru
          _
        // Predicated region
        $region33: #{forward_pallas.1} parent=11 // pred_check
          %p560 = pneg %p158
        $region34: #{forward_pallas.1} parent=11 // pred_check_branch
          %562 = sbr.rel (%p560) target = $region36
        $region35: #{forward_pallas.1} parent=11 // pred_region
          %564 = vsyncadd [#allocation8], 0
          %s566 = sshll.u32 %s5, 4
          %s567 = int_to_ptr.hbm [resolvable:$true] %s566
          %s568 = sshll.u32 [#allocation9], 4
          %s569 = int_to_ptr.vmem [resolvable:$true] %s568
          %571 = dma.hbm_to_vmem [thread:$0]  %s567, 32, %s569, [#allocation8]
        $region36: #{forward_pallas.1} parent=11 // pred_fallthru
          _
        // Predicated region
        $region37: #{forward_pallas.1} parent=11 // pred_check
          %p572 = pneg %p179
        $region38: #{forward_pallas.1} parent=11 // pred_check_branch
          %574 = sbr.rel (%p572) target = $region40
        $region39: #{forward_pallas.1} parent=11 // pred_region
          %576 = vsyncadd [#allocation11], 0
          %s578 = sshll.u32 %s6, 4
          %s579 = int_to_ptr.hbm [resolvable:$true] %s578
          %s580 = sshll.u32 [#allocation10], 4
          %s581 = int_to_ptr.vmem [resolvable:$true] %s580
          %583 = dma.hbm_to_vmem [thread:$0]  %s579, 32, %s581, [#allocation11]
        $region40: #{forward_pallas.1} parent=11 // pred_fallthru
          _
        // Predicated region
        $region41: #{forward_pallas.1} parent=11 // pred_check
          %p584 = pneg %p382
        $region42: #{forward_pallas.1} parent=11 // pred_check_branch
          %586 = sbr.rel (%p584) target = $region44
        $region43: #{forward_pallas.1} parent=11 // pred_region
          %588 = vsyncadd [#allocation8], 0
          %s589 = sshll.u32 %s14, 4
          %s590 = int_to_ptr.hbm [resolvable:$true] %s589
          %s591 = sshll.u32 [#allocation15], 4
          %s592 = int_to_ptr.vmem [resolvable:$true] %s591
          %597 = dma.hbm_to_vmem [thread:$0]  %s590, 2048, %s592, [#allocation8], 64, 64, 4
        $region44: #{forward_pallas.1} parent=11 // pred_fallthru
          _
        // Predicated region
        $region45: #{forward_pallas.1} parent=11 // pred_check
          %p598 = pneg %p403
        $region46: #{forward_pallas.1} parent=11 // pred_check_branch
          %600 = sbr.rel (%p598) target = $region48
        $region47: #{forward_pallas.1} parent=11 // pred_region
          _
        $region48: #{forward_pallas.1} parent=11 // pred_fallthru
          _
        // Predicated region
        $region49: #{forward_pallas.1} parent=11 // pred_check
          %p601 = pneg %p424
        $region50: #{forward_pallas.1} parent=11 // pred_check_branch
          %603 = sbr.rel (%p601) target = $region52
        $region51: #{forward_pallas.1} parent=11 // pred_region
          %605 = vsyncadd [#allocation11], 0
          %s607 = sshll.u32 %s16, 4
          %s608 = int_to_ptr.hbm [resolvable:$true] %s607
          %s609 = sshll.u32 [#allocation16], 4
          %s610 = int_to_ptr.vmem [resolvable:$true] %s609
          %612 = dma.hbm_to_vmem [thread:$0]  %s608, 16, %s610, [#allocation11]
        $region52: #{forward_pallas.1} parent=11 // pred_fallthru
          _
        // Predicated region
        $region53: #{forward_pallas.1} parent=11 // pred_check
          %p613 = pneg %p445
        $region54: #{forward_pallas.1} parent=11 // pred_check_branch
          %615 = sbr.rel (%p613) target = $region56
        $region55: #{forward_pallas.1} parent=11 // pred_region
          %617 = vsyncadd [#allocation18], 0
          %s618 = sshll.u32 %s17, 4
          %s619 = int_to_ptr.hbm [resolvable:$true] %s618
          %s620 = sshll.u32 [#allocation17], 4
          %s621 = int_to_ptr.vmem [resolvable:$true] %s620
          %626 = dma.hbm_to_vmem [thread:$0]  %s619, 8192, %s621, [#allocation18], 64, 64, 4
        $region56: #{forward_pallas.1} parent=11 // pred_fallthru
          _
        // Predicated region
        $region57: #{forward_pallas.1} parent=11 // pred_check
          %p627 = pneg %p466
        $region58: #{forward_pallas.1} parent=11 // pred_check_branch
          %629 = sbr.rel (%p627) target = $region60
        $region59: #{forward_pallas.1} parent=11 // pred_region
          %631 = vsyncadd [#allocation18], 0
          %s633 = sshll.u32 %s18, 4
          %s634 = int_to_ptr.hbm [resolvable:$true] %s633
          %s635 = sshll.u32 [#allocation19], 4
          %s636 = int_to_ptr.vmem [resolvable:$true] %s635
          %638 = dma.hbm_to_vmem [thread:$0]  %s634, 16, %s636, [#allocation18]
        $region60: #{forward_pallas.1} parent=11 // pred_fallthru
          _
        // Predicated region
        $region61: #{forward_pallas.1} parent=11 // pred_check
          %p639 = pneg %p487
        $region62: #{forward_pallas.1} parent=11 // pred_check_branch
          %641 = sbr.rel (%p639) target = $region64
        $region63: #{forward_pallas.1} parent=11 // pred_region
          _
        $region64: #{forward_pallas.1} parent=11 // pred_fallthru
          _
      $region12: #{forward_pallas.1} parent=5 // pred_fallthru
        _
      %p642 = scmp.lt.s32.totalorder %s32, 2
      // Predicated region
      $region65: #{forward_pallas.1} parent=5 // pred_check
        %p643 = pneg %p642
      $region66: #{forward_pallas.1} parent=5 // pred_check_branch
        %645 = sbr.rel (%p643) target = $region68
      $region67: #{forward_pallas.1} parent=5 // pred_region
        // Predicated region
        $region69: #{forward_pallas.1} parent=67 // pred_check
          %p646 = pneg %p199
        $region70: #{forward_pallas.1} parent=67 // pred_check_branch
          %648 = sbr.rel (%p646) target = $region72
        $region71: #{forward_pallas.1} parent=67 // pred_region
          %p649 = scmp.lt.s32.totalorder %s32, 1
          %s650 = scalar_select %p649, %s32, 1
          %s651 = smul.addr %s650, 192
          %s652 = smul.addr %s651, 4
          %s653 = scalar_lea.vmem %s7, %s652
        $region72: #{forward_pallas.1} parent=67 // pred_fallthru
          _
        // Predicated region
        $region73: #{forward_pallas.1} parent=67 // pred_check
          %p654 = pneg %p225
        $region74: #{forward_pallas.1} parent=67 // pred_check_branch
          %656 = sbr.rel (%p654) target = $region76
        $region75: #{forward_pallas.1} parent=67 // pred_region
          %s657 = sand.u32 %s32, 1
          %s658 = scalar_lea.sflag [#allocation6], %s657
          %s659 = sand.u32 %s215, 1
          %s660 = smul.addr %s659, 768
          %s661 = scalar_lea.vmem [#allocation12], %s660
          %663 = vsyncadd %s658, 0
          %s664 = smul.addr %s32, 192
          %s665 = smul.addr %s664, 4
          %s666 = scalar_lea.hbm %s8, %s665
          %s667 = sshll.u32 %s666, 4
          %s668 = int_to_ptr.hbm [resolvable:$true] %s667
          %s669 = sshll.u32 %s661, 4
          %s670 = int_to_ptr.vmem [resolvable:$true] %s669
          %675 = dma.hbm_to_vmem [thread:$0]  %s668, 12288, %s670, %s658, 128, 128, 8
        $region76: #{forward_pallas.1} parent=67 // pred_fallthru
          _
        // Predicated region
        $region77: #{forward_pallas.1} parent=67 // pred_check
          %p676 = pneg %p251
        $region78: #{forward_pallas.1} parent=67 // pred_check_branch
          %678 = sbr.rel (%p676) target = $region80
        $region79: #{forward_pallas.1} parent=67 // pred_region
          %p679 = scmp.lt.s32.totalorder %s32, 1
          %s680 = scalar_select %p679, %s32, 1
          %s681 = smul.addr %s680, 2
          %s682 = scalar_lea.vmem %s9, %s681
        $region80: #{forward_pallas.1} parent=67 // pred_fallthru
          _
        // Predicated region
        $region81: #{forward_pallas.1} parent=67 // pred_check
          %p683 = pneg %p277
        $region82: #{forward_pallas.1} parent=67 // pred_check_branch
          %685 = sbr.rel (%p683) target = $region84
        $region83: #{forward_pallas.1} parent=67 // pred_region
          %p686 = scmp.lt.s32.totalorder %s32, 1
          %s687 = scalar_select %p686, %s32, 1
          %s688 = smul.addr %s687, 2
          %s689 = scalar_lea.vmem %s10, %s688
        $region84: #{forward_pallas.1} parent=67 // pred_fallthru
          _
        // Predicated region
        $region85: #{forward_pallas.1} parent=67 // pred_check
          %p690 = pneg %p303
        $region86: #{forward_pallas.1} parent=67 // pred_check_branch
          %692 = sbr.rel (%p690) target = $region88
        $region87: #{forward_pallas.1} parent=67 // pred_region
          %p693 = scmp.lt.s32.totalorder %s32, 1
          %s694 = scalar_select %p693, %s32, 1
          %s695 = smul.addr %s694, 2
          %s696 = scalar_lea.vmem %s11, %s695
        $region88: #{forward_pallas.1} parent=67 // pred_fallthru
          _
        // Predicated region
        $region89: #{forward_pallas.1} parent=67 // pred_check
          %p697 = pneg %p329
        $region90: #{forward_pallas.1} parent=67 // pred_check_branch
          %699 = sbr.rel (%p697) target = $region92
        $region91: #{forward_pallas.1} parent=67 // pred_region
          %s700 = sand.u32 %s32, 1
          %s701 = scalar_lea.sflag [#allocation6], %s700
          %s702 = sand.u32 %s319, 1
          %s703 = smul.addr %s702, 2
          %s704 = scalar_lea.vmem [#allocation13], %s703
          %706 = vsyncadd %s701, 0
          %s707 = smul.addr %s32, 2
          %s708 = scalar_lea.hbm %s12, %s707
          %s710 = sshll.u32 %s708, 4
          %s711 = int_to_ptr.hbm [resolvable:$true] %s710
          %s712 = sshll.u32 %s704, 4
          %s713 = int_to_ptr.vmem [resolvable:$true] %s712
          %715 = dma.hbm_to_vmem [thread:$0]  %s711, 32, %s713, %s701
        $region92: #{forward_pallas.1} parent=67 // pred_fallthru
          _
        // Predicated region
        $region93: #{forward_pallas.1} parent=67 // pred_check
          %p716 = pneg %p355
        $region94: #{forward_pallas.1} parent=67 // pred_check_branch
          %718 = sbr.rel (%p716) target = $region96
        $region95: #{forward_pallas.1} parent=67 // pred_region
          %s719 = sand.u32 %s32, 1
          %s720 = scalar_lea.sflag [#allocation6], %s719
          %s721 = sand.u32 %s345, 1
          %s722 = smul.addr %s721, 2
          %s723 = scalar_lea.vmem [#allocation14], %s722
          %725 = vsyncadd %s720, 0
          %s726 = smul.addr %s32, 2
          %s727 = scalar_lea.hbm %s13, %s726
          %s729 = sshll.u32 %s727, 4
          %s730 = int_to_ptr.hbm [resolvable:$true] %s729
          %s731 = sshll.u32 %s723, 4
          %s732 = int_to_ptr.vmem [resolvable:$true] %s731
          %734 = dma.hbm_to_vmem [thread:$0]  %s730, 32, %s732, %s720
        $region96: #{forward_pallas.1} parent=67 // pred_fallthru
          _
      $region68: #{forward_pallas.1} parent=5 // pred_fallthru
        _
      %p735 = scmp.le.s32.totalorder 1, %s32
      %p736 = scmp.lt.s32.totalorder %s32, 3
      %p737 = pnand %p735, %p736
      %p738 = pneg %p737
      // Predicated region
      $region97: #{forward_pallas.1} parent=5 // pred_check
        _
      $region98: #{forward_pallas.1} parent=5 // pred_check_branch
        %740 = sbr.rel (%p737) target = $region100
      $region99: #{forward_pallas.1} parent=5 // pred_region
        %s741 = ssub.s32 %s32, 1
        // Predicated region
        $region101: #{forward_pallas.1} parent=99 // pred_check
          %p742 = pneg %p95
        $region102: #{forward_pallas.1} parent=99 // pred_check_branch
          %744 = sbr.rel (%p742) target = $region104
        $region103: #{forward_pallas.1} parent=99 // pred_region
          %746 = dma.done [#allocation6], 512
        $region104: #{forward_pallas.1} parent=99 // pred_fallthru
          _
        // Predicated region
        $region105: #{forward_pallas.1} parent=99 // pred_check
          %p747 = pneg %p137
        $region106: #{forward_pallas.1} parent=99 // pred_check_branch
          %749 = sbr.rel (%p747) target = $region108
        $region107: #{forward_pallas.1} parent=99 // pred_region
          %751 = dma.done [#allocation8], 2304
        $region108: #{forward_pallas.1} parent=99 // pred_fallthru
          _
        // Predicated region
        $region109: #{forward_pallas.1} parent=99 // pred_check
          %p752 = pneg %p158
        $region110: #{forward_pallas.1} parent=99 // pred_check_branch
          %754 = sbr.rel (%p752) target = $region112
        $region111: #{forward_pallas.1} parent=99 // pred_region
          %756 = dma.done [#allocation8], 32
        $region112: #{forward_pallas.1} parent=99 // pred_fallthru
          _
        // Predicated region
        $region113: #{forward_pallas.1} parent=99 // pred_check
          %p757 = pneg %p179
        $region114: #{forward_pallas.1} parent=99 // pred_check_branch
          %759 = sbr.rel (%p757) target = $region116
        $region115: #{forward_pallas.1} parent=99 // pred_region
          %761 = dma.done [#allocation11], 32
        $region116: #{forward_pallas.1} parent=99 // pred_fallthru
          _
        %s762 = sand.u32 %s37, 1
        %s763 = scalar_lea.sflag [#allocation6], %s762
        %s764 = sand.u32 %s218, 1
        %s765 = smul.addr %s764, 768
        %s766 = scalar_lea.vmem [#allocation12], %s765
        // Predicated region
        $region117: #{forward_pallas.1} parent=99 // pred_check
          %p767 = pneg %p231
        $region118: #{forward_pallas.1} parent=99 // pred_check_branch
          %769 = sbr.rel (%p767) target = $region120
        $region119: #{forward_pallas.1} parent=99 // pred_region
          %771 = dma.done %s763, 12288
        $region120: #{forward_pallas.1} parent=99 // pred_fallthru
          _
        %s772 = sand.u32 %s37, 1
        %s773 = scalar_lea.sflag [#allocation6], %s772
        %s774 = sand.u32 %s322, 1
        %s775 = smul.addr %s774, 2
        %s776 = scalar_lea.vmem [#allocation13], %s775
        // Predicated region
        $region121: #{forward_pallas.1} parent=99 // pred_check
          %p777 = pneg %p335
        $region122: #{forward_pallas.1} parent=99 // pred_check_branch
          %779 = sbr.rel (%p777) target = $region124
        $region123: #{forward_pallas.1} parent=99 // pred_region
          %781 = dma.done %s773, 32
        $region124: #{forward_pallas.1} parent=99 // pred_fallthru
          _
        %s782 = sand.u32 %s37, 1
        %s783 = scalar_lea.sflag [#allocation6], %s782
        %s784 = sand.u32 %s348, 1
        %s785 = smul.addr %s784, 2
        %s786 = scalar_lea.vmem [#allocation14], %s785
        // Predicated region
        $region125: #{forward_pallas.1} parent=99 // pred_check
          %p787 = pneg %p361
        $region126: #{forward_pallas.1} parent=99 // pred_check_branch
          %789 = sbr.rel (%p787) target = $region128
        $region127: #{forward_pallas.1} parent=99 // pred_region
          %791 = dma.done %s783, 32
        $region128: #{forward_pallas.1} parent=99 // pred_fallthru
          _
        // Predicated region
        $region129: #{forward_pallas.1} parent=99 // pred_check
          %p792 = pneg %p382
        $region130: #{forward_pallas.1} parent=99 // pred_check_branch
          %794 = sbr.rel (%p792) target = $region132
        $region131: #{forward_pallas.1} parent=99 // pred_region
          %796 = dma.done [#allocation8], 2048
        $region132: #{forward_pallas.1} parent=99 // pred_fallthru
          _
        // Predicated region
        $region133: #{forward_pallas.1} parent=99 // pred_check
          %p797 = pneg %p424
        $region134: #{forward_pallas.1} parent=99 // pred_check_branch
          %799 = sbr.rel (%p797) target = $region136
        $region135: #{forward_pallas.1} parent=99 // pred_region
          %801 = dma.done [#allocation11], 16
        $region136: #{forward_pallas.1} parent=99 // pred_fallthru
          _
        // Predicated region
        $region137: #{forward_pallas.1} parent=99 // pred_check
          %p802 = pneg %p445
        $region138: #{forward_pallas.1} parent=99 // pred_check_branch
          %804 = sbr.rel (%p802) target = $region140
        $region139: #{forward_pallas.1} parent=99 // pred_region
          %806 = dma.done [#allocation18], 8192
        $region140: #{forward_pallas.1} parent=99 // pred_fallthru
          _
        // Predicated region
        $region141: #{forward_pallas.1} parent=99 // pred_check
          %p807 = pneg %p466
        $region142: #{forward_pallas.1} parent=99 // pred_check_branch
          %809 = sbr.rel (%p807) target = $region144
        $region143: #{forward_pallas.1} parent=99 // pred_region
          %811 = dma.done [#allocation18], 16
        $region144: #{forward_pallas.1} parent=99 // pred_fallthru
          _
        %p812 = pneg %p53
        %p813 = pneg %p50
        %p814 = pneg %p74
        %p815 = pneg %p71
        %p816 = pneg %p95
        %p817 = pneg %p92
        %p818 = pneg %p116
        %p819 = pneg %p113
        %p820 = pneg %p137
        %p821 = pneg %p134
        %p822 = pneg %p158
        %p823 = pneg %p155
        %p824 = pneg %p179
        %p825 = pneg %p176
        %p826 = scmp.lt.s32.totalorder %s37, 1
        %s827 = scalar_select %p826, %s37, 1
        %s828 = smul.addr %s827, 192
        %s829 = smul.addr %s828, 4
        %s830 = scalar_lea.vmem %s7, %s829
        %p831 = pneg %p205
        %p832 = pneg %p202
        %s833 = sand.u32 %s37, 1
        %s834 = scalar_lea.sflag [#allocation6], %s833
        %s835 = sand.u32 %s218, 1
        %s836 = smul.addr %s835, 768
        %s837 = scalar_lea.vmem [#allocation12], %s836
        %p838 = pneg %p231
        %p839 = pneg %p228
        %p840 = scmp.lt.s32.totalorder %s37, 1
        %s841 = scalar_select %p840, %s37, 1
        %s842 = smul.addr %s841, 2
        %s843 = scalar_lea.vmem %s9, %s842
        %p844 = pneg %p257
        %p845 = pneg %p254
        %p846 = scmp.lt.s32.totalorder %s37, 1
        %s847 = scalar_select %p846, %s37, 1
        %s848 = smul.addr %s847, 2
        %s849 = scalar_lea.vmem %s10, %s848
        %p850 = pneg %p283
        %p851 = pneg %p280
        %p852 = scmp.lt.s32.totalorder %s37, 1
        %s853 = scalar_select %p852, %s37, 1
        %s854 = smul.addr %s853, 2
        %s855 = scalar_lea.vmem %s11, %s854
        %p856 = pneg %p309
        %p857 = pneg %p306
        %s858 = sand.u32 %s37, 1
        %s859 = scalar_lea.sflag [#allocation6], %s858
        %s860 = sand.u32 %s322, 1
        %s861 = smul.addr %s860, 2
        %s862 = scalar_lea.vmem [#allocation13], %s861
        %p863 = pneg %p335
        %p864 = pneg %p332
        %s865 = sand.u32 %s37, 1
        %s866 = scalar_lea.sflag [#allocation6], %s865
        %s867 = sand.u32 %s348, 1
        %s868 = smul.addr %s867, 2
        %s869 = scalar_lea.vmem [#allocation14], %s868
        %p870 = pneg %p361
        %p871 = pneg %p358
        %p872 = pneg %p382
        %p873 = pneg %p379
        %p874 = pneg %p403
        %p875 = pneg %p400
        %p876 = pneg %p424
        %p877 = pneg %p421
        %p878 = pneg %p445
        %p879 = pneg %p442
        %p880 = pneg %p466
        %p881 = pneg %p463
        %p882 = pneg %p487
        %p883 = pneg %p484
        %p884 = pneg %p508
        %p885 = pneg %p505
        %p886 = scmp.lt.s32.totalorder %s37, 1
        %s887 = scalar_select %p886, %s37, 1
        %s888 = smul.addr %s887, 192
        %s889 = smul.addr %s888, 4
        %s890 = scalar_lea.vmem %s7, %s889
        %p891 = scmp.lt.s32.totalorder %s37, 1
        %s892 = scalar_select %p891, %s37, 1
        %s893 = smul.addr %s892, 2
        %s894 = scalar_lea.vmem %s9, %s893
        %p895 = scmp.lt.s32.totalorder %s37, 1
        %s896 = scalar_select %p895, %s37, 1
        %s897 = smul.addr %s896, 2
        %s898 = scalar_lea.vmem %s10, %s897
        %p899 = scmp.lt.s32.totalorder %s37, 1
        %s900 = scalar_select %p899, %s37, 1
        %s901 = smul.addr %s900, 2
        %s902 = scalar_lea.vmem %s11, %s901
        %v904 = vld [vmem:[%s1] sm:$0xff]
        %v905 = vld [vmem:[%s1 + $0x8] sm:$0xff]
        %v906 = vld [vmem:[%s1 + $0x10] sm:$0xff]
        %v907 = vld [vmem:[%s1 + $0x18] sm:$0xff]
        %v908 = vld [vmem:[%s1 + $0x20] sm:$0xff]
        %v909 = vld [vmem:[%s1 + $0x28] sm:$0xff]
        %v910 = vld [vmem:[%s1 + $0x30] sm:$0xff]
        %v911 = vld [vmem:[%s1 + $0x38] sm:$0xff]
        %v912 = vld [vmem:[%s1 + $0x40] sm:$0xff]
        %v913 = vld [vmem:[%s1 + $0x48] sm:$0xff]
        %v914 = vld [vmem:[%s1 + $0x50] sm:$0xff]
        %v915 = vld [vmem:[%s1 + $0x58] sm:$0xff]
        %v916 = vld [vmem:[%s1 + $0x60] sm:$0xff]
        %v917 = vld [vmem:[%s1 + $0x68] sm:$0xff]
        %v918 = vld [vmem:[%s1 + $0x70] sm:$0xff]
        %v919 = vld [vmem:[%s1 + $0x78] sm:$0xff]
        %v920 = vld [vmem:[%s1 + $0x80] sm:$0xff]
        %v921 = vld [vmem:[%s1 + $0x88] sm:$0xff]
        %v922 = vld [vmem:[%s1 + $0x90] sm:$0xff]
        %v923 = vld [vmem:[%s1 + $0x98] sm:$0x3f]
        %p924 = scmp.eq.s32.totalorder %s37, 0
        // Predicated region
        $region145: #{forward_pallas.1} parent=99 // pred_check
          %p925 = pneg %p924
        $region146: #{forward_pallas.1} parent=99 // pred_check_branch
          %927 = sbr.rel (%p925) target = $region148
        $region147: #{forward_pallas.1} parent=99 // pred_region
          %928 = vst [vmem:[#allocation2] sm:$0xff] 0.0
          %929 = vst [vmem:[#allocation2 + $0x8] sm:$0xff] 0.0
          %930 = vst [vmem:[#allocation2 + $0x10] sm:$0xff] 0.0
          %931 = vst [vmem:[#allocation2 + $0x18] sm:$0xff] 0.0
          %932 = vst [vmem:[#allocation2 + $0x20] sm:$0xff] 0.0
          %933 = vst [vmem:[#allocation2 + $0x28] sm:$0xff] 0.0
          %934 = vst [vmem:[#allocation2 + $0x30] sm:$0xff] 0.0
          %935 = vst [vmem:[#allocation2 + $0x38] sm:$0xff] 0.0
          %936 = vst [vmem:[#allocation2 + $0x40] sm:$0xff] 0.0
          %937 = vst [vmem:[#allocation2 + $0x48] sm:$0xff] 0.0
          %938 = vst [vmem:[#allocation2 + $0x50] sm:$0xff] 0.0
          %939 = vst [vmem:[#allocation2 + $0x58] sm:$0xff] 0.0
          %940 = vst [vmem:[#allocation2 + $0x60] sm:$0xff] 0.0
          %941 = vst [vmem:[#allocation2 + $0x68] sm:$0xff] 0.0
          %942 = vst [vmem:[#allocation2 + $0x70] sm:$0xff] 0.0
          %943 = vst [vmem:[#allocation2 + $0x78] sm:$0xff] 0.0
          %944 = vst [vmem:[#allocation2 + $0x80] sm:$0xff] 0.0
          %945 = vst [vmem:[#allocation2 + $0x88] sm:$0xff] 0.0
          %946 = vst [vmem:[#allocation2 + $0x90] sm:$0xff] 0.0
          %947 = vst [vmem:[#allocation2 + $0x98] sm:$0xff] 0.0
          %948 = vst [vmem:[#allocation2 + $0xa0] sm:$0xff] 0.0
          %949 = vst [vmem:[#allocation2 + $0xa8] sm:$0xff] 0.0
          %950 = vst [vmem:[#allocation2 + $0xb0] sm:$0xff] 0.0
          %951 = vst [vmem:[#allocation2 + $0xb8] sm:$0xff] 0.0
          %952 = vst [vmem:[#allocation2 + $0xc0] sm:$0xff] 0.0
          %953 = vst [vmem:[#allocation2 + $0xc8] sm:$0xff] 0.0
          %954 = vst [vmem:[#allocation2 + $0xd0] sm:$0xff] 0.0
          %955 = vst [vmem:[#allocation2 + $0xd8] sm:$0xff] 0.0
          %956 = vst [vmem:[#allocation2 + $0xe0] sm:$0xff] 0.0
          %957 = vst [vmem:[#allocation2 + $0xe8] sm:$0xff] 0.0
          %958 = vst [vmem:[#allocation2 + $0xf0] sm:$0xff] 0.0
          %959 = vst [vmem:[#allocation2 + $0xf8] sm:$0xff] 0.0
          %960 = vst [vmem:[#allocation2 + $0x100] sm:$0xff] 0.0
          %961 = vst [vmem:[#allocation2 + $0x108] sm:$0xff] 0.0
          %962 = vst [vmem:[#allocation2 + $0x110] sm:$0xff] 0.0
          %963 = vst [vmem:[#allocation2 + $0x118] sm:$0xff] 0.0
          %964 = vst [vmem:[#allocation2 + $0x120] sm:$0xff] 0.0
          %965 = vst [vmem:[#allocation2 + $0x128] sm:$0xff] 0.0
          %966 = vst [vmem:[#allocation2 + $0x130] sm:$0xff] 0.0
          %967 = vst [vmem:[#allocation2 + $0x138] sm:$0xff] 0.0
          %968 = vst [vmem:[#allocation3] sm:$0xff] 0
          %969 = vst [vmem:[#allocation3 + $0x8] sm:$0xff] 0
          %970 = vst [vmem:[#allocation3 + $0x10] sm:$0xff] 0
          %971 = vst [vmem:[#allocation3 + $0x18] sm:$0xff] 0
          %972 = vst [vmem:[#allocation3 + $0x20] sm:$0xff] 0
          %973 = vst [vmem:[#allocation3 + $0x28] sm:$0xff] 0
          %974 = vst [vmem:[#allocation3 + $0x30] sm:$0xff] 0
          %975 = vst [vmem:[#allocation3 + $0x38] sm:$0xff] 0
          %976 = vst [vmem:[#allocation3 + $0x40] sm:$0xff] 0
          %977 = vst [vmem:[#allocation3 + $0x48] sm:$0xff] 0
          %978 = vst [vmem:[#allocation3 + $0x50] sm:$0xff] 0
          %979 = vst [vmem:[#allocation3 + $0x58] sm:$0xff] 0
          %980 = vst [vmem:[#allocation3 + $0x60] sm:$0xff] 0
          %981 = vst [vmem:[#allocation3 + $0x68] sm:$0xff] 0
          %982 = vst [vmem:[#allocation3 + $0x70] sm:$0xff] 0
          %983 = vst [vmem:[#allocation3 + $0x78] sm:$0xff] 0
          %984 = vst [vmem:[#allocation3 + $0x80] sm:$0xff] 0
          %985 = vst [vmem:[#allocation3 + $0x88] sm:$0xff] 0
          %986 = vst [vmem:[#allocation3 + $0x90] sm:$0xff] 0
          %987 = vst [vmem:[#allocation3 + $0x98] sm:$0xff] 0
          %v988 = vld [vmem:[%s0] sm:$0xf]
          %v989 = vld [vmem:[%s0 + $0x4] sm:$0xf]
          %v990 = vld [vmem:[%s0 + $0x8] sm:$0xf]
          %v991 = vld [vmem:[%s0 + $0xc] sm:$0xf]
          %v992 = vld [vmem:[%s0 + $0x10] sm:$0xf]
          %v993 = vld [vmem:[%s0 + $0x14] sm:$0xf]
          %v994 = vld [vmem:[%s0 + $0x18] sm:$0xf]
          %v995 = vld [vmem:[%s0 + $0x1c] sm:$0xf]
          %v996 = vld [vmem:[%s0 + $0x20] sm:$0xf]
          %v997 = vld [vmem:[%s0 + $0x24] sm:$0xf]
          %v998 = vld [vmem:[%s0 + $0x28] sm:$0xf]
          %v999 = vld [vmem:[%s0 + $0x2c] sm:$0xf]
          %v1000 = vld [vmem:[%s0 + $0x30] sm:$0xf]
          %v1001 = vld [vmem:[%s0 + $0x34] sm:$0xf]
          %v1002 = vld [vmem:[%s0 + $0x38] sm:$0xf]
          %v1003 = vld [vmem:[%s0 + $0x3c] sm:$0xf]
          %v1004 = vld [vmem:[%s0 + $0x40] sm:$0xf]
          %v1005 = vld [vmem:[%s0 + $0x44] sm:$0xf]
          %v1006 = vld [vmem:[%s0 + $0x48] sm:$0xf]
          %v1007 = vld [vmem:[%s0 + $0x4c] sm:$0x7]
          %v1008 = vld [vmem:[#allocation7] sm:$0xff]
          %v1009 = vld [vmem:[#allocation7 + $0x8] sm:$0xff]
          %v1010 = vld [vmem:[#allocation7 + $0x10] sm:$0xff]
          %v1011 = vld [vmem:[#allocation7 + $0x18] sm:$0xff]
          %v1012 = vld [vmem:[#allocation7 + $0x20] sm:$0xff]
          %v1013 = vld [vmem:[#allocation7 + $0x28] sm:$0xff]
          %v1014 = vld [vmem:[%s0 + $0x4c] sm:$0xf]
          %s1015 = scalar_lea.vmem [#allocation7], 48
          %v1016 = vld [vmem:[%s1015] sm:$0xff]
          %v1017 = vld [vmem:[%s1015 + $0x8] sm:$0xff]
          %v1018 = vld [vmem:[%s1015 + $0x10] sm:$0xff]
          %v1019 = vld [vmem:[%s1015 + $0x18] sm:$0xff]
          %v1020 = vld [vmem:[%s1015 + $0x20] sm:$0xff]
          %v1021 = vld [vmem:[%s1015 + $0x28] sm:$0xff]
          %v1042 = vunpack.c.l.b16 %v988
          %v1043 = vunpack.c.l.b16 %v989
          %v1044 = vunpack.c.l.b16 %v990
          %v1045 = vunpack.c.l.b16 %v991
          %v1046 = vunpack.c.l.b16 %v992
          %v1047 = vunpack.c.l.b16 %v993
          %v1048 = vunpack.c.l.b16 %v994
          %v1049 = vunpack.c.l.b16 %v995
          %v1050 = vunpack.c.l.b16 %v996
          %v1051 = vunpack.c.l.b16 %v997
          %v1052 = vunpack.c.l.b16 %v998
          %v1053 = vunpack.c.l.b16 %v999
          %v1054 = vunpack.c.l.b16 %v1000
          %v1055 = vunpack.c.l.b16 %v1001
          %v1056 = vunpack.c.l.b16 %v1002
          %v1057 = vunpack.c.l.b16 %v1003
          %v1058 = vunpack.c.l.b16 %v1004
          %v1059 = vunpack.c.l.b16 %v1005
          %v1060 = vunpack.c.l.b16 %v1006
          %v1061 = vunpack.c.l.b16 %v1014
          %v1062 = vpack.c.b16 %v1043, %v1042
          %v1063 = vpack.c.b16 %v1045, %v1044
          %v1064 = vpack.c.b16 %v1047, %v1046
          %v1065 = vpack.c.b16 %v1049, %v1048
          %v1066 = vpack.c.b16 %v1051, %v1050
          %v1067 = vpack.c.b16 %v1053, %v1052
          %v1068 = vpack.c.b16 %v1055, %v1054
          %v1069 = vpack.c.b16 %v1057, %v1056
          %v1070 = vpack.c.b16 %v1059, %v1058
          %v1071 = vpack.c.b16 %v1061, %v1060
          %vm1072 = vsmask.f32 7424
          %v1074 = vshrl.u32 %v1062, 16
          %v1076 = vshll.u32 %v1062, 16
          %v1078 = vrot.slane %v1076, 1
          %v1079 = vor.u32 %v1074, %v1078
          %v1081 = vshll.u32 %v1063, 16
          %v1083 = vrot.slane %v1081, 1
          %v1084 = vsel %vm1072, %v1079, %v1083
          %v1085 = vshrl.u32 %v1063, 16
          %v1087 = vor.u32 %v1085, %v1083
          %v1089 = vshll.u32 %v1064, 16
          %v1091 = vrot.slane %v1089, 1
          %v1092 = vsel %vm1072, %v1087, %v1091
          %v1093 = vshrl.u32 %v1064, 16
          %v1095 = vor.u32 %v1093, %v1091
          %v1097 = vshll.u32 %v1065, 16
          %v1099 = vrot.slane %v1097, 1
          %v1100 = vsel %vm1072, %v1095, %v1099
          %v1101 = vshrl.u32 %v1065, 16
          %v1103 = vor.u32 %v1101, %v1099
          %v1105 = vshll.u32 %v1066, 16
          %v1107 = vrot.slane %v1105, 1
          %v1108 = vsel %vm1072, %v1103, %v1107
          %v1109 = vshrl.u32 %v1066, 16
          %v1111 = vor.u32 %v1109, %v1107
          %v1113 = vshll.u32 %v1067, 16
          %v1115 = vrot.slane %v1113, 1
          %v1116 = vsel %vm1072, %v1111, %v1115
          %v1117 = vshrl.u32 %v1067, 16
          %v1119 = vor.u32 %v1117, %v1115
          %v1121 = vshll.u32 %v1068, 16
          %v1123 = vrot.slane %v1121, 1
          %v1124 = vsel %vm1072, %v1119, %v1123
          %v1125 = vshrl.u32 %v1068, 16
          %v1127 = vor.u32 %v1125, %v1123
          %v1129 = vshll.u32 %v1069, 16
          %v1131 = vrot.slane %v1129, 1
          %v1132 = vsel %vm1072, %v1127, %v1131
          %v1133 = vshrl.u32 %v1069, 16
          %v1135 = vor.u32 %v1133, %v1131
          %v1137 = vshll.u32 %v1070, 16
          %v1139 = vrot.slane %v1137, 1
          %v1140 = vsel %vm1072, %v1135, %v1139
          %v1141 = vshrl.u32 %v1070, 16
          %v1143 = vor.u32 %v1141, %v1139
          %v1145 = vshll.u32 %v1071, 16
          %v1147 = vrot.slane %v1145, 1
          %v1148 = vsel %vm1072, %v1143, %v1147
          %v1149 = vshrl.u32 %v1071, 16
          %v1151 = vor.u32 %v1149, %v1147
          %v1158 = vunpack.c.l.b16 %v1016
          %v1159 = vunpack.c.h.b16 %v1016
          %v1160 = vunpack.c.l.b16 %v1017
          %v1161 = vunpack.c.h.b16 %v1017
          %v1162 = vunpack.c.l.b16 %v1018
          %v1163 = vunpack.c.h.b16 %v1018
          %v1164 = vunpack.c.l.b16 %v1019
          %v1165 = vunpack.c.h.b16 %v1019
          %v1166 = vunpack.c.l.b16 %v1020
          %v1167 = vunpack.c.h.b16 %v1020
          %v1168 = vunpack.c.l.b16 %v1021
          %v1169 = vunpack.c.h.b16 %v1021
          %v1170 = vpack.c.b16 %v1160, %v1158
          %v1171 = vpack.c.b16 %v1161, %v1159
          %v1172 = vpack.c.b16 %v1164, %v1162
          %v1173 = vpack.c.b16 %v1165, %v1163
          %v1174 = vpack.c.b16 %v1168, %v1166
          %v1175 = vpack.c.b16 %v1169, %v1167
          %vm1182 = vcmask 392192
          %v1184 = vsel %vm1182, %v1084, 0
          %v1187 = vsel %vm1182, %v1092, 0
          %v1190 = vsel %vm1182, %v1100, 0
          %v1193 = vsel %vm1182, %v1108, 0
          %v1196 = vsel %vm1182, %v1116, 0
          %v1199 = vsel %vm1182, %v1124, 0
          %v1202 = vsel %vm1182, %v1132, 0
          %v1205 = vsel %vm1182, %v1140, 0
          %v1208 = vsel %vm1182, %v1148, 0
          %v1211 = vsel %vm1182, %v1151, 0
          %1213 = vmatpush.bf16.msra.mxu0 0
          %1214 = vmatpush.bf16.msra.mxu0 0
          %1215 = vmatpush.bf16.msra.mxu0 0
          %1216 = vmatpush.bf16.msra.mxu0 0
          %1217 = vmatpush.bf16.msra.mxu0 0
          %1218 = vmatpush.bf16.msra.mxu0 %v1174
          %1219 = vmatpush.bf16.msra.mxu0 %v1172
          %1220 = vmatpush.bf16.msra.mxu0 %v1170
          %1221 = vmatmul.bf16.gmra.mxu0 %v1184
          %v1222 = vpop.f32.mrf.mxu0
          %v1223 = vadd.f32 0.0, %v1222
          %v1224 = vpop.f32.mrf.mxu0
          %v1225 = vadd.f32 0.0, %v1224
          %1226 = vmatmul.bf16.gmra.mxu0 %v1187
          %v1227 = vpop.f32.mrf.mxu0
          %v1228 = vadd.f32 0.0, %v1227
          %v1229 = vpop.f32.mrf.mxu0
          %v1230 = vadd.f32 0.0, %v1229
          %1231 = vmatmul.bf16.gmra.mxu0 %v1190
          %v1232 = vpop.f32.mrf.mxu0
          %v1233 = vadd.f32 0.0, %v1232
          %v1234 = vpop.f32.mrf.mxu0
          %v1235 = vadd.f32 0.0, %v1234
          %1236 = vmatmul.bf16.gmra.mxu0 %v1193
          %v1237 = vpop.f32.mrf.mxu0
          %v1238 = vadd.f32 0.0, %v1237
          %v1239 = vpop.f32.mrf.mxu0
          %v1240 = vadd.f32 0.0, %v1239
          %1241 = vmatmul.bf16.gmra.mxu0 %v1196
          %v1242 = vpop.f32.mrf.mxu0
          %v1243 = vadd.f32 0.0, %v1242
          %v1244 = vpop.f32.mrf.mxu0
          %v1245 = vadd.f32 0.0, %v1244
          %1246 = vmatmul.bf16.gmra.mxu0 %v1199
          %v1247 = vpop.f32.mrf.mxu0
          %v1248 = vadd.f32 0.0, %v1247
          %v1249 = vpop.f32.mrf.mxu0
          %v1250 = vadd.f32 0.0, %v1249
          %1251 = vmatmul.bf16.gmra.mxu0 %v1202
          %v1252 = vpop.f32.mrf.mxu0
          %v1253 = vadd.f32 0.0, %v1252
          %v1254 = vpop.f32.mrf.mxu0
          %v1255 = vadd.f32 0.0, %v1254
          %1256 = vmatmul.bf16.gmra.mxu0 %v1205
          %v1257 = vpop.f32.mrf.mxu0
          %v1258 = vadd.f32 0.0, %v1257
          %v1259 = vpop.f32.mrf.mxu0
          %v1260 = vadd.f32 0.0, %v1259
          %1261 = vmatmul.bf16.gmra.mxu0 %v1208
          %v1262 = vpop.f32.mrf.mxu0
          %v1263 = vadd.f32 0.0, %v1262
          %v1264 = vpop.f32.mrf.mxu0
          %v1265 = vadd.f32 0.0, %v1264
          %1266 = vmatmul.bf16.gmra.mxu0 %v1211
          %v1267 = vpop.f32.mrf.mxu0
          %v1268 = vadd.f32 0.0, %v1267
          %v1269 = vpop.f32.mrf.mxu0
          %v1270 = vadd.f32 0.0, %v1269
          %1271 = vdwg.mxu0
          %1272 = vmatpush.bf16.msra.mxu0 0
          %1273 = vmatpush.bf16.msra.mxu0 0
          %1274 = vmatpush.bf16.msra.mxu0 0
          %1275 = vmatpush.bf16.msra.mxu0 0
          %1276 = vmatpush.bf16.msra.mxu0 0
          %1277 = vmatpush.bf16.msra.mxu0 %v1175
          %1278 = vmatpush.bf16.msra.mxu0 %v1173
          %1279 = vmatpush.bf16.msra.mxu0 %v1171
          %1280 = vmatmul.bf16.gmra.mxu0 %v1184
          %v1281 = vpop.f32.mrf.mxu0
          %v1282 = vadd.f32 0.0, %v1281
          %v1283 = vpop.f32.mrf.mxu0
          %v1284 = vadd.f32 0.0, %v1283
          %1285 = vmatmul.bf16.gmra.mxu0 %v1187
          %v1286 = vpop.f32.mrf.mxu0
          %v1287 = vadd.f32 0.0, %v1286
          %v1288 = vpop.f32.mrf.mxu0
          %v1289 = vadd.f32 0.0, %v1288
          %1290 = vmatmul.bf16.gmra.mxu0 %v1190
          %v1291 = vpop.f32.mrf.mxu0
          %v1292 = vadd.f32 0.0, %v1291
          %v1293 = vpop.f32.mrf.mxu0
          %v1294 = vadd.f32 0.0, %v1293
          %1295 = vmatmul.bf16.gmra.mxu0 %v1193
          %v1296 = vpop.f32.mrf.mxu0
          %v1297 = vadd.f32 0.0, %v1296
          %v1298 = vpop.f32.mrf.mxu0
          %v1299 = vadd.f32 0.0, %v1298
          %1300 = vmatmul.bf16.gmra.mxu0 %v1196
          %v1301 = vpop.f32.mrf.mxu0
          %v1302 = vadd.f32 0.0, %v1301
          %v1303 = vpop.f32.mrf.mxu0
          %v1304 = vadd.f32 0.0, %v1303
          %1305 = vmatmul.bf16.gmra.mxu0 %v1199
          %v1306 = vpop.f32.mrf.mxu0
          %v1307 = vadd.f32 0.0, %v1306
          %v1308 = vpop.f32.mrf.mxu0
          %v1309 = vadd.f32 0.0, %v1308
          %1310 = vmatmul.bf16.gmra.mxu0 %v1202
          %v1311 = vpop.f32.mrf.mxu0
          %v1312 = vadd.f32 0.0, %v1311
          %v1313 = vpop.f32.mrf.mxu0
          %v1314 = vadd.f32 0.0, %v1313
          %1315 = vmatmul.bf16.gmra.mxu0 %v1205
          %v1316 = vpop.f32.mrf.mxu0
          %v1317 = vadd.f32 0.0, %v1316
          %v1318 = vpop.f32.mrf.mxu0
          %v1319 = vadd.f32 0.0, %v1318
          %1320 = vmatmul.bf16.gmra.mxu0 %v1208
          %v1321 = vpop.f32.mrf.mxu0
          %v1322 = vadd.f32 0.0, %v1321
          %v1323 = vpop.f32.mrf.mxu0
          %v1324 = vadd.f32 0.0, %v1323
          %1325 = vmatmul.bf16.gmra.mxu0 %v1211
          %v1326 = vpop.f32.mrf.mxu0
          %v1327 = vadd.f32 0.0, %v1326
          %v1328 = vpop.f32.mrf.mxu0
          %v1329 = vadd.f32 0.0, %v1328
          %1330 = vdwg.mxu0
          %v1332 = vunpack.c.l.b16 %v1007
          %v1333 = vpack.c.b16 %v1332, %v1060
          %v1340 = vunpack.c.l.b16 %v1008
          %v1341 = vunpack.c.h.b16 %v1008
          %v1342 = vunpack.c.l.b16 %v1009
          %v1343 = vunpack.c.h.b16 %v1009
          %v1344 = vunpack.c.l.b16 %v1010
          %v1345 = vunpack.c.h.b16 %v1010
          %v1346 = vunpack.c.l.b16 %v1011
          %v1347 = vunpack.c.h.b16 %v1011
          %v1348 = vunpack.c.l.b16 %v1012
          %v1349 = vunpack.c.h.b16 %v1012
          %v1350 = vunpack.c.l.b16 %v1013
          %v1351 = vunpack.c.h.b16 %v1013
          %v1352 = vpack.c.b16 %v1342, %v1340
          %v1353 = vpack.c.b16 %v1343, %v1341
          %v1354 = vpack.c.b16 %v1346, %v1344
          %v1355 = vpack.c.b16 %v1347, %v1345
          %v1356 = vpack.c.b16 %v1350, %v1348
          %v1357 = vpack.c.b16 %v1351, %v1349
          %v1364 = vsel %vm1182, %v1062, 0
          %v1366 = vsel %vm1182, %v1063, 0
          %v1368 = vsel %vm1182, %v1064, 0
          %v1370 = vsel %vm1182, %v1065, 0
          %v1372 = vsel %vm1182, %v1066, 0
          %v1374 = vsel %vm1182, %v1067, 0
          %v1376 = vsel %vm1182, %v1068, 0
          %v1378 = vsel %vm1182, %v1069, 0
          %v1380 = vsel %vm1182, %v1070, 0
          %v1383 = vsel %vm1182, %v1333, 0
          %1385 = vmatpush.bf16.msra.mxu0 0
          %1386 = vmatpush.bf16.msra.mxu0 0
          %1387 = vmatpush.bf16.msra.mxu0 0
          %1388 = vmatpush.bf16.msra.mxu0 0
          %1389 = vmatpush.bf16.msra.mxu0 0
          %1390 = vmatpush.bf16.msra.mxu0 %v1356
          %1391 = vmatpush.bf16.msra.mxu0 %v1354
          %1392 = vmatpush.bf16.msra.mxu0 %v1352
          %1393 = vmatmul.bf16.gmra.mxu0 %v1364
          %v1394 = vpop.f32.mrf.mxu0
          %v1395 = vadd.f32 %v1223, %v1394
          %v1396 = vpop.f32.mrf.mxu0
          %v1397 = vadd.f32 %v1225, %v1396
          %1398 = vmatmul.bf16.gmra.mxu0 %v1366
          %v1399 = vpop.f32.mrf.mxu0
          %v1400 = vadd.f32 %v1228, %v1399
          %v1401 = vpop.f32.mrf.mxu0
          %v1402 = vadd.f32 %v1230, %v1401
          %1403 = vmatmul.bf16.gmra.mxu0 %v1368
          %v1404 = vpop.f32.mrf.mxu0
          %v1405 = vadd.f32 %v1233, %v1404
          %v1406 = vpop.f32.mrf.mxu0
          %v1407 = vadd.f32 %v1235, %v1406
          %1408 = vmatmul.bf16.gmra.mxu0 %v1370
          %v1409 = vpop.f32.mrf.mxu0
          %v1410 = vadd.f32 %v1238, %v1409
          %v1411 = vpop.f32.mrf.mxu0
          %v1412 = vadd.f32 %v1240, %v1411
          %1413 = vmatmul.bf16.gmra.mxu0 %v1372
          %v1414 = vpop.f32.mrf.mxu0
          %v1415 = vadd.f32 %v1243, %v1414
          %v1416 = vpop.f32.mrf.mxu0
          %v1417 = vadd.f32 %v1245, %v1416
          %1418 = vmatmul.bf16.gmra.mxu0 %v1374
          %v1419 = vpop.f32.mrf.mxu0
          %v1420 = vadd.f32 %v1248, %v1419
          %v1421 = vpop.f32.mrf.mxu0
          %v1422 = vadd.f32 %v1250, %v1421
          %1423 = vmatmul.bf16.gmra.mxu0 %v1376
          %v1424 = vpop.f32.mrf.mxu0
          %v1425 = vadd.f32 %v1253, %v1424
          %v1426 = vpop.f32.mrf.mxu0
          %v1427 = vadd.f32 %v1255, %v1426
          %1428 = vmatmul.bf16.gmra.mxu0 %v1378
          %v1429 = vpop.f32.mrf.mxu0
          %v1430 = vadd.f32 %v1258, %v1429
          %v1431 = vpop.f32.mrf.mxu0
          %v1432 = vadd.f32 %v1260, %v1431
          %1433 = vmatmul.bf16.gmra.mxu0 %v1380
          %v1434 = vpop.f32.mrf.mxu0
          %v1435 = vadd.f32 %v1263, %v1434
          %v1436 = vpop.f32.mrf.mxu0
          %v1437 = vadd.f32 %v1265, %v1436
          %1438 = vmatmul.bf16.gmra.mxu0 %v1383
          %v1439 = vpop.f32.mrf.mxu0
          %v1440 = vadd.f32 %v1268, %v1439
          %v1441 = vpop.f32.mrf.mxu0
          %v1442 = vadd.f32 %v1270, %v1441
          %1443 = vdwg.mxu0
          %1444 = vmatpush.bf16.msra.mxu0 0
          %1445 = vmatpush.bf16.msra.mxu0 0
          %1446 = vmatpush.bf16.msra.mxu0 0
          %1447 = vmatpush.bf16.msra.mxu0 0
          %1448 = vmatpush.bf16.msra.mxu0 0
          %1449 = vmatpush.bf16.msra.mxu0 %v1357
          %1450 = vmatpush.bf16.msra.mxu0 %v1355
          %1451 = vmatpush.bf16.msra.mxu0 %v1353
          %1452 = vmatmul.bf16.gmra.mxu0 %v1364
          %v1453 = vpop.f32.mrf.mxu0
          %v1454 = vadd.f32 %v1282, %v1453
          %v1455 = vpop.f32.mrf.mxu0
          %v1456 = vadd.f32 %v1284, %v1455
          %1457 = vmatmul.bf16.gmra.mxu0 %v1366
          %v1458 = vpop.f32.mrf.mxu0
          %v1459 = vadd.f32 %v1287, %v1458
          %v1460 = vpop.f32.mrf.mxu0
          %v1461 = vadd.f32 %v1289, %v1460
          %1462 = vmatmul.bf16.gmra.mxu0 %v1368
          %v1463 = vpop.f32.mrf.mxu0
          %v1464 = vadd.f32 %v1292, %v1463
          %v1465 = vpop.f32.mrf.mxu0
          %v1466 = vadd.f32 %v1294, %v1465
          %1467 = vmatmul.bf16.gmra.mxu0 %v1370
          %v1468 = vpop.f32.mrf.mxu0
          %v1469 = vadd.f32 %v1297, %v1468
          %v1470 = vpop.f32.mrf.mxu0
          %v1471 = vadd.f32 %v1299, %v1470
          %1472 = vmatmul.bf16.gmra.mxu0 %v1372
          %v1473 = vpop.f32.mrf.mxu0
          %v1474 = vadd.f32 %v1302, %v1473
          %v1475 = vpop.f32.mrf.mxu0
          %v1476 = vadd.f32 %v1304, %v1475
          %1477 = vmatmul.bf16.gmra.mxu0 %v1374
          %v1478 = vpop.f32.mrf.mxu0
          %v1479 = vadd.f32 %v1307, %v1478
          %v1480 = vpop.f32.mrf.mxu0
          %v1481 = vadd.f32 %v1309, %v1480
          %1482 = vmatmul.bf16.gmra.mxu0 %v1376
          %v1483 = vpop.f32.mrf.mxu0
          %v1484 = vadd.f32 %v1312, %v1483
          %v1485 = vpop.f32.mrf.mxu0
          %v1486 = vadd.f32 %v1314, %v1485
          %1487 = vmatmul.bf16.gmra.mxu0 %v1378
          %v1488 = vpop.f32.mrf.mxu0
          %v1489 = vadd.f32 %v1317, %v1488
          %v1490 = vpop.f32.mrf.mxu0
          %v1491 = vadd.f32 %v1319, %v1490
          %1492 = vmatmul.bf16.gmra.mxu0 %v1380
          %v1493 = vpop.f32.mrf.mxu0
          %v1494 = vadd.f32 %v1322, %v1493
          %v1495 = vpop.f32.mrf.mxu0
          %v1496 = vadd.f32 %v1324, %v1495
          %1497 = vmatmul.bf16.gmra.mxu0 %v1383
          %v1498 = vpop.f32.mrf.mxu0
          %v1499 = vadd.f32 %v1327, %v1498
          %v1500 = vpop.f32.mrf.mxu0
          %v1501 = vadd.f32 %v1329, %v1500
          %1502 = vdwg.mxu0
          %v1503 = vld [vmem:[%s0] sm:$0xe]
          %s1504 = scalar_lea.vmem [#allocation7], 96
          %v1505 = vld [vmem:[%s1504] sm:$0xff]
          %v1506 = vld [vmem:[%s1504 + $0x8] sm:$0xff]
          %v1507 = vld [vmem:[%s1504 + $0x10] sm:$0xff]
          %v1508 = vld [vmem:[%s1504 + $0x18] sm:$0xff]
          %v1509 = vld [vmem:[%s1504 + $0x20] sm:$0xff]
          %v1510 = vld [vmem:[%s1504 + $0x28] sm:$0xff]
          %v1512 = vunpack.c.l.b16 %v1503
          %v1513 = vpack.c.b16 %v1043, %v1512
          %vm1514 = vcmask 1046528
          %v1515 = vrot.slane %v1513, 1
          %v1516 = vrot.slane %v1063, 1
          %v1517 = vsel %vm1514, %v1515, %v1516
          %v1518 = vrot.slane %v1064, 1
          %v1519 = vsel %vm1514, %v1516, %v1518
          %v1520 = vrot.slane %v1065, 1
          %v1521 = vsel %vm1514, %v1518, %v1520
          %v1522 = vrot.slane %v1066, 1
          %v1523 = vsel %vm1514, %v1520, %v1522
          %v1524 = vrot.slane %v1067, 1
          %v1525 = vsel %vm1514, %v1522, %v1524
          %v1526 = vrot.slane %v1068, 1
          %v1527 = vsel %vm1514, %v1524, %v1526
          %v1528 = vrot.slane %v1069, 1
          %v1529 = vsel %vm1514, %v1526, %v1528
          %v1530 = vrot.slane %v1070, 1
          %v1531 = vsel %vm1514, %v1528, %v1530
          %v1532 = vrot.slane %v1071, 1
          %v1533 = vsel %vm1514, %v1530, %v1532
          %v1540 = vunpack.c.l.b16 %v1505
          %v1541 = vunpack.c.h.b16 %v1505
          %v1542 = vunpack.c.l.b16 %v1506
          %v1543 = vunpack.c.h.b16 %v1506
          %v1544 = vunpack.c.l.b16 %v1507
          %v1545 = vunpack.c.h.b16 %v1507
          %v1546 = vunpack.c.l.b16 %v1508
          %v1547 = vunpack.c.h.b16 %v1508
          %v1548 = vunpack.c.l.b16 %v1509
          %v1549 = vunpack.c.h.b16 %v1509
          %v1550 = vunpack.c.l.b16 %v1510
          %v1551 = vunpack.c.h.b16 %v1510
          %v1552 = vpack.c.b16 %v1542, %v1540
          %v1553 = vpack.c.b16 %v1543, %v1541
          %v1554 = vpack.c.b16 %v1546, %v1544
          %v1555 = vpack.c.b16 %v1547, %v1545
          %v1556 = vpack.c.b16 %v1550, %v1548
          %v1557 = vpack.c.b16 %v1551, %v1549
          %v1565 = vsel %vm1182, %v1517, 0
          %v1568 = vsel %vm1182, %v1519, 0
          %v1571 = vsel %vm1182, %v1521, 0
          %v1574 = vsel %vm1182, %v1523, 0
          %v1577 = vsel %vm1182, %v1525, 0
          %v1580 = vsel %vm1182, %v1527, 0
          %v1583 = vsel %vm1182, %v1529, 0
          %v1586 = vsel %vm1182, %v1531, 0
          %v1589 = vsel %vm1182, %v1533, 0
          %v1592 = vsel %vm1182, %v1532, 0
          %1594 = vmatpush.bf16.msra.mxu0 0
          %1595 = vmatpush.bf16.msra.mxu0 0
          %1596 = vmatpush.bf16.msra.mxu0 0
          %1597 = vmatpush.bf16.msra.mxu0 0
          %1598 = vmatpush.bf16.msra.mxu0 0
          %1599 = vmatpush.bf16.msra.mxu0 %v1556
          %1600 = vmatpush.bf16.msra.mxu0 %v1554
          %1601 = vmatpush.bf16.msra.mxu0 %v1552
          %1602 = vmatmul.bf16.gmra.mxu0 %v1565
          %v1603 = vpop.f32.mrf.mxu0
          %v1604 = vadd.f32 0.0, %v1603
          %v1605 = vpop.f32.mrf.mxu0
          %v1606 = vadd.f32 0.0, %v1605
          %1607 = vmatmul.bf16.gmra.mxu0 %v1568
          %v1608 = vpop.f32.mrf.mxu0
          %v1609 = vadd.f32 0.0, %v1608
          %v1610 = vpop.f32.mrf.mxu0
          %v1611 = vadd.f32 0.0, %v1610
          %1612 = vmatmul.bf16.gmra.mxu0 %v1571
          %v1613 = vpop.f32.mrf.mxu0
          %v1614 = vadd.f32 0.0, %v1613
          %v1615 = vpop.f32.mrf.mxu0
          %v1616 = vadd.f32 0.0, %v1615
          %1617 = vmatmul.bf16.gmra.mxu0 %v1574
          %v1618 = vpop.f32.mrf.mxu0
          %v1619 = vadd.f32 0.0, %v1618
          %v1620 = vpop.f32.mrf.mxu0
          %v1621 = vadd.f32 0.0, %v1620
          %1622 = vmatmul.bf16.gmra.mxu0 %v1577
          %v1623 = vpop.f32.mrf.mxu0
          %v1624 = vadd.f32 0.0, %v1623
          %v1625 = vpop.f32.mrf.mxu0
          %v1626 = vadd.f32 0.0, %v1625
          %1627 = vmatmul.bf16.gmra.mxu0 %v1580
          %v1628 = vpop.f32.mrf.mxu0
          %v1629 = vadd.f32 0.0, %v1628
          %v1630 = vpop.f32.mrf.mxu0
          %v1631 = vadd.f32 0.0, %v1630
          %1632 = vmatmul.bf16.gmra.mxu0 %v1583
          %v1633 = vpop.f32.mrf.mxu0
          %v1634 = vadd.f32 0.0, %v1633
          %v1635 = vpop.f32.mrf.mxu0
          %v1636 = vadd.f32 0.0, %v1635
          %1637 = vmatmul.bf16.gmra.mxu0 %v1586
          %v1638 = vpop.f32.mrf.mxu0
          %v1639 = vadd.f32 0.0, %v1638
          %v1640 = vpop.f32.mrf.mxu0
          %v1641 = vadd.f32 0.0, %v1640
          %1642 = vmatmul.bf16.gmra.mxu0 %v1589
          %v1643 = vpop.f32.mrf.mxu0
          %v1644 = vadd.f32 0.0, %v1643
          %v1645 = vpop.f32.mrf.mxu0
          %v1646 = vadd.f32 0.0, %v1645
          %1647 = vmatmul.bf16.gmra.mxu0 %v1592
          %v1648 = vpop.f32.mrf.mxu0
          %v1649 = vadd.f32 0.0, %v1648
          %v1650 = vpop.f32.mrf.mxu0
          %v1651 = vadd.f32 0.0, %v1650
          %1652 = vdwg.mxu0
          %1653 = vmatpush.bf16.msra.mxu0 0
          %1654 = vmatpush.bf16.msra.mxu0 0
          %1655 = vmatpush.bf16.msra.mxu0 0
          %1656 = vmatpush.bf16.msra.mxu0 0
          %1657 = vmatpush.bf16.msra.mxu0 0
          %1658 = vmatpush.bf16.msra.mxu0 %v1557
          %1659 = vmatpush.bf16.msra.mxu0 %v1555
          %1660 = vmatpush.bf16.msra.mxu0 %v1553
          %1661 = vmatmul.bf16.gmra.mxu0 %v1565
          %v1662 = vpop.f32.mrf.mxu0
          %v1663 = vadd.f32 0.0, %v1662
          %v1664 = vpop.f32.mrf.mxu0
          %v1665 = vadd.f32 0.0, %v1664
          %1666 = vmatmul.bf16.gmra.mxu0 %v1568
          %v1667 = vpop.f32.mrf.mxu0
          %v1668 = vadd.f32 0.0, %v1667
          %v1669 = vpop.f32.mrf.mxu0
          %v1670 = vadd.f32 0.0, %v1669
          %1671 = vmatmul.bf16.gmra.mxu0 %v1571
          %v1672 = vpop.f32.mrf.mxu0
          %v1673 = vadd.f32 0.0, %v1672
          %v1674 = vpop.f32.mrf.mxu0
          %v1675 = vadd.f32 0.0, %v1674
          %1676 = vmatmul.bf16.gmra.mxu0 %v1574
          %v1677 = vpop.f32.mrf.mxu0
          %v1678 = vadd.f32 0.0, %v1677
          %v1679 = vpop.f32.mrf.mxu0
          %v1680 = vadd.f32 0.0, %v1679
          %1681 = vmatmul.bf16.gmra.mxu0 %v1577
          %v1682 = vpop.f32.mrf.mxu0
          %v1683 = vadd.f32 0.0, %v1682
          %v1684 = vpop.f32.mrf.mxu0
          %v1685 = vadd.f32 0.0, %v1684
          %1686 = vmatmul.bf16.gmra.mxu0 %v1580
          %v1687 = vpop.f32.mrf.mxu0
          %v1688 = vadd.f32 0.0, %v1687
          %v1689 = vpop.f32.mrf.mxu0
          %v1690 = vadd.f32 0.0, %v1689
          %1691 = vmatmul.bf16.gmra.mxu0 %v1583
          %v1692 = vpop.f32.mrf.mxu0
          %v1693 = vadd.f32 0.0, %v1692
          %v1694 = vpop.f32.mrf.mxu0
          %v1695 = vadd.f32 0.0, %v1694
          %1696 = vmatmul.bf16.gmra.mxu0 %v1586
          %v1697 = vpop.f32.mrf.mxu0
          %v1698 = vadd.f32 0.0, %v1697
          %v1699 = vpop.f32.mrf.mxu0
          %v1700 = vadd.f32 0.0, %v1699
          %1701 = vmatmul.bf16.gmra.mxu0 %v1589
          %v1702 = vpop.f32.mrf.mxu0
          %v1703 = vadd.f32 0.0, %v1702
          %v1704 = vpop.f32.mrf.mxu0
          %v1705 = vadd.f32 0.0, %v1704
          %1706 = vmatmul.bf16.gmra.mxu0 %v1592
          %v1707 = vpop.f32.mrf.mxu0
          %v1708 = vadd.f32 0.0, %v1707
          %v1709 = vpop.f32.mrf.mxu0
          %v1710 = vadd.f32 0.0, %v1709
          %1711 = vdwg.mxu0
          %v1712 = vadd.f32 %v1395, %v1604
          %v1713 = vadd.f32 %v1454, %v1663
          %v1714 = vadd.f32 %v1397, %v1606
          %v1715 = vadd.f32 %v1456, %v1665
          %v1716 = vadd.f32 %v1400, %v1609
          %v1717 = vadd.f32 %v1459, %v1668
          %v1718 = vadd.f32 %v1402, %v1611
          %v1719 = vadd.f32 %v1461, %v1670
          %v1720 = vadd.f32 %v1405, %v1614
          %v1721 = vadd.f32 %v1464, %v1673
          %v1722 = vadd.f32 %v1407, %v1616
          %v1723 = vadd.f32 %v1466, %v1675
          %v1724 = vadd.f32 %v1410, %v1619
          %v1725 = vadd.f32 %v1469, %v1678
          %v1726 = vadd.f32 %v1412, %v1621
          %v1727 = vadd.f32 %v1471, %v1680
          %v1728 = vadd.f32 %v1415, %v1624
          %v1729 = vadd.f32 %v1474, %v1683
          %v1730 = vadd.f32 %v1417, %v1626
          %v1731 = vadd.f32 %v1476, %v1685
          %v1732 = vadd.f32 %v1420, %v1629
          %v1733 = vadd.f32 %v1479, %v1688
          %v1734 = vadd.f32 %v1422, %v1631
          %v1735 = vadd.f32 %v1481, %v1690
          %v1736 = vadd.f32 %v1425, %v1634
          %v1737 = vadd.f32 %v1484, %v1693
          %v1738 = vadd.f32 %v1427, %v1636
          %v1739 = vadd.f32 %v1486, %v1695
          %v1740 = vadd.f32 %v1430, %v1639
          %v1741 = vadd.f32 %v1489, %v1698
          %v1742 = vadd.f32 %v1432, %v1641
          %v1743 = vadd.f32 %v1491, %v1700
          %v1744 = vadd.f32 %v1435, %v1644
          %v1745 = vadd.f32 %v1494, %v1703
          %v1746 = vadd.f32 %v1437, %v1646
          %v1747 = vadd.f32 %v1496, %v1705
          %v1748 = vadd.f32 %v1440, %v1649
          %v1749 = vadd.f32 %v1499, %v1708
          %v1750 = vadd.f32 %v1442, %v1651
          %v1751 = vadd.f32 %v1501, %v1710
          %v1752 = vld [vmem:[#allocation9] sm:$0x3]
          %v1754 = vperm.slane %v1752, 0
          %v1755 = vperm.slane %v1752, 1
          %v1758 = vmul.f32 %v1712, %v1754
          %v1759 = vmul.f32 %v1713, %v1755
          %v1760 = vmul.f32 %v1714, %v1754
          %v1761 = vmul.f32 %v1715, %v1755
          %v1762 = vmul.f32 %v1716, %v1754
          %v1763 = vmul.f32 %v1717, %v1755
          %v1764 = vmul.f32 %v1718, %v1754
          %v1765 = vmul.f32 %v1719, %v1755
          %v1766 = vmul.f32 %v1720, %v1754
          %v1767 = vmul.f32 %v1721, %v1755
          %v1768 = vmul.f32 %v1722, %v1754
          %v1769 = vmul.f32 %v1723, %v1755
          %v1770 = vmul.f32 %v1724, %v1754
          %v1771 = vmul.f32 %v1725, %v1755
          %v1772 = vmul.f32 %v1726, %v1754
          %v1773 = vmul.f32 %v1727, %v1755
          %v1774 = vmul.f32 %v1728, %v1754
          %v1775 = vmul.f32 %v1729, %v1755
          %v1776 = vmul.f32 %v1730, %v1754
          %v1777 = vmul.f32 %v1731, %v1755
          %v1778 = vmul.f32 %v1732, %v1754
          %v1779 = vmul.f32 %v1733, %v1755
          %v1780 = vmul.f32 %v1734, %v1754
          %v1781 = vmul.f32 %v1735, %v1755
          %v1782 = vmul.f32 %v1736, %v1754
          %v1783 = vmul.f32 %v1737, %v1755
          %v1784 = vmul.f32 %v1738, %v1754
          %v1785 = vmul.f32 %v1739, %v1755
          %v1786 = vmul.f32 %v1740, %v1754
          %v1787 = vmul.f32 %v1741, %v1755
          %v1788 = vmul.f32 %v1742, %v1754
          %v1789 = vmul.f32 %v1743, %v1755
          %v1790 = vmul.f32 %v1744, %v1754
          %v1791 = vmul.f32 %v1745, %v1755
          %v1792 = vmul.f32 %v1746, %v1754
          %v1793 = vmul.f32 %v1747, %v1755
          %v1794 = vmul.f32 %v1748, %v1754
          %v1795 = vmul.f32 %v1749, %v1755
          %v1796 = vmul.f32 %v1750, %v1754
          %v1797 = vmul.f32 %v1751, %v1755
          %v1798 = vld [vmem:[#allocation10] sm:$0x3]
          %v1800 = vperm.slane %v1798, 0
          %v1801 = vperm.slane %v1798, 1
          %v1804 = vadd.f32 %v1758, %v1800
          %v1805 = vadd.f32 %v1759, %v1801
          %v1806 = vadd.f32 %v1760, %v1800
          %v1807 = vadd.f32 %v1761, %v1801
          %v1808 = vadd.f32 %v1762, %v1800
          %v1809 = vadd.f32 %v1763, %v1801
          %v1810 = vadd.f32 %v1764, %v1800
          %v1811 = vadd.f32 %v1765, %v1801
          %v1812 = vadd.f32 %v1766, %v1800
          %v1813 = vadd.f32 %v1767, %v1801
          %v1814 = vadd.f32 %v1768, %v1800
          %v1815 = vadd.f32 %v1769, %v1801
          %v1816 = vadd.f32 %v1770, %v1800
          %v1817 = vadd.f32 %v1771, %v1801
          %v1818 = vadd.f32 %v1772, %v1800
          %v1819 = vadd.f32 %v1773, %v1801
          %v1820 = vadd.f32 %v1774, %v1800
          %v1821 = vadd.f32 %v1775, %v1801
          %v1822 = vadd.f32 %v1776, %v1800
          %v1823 = vadd.f32 %v1777, %v1801
          %v1824 = vadd.f32 %v1778, %v1800
          %v1825 = vadd.f32 %v1779, %v1801
          %v1826 = vadd.f32 %v1780, %v1800
          %v1827 = vadd.f32 %v1781, %v1801
          %v1828 = vadd.f32 %v1782, %v1800
          %v1829 = vadd.f32 %v1783, %v1801
          %v1830 = vadd.f32 %v1784, %v1800
          %v1831 = vadd.f32 %v1785, %v1801
          %v1832 = vadd.f32 %v1786, %v1800
          %v1833 = vadd.f32 %v1787, %v1801
          %v1834 = vadd.f32 %v1788, %v1800
          %v1835 = vadd.f32 %v1789, %v1801
          %v1836 = vadd.f32 %v1790, %v1800
          %v1837 = vadd.f32 %v1791, %v1801
          %v1838 = vadd.f32 %v1792, %v1800
          %v1839 = vadd.f32 %v1793, %v1801
          %v1840 = vadd.f32 %v1794, %v1800
          %v1841 = vadd.f32 %v1795, %v1801
          %v1842 = vadd.f32 %v1796, %v1800
          %v1843 = vadd.f32 %v1797, %v1801
          %v1844 = vmax.f32 %v1804, 0.0
          %v1845 = vmax.f32 %v1805, 0.0
          %v1846 = vmax.f32 %v1806, 0.0
          %v1847 = vmax.f32 %v1807, 0.0
          %v1848 = vmax.f32 %v1808, 0.0
          %v1849 = vmax.f32 %v1809, 0.0
          %v1850 = vmax.f32 %v1810, 0.0
          %v1851 = vmax.f32 %v1811, 0.0
          %v1852 = vmax.f32 %v1812, 0.0
          %v1853 = vmax.f32 %v1813, 0.0
          %v1854 = vmax.f32 %v1814, 0.0
          %v1855 = vmax.f32 %v1815, 0.0
          %v1856 = vmax.f32 %v1816, 0.0
          %v1857 = vmax.f32 %v1817, 0.0
          %v1858 = vmax.f32 %v1818, 0.0
          %v1859 = vmax.f32 %v1819, 0.0
          %v1860 = vmax.f32 %v1820, 0.0
          %v1861 = vmax.f32 %v1821, 0.0
          %v1862 = vmax.f32 %v1822, 0.0
          %v1863 = vmax.f32 %v1823, 0.0
          %v1864 = vmax.f32 %v1824, 0.0
          %v1865 = vmax.f32 %v1825, 0.0
          %v1866 = vmax.f32 %v1826, 0.0
          %v1867 = vmax.f32 %v1827, 0.0
          %v1868 = vmax.f32 %v1828, 0.0
          %v1869 = vmax.f32 %v1829, 0.0
          %v1870 = vmax.f32 %v1830, 0.0
          %v1871 = vmax.f32 %v1831, 0.0
          %v1872 = vmax.f32 %v1832, 0.0
          %v1873 = vmax.f32 %v1833, 0.0
          %v1874 = vmax.f32 %v1834, 0.0
          %v1875 = vmax.f32 %v1835, 0.0
          %v1876 = vmax.f32 %v1836, 0.0
          %v1877 = vmax.f32 %v1837, 0.0
          %v1878 = vmax.f32 %v1838, 0.0
          %v1879 = vmax.f32 %v1839, 0.0
          %v1880 = vmax.f32 %v1840, 0.0
          %v1881 = vmax.f32 %v1841, 0.0
          %v1882 = vmax.f32 %v1842, 0.0
          %v1883 = vmax.f32 %v1843, 0.0
          %1885 = vset.pattern.permute.xlu0 0
          %1886 = vperm.xlu0 %1885, %v904
          %v1887 = vpop.permute.xlu0 %1886
          %1890 = vset.pattern.permute.xlu0 0
          %1891 = vperm.xlu0 %1890, %v905
          %v1892 = vpop.permute.xlu0 %1891
          %1895 = vset.pattern.permute.xlu0 0
          %1896 = vperm.xlu0 %1895, %v906
          %v1897 = vpop.permute.xlu0 %1896
          %1900 = vset.pattern.permute.xlu0 0
          %1901 = vperm.xlu0 %1900, %v907
          %v1902 = vpop.permute.xlu0 %1901
          %1905 = vset.pattern.permute.xlu0 0
          %1906 = vperm.xlu0 %1905, %v908
          %v1907 = vpop.permute.xlu0 %1906
          %1910 = vset.pattern.permute.xlu0 0
          %1911 = vperm.xlu0 %1910, %v909
          %v1912 = vpop.permute.xlu0 %1911
          %1915 = vset.pattern.permute.xlu0 0
          %1916 = vperm.xlu0 %1915, %v910
          %v1917 = vpop.permute.xlu0 %1916
          %1920 = vset.pattern.permute.xlu0 0
          %1921 = vperm.xlu0 %1920, %v911
          %v1922 = vpop.permute.xlu0 %1921
          %1925 = vset.pattern.permute.xlu0 0
          %1926 = vperm.xlu0 %1925, %v912
          %v1927 = vpop.permute.xlu0 %1926
          %1930 = vset.pattern.permute.xlu0 0
          %1931 = vperm.xlu0 %1930, %v913
          %v1932 = vpop.permute.xlu0 %1931
          %1935 = vset.pattern.permute.xlu0 0
          %1936 = vperm.xlu0 %1935, %v914
          %v1937 = vpop.permute.xlu0 %1936
          %1940 = vset.pattern.permute.xlu0 0
          %1941 = vperm.xlu0 %1940, %v915
          %v1942 = vpop.permute.xlu0 %1941
          %1945 = vset.pattern.permute.xlu0 0
          %1946 = vperm.xlu0 %1945, %v916
          %v1947 = vpop.permute.xlu0 %1946
          %1950 = vset.pattern.permute.xlu0 0
          %1951 = vperm.xlu0 %1950, %v917
          %v1952 = vpop.permute.xlu0 %1951
          %1955 = vset.pattern.permute.xlu0 0
          %1956 = vperm.xlu0 %1955, %v918
          %v1957 = vpop.permute.xlu0 %1956
          %1960 = vset.pattern.permute.xlu0 0
          %1961 = vperm.xlu0 %1960, %v919
          %v1962 = vpop.permute.xlu0 %1961
          %1965 = vset.pattern.permute.xlu0 0
          %1966 = vperm.xlu0 %1965, %v920
          %v1967 = vpop.permute.xlu0 %1966
          %1970 = vset.pattern.permute.xlu0 0
          %1971 = vperm.xlu0 %1970, %v921
          %v1972 = vpop.permute.xlu0 %1971
          %1975 = vset.pattern.permute.xlu0 0
          %1976 = vperm.xlu0 %1975, %v922
          %v1977 = vpop.permute.xlu0 %1976
          %1980 = vset.pattern.permute.xlu0 0
          %1981 = vperm.xlu0 %1980, %v923
          %v1982 = vpop.permute.xlu0 %1981
          %v1984 = vmul.f32 %v1844, %v1887
          %v1985 = vmul.f32 %v1845, %v1887
          %v1986 = vmul.f32 %v1846, %v1892
          %v1987 = vmul.f32 %v1847, %v1892
          %v1988 = vmul.f32 %v1848, %v1897
          %v1989 = vmul.f32 %v1849, %v1897
          %v1990 = vmul.f32 %v1850, %v1902
          %v1991 = vmul.f32 %v1851, %v1902
          %v1992 = vmul.f32 %v1852, %v1907
          %v1993 = vmul.f32 %v1853, %v1907
          %v1994 = vmul.f32 %v1854, %v1912
          %v1995 = vmul.f32 %v1855, %v1912
          %v1996 = vmul.f32 %v1856, %v1917
          %v1997 = vmul.f32 %v1857, %v1917
          %v1998 = vmul.f32 %v1858, %v1922
          %v1999 = vmul.f32 %v1859, %v1922
          %v2000 = vmul.f32 %v1860, %v1927
          %v2001 = vmul.f32 %v1861, %v1927
          %v2002 = vmul.f32 %v1862, %v1932
          %v2003 = vmul.f32 %v1863, %v1932
          %v2004 = vmul.f32 %v1864, %v1937
          %v2005 = vmul.f32 %v1865, %v1937
          %v2006 = vmul.f32 %v1866, %v1942
          %v2007 = vmul.f32 %v1867, %v1942
          %v2008 = vmul.f32 %v1868, %v1947
          %v2009 = vmul.f32 %v1869, %v1947
          %v2010 = vmul.f32 %v1870, %v1952
          %v2011 = vmul.f32 %v1871, %v1952
          %v2012 = vmul.f32 %v1872, %v1957
          %v2013 = vmul.f32 %v1873, %v1957
          %v2014 = vmul.f32 %v1874, %v1962
          %v2015 = vmul.f32 %v1875, %v1962
          %v2016 = vmul.f32 %v1876, %v1967
          %v2017 = vmul.f32 %v1877, %v1967
          %v2018 = vmul.f32 %v1878, %v1972
          %v2019 = vmul.f32 %v1879, %v1972
          %v2020 = vmul.f32 %v1880, %v1977
          %v2021 = vmul.f32 %v1881, %v1977
          %v2022 = vmul.f32 %v1882, %v1982
          %v2023 = vmul.f32 %v1883, %v1982
          %vm2064 = vcmask 1040384
          %v2065 = vrot.slane %v1984, 7
          %v2066 = vrot.slane %v1985, 7
          %v2067 = vrot.slane %v1986, 7
          %v2068 = vsel %vm2064, %v2065, %v2067
          %v2069 = vrot.slane %v1987, 7
          %v2070 = vsel %vm2064, %v2066, %v2069
          %v2071 = vrot.slane %v1988, 7
          %v2072 = vsel %vm2064, %v2067, %v2071
          %v2073 = vrot.slane %v1989, 7
          %v2074 = vsel %vm2064, %v2069, %v2073
          %v2075 = vrot.slane %v1990, 7
          %v2076 = vsel %vm2064, %v2071, %v2075
          %v2077 = vrot.slane %v1991, 7
          %v2078 = vsel %vm2064, %v2073, %v2077
          %v2079 = vrot.slane %v1992, 7
          %v2080 = vsel %vm2064, %v2075, %v2079
          %v2081 = vrot.slane %v1993, 7
          %v2082 = vsel %vm2064, %v2077, %v2081
          %v2083 = vrot.slane %v1994, 7
          %v2084 = vsel %vm2064, %v2079, %v2083
          %v2085 = vrot.slane %v1995, 7
          %v2086 = vsel %vm2064, %v2081, %v2085
          %v2087 = vrot.slane %v1996, 7
          %v2088 = vsel %vm2064, %v2083, %v2087
          %v2089 = vrot.slane %v1997, 7
          %v2090 = vsel %vm2064, %v2085, %v2089
          %v2091 = vrot.slane %v1998, 7
          %v2092 = vsel %vm2064, %v2087, %v2091
          %v2093 = vrot.slane %v1999, 7
          %v2094 = vsel %vm2064, %v2089, %v2093
          %v2095 = vrot.slane %v2000, 7
          %v2096 = vsel %vm2064, %v2091, %v2095
          %v2097 = vrot.slane %v2001, 7
          %v2098 = vsel %vm2064, %v2093, %v2097
          %v2099 = vrot.slane %v2002, 7
          %v2100 = vsel %vm2064, %v2095, %v2099
          %v2101 = vrot.slane %v2003, 7
          %v2102 = vsel %vm2064, %v2097, %v2101
          %v2103 = vrot.slane %v2004, 7
          %v2104 = vsel %vm2064, %v2099, %v2103
          %v2105 = vrot.slane %v2005, 7
          %v2106 = vsel %vm2064, %v2101, %v2105
          %v2107 = vrot.slane %v2006, 7
          %v2108 = vsel %vm2064, %v2103, %v2107
          %v2109 = vrot.slane %v2007, 7
          %v2110 = vsel %vm2064, %v2105, %v2109
          %v2111 = vrot.slane %v2008, 7
          %v2112 = vsel %vm2064, %v2107, %v2111
          %v2113 = vrot.slane %v2009, 7
          %v2114 = vsel %vm2064, %v2109, %v2113
          %v2115 = vrot.slane %v2010, 7
          %v2116 = vsel %vm2064, %v2111, %v2115
          %v2117 = vrot.slane %v2011, 7
          %v2118 = vsel %vm2064, %v2113, %v2117
          %v2119 = vrot.slane %v2012, 7
          %v2120 = vsel %vm2064, %v2115, %v2119
          %v2121 = vrot.slane %v2013, 7
          %v2122 = vsel %vm2064, %v2117, %v2121
          %v2123 = vrot.slane %v2014, 7
          %v2124 = vsel %vm2064, %v2119, %v2123
          %v2125 = vrot.slane %v2015, 7
          %v2126 = vsel %vm2064, %v2121, %v2125
          %v2127 = vrot.slane %v2016, 7
          %v2128 = vsel %vm2064, %v2123, %v2127
          %v2129 = vrot.slane %v2017, 7
          %v2130 = vsel %vm2064, %v2125, %v2129
          %v2131 = vrot.slane %v2018, 7
          %v2132 = vsel %vm2064, %v2127, %v2131
          %v2133 = vrot.slane %v2019, 7
          %v2134 = vsel %vm2064, %v2129, %v2133
          %v2135 = vrot.slane %v2020, 7
          %v2136 = vsel %vm2064, %v2131, %v2135
          %v2137 = vrot.slane %v2021, 7
          %v2138 = vsel %vm2064, %v2133, %v2137
          %v2139 = vrot.slane %v2022, 7
          %v2140 = vsel %vm2064, %v2135, %v2139
          %v2141 = vrot.slane %v2023, 7
          %v2142 = vsel %vm2064, %v2137, %v2141
          %2183 = vst [vmem:[#allocation2] sm:$0xfe] %v2065
          %2184 = vst [vmem:[#allocation2 + $0x8] sm:$0xfe] %v2066
          %2185 = vst [vmem:[#allocation2 + $0x10] sm:$0xff] %v2068
          %2186 = vst [vmem:[#allocation2 + $0x18] sm:$0xff] %v2070
          %2187 = vst [vmem:[#allocation2 + $0x20] sm:$0xff] %v2072
          %2188 = vst [vmem:[#allocation2 + $0x28] sm:$0xff] %v2074
          %2189 = vst [vmem:[#allocation2 + $0x30] sm:$0xff] %v2076
          %2190 = vst [vmem:[#allocation2 + $0x38] sm:$0xff] %v2078
          %2191 = vst [vmem:[#allocation2 + $0x40] sm:$0xff] %v2080
          %2192 = vst [vmem:[#allocation2 + $0x48] sm:$0xff] %v2082
          %2193 = vst [vmem:[#allocation2 + $0x50] sm:$0xff] %v2084
          %2194 = vst [vmem:[#allocation2 + $0x58] sm:$0xff] %v2086
          %2195 = vst [vmem:[#allocation2 + $0x60] sm:$0xff] %v2088
          %2196 = vst [vmem:[#allocation2 + $0x68] sm:$0xff] %v2090
          %2197 = vst [vmem:[#allocation2 + $0x70] sm:$0xff] %v2092
          %2198 = vst [vmem:[#allocation2 + $0x78] sm:$0xff] %v2094
          %2199 = vst [vmem:[#allocation2 + $0x80] sm:$0xff] %v2096
          %2200 = vst [vmem:[#allocation2 + $0x88] sm:$0xff] %v2098
          %2201 = vst [vmem:[#allocation2 + $0x90] sm:$0xff] %v2100
          %2202 = vst [vmem:[#allocation2 + $0x98] sm:$0xff] %v2102
          %2203 = vst [vmem:[#allocation2 + $0xa0] sm:$0xff] %v2104
          %2204 = vst [vmem:[#allocation2 + $0xa8] sm:$0xff] %v2106
          %2205 = vst [vmem:[#allocation2 + $0xb0] sm:$0xff] %v2108
          %2206 = vst [vmem:[#allocation2 + $0xb8] sm:$0xff] %v2110
          %2207 = vst [vmem:[#allocation2 + $0xc0] sm:$0xff] %v2112
          %2208 = vst [vmem:[#allocation2 + $0xc8] sm:$0xff] %v2114
          %2209 = vst [vmem:[#allocation2 + $0xd0] sm:$0xff] %v2116
          %2210 = vst [vmem:[#allocation2 + $0xd8] sm:$0xff] %v2118
          %2211 = vst [vmem:[#allocation2 + $0xe0] sm:$0xff] %v2120
          %2212 = vst [vmem:[#allocation2 + $0xe8] sm:$0xff] %v2122
          %2213 = vst [vmem:[#allocation2 + $0xf0] sm:$0xff] %v2124
          %2214 = vst [vmem:[#allocation2 + $0xf8] sm:$0xff] %v2126
          %2215 = vst [vmem:[#allocation2 + $0x100] sm:$0xff] %v2128
          %2216 = vst [vmem:[#allocation2 + $0x108] sm:$0xff] %v2130
          %2217 = vst [vmem:[#allocation2 + $0x110] sm:$0xff] %v2132
          %2218 = vst [vmem:[#allocation2 + $0x118] sm:$0xff] %v2134
          %2219 = vst [vmem:[#allocation2 + $0x120] sm:$0xff] %v2136
          %2220 = vst [vmem:[#allocation2 + $0x128] sm:$0xff] %v2138
          %2221 = vst [vmem:[#allocation2 + $0x130] sm:$0x7f] %v2140
          %2222 = vst [vmem:[#allocation2 + $0x138] sm:$0x7f] %v2142
        $region148: #{forward_pallas.1} parent=99 // pred_fallthru
          _
        %v2223 = vld [vmem:[#allocation2] sm:$0xfe]
        %v2224 = vld [vmem:[#allocation2 + $0x8] sm:$0xfe]
        %v2225 = vld [vmem:[#allocation2 + $0x10] sm:$0xff]
        %v2226 = vld [vmem:[#allocation2 + $0x18] sm:$0xff]
        %v2227 = vld [vmem:[#allocation2 + $0x20] sm:$0xff]
        %v2228 = vld [vmem:[#allocation2 + $0x28] sm:$0xff]
        %v2229 = vld [vmem:[#allocation2 + $0x30] sm:$0xff]
        %v2230 = vld [vmem:[#allocation2 + $0x38] sm:$0xff]
        %v2231 = vld [vmem:[#allocation2 + $0x40] sm:$0xff]
        %v2232 = vld [vmem:[#allocation2 + $0x48] sm:$0xff]
        %v2233 = vld [vmem:[#allocation2 + $0x50] sm:$0xff]
        %v2234 = vld [vmem:[#allocation2 + $0x58] sm:$0xff]
        %v2235 = vld [vmem:[#allocation2 + $0x60] sm:$0xff]
        %v2236 = vld [vmem:[#allocation2 + $0x68] sm:$0xff]
        %v2237 = vld [vmem:[#allocation2 + $0x70] sm:$0xff]
        %v2238 = vld [vmem:[#allocation2 + $0x78] sm:$0xff]
        %v2239 = vld [vmem:[#allocation2 + $0x80] sm:$0xff]
        %v2240 = vld [vmem:[#allocation2 + $0x88] sm:$0xff]
        %v2241 = vld [vmem:[#allocation2 + $0x90] sm:$0xff]
        %v2242 = vld [vmem:[#allocation2 + $0x98] sm:$0xff]
        %v2243 = vld [vmem:[#allocation2 + $0xa0] sm:$0xff]
        %v2244 = vld [vmem:[#allocation2 + $0xa8] sm:$0xff]
        %v2245 = vld [vmem:[#allocation2 + $0xb0] sm:$0xff]
        %v2246 = vld [vmem:[#allocation2 + $0xb8] sm:$0xff]
        %v2247 = vld [vmem:[#allocation2 + $0xc0] sm:$0xff]
        %v2248 = vld [vmem:[#allocation2 + $0xc8] sm:$0xff]
        %v2249 = vld [vmem:[#allocation2 + $0xd0] sm:$0xff]
        %v2250 = vld [vmem:[#allocation2 + $0xd8] sm:$0xff]
        %v2251 = vld [vmem:[#allocation2 + $0xe0] sm:$0xff]
        %v2252 = vld [vmem:[#allocation2 + $0xe8] sm:$0xff]
        %v2253 = vld [vmem:[#allocation2 + $0xf0] sm:$0xff]
        %v2254 = vld [vmem:[#allocation2 + $0xf8] sm:$0xff]
        %v2255 = vld [vmem:[#allocation2 + $0x100] sm:$0xff]
        %v2256 = vld [vmem:[#allocation2 + $0x108] sm:$0xff]
        %v2257 = vld [vmem:[#allocation2 + $0x110] sm:$0xff]
        %v2258 = vld [vmem:[#allocation2 + $0x118] sm:$0xff]
        %v2259 = vld [vmem:[#allocation2 + $0x120] sm:$0xff]
        %v2260 = vld [vmem:[#allocation2 + $0x128] sm:$0xff]
        %v2261 = vld [vmem:[#allocation2 + $0x130] sm:$0x7f]
        %v2262 = vld [vmem:[#allocation2 + $0x138] sm:$0x7f]
        %v2263 = vld [vmem:[%s894] sm:$0x3]
        %v2265 = vperm.slane %v2263, 0
        %v2266 = vperm.slane %v2263, 1
        %v2269 = vmul.f32 %v2223, %v2265
        %v2270 = vmul.f32 %v2224, %v2266
        %v2271 = vmul.f32 %v2225, %v2265
        %v2272 = vmul.f32 %v2226, %v2266
        %v2273 = vmul.f32 %v2227, %v2265
        %v2274 = vmul.f32 %v2228, %v2266
        %v2275 = vmul.f32 %v2229, %v2265
        %v2276 = vmul.f32 %v2230, %v2266
        %v2277 = vmul.f32 %v2231, %v2265
        %v2278 = vmul.f32 %v2232, %v2266
        %v2279 = vmul.f32 %v2233, %v2265
        %v2280 = vmul.f32 %v2234, %v2266
        %v2281 = vmul.f32 %v2235, %v2265
        %v2282 = vmul.f32 %v2236, %v2266
        %v2283 = vmul.f32 %v2237, %v2265
        %v2284 = vmul.f32 %v2238, %v2266
        %v2285 = vmul.f32 %v2239, %v2265
        %v2286 = vmul.f32 %v2240, %v2266
        %v2287 = vmul.f32 %v2241, %v2265
        %v2288 = vmul.f32 %v2242, %v2266
        %v2289 = vmul.f32 %v2243, %v2265
        %v2290 = vmul.f32 %v2244, %v2266
        %v2291 = vmul.f32 %v2245, %v2265
        %v2292 = vmul.f32 %v2246, %v2266
        %v2293 = vmul.f32 %v2247, %v2265
        %v2294 = vmul.f32 %v2248, %v2266
        %v2295 = vmul.f32 %v2249, %v2265
        %v2296 = vmul.f32 %v2250, %v2266
        %v2297 = vmul.f32 %v2251, %v2265
        %v2298 = vmul.f32 %v2252, %v2266
        %v2299 = vmul.f32 %v2253, %v2265
        %v2300 = vmul.f32 %v2254, %v2266
        %v2301 = vmul.f32 %v2255, %v2265
        %v2302 = vmul.f32 %v2256, %v2266
        %v2303 = vmul.f32 %v2257, %v2265
        %v2304 = vmul.f32 %v2258, %v2266
        %v2305 = vmul.f32 %v2259, %v2265
        %v2306 = vmul.f32 %v2260, %v2266
        %v2307 = vmul.f32 %v2261, %v2265
        %v2308 = vmul.f32 %v2262, %v2266
        %v2309 = vld [vmem:[%s898] sm:$0x3]
        %v2311 = vperm.slane %v2309, 0
        %v2312 = vperm.slane %v2309, 1
        %v2315 = vadd.f32 %v2269, %v2311
        %v2316 = vadd.f32 %v2270, %v2312
        %v2317 = vadd.f32 %v2271, %v2311
        %v2318 = vadd.f32 %v2272, %v2312
        %v2319 = vadd.f32 %v2273, %v2311
        %v2320 = vadd.f32 %v2274, %v2312
        %v2321 = vadd.f32 %v2275, %v2311
        %v2322 = vadd.f32 %v2276, %v2312
        %v2323 = vadd.f32 %v2277, %v2311
        %v2324 = vadd.f32 %v2278, %v2312
        %v2325 = vadd.f32 %v2279, %v2311
        %v2326 = vadd.f32 %v2280, %v2312
        %v2327 = vadd.f32 %v2281, %v2311
        %v2328 = vadd.f32 %v2282, %v2312
        %v2329 = vadd.f32 %v2283, %v2311
        %v2330 = vadd.f32 %v2284, %v2312
        %v2331 = vadd.f32 %v2285, %v2311
        %v2332 = vadd.f32 %v2286, %v2312
        %v2333 = vadd.f32 %v2287, %v2311
        %v2334 = vadd.f32 %v2288, %v2312
        %v2335 = vadd.f32 %v2289, %v2311
        %v2336 = vadd.f32 %v2290, %v2312
        %v2337 = vadd.f32 %v2291, %v2311
        %v2338 = vadd.f32 %v2292, %v2312
        %v2339 = vadd.f32 %v2293, %v2311
        %v2340 = vadd.f32 %v2294, %v2312
        %v2341 = vadd.f32 %v2295, %v2311
        %v2342 = vadd.f32 %v2296, %v2312
        %v2343 = vadd.f32 %v2297, %v2311
        %v2344 = vadd.f32 %v2298, %v2312
        %v2345 = vadd.f32 %v2299, %v2311
        %v2346 = vadd.f32 %v2300, %v2312
        %v2347 = vadd.f32 %v2301, %v2311
        %v2348 = vadd.f32 %v2302, %v2312
        %v2349 = vadd.f32 %v2303, %v2311
        %v2350 = vadd.f32 %v2304, %v2312
        %v2351 = vadd.f32 %v2305, %v2311
        %v2352 = vadd.f32 %v2306, %v2312
        %v2353 = vadd.f32 %v2307, %v2311
        %v2354 = vadd.f32 %v2308, %v2312
        %v2355 = vmax.f32 %v2315, 0.0
        %v2356 = vmax.f32 %v2316, 0.0
        %v2357 = vmax.f32 %v2317, 0.0
        %v2358 = vmax.f32 %v2318, 0.0
        %v2359 = vmax.f32 %v2319, 0.0
        %v2360 = vmax.f32 %v2320, 0.0
        %v2361 = vmax.f32 %v2321, 0.0
        %v2362 = vmax.f32 %v2322, 0.0
        %v2363 = vmax.f32 %v2323, 0.0
        %v2364 = vmax.f32 %v2324, 0.0
        %v2365 = vmax.f32 %v2325, 0.0
        %v2366 = vmax.f32 %v2326, 0.0
        %v2367 = vmax.f32 %v2327, 0.0
        %v2368 = vmax.f32 %v2328, 0.0
        %v2369 = vmax.f32 %v2329, 0.0
        %v2370 = vmax.f32 %v2330, 0.0
        %v2371 = vmax.f32 %v2331, 0.0
        %v2372 = vmax.f32 %v2332, 0.0
        %v2373 = vmax.f32 %v2333, 0.0
        %v2374 = vmax.f32 %v2334, 0.0
        %v2375 = vmax.f32 %v2335, 0.0
        %v2376 = vmax.f32 %v2336, 0.0
        %v2377 = vmax.f32 %v2337, 0.0
        %v2378 = vmax.f32 %v2338, 0.0
        %v2379 = vmax.f32 %v2339, 0.0
        %v2380 = vmax.f32 %v2340, 0.0
        %v2381 = vmax.f32 %v2341, 0.0
        %v2382 = vmax.f32 %v2342, 0.0
        %v2383 = vmax.f32 %v2343, 0.0
        %v2384 = vmax.f32 %v2344, 0.0
        %v2385 = vmax.f32 %v2345, 0.0
        %v2386 = vmax.f32 %v2346, 0.0
        %v2387 = vmax.f32 %v2347, 0.0
        %v2388 = vmax.f32 %v2348, 0.0
        %v2389 = vmax.f32 %v2349, 0.0
        %v2390 = vmax.f32 %v2350, 0.0
        %v2391 = vmax.f32 %v2351, 0.0
        %v2392 = vmax.f32 %v2352, 0.0
        %v2393 = vmax.f32 %v2353, 0.0
        %v2394 = vmax.f32 %v2354, 0.0
        %2396 = vset.pattern.permute.xlu0 0
        %2397 = vperm.xlu0 %2396, %v904
        %v2398 = vpop.permute.xlu0 %2397
        %2401 = vset.pattern.permute.xlu0 0
        %2402 = vperm.xlu0 %2401, %v905
        %v2403 = vpop.permute.xlu0 %2402
        %2406 = vset.pattern.permute.xlu0 0
        %2407 = vperm.xlu0 %2406, %v906
        %v2408 = vpop.permute.xlu0 %2407
        %2411 = vset.pattern.permute.xlu0 0
        %2412 = vperm.xlu0 %2411, %v907
        %v2413 = vpop.permute.xlu0 %2412
        %2416 = vset.pattern.permute.xlu0 0
        %2417 = vperm.xlu0 %2416, %v908
        %v2418 = vpop.permute.xlu0 %2417
        %2421 = vset.pattern.permute.xlu0 0
        %2422 = vperm.xlu0 %2421, %v909
        %v2423 = vpop.permute.xlu0 %2422
        %2426 = vset.pattern.permute.xlu0 0
        %2427 = vperm.xlu0 %2426, %v910
        %v2428 = vpop.permute.xlu0 %2427
        %2431 = vset.pattern.permute.xlu0 0
        %2432 = vperm.xlu0 %2431, %v911
        %v2433 = vpop.permute.xlu0 %2432
        %2436 = vset.pattern.permute.xlu0 0
        %2437 = vperm.xlu0 %2436, %v912
        %v2438 = vpop.permute.xlu0 %2437
        %2441 = vset.pattern.permute.xlu0 0
        %2442 = vperm.xlu0 %2441, %v913
        %v2443 = vpop.permute.xlu0 %2442
        %2446 = vset.pattern.permute.xlu0 0
        %2447 = vperm.xlu0 %2446, %v914
        %v2448 = vpop.permute.xlu0 %2447
        %2451 = vset.pattern.permute.xlu0 0
        %2452 = vperm.xlu0 %2451, %v915
        %v2453 = vpop.permute.xlu0 %2452
        %2456 = vset.pattern.permute.xlu0 0
        %2457 = vperm.xlu0 %2456, %v916
        %v2458 = vpop.permute.xlu0 %2457
        %2461 = vset.pattern.permute.xlu0 0
        %2462 = vperm.xlu0 %2461, %v917
        %v2463 = vpop.permute.xlu0 %2462
        %2466 = vset.pattern.permute.xlu0 0
        %2467 = vperm.xlu0 %2466, %v918
        %v2468 = vpop.permute.xlu0 %2467
        %2471 = vset.pattern.permute.xlu0 0
        %2472 = vperm.xlu0 %2471, %v919
        %v2473 = vpop.permute.xlu0 %2472
        %2476 = vset.pattern.permute.xlu0 0
        %2477 = vperm.xlu0 %2476, %v920
        %v2478 = vpop.permute.xlu0 %2477
        %2481 = vset.pattern.permute.xlu0 0
        %2482 = vperm.xlu0 %2481, %v921
        %v2483 = vpop.permute.xlu0 %2482
        %2486 = vset.pattern.permute.xlu0 0
        %2487 = vperm.xlu0 %2486, %v922
        %v2488 = vpop.permute.xlu0 %2487
        %2491 = vset.pattern.permute.xlu0 0
        %2492 = vperm.xlu0 %2491, %v923
        %v2493 = vpop.permute.xlu0 %2492
        %vm2495 = vcmask 1040384
        %v2496 = vrot.slane %v2398, 7
        %v2497 = vrot.slane %v2403, 7
        %v2498 = vsel %vm2495, %v2496, %v2497
        %v2499 = vrot.slane %v2408, 7
        %v2500 = vsel %vm2495, %v2497, %v2499
        %v2501 = vrot.slane %v2413, 7
        %v2502 = vsel %vm2495, %v2499, %v2501
        %v2503 = vrot.slane %v2418, 7
        %v2504 = vsel %vm2495, %v2501, %v2503
        %v2505 = vrot.slane %v2423, 7
        %v2506 = vsel %vm2495, %v2503, %v2505
        %v2507 = vrot.slane %v2428, 7
        %v2508 = vsel %vm2495, %v2505, %v2507
        %v2509 = vrot.slane %v2433, 7
        %v2510 = vsel %vm2495, %v2507, %v2509
        %v2511 = vrot.slane %v2438, 7
        %v2512 = vsel %vm2495, %v2509, %v2511
        %v2513 = vrot.slane %v2443, 7
        %v2514 = vsel %vm2495, %v2511, %v2513
        %v2515 = vrot.slane %v2448, 7
        %v2516 = vsel %vm2495, %v2513, %v2515
        %v2517 = vrot.slane %v2453, 7
        %v2518 = vsel %vm2495, %v2515, %v2517
        %v2519 = vrot.slane %v2458, 7
        %v2520 = vsel %vm2495, %v2517, %v2519
        %v2521 = vrot.slane %v2463, 7
        %v2522 = vsel %vm2495, %v2519, %v2521
        %v2523 = vrot.slane %v2468, 7
        %v2524 = vsel %vm2495, %v2521, %v2523
        %v2525 = vrot.slane %v2473, 7
        %v2526 = vsel %vm2495, %v2523, %v2525
        %v2527 = vrot.slane %v2478, 7
        %v2528 = vsel %vm2495, %v2525, %v2527
        %v2529 = vrot.slane %v2483, 7
        %v2530 = vsel %vm2495, %v2527, %v2529
        %v2531 = vrot.slane %v2488, 7
        %v2532 = vsel %vm2495, %v2529, %v2531
        %v2533 = vrot.slane %v2493, 7
        %v2534 = vsel %vm2495, %v2531, %v2533
        %v2555 = vmul.f32 %v2355, %v2496
        %v2556 = vmul.f32 %v2356, %v2496
        %v2557 = vmul.f32 %v2357, %v2498
        %v2558 = vmul.f32 %v2358, %v2498
        %v2559 = vmul.f32 %v2359, %v2500
        %v2560 = vmul.f32 %v2360, %v2500
        %v2561 = vmul.f32 %v2361, %v2502
        %v2562 = vmul.f32 %v2362, %v2502
        %v2563 = vmul.f32 %v2363, %v2504
        %v2564 = vmul.f32 %v2364, %v2504
        %v2565 = vmul.f32 %v2365, %v2506
        %v2566 = vmul.f32 %v2366, %v2506
        %v2567 = vmul.f32 %v2367, %v2508
        %v2568 = vmul.f32 %v2368, %v2508
        %v2569 = vmul.f32 %v2369, %v2510
        %v2570 = vmul.f32 %v2370, %v2510
        %v2571 = vmul.f32 %v2371, %v2512
        %v2572 = vmul.f32 %v2372, %v2512
        %v2573 = vmul.f32 %v2373, %v2514
        %v2574 = vmul.f32 %v2374, %v2514
        %v2575 = vmul.f32 %v2375, %v2516
        %v2576 = vmul.f32 %v2376, %v2516
        %v2577 = vmul.f32 %v2377, %v2518
        %v2578 = vmul.f32 %v2378, %v2518
        %v2579 = vmul.f32 %v2379, %v2520
        %v2580 = vmul.f32 %v2380, %v2520
        %v2581 = vmul.f32 %v2381, %v2522
        %v2582 = vmul.f32 %v2382, %v2522
        %v2583 = vmul.f32 %v2383, %v2524
        %v2584 = vmul.f32 %v2384, %v2524
        %v2585 = vmul.f32 %v2385, %v2526
        %v2586 = vmul.f32 %v2386, %v2526
        %v2587 = vmul.f32 %v2387, %v2528
        %v2588 = vmul.f32 %v2388, %v2528
        %v2589 = vmul.f32 %v2389, %v2530
        %v2590 = vmul.f32 %v2390, %v2530
        %v2591 = vmul.f32 %v2391, %v2532
        %v2592 = vmul.f32 %v2392, %v2532
        %v2593 = vmul.f32 %v2393, %v2534
        %v2594 = vmul.f32 %v2394, %v2534
        %v2595 = vpack.c.bf16 %v2556, %v2555
        %v2596 = vpack.c.bf16 %v2558, %v2557
        %v2597 = vpack.c.bf16 %v2560, %v2559
        %v2598 = vpack.c.bf16 %v2562, %v2561
        %v2599 = vpack.c.bf16 %v2564, %v2563
        %v2600 = vpack.c.bf16 %v2566, %v2565
        %v2601 = vpack.c.bf16 %v2568, %v2567
        %v2602 = vpack.c.bf16 %v2570, %v2569
        %v2603 = vpack.c.bf16 %v2572, %v2571
        %v2604 = vpack.c.bf16 %v2574, %v2573
        %v2605 = vpack.c.bf16 %v2576, %v2575
        %v2606 = vpack.c.bf16 %v2578, %v2577
        %v2607 = vpack.c.bf16 %v2580, %v2579
        %v2608 = vpack.c.bf16 %v2582, %v2581
        %v2609 = vpack.c.bf16 %v2584, %v2583
        %v2610 = vpack.c.bf16 %v2586, %v2585
        %v2611 = vpack.c.bf16 %v2588, %v2587
        %v2612 = vpack.c.bf16 %v2590, %v2589
        %v2613 = vpack.c.bf16 %v2592, %v2591
        %v2614 = vpack.c.bf16 %v2594, %v2593
        %vm2615 = vcmask 1043456
        %vm2616 = vsmask.f32 7938
        %vm2617 = vmand %vm2615, %vm2616
        %vm2618 = vcmask 1047556
        %vm2619 = vsmask.f32 7954
        %vm2620 = vmand %vm2618, %vm2619
        %vm2621 = vmor %vm2620, %vm2617
        %v2622 = vld [vmem:[#allocation3] sm:$0xff]
        %v2623 = vsel %vm2621, %v2595, %v2622
        %2624 = vst [vmem:[#allocation3] sm:$0xff] %v2623
        %2625 = vst [vmem:[#allocation3 + $0x8] sm:$0xff] %v2596
        %2626 = vst [vmem:[#allocation3 + $0x10] sm:$0xff] %v2597
        %2627 = vst [vmem:[#allocation3 + $0x18] sm:$0xff] %v2598
        %2628 = vst [vmem:[#allocation3 + $0x20] sm:$0xff] %v2599
        %2629 = vst [vmem:[#allocation3 + $0x28] sm:$0xff] %v2600
        %2630 = vst [vmem:[#allocation3 + $0x30] sm:$0xff] %v2601
        %2631 = vst [vmem:[#allocation3 + $0x38] sm:$0xff] %v2602
        %2632 = vst [vmem:[#allocation3 + $0x40] sm:$0xff] %v2603
        %2633 = vst [vmem:[#allocation3 + $0x48] sm:$0xff] %v2604
        %2634 = vst [vmem:[#allocation3 + $0x50] sm:$0xff] %v2605
        %2635 = vst [vmem:[#allocation3 + $0x58] sm:$0xff] %v2606
        %2636 = vst [vmem:[#allocation3 + $0x60] sm:$0xff] %v2607
        %2637 = vst [vmem:[#allocation3 + $0x68] sm:$0xff] %v2608
        %2638 = vst [vmem:[#allocation3 + $0x70] sm:$0xff] %v2609
        %2639 = vst [vmem:[#allocation3 + $0x78] sm:$0xff] %v2610
        %2640 = vst [vmem:[#allocation3 + $0x80] sm:$0xff] %v2611
        %2641 = vst [vmem:[#allocation3 + $0x88] sm:$0xff] %v2612
        %2642 = vst [vmem:[#allocation3 + $0x90] sm:$0xff] %v2613
        %vm2643 = vsmask.f32 3328
        %vm2644 = vmand %vm2615, %vm2643
        %vm2645 = vsmask.f32 7424
        %vm2646 = vmand %vm2618, %vm2645
        %vm2647 = vmor %vm2646, %vm2644
        %v2648 = vld [vmem:[#allocation3 + $0x98] sm:$0xff]
        %v2649 = vsel %vm2647, %v2614, %v2648
        %2650 = vst [vmem:[#allocation3 + $0x98] sm:$0xff] %v2649
        %v2651 = vld [vmem:[#allocation3] sm:$0xff]
        %v2652 = vld [vmem:[#allocation3 + $0x8] sm:$0xff]
        %v2653 = vld [vmem:[#allocation3 + $0x10] sm:$0xff]
        %v2654 = vld [vmem:[#allocation3 + $0x18] sm:$0xff]
        %v2655 = vld [vmem:[#allocation3 + $0x20] sm:$0xff]
        %v2656 = vld [vmem:[#allocation3 + $0x28] sm:$0xff]
        %v2657 = vld [vmem:[#allocation3 + $0x30] sm:$0xff]
        %v2658 = vld [vmem:[#allocation3 + $0x38] sm:$0xff]
        %v2659 = vld [vmem:[#allocation3 + $0x40] sm:$0xff]
        %v2660 = vld [vmem:[#allocation3 + $0x48] sm:$0xff]
        %v2661 = vld [vmem:[#allocation3 + $0x50] sm:$0xff]
        %v2662 = vld [vmem:[#allocation3 + $0x58] sm:$0xff]
        %v2663 = vld [vmem:[#allocation3 + $0x60] sm:$0xff]
        %v2664 = vld [vmem:[#allocation3 + $0x68] sm:$0xff]
        %v2665 = vld [vmem:[#allocation3 + $0x70] sm:$0xff]
        %v2666 = vld [vmem:[#allocation3 + $0x78] sm:$0xff]
        %v2667 = vld [vmem:[#allocation3 + $0x80] sm:$0xff]
        %v2668 = vld [vmem:[#allocation3 + $0x88] sm:$0xff]
        %v2669 = vld [vmem:[#allocation3 + $0x90] sm:$0xff]
        %v2670 = vld [vmem:[#allocation3 + $0x98] sm:$0x77]
        %v2671 = vld [vmem:[%s890] sm:$0xff]
        %v2672 = vld [vmem:[%s890 + $0x8] sm:$0xff]
        %v2673 = vld [vmem:[%s890 + $0x10] sm:$0xff]
        %v2674 = vld [vmem:[%s890 + $0x18] sm:$0xff]
        %v2675 = vld [vmem:[%s890 + $0x20] sm:$0xff]
        %v2676 = vld [vmem:[%s890 + $0x28] sm:$0xff]
        %v2677 = vld [vmem:[%s890 + $0x30] sm:$0xff]
        %v2678 = vld [vmem:[%s890 + $0x38] sm:$0xff]
        %v2679 = vld [vmem:[%s890 + $0x40] sm:$0xff]
        %v2680 = vld [vmem:[%s890 + $0x48] sm:$0xff]
        %v2681 = vld [vmem:[%s890 + $0x50] sm:$0xff]
        %v2682 = vld [vmem:[%s890 + $0x58] sm:$0xff]
        %v2683 = vld [vmem:[%s890 + $0x60] sm:$0xff]
        %v2684 = vld [vmem:[%s890 + $0x68] sm:$0xff]
        %v2685 = vld [vmem:[%s890 + $0x70] sm:$0xff]
        %v2686 = vld [vmem:[%s890 + $0x78] sm:$0xff]
        %v2687 = vld [vmem:[%s890 + $0x80] sm:$0xff]
        %v2688 = vld [vmem:[%s890 + $0x88] sm:$0xff]
        %v2689 = vld [vmem:[%s890 + $0x90] sm:$0xff]
        %v2690 = vld [vmem:[%s890 + $0x98] sm:$0xff]
        %v2691 = vld [vmem:[%s890 + $0xa0] sm:$0xff]
        %v2692 = vld [vmem:[%s890 + $0xa8] sm:$0xff]
        %v2693 = vld [vmem:[%s890 + $0xb0] sm:$0xff]
        %v2694 = vld [vmem:[%s890 + $0xb8] sm:$0xff]
        %v2695 = vld [vmem:[%s890 + $0xc0] sm:$0xff]
        %v2696 = vld [vmem:[%s890 + $0xc8] sm:$0xff]
        %v2697 = vld [vmem:[%s890 + $0xd0] sm:$0xff]
        %v2698 = vld [vmem:[%s890 + $0xd8] sm:$0xff]
        %v2699 = vld [vmem:[%s890 + $0xe0] sm:$0xff]
        %v2700 = vld [vmem:[%s890 + $0xe8] sm:$0xff]
        %v2701 = vld [vmem:[%s890 + $0xf0] sm:$0xff]
        %v2702 = vld [vmem:[%s890 + $0xf8] sm:$0xff]
        %v2703 = vld [vmem:[#allocation3 + $0x98] sm:$0xff]
        %s2704 = scalar_lea.vmem %s890, 256
        %v2705 = vld [vmem:[%s2704] sm:$0xff]
        %v2706 = vld [vmem:[%s2704 + $0x8] sm:$0xff]
        %v2707 = vld [vmem:[%s2704 + $0x10] sm:$0xff]
        %v2708 = vld [vmem:[%s2704 + $0x18] sm:$0xff]
        %v2709 = vld [vmem:[%s2704 + $0x20] sm:$0xff]
        %v2710 = vld [vmem:[%s2704 + $0x28] sm:$0xff]
        %v2711 = vld [vmem:[%s2704 + $0x30] sm:$0xff]
        %v2712 = vld [vmem:[%s2704 + $0x38] sm:$0xff]
        %v2713 = vld [vmem:[%s2704 + $0x40] sm:$0xff]
        %v2714 = vld [vmem:[%s2704 + $0x48] sm:$0xff]
        %v2715 = vld [vmem:[%s2704 + $0x50] sm:$0xff]
        %v2716 = vld [vmem:[%s2704 + $0x58] sm:$0xff]
        %v2717 = vld [vmem:[%s2704 + $0x60] sm:$0xff]
        %v2718 = vld [vmem:[%s2704 + $0x68] sm:$0xff]
        %v2719 = vld [vmem:[%s2704 + $0x70] sm:$0xff]
        %v2720 = vld [vmem:[%s2704 + $0x78] sm:$0xff]
        %v2721 = vld [vmem:[%s2704 + $0x80] sm:$0xff]
        %v2722 = vld [vmem:[%s2704 + $0x88] sm:$0xff]
        %v2723 = vld [vmem:[%s2704 + $0x90] sm:$0xff]
        %v2724 = vld [vmem:[%s2704 + $0x98] sm:$0xff]
        %v2725 = vld [vmem:[%s2704 + $0xa0] sm:$0xff]
        %v2726 = vld [vmem:[%s2704 + $0xa8] sm:$0xff]
        %v2727 = vld [vmem:[%s2704 + $0xb0] sm:$0xff]
        %v2728 = vld [vmem:[%s2704 + $0xb8] sm:$0xff]
        %v2729 = vld [vmem:[%s2704 + $0xc0] sm:$0xff]
        %v2730 = vld [vmem:[%s2704 + $0xc8] sm:$0xff]
        %v2731 = vld [vmem:[%s2704 + $0xd0] sm:$0xff]
        %v2732 = vld [vmem:[%s2704 + $0xd8] sm:$0xff]
        %v2733 = vld [vmem:[%s2704 + $0xe0] sm:$0xff]
        %v2734 = vld [vmem:[%s2704 + $0xe8] sm:$0xff]
        %v2735 = vld [vmem:[%s2704 + $0xf0] sm:$0xff]
        %v2736 = vld [vmem:[%s2704 + $0xf8] sm:$0xff]
        %v2757 = vunpack.c.l.b16 %v2651
        %v2758 = vunpack.c.h.b16 %v2651
        %v2759 = vunpack.c.l.b16 %v2652
        %v2760 = vunpack.c.h.b16 %v2652
        %v2761 = vunpack.c.l.b16 %v2653
        %v2762 = vunpack.c.h.b16 %v2653
        %v2763 = vunpack.c.l.b16 %v2654
        %v2764 = vunpack.c.h.b16 %v2654
        %v2765 = vunpack.c.l.b16 %v2655
        %v2766 = vunpack.c.h.b16 %v2655
        %v2767 = vunpack.c.l.b16 %v2656
        %v2768 = vunpack.c.h.b16 %v2656
        %v2769 = vunpack.c.l.b16 %v2657
        %v2770 = vunpack.c.h.b16 %v2657
        %v2771 = vunpack.c.l.b16 %v2658
        %v2772 = vunpack.c.h.b16 %v2658
        %v2773 = vunpack.c.l.b16 %v2659
        %v2774 = vunpack.c.h.b16 %v2659
        %v2775 = vunpack.c.l.b16 %v2660
        %v2776 = vunpack.c.h.b16 %v2660
        %v2777 = vunpack.c.l.b16 %v2661
        %v2778 = vunpack.c.h.b16 %v2661
        %v2779 = vunpack.c.l.b16 %v2662
        %v2780 = vunpack.c.h.b16 %v2662
        %v2781 = vunpack.c.l.b16 %v2663
        %v2782 = vunpack.c.h.b16 %v2663
        %v2783 = vunpack.c.l.b16 %v2664
        %v2784 = vunpack.c.h.b16 %v2664
        %v2785 = vunpack.c.l.b16 %v2665
        %v2786 = vunpack.c.h.b16 %v2665
        %v2787 = vunpack.c.l.b16 %v2666
        %v2788 = vunpack.c.h.b16 %v2666
        %v2789 = vunpack.c.l.b16 %v2667
        %v2790 = vunpack.c.h.b16 %v2667
        %v2791 = vunpack.c.l.b16 %v2668
        %v2792 = vunpack.c.h.b16 %v2668
        %v2793 = vunpack.c.l.b16 %v2669
        %v2794 = vunpack.c.h.b16 %v2669
        %v2795 = vunpack.c.l.b16 %v2703
        %v2796 = vunpack.c.h.b16 %v2703
        %v2797 = vpack.c.b16 %v2759, %v2757
        %v2798 = vpack.c.b16 %v2760, %v2758
        %v2799 = vpack.c.b16 %v2763, %v2761
        %v2800 = vpack.c.b16 %v2764, %v2762
        %v2801 = vpack.c.b16 %v2767, %v2765
        %v2802 = vpack.c.b16 %v2768, %v2766
        %v2803 = vpack.c.b16 %v2771, %v2769
        %v2804 = vpack.c.b16 %v2772, %v2770
        %v2805 = vpack.c.b16 %v2775, %v2773
        %v2806 = vpack.c.b16 %v2776, %v2774
        %v2807 = vpack.c.b16 %v2779, %v2777
        %v2808 = vpack.c.b16 %v2780, %v2778
        %v2809 = vpack.c.b16 %v2783, %v2781
        %v2810 = vpack.c.b16 %v2784, %v2782
        %v2811 = vpack.c.b16 %v2787, %v2785
        %v2812 = vpack.c.b16 %v2788, %v2786
        %v2813 = vpack.c.b16 %v2791, %v2789
        %v2814 = vpack.c.b16 %v2792, %v2790
        %v2815 = vpack.c.b16 %v2795, %v2793
        %v2816 = vpack.c.b16 %v2796, %v2794
        %v2818 = vshrl.u32 %v2797, 16
        %v2820 = vshll.u32 %v2797, 16
        %v2822 = vrot.slane %v2820, 1
        %v2823 = vor.u32 %v2818, %v2822
        %v2825 = vshll.u32 %v2799, 16
        %v2827 = vrot.slane %v2825, 1
        %v2828 = vsel %vm2645, %v2823, %v2827
        %v2830 = vshrl.u32 %v2798, 16
        %v2832 = vshll.u32 %v2798, 16
        %v2834 = vrot.slane %v2832, 1
        %v2835 = vor.u32 %v2830, %v2834
        %v2837 = vshll.u32 %v2800, 16
        %v2839 = vrot.slane %v2837, 1
        %v2840 = vsel %vm2645, %v2835, %v2839
        %v2841 = vshrl.u32 %v2799, 16
        %v2843 = vor.u32 %v2841, %v2827
        %v2845 = vshll.u32 %v2801, 16
        %v2847 = vrot.slane %v2845, 1
        %v2848 = vsel %vm2645, %v2843, %v2847
        %v2849 = vshrl.u32 %v2800, 16
        %v2851 = vor.u32 %v2849, %v2839
        %v2853 = vshll.u32 %v2802, 16
        %v2855 = vrot.slane %v2853, 1
        %v2856 = vsel %vm2645, %v2851, %v2855
        %v2857 = vshrl.u32 %v2801, 16
        %v2859 = vor.u32 %v2857, %v2847
        %v2861 = vshll.u32 %v2803, 16
        %v2863 = vrot.slane %v2861, 1
        %v2864 = vsel %vm2645, %v2859, %v2863
        %v2865 = vshrl.u32 %v2802, 16
        %v2867 = vor.u32 %v2865, %v2855
        %v2869 = vshll.u32 %v2804, 16
        %v2871 = vrot.slane %v2869, 1
        %v2872 = vsel %vm2645, %v2867, %v2871
        %v2873 = vshrl.u32 %v2803, 16
        %v2875 = vor.u32 %v2873, %v2863
        %v2877 = vshll.u32 %v2805, 16
        %v2879 = vrot.slane %v2877, 1
        %v2880 = vsel %vm2645, %v2875, %v2879
        %v2881 = vshrl.u32 %v2804, 16
        %v2883 = vor.u32 %v2881, %v2871
        %v2885 = vshll.u32 %v2806, 16
        %v2887 = vrot.slane %v2885, 1
        %v2888 = vsel %vm2645, %v2883, %v2887
        %v2889 = vshrl.u32 %v2805, 16
        %v2891 = vor.u32 %v2889, %v2879
        %v2893 = vshll.u32 %v2807, 16
        %v2895 = vrot.slane %v2893, 1
        %v2896 = vsel %vm2645, %v2891, %v2895
        %v2897 = vshrl.u32 %v2806, 16
        %v2899 = vor.u32 %v2897, %v2887
        %v2901 = vshll.u32 %v2808, 16
        %v2903 = vrot.slane %v2901, 1
        %v2904 = vsel %vm2645, %v2899, %v2903
        %v2905 = vshrl.u32 %v2807, 16
        %v2907 = vor.u32 %v2905, %v2895
        %v2909 = vshll.u32 %v2809, 16
        %v2911 = vrot.slane %v2909, 1
        %v2912 = vsel %vm2645, %v2907, %v2911
        %v2913 = vshrl.u32 %v2808, 16
        %v2915 = vor.u32 %v2913, %v2903
        %v2917 = vshll.u32 %v2810, 16
        %v2919 = vrot.slane %v2917, 1
        %v2920 = vsel %vm2645, %v2915, %v2919
        %v2921 = vshrl.u32 %v2809, 16
        %v2923 = vor.u32 %v2921, %v2911
        %v2925 = vshll.u32 %v2811, 16
        %v2927 = vrot.slane %v2925, 1
        %v2928 = vsel %vm2645, %v2923, %v2927
        %v2929 = vshrl.u32 %v2810, 16
        %v2931 = vor.u32 %v2929, %v2919
        %v2933 = vshll.u32 %v2812, 16
        %v2935 = vrot.slane %v2933, 1
        %v2936 = vsel %vm2645, %v2931, %v2935
        %v2937 = vshrl.u32 %v2811, 16
        %v2939 = vor.u32 %v2937, %v2927
        %v2941 = vshll.u32 %v2813, 16
        %v2943 = vrot.slane %v2941, 1
        %v2944 = vsel %vm2645, %v2939, %v2943
        %v2945 = vshrl.u32 %v2812, 16
        %v2947 = vor.u32 %v2945, %v2935
        %v2949 = vshll.u32 %v2814, 16
        %v2951 = vrot.slane %v2949, 1
        %v2952 = vsel %vm2645, %v2947, %v2951
        %v2953 = vshrl.u32 %v2813, 16
        %v2955 = vor.u32 %v2953, %v2943
        %v2957 = vshll.u32 %v2815, 16
        %v2959 = vrot.slane %v2957, 1
        %v2960 = vsel %vm2645, %v2955, %v2959
        %v2961 = vshrl.u32 %v2814, 16
        %v2963 = vor.u32 %v2961, %v2951
        %v2965 = vshll.u32 %v2816, 16
        %v2967 = vrot.slane %v2965, 1
        %v2968 = vsel %vm2645, %v2963, %v2967
        %v2969 = vshrl.u32 %v2815, 16
        %v2971 = vor.u32 %v2969, %v2959
        %v2972 = vshrl.u32 %v2816, 16
        %v2974 = vor.u32 %v2972, %v2967
        %v3027 = vunpack.c.l.b16 %v2705
        %v3028 = vunpack.c.h.b16 %v2705
        %v3029 = vunpack.c.l.b16 %v2706
        %v3030 = vunpack.c.h.b16 %v2706
        %v3031 = vunpack.c.l.b16 %v2707
        %v3032 = vunpack.c.h.b16 %v2707
        %v3033 = vunpack.c.l.b16 %v2708
        %v3034 = vunpack.c.h.b16 %v2708
        %v3035 = vunpack.c.l.b16 %v2709
        %v3036 = vunpack.c.h.b16 %v2709
        %v3037 = vunpack.c.l.b16 %v2710
        %v3038 = vunpack.c.h.b16 %v2710
        %v3039 = vunpack.c.l.b16 %v2711
        %v3040 = vunpack.c.h.b16 %v2711
        %v3041 = vunpack.c.l.b16 %v2712
        %v3042 = vunpack.c.h.b16 %v2712
        %v3043 = vunpack.c.l.b16 %v2713
        %v3044 = vunpack.c.h.b16 %v2713
        %v3045 = vunpack.c.l.b16 %v2714
        %v3046 = vunpack.c.h.b16 %v2714
        %v3047 = vunpack.c.l.b16 %v2715
        %v3048 = vunpack.c.h.b16 %v2715
        %v3049 = vunpack.c.l.b16 %v2716
        %v3050 = vunpack.c.h.b16 %v2716
        %v3051 = vunpack.c.l.b16 %v2717
        %v3052 = vunpack.c.h.b16 %v2717
        %v3053 = vunpack.c.l.b16 %v2718
        %v3054 = vunpack.c.h.b16 %v2718
        %v3055 = vunpack.c.l.b16 %v2719
        %v3056 = vunpack.c.h.b16 %v2719
        %v3057 = vunpack.c.l.b16 %v2720
        %v3058 = vunpack.c.h.b16 %v2720
        %v3059 = vunpack.c.l.b16 %v2721
        %v3060 = vunpack.c.h.b16 %v2721
        %v3061 = vunpack.c.l.b16 %v2722
        %v3062 = vunpack.c.h.b16 %v2722
        %v3063 = vunpack.c.l.b16 %v2723
        %v3064 = vunpack.c.h.b16 %v2723
        %v3065 = vunpack.c.l.b16 %v2724
        %v3066 = vunpack.c.h.b16 %v2724
        %v3067 = vunpack.c.l.b16 %v2725
        %v3068 = vunpack.c.h.b16 %v2725
        %v3069 = vunpack.c.l.b16 %v2726
        %v3070 = vunpack.c.h.b16 %v2726
        %v3071 = vunpack.c.l.b16 %v2727
        %v3072 = vunpack.c.h.b16 %v2727
        %v3073 = vunpack.c.l.b16 %v2728
        %v3074 = vunpack.c.h.b16 %v2728
        %v3075 = vunpack.c.l.b16 %v2729
        %v3076 = vunpack.c.h.b16 %v2729
        %v3077 = vunpack.c.l.b16 %v2730
        %v3078 = vunpack.c.h.b16 %v2730
        %v3079 = vunpack.c.l.b16 %v2731
        %v3080 = vunpack.c.h.b16 %v2731
        %v3081 = vunpack.c.l.b16 %v2732
        %v3082 = vunpack.c.h.b16 %v2732
        %v3083 = vunpack.c.l.b16 %v2733
        %v3084 = vunpack.c.h.b16 %v2733
        %v3085 = vunpack.c.l.b16 %v2734
        %v3086 = vunpack.c.h.b16 %v2734
        %v3087 = vunpack.c.l.b16 %v2735
        %v3088 = vunpack.c.h.b16 %v2735
        %v3089 = vunpack.c.l.b16 %v2736
        %v3090 = vunpack.c.h.b16 %v2736
        %v3091 = vpack.c.b16 %v3029, %v3027
        %v3092 = vpack.c.b16 %v3030, %v3028
        %v3093 = vpack.c.b16 %v3033, %v3031
        %v3094 = vpack.c.b16 %v3034, %v3032
        %v3095 = vpack.c.b16 %v3037, %v3035
        %v3096 = vpack.c.b16 %v3038, %v3036
        %v3097 = vpack.c.b16 %v3041, %v3039
        %v3098 = vpack.c.b16 %v3042, %v3040
        %v3099 = vpack.c.b16 %v3045, %v3043
        %v3100 = vpack.c.b16 %v3046, %v3044
        %v3101 = vpack.c.b16 %v3049, %v3047
        %v3102 = vpack.c.b16 %v3050, %v3048
        %v3103 = vpack.c.b16 %v3053, %v3051
        %v3104 = vpack.c.b16 %v3054, %v3052
        %v3105 = vpack.c.b16 %v3057, %v3055
        %v3106 = vpack.c.b16 %v3058, %v3056
        %v3107 = vpack.c.b16 %v3061, %v3059
        %v3108 = vpack.c.b16 %v3062, %v3060
        %v3109 = vpack.c.b16 %v3065, %v3063
        %v3110 = vpack.c.b16 %v3066, %v3064
        %v3111 = vpack.c.b16 %v3069, %v3067
        %v3112 = vpack.c.b16 %v3070, %v3068
        %v3113 = vpack.c.b16 %v3073, %v3071
        %v3114 = vpack.c.b16 %v3074, %v3072
        %v3115 = vpack.c.b16 %v3077, %v3075
        %v3116 = vpack.c.b16 %v3078, %v3076
        %v3117 = vpack.c.b16 %v3081, %v3079
        %v3118 = vpack.c.b16 %v3082, %v3080
        %v3119 = vpack.c.b16 %v3085, %v3083
        %v3120 = vpack.c.b16 %v3086, %v3084
        %v3121 = vpack.c.b16 %v3089, %v3087
        %v3122 = vpack.c.b16 %v3090, %v3088
        %3155 = vmatpush.bf16.msra.mxu0 %v3105
        %3156 = vmatpush.bf16.msra.mxu0 %v3103
        %3157 = vmatpush.bf16.msra.mxu0 %v3101
        %3158 = vmatpush.bf16.msra.mxu0 %v3099
        %3159 = vmatpush.bf16.msra.mxu0 %v3097
        %3160 = vmatpush.bf16.msra.mxu0 %v3095
        %3161 = vmatpush.bf16.msra.mxu0 %v3093
        %3162 = vmatpush.bf16.msra.mxu0 %v3091
        %3163 = vmatmul.bf16.gmra.mxu0 %v2828
        %v3164 = vpop.f32.mrf.mxu0
        %v3165 = vadd.f32 0.0, %v3164
        %v3166 = vpop.f32.mrf.mxu0
        %v3167 = vadd.f32 0.0, %v3166
        %3168 = vmatmul.bf16.gmra.mxu0 %v2848
        %v3169 = vpop.f32.mrf.mxu0
        %v3170 = vadd.f32 0.0, %v3169
        %v3171 = vpop.f32.mrf.mxu0
        %v3172 = vadd.f32 0.0, %v3171
        %3173 = vmatmul.bf16.gmra.mxu0 %v2864
        %v3174 = vpop.f32.mrf.mxu0
        %v3175 = vadd.f32 0.0, %v3174
        %v3176 = vpop.f32.mrf.mxu0
        %v3177 = vadd.f32 0.0, %v3176
        %3178 = vmatmul.bf16.gmra.mxu0 %v2880
        %v3179 = vpop.f32.mrf.mxu0
        %v3180 = vadd.f32 0.0, %v3179
        %v3181 = vpop.f32.mrf.mxu0
        %v3182 = vadd.f32 0.0, %v3181
        %3183 = vmatmul.bf16.gmra.mxu0 %v2896
        %v3184 = vpop.f32.mrf.mxu0
        %v3185 = vadd.f32 0.0, %v3184
        %v3186 = vpop.f32.mrf.mxu0
        %v3187 = vadd.f32 0.0, %v3186
        %3188 = vmatmul.bf16.gmra.mxu0 %v2912
        %v3189 = vpop.f32.mrf.mxu0
        %v3190 = vadd.f32 0.0, %v3189
        %v3191 = vpop.f32.mrf.mxu0
        %v3192 = vadd.f32 0.0, %v3191
        %3193 = vmatmul.bf16.gmra.mxu0 %v2928
        %v3194 = vpop.f32.mrf.mxu0
        %v3195 = vadd.f32 0.0, %v3194
        %v3196 = vpop.f32.mrf.mxu0
        %v3197 = vadd.f32 0.0, %v3196
        %3198 = vmatmul.bf16.gmra.mxu0 %v2944
        %v3199 = vpop.f32.mrf.mxu0
        %v3200 = vadd.f32 0.0, %v3199
        %v3201 = vpop.f32.mrf.mxu0
        %v3202 = vadd.f32 0.0, %v3201
        %3203 = vmatmul.bf16.gmra.mxu0 %v2960
        %v3204 = vpop.f32.mrf.mxu0
        %v3205 = vadd.f32 0.0, %v3204
        %v3206 = vpop.f32.mrf.mxu0
        %v3207 = vadd.f32 0.0, %v3206
        %3208 = vmatmul.bf16.gmra.mxu0 %v2971
        %v3209 = vpop.f32.mrf.mxu0
        %v3210 = vadd.f32 0.0, %v3209
        %v3211 = vpop.f32.mrf.mxu0
        %v3212 = vadd.f32 0.0, %v3211
        %3213 = vdwg.mxu0
        %3214 = vmatpush.bf16.msra.mxu0 %v3121
        %3215 = vmatpush.bf16.msra.mxu0 %v3119
        %3216 = vmatpush.bf16.msra.mxu0 %v3117
        %3217 = vmatpush.bf16.msra.mxu0 %v3115
        %3218 = vmatpush.bf16.msra.mxu0 %v3113
        %3219 = vmatpush.bf16.msra.mxu0 %v3111
        %3220 = vmatpush.bf16.msra.mxu0 %v3109
        %3221 = vmatpush.bf16.msra.mxu0 %v3107
        %3222 = vmatmul.bf16.gmra.mxu0 %v2840
        %v3223 = vpop.f32.mrf.mxu0
        %v3224 = vadd.f32 %v3165, %v3223
        %v3225 = vpop.f32.mrf.mxu0
        %v3226 = vadd.f32 %v3167, %v3225
        %3227 = vmatmul.bf16.gmra.mxu0 %v2856
        %v3228 = vpop.f32.mrf.mxu0
        %v3229 = vadd.f32 %v3170, %v3228
        %v3230 = vpop.f32.mrf.mxu0
        %v3231 = vadd.f32 %v3172, %v3230
        %3232 = vmatmul.bf16.gmra.mxu0 %v2872
        %v3233 = vpop.f32.mrf.mxu0
        %v3234 = vadd.f32 %v3175, %v3233
        %v3235 = vpop.f32.mrf.mxu0
        %v3236 = vadd.f32 %v3177, %v3235
        %3237 = vmatmul.bf16.gmra.mxu0 %v2888
        %v3238 = vpop.f32.mrf.mxu0
        %v3239 = vadd.f32 %v3180, %v3238
        %v3240 = vpop.f32.mrf.mxu0
        %v3241 = vadd.f32 %v3182, %v3240
        %3242 = vmatmul.bf16.gmra.mxu0 %v2904
        %v3243 = vpop.f32.mrf.mxu0
        %v3244 = vadd.f32 %v3185, %v3243
        %v3245 = vpop.f32.mrf.mxu0
        %v3246 = vadd.f32 %v3187, %v3245
        %3247 = vmatmul.bf16.gmra.mxu0 %v2920
        %v3248 = vpop.f32.mrf.mxu0
        %v3249 = vadd.f32 %v3190, %v3248
        %v3250 = vpop.f32.mrf.mxu0
        %v3251 = vadd.f32 %v3192, %v3250
        %3252 = vmatmul.bf16.gmra.mxu0 %v2936
        %v3253 = vpop.f32.mrf.mxu0
        %v3254 = vadd.f32 %v3195, %v3253
        %v3255 = vpop.f32.mrf.mxu0
        %v3256 = vadd.f32 %v3197, %v3255
        %3257 = vmatmul.bf16.gmra.mxu0 %v2952
        %v3258 = vpop.f32.mrf.mxu0
        %v3259 = vadd.f32 %v3200, %v3258
        %v3260 = vpop.f32.mrf.mxu0
        %v3261 = vadd.f32 %v3202, %v3260
        %3262 = vmatmul.bf16.gmra.mxu0 %v2968
        %v3263 = vpop.f32.mrf.mxu0
        %v3264 = vadd.f32 %v3205, %v3263
        %v3265 = vpop.f32.mrf.mxu0
        %v3266 = vadd.f32 %v3207, %v3265
        %3267 = vmatmul.bf16.gmra.mxu0 %v2974
        %v3268 = vpop.f32.mrf.mxu0
        %v3269 = vadd.f32 %v3210, %v3268
        %v3270 = vpop.f32.mrf.mxu0
        %v3271 = vadd.f32 %v3212, %v3270
        %3272 = vdwg.mxu0
        %3273 = vmatpush.bf16.msra.mxu0 %v3106
        %3274 = vmatpush.bf16.msra.mxu0 %v3104
        %3275 = vmatpush.bf16.msra.mxu0 %v3102
        %3276 = vmatpush.bf16.msra.mxu0 %v3100
        %3277 = vmatpush.bf16.msra.mxu0 %v3098
        %3278 = vmatpush.bf16.msra.mxu0 %v3096
        %3279 = vmatpush.bf16.msra.mxu0 %v3094
        %3280 = vmatpush.bf16.msra.mxu0 %v3092
        %3281 = vmatmul.bf16.gmra.mxu0 %v2828
        %v3282 = vpop.f32.mrf.mxu0
        %v3283 = vadd.f32 0.0, %v3282
        %v3284 = vpop.f32.mrf.mxu0
        %v3285 = vadd.f32 0.0, %v3284
        %3286 = vmatmul.bf16.gmra.mxu0 %v2848
        %v3287 = vpop.f32.mrf.mxu0
        %v3288 = vadd.f32 0.0, %v3287
        %v3289 = vpop.f32.mrf.mxu0
        %v3290 = vadd.f32 0.0, %v3289
        %3291 = vmatmul.bf16.gmra.mxu0 %v2864
        %v3292 = vpop.f32.mrf.mxu0
        %v3293 = vadd.f32 0.0, %v3292
        %v3294 = vpop.f32.mrf.mxu0
        %v3295 = vadd.f32 0.0, %v3294
        %3296 = vmatmul.bf16.gmra.mxu0 %v2880
        %v3297 = vpop.f32.mrf.mxu0
        %v3298 = vadd.f32 0.0, %v3297
        %v3299 = vpop.f32.mrf.mxu0
        %v3300 = vadd.f32 0.0, %v3299
        %3301 = vmatmul.bf16.gmra.mxu0 %v2896
        %v3302 = vpop.f32.mrf.mxu0
        %v3303 = vadd.f32 0.0, %v3302
        %v3304 = vpop.f32.mrf.mxu0
        %v3305 = vadd.f32 0.0, %v3304
        %3306 = vmatmul.bf16.gmra.mxu0 %v2912
        %v3307 = vpop.f32.mrf.mxu0
        %v3308 = vadd.f32 0.0, %v3307
        %v3309 = vpop.f32.mrf.mxu0
        %v3310 = vadd.f32 0.0, %v3309
        %3311 = vmatmul.bf16.gmra.mxu0 %v2928
        %v3312 = vpop.f32.mrf.mxu0
        %v3313 = vadd.f32 0.0, %v3312
        %v3314 = vpop.f32.mrf.mxu0
        %v3315 = vadd.f32 0.0, %v3314
        %3316 = vmatmul.bf16.gmra.mxu0 %v2944
        %v3317 = vpop.f32.mrf.mxu0
        %v3318 = vadd.f32 0.0, %v3317
        %v3319 = vpop.f32.mrf.mxu0
        %v3320 = vadd.f32 0.0, %v3319
        %3321 = vmatmul.bf16.gmra.mxu0 %v2960
        %v3322 = vpop.f32.mrf.mxu0
        %v3323 = vadd.f32 0.0, %v3322
        %v3324 = vpop.f32.mrf.mxu0
        %v3325 = vadd.f32 0.0, %v3324
        %3326 = vmatmul.bf16.gmra.mxu0 %v2971
        %v3327 = vpop.f32.mrf.mxu0
        %v3328 = vadd.f32 0.0, %v3327
        %v3329 = vpop.f32.mrf.mxu0
        %v3330 = vadd.f32 0.0, %v3329
        %3331 = vdwg.mxu0
        %3332 = vmatpush.bf16.msra.mxu0 %v3122
        %3333 = vmatpush.bf16.msra.mxu0 %v3120
        %3334 = vmatpush.bf16.msra.mxu0 %v3118
        %3335 = vmatpush.bf16.msra.mxu0 %v3116
        %3336 = vmatpush.bf16.msra.mxu0 %v3114
        %3337 = vmatpush.bf16.msra.mxu0 %v3112
        %3338 = vmatpush.bf16.msra.mxu0 %v3110
        %3339 = vmatpush.bf16.msra.mxu0 %v3108
        %3340 = vmatmul.bf16.gmra.mxu0 %v2840
        %v3341 = vpop.f32.mrf.mxu0
        %v3342 = vadd.f32 %v3283, %v3341
        %v3343 = vpop.f32.mrf.mxu0
        %v3344 = vadd.f32 %v3285, %v3343
        %3345 = vmatmul.bf16.gmra.mxu0 %v2856
        %v3346 = vpop.f32.mrf.mxu0
        %v3347 = vadd.f32 %v3288, %v3346
        %v3348 = vpop.f32.mrf.mxu0
        %v3349 = vadd.f32 %v3290, %v3348
        %3350 = vmatmul.bf16.gmra.mxu0 %v2872
        %v3351 = vpop.f32.mrf.mxu0
        %v3352 = vadd.f32 %v3293, %v3351
        %v3353 = vpop.f32.mrf.mxu0
        %v3354 = vadd.f32 %v3295, %v3353
        %3355 = vmatmul.bf16.gmra.mxu0 %v2888
        %v3356 = vpop.f32.mrf.mxu0
        %v3357 = vadd.f32 %v3298, %v3356
        %v3358 = vpop.f32.mrf.mxu0
        %v3359 = vadd.f32 %v3300, %v3358
        %3360 = vmatmul.bf16.gmra.mxu0 %v2904
        %v3361 = vpop.f32.mrf.mxu0
        %v3362 = vadd.f32 %v3303, %v3361
        %v3363 = vpop.f32.mrf.mxu0
        %v3364 = vadd.f32 %v3305, %v3363
        %3365 = vmatmul.bf16.gmra.mxu0 %v2920
        %v3366 = vpop.f32.mrf.mxu0
        %v3367 = vadd.f32 %v3308, %v3366
        %v3368 = vpop.f32.mrf.mxu0
        %v3369 = vadd.f32 %v3310, %v3368
        %3370 = vmatmul.bf16.gmra.mxu0 %v2936
        %v3371 = vpop.f32.mrf.mxu0
        %v3372 = vadd.f32 %v3313, %v3371
        %v3373 = vpop.f32.mrf.mxu0
        %v3374 = vadd.f32 %v3315, %v3373
        %3375 = vmatmul.bf16.gmra.mxu0 %v2952
        %v3376 = vpop.f32.mrf.mxu0
        %v3377 = vadd.f32 %v3318, %v3376
        %v3378 = vpop.f32.mrf.mxu0
        %v3379 = vadd.f32 %v3320, %v3378
        %3380 = vmatmul.bf16.gmra.mxu0 %v2968
        %v3381 = vpop.f32.mrf.mxu0
        %v3382 = vadd.f32 %v3323, %v3381
        %v3383 = vpop.f32.mrf.mxu0
        %v3384 = vadd.f32 %v3325, %v3383
        %3385 = vmatmul.bf16.gmra.mxu0 %v2974
        %v3386 = vpop.f32.mrf.mxu0
        %v3387 = vadd.f32 %v3328, %v3386
        %v3388 = vpop.f32.mrf.mxu0
        %v3389 = vadd.f32 %v3330, %v3388
        %3390 = vdwg.mxu0
        %v3392 = vunpack.c.l.b16 %v2670
        %v3393 = vunpack.c.h.b16 %v2670
        %v3394 = vpack.c.b16 %v3392, %v2793
        %v3395 = vpack.c.b16 %v3393, %v2794
        %v3448 = vunpack.c.l.b16 %v2671
        %v3449 = vunpack.c.h.b16 %v2671
        %v3450 = vunpack.c.l.b16 %v2672
        %v3451 = vunpack.c.h.b16 %v2672
        %v3452 = vunpack.c.l.b16 %v2673
        %v3453 = vunpack.c.h.b16 %v2673
        %v3454 = vunpack.c.l.b16 %v2674
        %v3455 = vunpack.c.h.b16 %v2674
        %v3456 = vunpack.c.l.b16 %v2675
        %v3457 = vunpack.c.h.b16 %v2675
        %v3458 = vunpack.c.l.b16 %v2676
        %v3459 = vunpack.c.h.b16 %v2676
        %v3460 = vunpack.c.l.b16 %v2677
        %v3461 = vunpack.c.h.b16 %v2677
        %v3462 = vunpack.c.l.b16 %v2678
        %v3463 = vunpack.c.h.b16 %v2678
        %v3464 = vunpack.c.l.b16 %v2679
        %v3465 = vunpack.c.h.b16 %v2679
        %v3466 = vunpack.c.l.b16 %v2680
        %v3467 = vunpack.c.h.b16 %v2680
        %v3468 = vunpack.c.l.b16 %v2681
        %v3469 = vunpack.c.h.b16 %v2681
        %v3470 = vunpack.c.l.b16 %v2682
        %v3471 = vunpack.c.h.b16 %v2682
        %v3472 = vunpack.c.l.b16 %v2683
        %v3473 = vunpack.c.h.b16 %v2683
        %v3474 = vunpack.c.l.b16 %v2684
        %v3475 = vunpack.c.h.b16 %v2684
        %v3476 = vunpack.c.l.b16 %v2685
        %v3477 = vunpack.c.h.b16 %v2685
        %v3478 = vunpack.c.l.b16 %v2686
        %v3479 = vunpack.c.h.b16 %v2686
        %v3480 = vunpack.c.l.b16 %v2687
        %v3481 = vunpack.c.h.b16 %v2687
        %v3482 = vunpack.c.l.b16 %v2688
        %v3483 = vunpack.c.h.b16 %v2688
        %v3484 = vunpack.c.l.b16 %v2689
        %v3485 = vunpack.c.h.b16 %v2689
        %v3486 = vunpack.c.l.b16 %v2690
        %v3487 = vunpack.c.h.b16 %v2690
        %v3488 = vunpack.c.l.b16 %v2691
        %v3489 = vunpack.c.h.b16 %v2691
        %v3490 = vunpack.c.l.b16 %v2692
        %v3491 = vunpack.c.h.b16 %v2692
        %v3492 = vunpack.c.l.b16 %v2693
        %v3493 = vunpack.c.h.b16 %v2693
        %v3494 = vunpack.c.l.b16 %v2694
        %v3495 = vunpack.c.h.b16 %v2694
        %v3496 = vunpack.c.l.b16 %v2695
        %v3497 = vunpack.c.h.b16 %v2695
        %v3498 = vunpack.c.l.b16 %v2696
        %v3499 = vunpack.c.h.b16 %v2696
        %v3500 = vunpack.c.l.b16 %v2697
        %v3501 = vunpack.c.h.b16 %v2697
        %v3502 = vunpack.c.l.b16 %v2698
        %v3503 = vunpack.c.h.b16 %v2698
        %v3504 = vunpack.c.l.b16 %v2699
        %v3505 = vunpack.c.h.b16 %v2699
        %v3506 = vunpack.c.l.b16 %v2700
        %v3507 = vunpack.c.h.b16 %v2700
        %v3508 = vunpack.c.l.b16 %v2701
        %v3509 = vunpack.c.h.b16 %v2701
        %v3510 = vunpack.c.l.b16 %v2702
        %v3511 = vunpack.c.h.b16 %v2702
        %v3512 = vpack.c.b16 %v3450, %v3448
        %v3513 = vpack.c.b16 %v3451, %v3449
        %v3514 = vpack.c.b16 %v3454, %v3452
        %v3515 = vpack.c.b16 %v3455, %v3453
        %v3516 = vpack.c.b16 %v3458, %v3456
        %v3517 = vpack.c.b16 %v3459, %v3457
        %v3518 = vpack.c.b16 %v3462, %v3460
        %v3519 = vpack.c.b16 %v3463, %v3461
        %v3520 = vpack.c.b16 %v3466, %v3464
        %v3521 = vpack.c.b16 %v3467, %v3465
        %v3522 = vpack.c.b16 %v3470, %v3468
        %v3523 = vpack.c.b16 %v3471, %v3469
        %v3524 = vpack.c.b16 %v3474, %v3472
        %v3525 = vpack.c.b16 %v3475, %v3473
        %v3526 = vpack.c.b16 %v3478, %v3476
        %v3527 = vpack.c.b16 %v3479, %v3477
        %v3528 = vpack.c.b16 %v3482, %v3480
        %v3529 = vpack.c.b16 %v3483, %v3481
        %v3530 = vpack.c.b16 %v3486, %v3484
        %v3531 = vpack.c.b16 %v3487, %v3485
        %v3532 = vpack.c.b16 %v3490, %v3488
        %v3533 = vpack.c.b16 %v3491, %v3489
        %v3534 = vpack.c.b16 %v3494, %v3492
        %v3535 = vpack.c.b16 %v3495, %v3493
        %v3536 = vpack.c.b16 %v3498, %v3496
        %v3537 = vpack.c.b16 %v3499, %v3497
        %v3538 = vpack.c.b16 %v3502, %v3500
        %v3539 = vpack.c.b16 %v3503, %v3501
        %v3540 = vpack.c.b16 %v3506, %v3504
        %v3541 = vpack.c.b16 %v3507, %v3505
        %v3542 = vpack.c.b16 %v3510, %v3508
        %v3543 = vpack.c.b16 %v3511, %v3509
        %3576 = vmatpush.bf16.msra.mxu0 %v3526
        %3577 = vmatpush.bf16.msra.mxu0 %v3524
        %3578 = vmatpush.bf16.msra.mxu0 %v3522
        %3579 = vmatpush.bf16.msra.mxu0 %v3520
        %3580 = vmatpush.bf16.msra.mxu0 %v3518
        %3581 = vmatpush.bf16.msra.mxu0 %v3516
        %3582 = vmatpush.bf16.msra.mxu0 %v3514
        %3583 = vmatpush.bf16.msra.mxu0 %v3512
        %3584 = vmatmul.bf16.gmra.mxu0 %v2797
        %v3585 = vpop.f32.mrf.mxu0
        %v3586 = vadd.f32 %v3224, %v3585
        %v3587 = vpop.f32.mrf.mxu0
        %v3588 = vadd.f32 %v3226, %v3587
        %3589 = vmatmul.bf16.gmra.mxu0 %v2799
        %v3590 = vpop.f32.mrf.mxu0
        %v3591 = vadd.f32 %v3229, %v3590
        %v3592 = vpop.f32.mrf.mxu0
        %v3593 = vadd.f32 %v3231, %v3592
        %3594 = vmatmul.bf16.gmra.mxu0 %v2801
        %v3595 = vpop.f32.mrf.mxu0
        %v3596 = vadd.f32 %v3234, %v3595
        %v3597 = vpop.f32.mrf.mxu0
        %v3598 = vadd.f32 %v3236, %v3597
        %3599 = vmatmul.bf16.gmra.mxu0 %v2803
        %v3600 = vpop.f32.mrf.mxu0
        %v3601 = vadd.f32 %v3239, %v3600
        %v3602 = vpop.f32.mrf.mxu0
        %v3603 = vadd.f32 %v3241, %v3602
        %3604 = vmatmul.bf16.gmra.mxu0 %v2805
        %v3605 = vpop.f32.mrf.mxu0
        %v3606 = vadd.f32 %v3244, %v3605
        %v3607 = vpop.f32.mrf.mxu0
        %v3608 = vadd.f32 %v3246, %v3607
        %3609 = vmatmul.bf16.gmra.mxu0 %v2807
        %v3610 = vpop.f32.mrf.mxu0
        %v3611 = vadd.f32 %v3249, %v3610
        %v3612 = vpop.f32.mrf.mxu0
        %v3613 = vadd.f32 %v3251, %v3612
        %3614 = vmatmul.bf16.gmra.mxu0 %v2809
        %v3615 = vpop.f32.mrf.mxu0
        %v3616 = vadd.f32 %v3254, %v3615
        %v3617 = vpop.f32.mrf.mxu0
        %v3618 = vadd.f32 %v3256, %v3617
        %3619 = vmatmul.bf16.gmra.mxu0 %v2811
        %v3620 = vpop.f32.mrf.mxu0
        %v3621 = vadd.f32 %v3259, %v3620
        %v3622 = vpop.f32.mrf.mxu0
        %v3623 = vadd.f32 %v3261, %v3622
        %3624 = vmatmul.bf16.gmra.mxu0 %v2813
        %v3625 = vpop.f32.mrf.mxu0
        %v3626 = vadd.f32 %v3264, %v3625
        %v3627 = vpop.f32.mrf.mxu0
        %v3628 = vadd.f32 %v3266, %v3627
        %3629 = vmatmul.bf16.gmra.mxu0 %v3394
        %v3630 = vpop.f32.mrf.mxu0
        %v3631 = vadd.f32 %v3269, %v3630
        %v3632 = vpop.f32.mrf.mxu0
        %v3633 = vadd.f32 %v3271, %v3632
        %3634 = vdwg.mxu0
        %3635 = vmatpush.bf16.msra.mxu0 %v3542
        %3636 = vmatpush.bf16.msra.mxu0 %v3540
        %3637 = vmatpush.bf16.msra.mxu0 %v3538
        %3638 = vmatpush.bf16.msra.mxu0 %v3536
        %3639 = vmatpush.bf16.msra.mxu0 %v3534
        %3640 = vmatpush.bf16.msra.mxu0 %v3532
        %3641 = vmatpush.bf16.msra.mxu0 %v3530
        %3642 = vmatpush.bf16.msra.mxu0 %v3528
        %3643 = vmatmul.bf16.gmra.mxu0 %v2798
        %v3644 = vpop.f32.mrf.mxu0
        %v3645 = vadd.f32 %v3586, %v3644
        %v3646 = vpop.f32.mrf.mxu0
        %v3647 = vadd.f32 %v3588, %v3646
        %3648 = vmatmul.bf16.gmra.mxu0 %v2800
        %v3649 = vpop.f32.mrf.mxu0
        %v3650 = vadd.f32 %v3591, %v3649
        %v3651 = vpop.f32.mrf.mxu0
        %v3652 = vadd.f32 %v3593, %v3651
        %3653 = vmatmul.bf16.gmra.mxu0 %v2802
        %v3654 = vpop.f32.mrf.mxu0
        %v3655 = vadd.f32 %v3596, %v3654
        %v3656 = vpop.f32.mrf.mxu0
        %v3657 = vadd.f32 %v3598, %v3656
        %3658 = vmatmul.bf16.gmra.mxu0 %v2804
        %v3659 = vpop.f32.mrf.mxu0
        %v3660 = vadd.f32 %v3601, %v3659
        %v3661 = vpop.f32.mrf.mxu0
        %v3662 = vadd.f32 %v3603, %v3661
        %3663 = vmatmul.bf16.gmra.mxu0 %v2806
        %v3664 = vpop.f32.mrf.mxu0
        %v3665 = vadd.f32 %v3606, %v3664
        %v3666 = vpop.f32.mrf.mxu0
        %v3667 = vadd.f32 %v3608, %v3666
        %3668 = vmatmul.bf16.gmra.mxu0 %v2808
        %v3669 = vpop.f32.mrf.mxu0
        %v3670 = vadd.f32 %v3611, %v3669
        %v3671 = vpop.f32.mrf.mxu0
        %v3672 = vadd.f32 %v3613, %v3671
        %3673 = vmatmul.bf16.gmra.mxu0 %v2810
        %v3674 = vpop.f32.mrf.mxu0
        %v3675 = vadd.f32 %v3616, %v3674
        %v3676 = vpop.f32.mrf.mxu0
        %v3677 = vadd.f32 %v3618, %v3676
        %3678 = vmatmul.bf16.gmra.mxu0 %v2812
        %v3679 = vpop.f32.mrf.mxu0
        %v3680 = vadd.f32 %v3621, %v3679
        %v3681 = vpop.f32.mrf.mxu0
        %v3682 = vadd.f32 %v3623, %v3681
        %3683 = vmatmul.bf16.gmra.mxu0 %v2814
        %v3684 = vpop.f32.mrf.mxu0
        %v3685 = vadd.f32 %v3626, %v3684
        %v3686 = vpop.f32.mrf.mxu0
        %v3687 = vadd.f32 %v3628, %v3686
        %3688 = vmatmul.bf16.gmra.mxu0 %v3395
        %v3689 = vpop.f32.mrf.mxu0
        %v3690 = vadd.f32 %v3631, %v3689
        %v3691 = vpop.f32.mrf.mxu0
        %v3692 = vadd.f32 %v3633, %v3691
        %3693 = vdwg.mxu0
        %3694 = vmatpush.bf16.msra.mxu0 %v3527
        %3695 = vmatpush.bf16.msra.mxu0 %v3525
        %3696 = vmatpush.bf16.msra.mxu0 %v3523
        %3697 = vmatpush.bf16.msra.mxu0 %v3521
        %3698 = vmatpush.bf16.msra.mxu0 %v3519
        %3699 = vmatpush.bf16.msra.mxu0 %v3517
        %3700 = vmatpush.bf16.msra.mxu0 %v3515
        %3701 = vmatpush.bf16.msra.mxu0 %v3513
        %3702 = vmatmul.bf16.gmra.mxu0 %v2797
        %v3703 = vpop.f32.mrf.mxu0
        %v3704 = vadd.f32 %v3342, %v3703
        %v3705 = vpop.f32.mrf.mxu0
        %v3706 = vadd.f32 %v3344, %v3705
        %3707 = vmatmul.bf16.gmra.mxu0 %v2799
        %v3708 = vpop.f32.mrf.mxu0
        %v3709 = vadd.f32 %v3347, %v3708
        %v3710 = vpop.f32.mrf.mxu0
        %v3711 = vadd.f32 %v3349, %v3710
        %3712 = vmatmul.bf16.gmra.mxu0 %v2801
        %v3713 = vpop.f32.mrf.mxu0
        %v3714 = vadd.f32 %v3352, %v3713
        %v3715 = vpop.f32.mrf.mxu0
        %v3716 = vadd.f32 %v3354, %v3715
        %3717 = vmatmul.bf16.gmra.mxu0 %v2803
        %v3718 = vpop.f32.mrf.mxu0
        %v3719 = vadd.f32 %v3357, %v3718
        %v3720 = vpop.f32.mrf.mxu0
        %v3721 = vadd.f32 %v3359, %v3720
        %3722 = vmatmul.bf16.gmra.mxu0 %v2805
        %v3723 = vpop.f32.mrf.mxu0
        %v3724 = vadd.f32 %v3362, %v3723
        %v3725 = vpop.f32.mrf.mxu0
        %v3726 = vadd.f32 %v3364, %v3725
        %3727 = vmatmul.bf16.gmra.mxu0 %v2807
        %v3728 = vpop.f32.mrf.mxu0
        %v3729 = vadd.f32 %v3367, %v3728
        %v3730 = vpop.f32.mrf.mxu0
        %v3731 = vadd.f32 %v3369, %v3730
        %3732 = vmatmul.bf16.gmra.mxu0 %v2809
        %v3733 = vpop.f32.mrf.mxu0
        %v3734 = vadd.f32 %v3372, %v3733
        %v3735 = vpop.f32.mrf.mxu0
        %v3736 = vadd.f32 %v3374, %v3735
        %3737 = vmatmul.bf16.gmra.mxu0 %v2811
        %v3738 = vpop.f32.mrf.mxu0
        %v3739 = vadd.f32 %v3377, %v3738
        %v3740 = vpop.f32.mrf.mxu0
        %v3741 = vadd.f32 %v3379, %v3740
        %3742 = vmatmul.bf16.gmra.mxu0 %v2813
        %v3743 = vpop.f32.mrf.mxu0
        %v3744 = vadd.f32 %v3382, %v3743
        %v3745 = vpop.f32.mrf.mxu0
        %v3746 = vadd.f32 %v3384, %v3745
        %3747 = vmatmul.bf16.gmra.mxu0 %v3394
        %v3748 = vpop.f32.mrf.mxu0
        %v3749 = vadd.f32 %v3387, %v3748
        %v3750 = vpop.f32.mrf.mxu0
        %v3751 = vadd.f32 %v3389, %v3750
        %3752 = vdwg.mxu0
        %3753 = vmatpush.bf16.msra.mxu0 %v3543
        %3754 = vmatpush.bf16.msra.mxu0 %v3541
        %3755 = vmatpush.bf16.msra.mxu0 %v3539
        %3756 = vmatpush.bf16.msra.mxu0 %v3537
        %3757 = vmatpush.bf16.msra.mxu0 %v3535
        %3758 = vmatpush.bf16.msra.mxu0 %v3533
        %3759 = vmatpush.bf16.msra.mxu0 %v3531
        %3760 = vmatpush.bf16.msra.mxu0 %v3529
        %3761 = vmatmul.bf16.gmra.mxu0 %v2798
        %v3762 = vpop.f32.mrf.mxu0
        %v3763 = vadd.f32 %v3704, %v3762
        %v3764 = vpop.f32.mrf.mxu0
        %v3765 = vadd.f32 %v3706, %v3764
        %3766 = vmatmul.bf16.gmra.mxu0 %v2800
        %v3767 = vpop.f32.mrf.mxu0
        %v3768 = vadd.f32 %v3709, %v3767
        %v3769 = vpop.f32.mrf.mxu0
        %v3770 = vadd.f32 %v3711, %v3769
        %3771 = vmatmul.bf16.gmra.mxu0 %v2802
        %v3772 = vpop.f32.mrf.mxu0
        %v3773 = vadd.f32 %v3714, %v3772
        %v3774 = vpop.f32.mrf.mxu0
        %v3775 = vadd.f32 %v3716, %v3774
        %3776 = vmatmul.bf16.gmra.mxu0 %v2804
        %v3777 = vpop.f32.mrf.mxu0
        %v3778 = vadd.f32 %v3719, %v3777
        %v3779 = vpop.f32.mrf.mxu0
        %v3780 = vadd.f32 %v3721, %v3779
        %3781 = vmatmul.bf16.gmra.mxu0 %v2806
        %v3782 = vpop.f32.mrf.mxu0
        %v3783 = vadd.f32 %v3724, %v3782
        %v3784 = vpop.f32.mrf.mxu0
        %v3785 = vadd.f32 %v3726, %v3784
        %3786 = vmatmul.bf16.gmra.mxu0 %v2808
        %v3787 = vpop.f32.mrf.mxu0
        %v3788 = vadd.f32 %v3729, %v3787
        %v3789 = vpop.f32.mrf.mxu0
        %v3790 = vadd.f32 %v3731, %v3789
        %3791 = vmatmul.bf16.gmra.mxu0 %v2810
        %v3792 = vpop.f32.mrf.mxu0
        %v3793 = vadd.f32 %v3734, %v3792
        %v3794 = vpop.f32.mrf.mxu0
        %v3795 = vadd.f32 %v3736, %v3794
        %3796 = vmatmul.bf16.gmra.mxu0 %v2812
        %v3797 = vpop.f32.mrf.mxu0
        %v3798 = vadd.f32 %v3739, %v3797
        %v3799 = vpop.f32.mrf.mxu0
        %v3800 = vadd.f32 %v3741, %v3799
        %3801 = vmatmul.bf16.gmra.mxu0 %v2814
        %v3802 = vpop.f32.mrf.mxu0
        %v3803 = vadd.f32 %v3744, %v3802
        %v3804 = vpop.f32.mrf.mxu0
        %v3805 = vadd.f32 %v3746, %v3804
        %3806 = vmatmul.bf16.gmra.mxu0 %v3395
        %v3807 = vpop.f32.mrf.mxu0
        %v3808 = vadd.f32 %v3749, %v3807
        %v3809 = vpop.f32.mrf.mxu0
        %v3810 = vadd.f32 %v3751, %v3809
        %3811 = vdwg.mxu0
        %v3812 = vld [vmem:[#allocation3] sm:$0xee]
        %s3813 = scalar_lea.vmem %s890, 512
        %v3814 = vld [vmem:[%s3813] sm:$0xff]
        %v3815 = vld [vmem:[%s3813 + $0x8] sm:$0xff]
        %v3816 = vld [vmem:[%s3813 + $0x10] sm:$0xff]
        %v3817 = vld [vmem:[%s3813 + $0x18] sm:$0xff]
        %v3818 = vld [vmem:[%s3813 + $0x20] sm:$0xff]
        %v3819 = vld [vmem:[%s3813 + $0x28] sm:$0xff]
        %v3820 = vld [vmem:[%s3813 + $0x30] sm:$0xff]
        %v3821 = vld [vmem:[%s3813 + $0x38] sm:$0xff]
        %v3822 = vld [vmem:[%s3813 + $0x40] sm:$0xff]
        %v3823 = vld [vmem:[%s3813 + $0x48] sm:$0xff]
        %v3824 = vld [vmem:[%s3813 + $0x50] sm:$0xff]
        %v3825 = vld [vmem:[%s3813 + $0x58] sm:$0xff]
        %v3826 = vld [vmem:[%s3813 + $0x60] sm:$0xff]
        %v3827 = vld [vmem:[%s3813 + $0x68] sm:$0xff]
        %v3828 = vld [vmem:[%s3813 + $0x70] sm:$0xff]
        %v3829 = vld [vmem:[%s3813 + $0x78] sm:$0xff]
        %v3830 = vld [vmem:[%s3813 + $0x80] sm:$0xff]
        %v3831 = vld [vmem:[%s3813 + $0x88] sm:$0xff]
        %v3832 = vld [vmem:[%s3813 + $0x90] sm:$0xff]
        %v3833 = vld [vmem:[%s3813 + $0x98] sm:$0xff]
        %v3834 = vld [vmem:[%s3813 + $0xa0] sm:$0xff]
        %v3835 = vld [vmem:[%s3813 + $0xa8] sm:$0xff]
        %v3836 = vld [vmem:[%s3813 + $0xb0] sm:$0xff]
        %v3837 = vld [vmem:[%s3813 + $0xb8] sm:$0xff]
        %v3838 = vld [vmem:[%s3813 + $0xc0] sm:$0xff]
        %v3839 = vld [vmem:[%s3813 + $0xc8] sm:$0xff]
        %v3840 = vld [vmem:[%s3813 + $0xd0] sm:$0xff]
        %v3841 = vld [vmem:[%s3813 + $0xd8] sm:$0xff]
        %v3842 = vld [vmem:[%s3813 + $0xe0] sm:$0xff]
        %v3843 = vld [vmem:[%s3813 + $0xe8] sm:$0xff]
        %v3844 = vld [vmem:[%s3813 + $0xf0] sm:$0xff]
        %v3845 = vld [vmem:[%s3813 + $0xf8] sm:$0xff]
        %v3847 = vunpack.c.l.b16 %v3812
        %v3848 = vunpack.c.h.b16 %v3812
        %v3849 = vpack.c.b16 %v2759, %v3847
        %v3850 = vpack.c.b16 %v2760, %v3848
        %vm3851 = vcmask 1046528
        %v3852 = vrot.slane %v3849, 1
        %v3853 = vrot.slane %v2799, 1
        %v3854 = vsel %vm3851, %v3852, %v3853
        %v3855 = vrot.slane %v3850, 1
        %v3856 = vrot.slane %v2800, 1
        %v3857 = vsel %vm3851, %v3855, %v3856
        %v3858 = vrot.slane %v2801, 1
        %v3859 = vsel %vm3851, %v3853, %v3858
        %v3860 = vrot.slane %v2802, 1
        %v3861 = vsel %vm3851, %v3856, %v3860
        %v3862 = vrot.slane %v2803, 1
        %v3863 = vsel %vm3851, %v3858, %v3862
        %v3864 = vrot.slane %v2804, 1
        %v3865 = vsel %vm3851, %v3860, %v3864
        %v3866 = vrot.slane %v2805, 1
        %v3867 = vsel %vm3851, %v3862, %v3866
        %v3868 = vrot.slane %v2806, 1
        %v3869 = vsel %vm3851, %v3864, %v3868
        %v3870 = vrot.slane %v2807, 1
        %v3871 = vsel %vm3851, %v3866, %v3870
        %v3872 = vrot.slane %v2808, 1
        %v3873 = vsel %vm3851, %v3868, %v3872
        %v3874 = vrot.slane %v2809, 1
        %v3875 = vsel %vm3851, %v3870, %v3874
        %v3876 = vrot.slane %v2810, 1
        %v3877 = vsel %vm3851, %v3872, %v3876
        %v3878 = vrot.slane %v2811, 1
        %v3879 = vsel %vm3851, %v3874, %v3878
        %v3880 = vrot.slane %v2812, 1
        %v3881 = vsel %vm3851, %v3876, %v3880
        %v3882 = vrot.slane %v2813, 1
        %v3883 = vsel %vm3851, %v3878, %v3882
        %v3884 = vrot.slane %v2814, 1
        %v3885 = vsel %vm3851, %v3880, %v3884
        %v3886 = vrot.slane %v2815, 1
        %v3887 = vsel %vm3851, %v3882, %v3886
        %v3888 = vrot.slane %v2816, 1
        %v3889 = vsel %vm3851, %v3884, %v3888
        %v3942 = vunpack.c.l.b16 %v3814
        %v3943 = vunpack.c.h.b16 %v3814
        %v3944 = vunpack.c.l.b16 %v3815
        %v3945 = vunpack.c.h.b16 %v3815
        %v3946 = vunpack.c.l.b16 %v3816
        %v3947 = vunpack.c.h.b16 %v3816
        %v3948 = vunpack.c.l.b16 %v3817
        %v3949 = vunpack.c.h.b16 %v3817
        %v3950 = vunpack.c.l.b16 %v3818
        %v3951 = vunpack.c.h.b16 %v3818
        %v3952 = vunpack.c.l.b16 %v3819
        %v3953 = vunpack.c.h.b16 %v3819
        %v3954 = vunpack.c.l.b16 %v3820
        %v3955 = vunpack.c.h.b16 %v3820
        %v3956 = vunpack.c.l.b16 %v3821
        %v3957 = vunpack.c.h.b16 %v3821
        %v3958 = vunpack.c.l.b16 %v3822
        %v3959 = vunpack.c.h.b16 %v3822
        %v3960 = vunpack.c.l.b16 %v3823
        %v3961 = vunpack.c.h.b16 %v3823
        %v3962 = vunpack.c.l.b16 %v3824
        %v3963 = vunpack.c.h.b16 %v3824
        %v3964 = vunpack.c.l.b16 %v3825
        %v3965 = vunpack.c.h.b16 %v3825
        %v3966 = vunpack.c.l.b16 %v3826
        %v3967 = vunpack.c.h.b16 %v3826
        %v3968 = vunpack.c.l.b16 %v3827
        %v3969 = vunpack.c.h.b16 %v3827
        %v3970 = vunpack.c.l.b16 %v3828
        %v3971 = vunpack.c.h.b16 %v3828
        %v3972 = vunpack.c.l.b16 %v3829
        %v3973 = vunpack.c.h.b16 %v3829
        %v3974 = vunpack.c.l.b16 %v3830
        %v3975 = vunpack.c.h.b16 %v3830
        %v3976 = vunpack.c.l.b16 %v3831
        %v3977 = vunpack.c.h.b16 %v3831
        %v3978 = vunpack.c.l.b16 %v3832
        %v3979 = vunpack.c.h.b16 %v3832
        %v3980 = vunpack.c.l.b16 %v3833
        %v3981 = vunpack.c.h.b16 %v3833
        %v3982 = vunpack.c.l.b16 %v3834
        %v3983 = vunpack.c.h.b16 %v3834
        %v3984 = vunpack.c.l.b16 %v3835
        %v3985 = vunpack.c.h.b16 %v3835
        %v3986 = vunpack.c.l.b16 %v3836
        %v3987 = vunpack.c.h.b16 %v3836
        %v3988 = vunpack.c.l.b16 %v3837
        %v3989 = vunpack.c.h.b16 %v3837
        %v3990 = vunpack.c.l.b16 %v3838
        %v3991 = vunpack.c.h.b16 %v3838
        %v3992 = vunpack.c.l.b16 %v3839
        %v3993 = vunpack.c.h.b16 %v3839
        %v3994 = vunpack.c.l.b16 %v3840
        %v3995 = vunpack.c.h.b16 %v3840
        %v3996 = vunpack.c.l.b16 %v3841
        %v3997 = vunpack.c.h.b16 %v3841
        %v3998 = vunpack.c.l.b16 %v3842
        %v3999 = vunpack.c.h.b16 %v3842
        %v4000 = vunpack.c.l.b16 %v3843
        %v4001 = vunpack.c.h.b16 %v3843
        %v4002 = vunpack.c.l.b16 %v3844
        %v4003 = vunpack.c.h.b16 %v3844
        %v4004 = vunpack.c.l.b16 %v3845
        %v4005 = vunpack.c.h.b16 %v3845
        %v4006 = vpack.c.b16 %v3944, %v3942
        %v4007 = vpack.c.b16 %v3945, %v3943
        %v4008 = vpack.c.b16 %v3948, %v3946
        %v4009 = vpack.c.b16 %v3949, %v3947
        %v4010 = vpack.c.b16 %v3952, %v3950
        %v4011 = vpack.c.b16 %v3953, %v3951
        %v4012 = vpack.c.b16 %v3956, %v3954
        %v4013 = vpack.c.b16 %v3957, %v3955
        %v4014 = vpack.c.b16 %v3960, %v3958
        %v4015 = vpack.c.b16 %v3961, %v3959
        %v4016 = vpack.c.b16 %v3964, %v3962
        %v4017 = vpack.c.b16 %v3965, %v3963
        %v4018 = vpack.c.b16 %v3968, %v3966
        %v4019 = vpack.c.b16 %v3969, %v3967
        %v4020 = vpack.c.b16 %v3972, %v3970
        %v4021 = vpack.c.b16 %v3973, %v3971
        %v4022 = vpack.c.b16 %v3976, %v3974
        %v4023 = vpack.c.b16 %v3977, %v3975
        %v4024 = vpack.c.b16 %v3980, %v3978
        %v4025 = vpack.c.b16 %v3981, %v3979
        %v4026 = vpack.c.b16 %v3984, %v3982
        %v4027 = vpack.c.b16 %v3985, %v3983
        %v4028 = vpack.c.b16 %v3988, %v3986
        %v4029 = vpack.c.b16 %v3989, %v3987
        %v4030 = vpack.c.b16 %v3992, %v3990
        %v4031 = vpack.c.b16 %v3993, %v3991
        %v4032 = vpack.c.b16 %v3996, %v3994
        %v4033 = vpack.c.b16 %v3997, %v3995
        %v4034 = vpack.c.b16 %v4000, %v3998
        %v4035 = vpack.c.b16 %v4001, %v3999
        %v4036 = vpack.c.b16 %v4004, %v4002
        %v4037 = vpack.c.b16 %v4005, %v4003
        %4070 = vmatpush.bf16.msra.mxu0 %v4020
        %4071 = vmatpush.bf16.msra.mxu0 %v4018
        %4072 = vmatpush.bf16.msra.mxu0 %v4016
        %4073 = vmatpush.bf16.msra.mxu0 %v4014
        %4074 = vmatpush.bf16.msra.mxu0 %v4012
        %4075 = vmatpush.bf16.msra.mxu0 %v4010
        %4076 = vmatpush.bf16.msra.mxu0 %v4008
        %4077 = vmatpush.bf16.msra.mxu0 %v4006
        %4078 = vmatmul.bf16.gmra.mxu0 %v3854
        %v4079 = vpop.f32.mrf.mxu0
        %v4080 = vadd.f32 0.0, %v4079
        %v4081 = vpop.f32.mrf.mxu0
        %v4082 = vadd.f32 0.0, %v4081
        %4083 = vmatmul.bf16.gmra.mxu0 %v3859
        %v4084 = vpop.f32.mrf.mxu0
        %v4085 = vadd.f32 0.0, %v4084
        %v4086 = vpop.f32.mrf.mxu0
        %v4087 = vadd.f32 0.0, %v4086
        %4088 = vmatmul.bf16.gmra.mxu0 %v3863
        %v4089 = vpop.f32.mrf.mxu0
        %v4090 = vadd.f32 0.0, %v4089
        %v4091 = vpop.f32.mrf.mxu0
        %v4092 = vadd.f32 0.0, %v4091
        %4093 = vmatmul.bf16.gmra.mxu0 %v3867
        %v4094 = vpop.f32.mrf.mxu0
        %v4095 = vadd.f32 0.0, %v4094
        %v4096 = vpop.f32.mrf.mxu0
        %v4097 = vadd.f32 0.0, %v4096
        %4098 = vmatmul.bf16.gmra.mxu0 %v3871
        %v4099 = vpop.f32.mrf.mxu0
        %v4100 = vadd.f32 0.0, %v4099
        %v4101 = vpop.f32.mrf.mxu0
        %v4102 = vadd.f32 0.0, %v4101
        %4103 = vmatmul.bf16.gmra.mxu0 %v3875
        %v4104 = vpop.f32.mrf.mxu0
        %v4105 = vadd.f32 0.0, %v4104
        %v4106 = vpop.f32.mrf.mxu0
        %v4107 = vadd.f32 0.0, %v4106
        %4108 = vmatmul.bf16.gmra.mxu0 %v3879
        %v4109 = vpop.f32.mrf.mxu0
        %v4110 = vadd.f32 0.0, %v4109
        %v4111 = vpop.f32.mrf.mxu0
        %v4112 = vadd.f32 0.0, %v4111
        %4113 = vmatmul.bf16.gmra.mxu0 %v3883
        %v4114 = vpop.f32.mrf.mxu0
        %v4115 = vadd.f32 0.0, %v4114
        %v4116 = vpop.f32.mrf.mxu0
        %v4117 = vadd.f32 0.0, %v4116
        %4118 = vmatmul.bf16.gmra.mxu0 %v3887
        %v4119 = vpop.f32.mrf.mxu0
        %v4120 = vadd.f32 0.0, %v4119
        %v4121 = vpop.f32.mrf.mxu0
        %v4122 = vadd.f32 0.0, %v4121
        %4123 = vmatmul.bf16.gmra.mxu0 %v3886
        %v4124 = vpop.f32.mrf.mxu0
        %v4125 = vadd.f32 0.0, %v4124
        %v4126 = vpop.f32.mrf.mxu0
        %v4127 = vadd.f32 0.0, %v4126
        %4128 = vdwg.mxu0
        %4129 = vmatpush.bf16.msra.mxu0 %v4036
        %4130 = vmatpush.bf16.msra.mxu0 %v4034
        %4131 = vmatpush.bf16.msra.mxu0 %v4032
        %4132 = vmatpush.bf16.msra.mxu0 %v4030
        %4133 = vmatpush.bf16.msra.mxu0 %v4028
        %4134 = vmatpush.bf16.msra.mxu0 %v4026
        %4135 = vmatpush.bf16.msra.mxu0 %v4024
        %4136 = vmatpush.bf16.msra.mxu0 %v4022
        %4137 = vmatmul.bf16.gmra.mxu0 %v3857
        %v4138 = vpop.f32.mrf.mxu0
        %v4139 = vadd.f32 %v4080, %v4138
        %v4140 = vpop.f32.mrf.mxu0
        %v4141 = vadd.f32 %v4082, %v4140
        %4142 = vmatmul.bf16.gmra.mxu0 %v3861
        %v4143 = vpop.f32.mrf.mxu0
        %v4144 = vadd.f32 %v4085, %v4143
        %v4145 = vpop.f32.mrf.mxu0
        %v4146 = vadd.f32 %v4087, %v4145
        %4147 = vmatmul.bf16.gmra.mxu0 %v3865
        %v4148 = vpop.f32.mrf.mxu0
        %v4149 = vadd.f32 %v4090, %v4148
        %v4150 = vpop.f32.mrf.mxu0
        %v4151 = vadd.f32 %v4092, %v4150
        %4152 = vmatmul.bf16.gmra.mxu0 %v3869
        %v4153 = vpop.f32.mrf.mxu0
        %v4154 = vadd.f32 %v4095, %v4153
        %v4155 = vpop.f32.mrf.mxu0
        %v4156 = vadd.f32 %v4097, %v4155
        %4157 = vmatmul.bf16.gmra.mxu0 %v3873
        %v4158 = vpop.f32.mrf.mxu0
        %v4159 = vadd.f32 %v4100, %v4158
        %v4160 = vpop.f32.mrf.mxu0
        %v4161 = vadd.f32 %v4102, %v4160
        %4162 = vmatmul.bf16.gmra.mxu0 %v3877
        %v4163 = vpop.f32.mrf.mxu0
        %v4164 = vadd.f32 %v4105, %v4163
        %v4165 = vpop.f32.mrf.mxu0
        %v4166 = vadd.f32 %v4107, %v4165
        %4167 = vmatmul.bf16.gmra.mxu0 %v3881
        %v4168 = vpop.f32.mrf.mxu0
        %v4169 = vadd.f32 %v4110, %v4168
        %v4170 = vpop.f32.mrf.mxu0
        %v4171 = vadd.f32 %v4112, %v4170
        %4172 = vmatmul.bf16.gmra.mxu0 %v3885
        %v4173 = vpop.f32.mrf.mxu0
        %v4174 = vadd.f32 %v4115, %v4173
        %v4175 = vpop.f32.mrf.mxu0
        %v4176 = vadd.f32 %v4117, %v4175
        %4177 = vmatmul.bf16.gmra.mxu0 %v3889
        %v4178 = vpop.f32.mrf.mxu0
        %v4179 = vadd.f32 %v4120, %v4178
        %v4180 = vpop.f32.mrf.mxu0
        %v4181 = vadd.f32 %v4122, %v4180
        %4182 = vmatmul.bf16.gmra.mxu0 %v3888
        %v4183 = vpop.f32.mrf.mxu0
        %v4184 = vadd.f32 %v4125, %v4183
        %v4185 = vpop.f32.mrf.mxu0
        %v4186 = vadd.f32 %v4127, %v4185
        %4187 = vdwg.mxu0
        %4188 = vmatpush.bf16.msra.mxu0 %v4021
        %4189 = vmatpush.bf16.msra.mxu0 %v4019
        %4190 = vmatpush.bf16.msra.mxu0 %v4017
        %4191 = vmatpush.bf16.msra.mxu0 %v4015
        %4192 = vmatpush.bf16.msra.mxu0 %v4013
        %4193 = vmatpush.bf16.msra.mxu0 %v4011
        %4194 = vmatpush.bf16.msra.mxu0 %v4009
        %4195 = vmatpush.bf16.msra.mxu0 %v4007
        %4196 = vmatmul.bf16.gmra.mxu0 %v3854
        %v4197 = vpop.f32.mrf.mxu0
        %v4198 = vadd.f32 0.0, %v4197
        %v4199 = vpop.f32.mrf.mxu0
        %v4200 = vadd.f32 0.0, %v4199
        %4201 = vmatmul.bf16.gmra.mxu0 %v3859
        %v4202 = vpop.f32.mrf.mxu0
        %v4203 = vadd.f32 0.0, %v4202
        %v4204 = vpop.f32.mrf.mxu0
        %v4205 = vadd.f32 0.0, %v4204
        %4206 = vmatmul.bf16.gmra.mxu0 %v3863
        %v4207 = vpop.f32.mrf.mxu0
        %v4208 = vadd.f32 0.0, %v4207
        %v4209 = vpop.f32.mrf.mxu0
        %v4210 = vadd.f32 0.0, %v4209
        %4211 = vmatmul.bf16.gmra.mxu0 %v3867
        %v4212 = vpop.f32.mrf.mxu0
        %v4213 = vadd.f32 0.0, %v4212
        %v4214 = vpop.f32.mrf.mxu0
        %v4215 = vadd.f32 0.0, %v4214
        %4216 = vmatmul.bf16.gmra.mxu0 %v3871
        %v4217 = vpop.f32.mrf.mxu0
        %v4218 = vadd.f32 0.0, %v4217
        %v4219 = vpop.f32.mrf.mxu0
        %v4220 = vadd.f32 0.0, %v4219
        %4221 = vmatmul.bf16.gmra.mxu0 %v3875
        %v4222 = vpop.f32.mrf.mxu0
        %v4223 = vadd.f32 0.0, %v4222
        %v4224 = vpop.f32.mrf.mxu0
        %v4225 = vadd.f32 0.0, %v4224
        %4226 = vmatmul.bf16.gmra.mxu0 %v3879
        %v4227 = vpop.f32.mrf.mxu0
        %v4228 = vadd.f32 0.0, %v4227
        %v4229 = vpop.f32.mrf.mxu0
        %v4230 = vadd.f32 0.0, %v4229
        %4231 = vmatmul.bf16.gmra.mxu0 %v3883
        %v4232 = vpop.f32.mrf.mxu0
        %v4233 = vadd.f32 0.0, %v4232
        %v4234 = vpop.f32.mrf.mxu0
        %v4235 = vadd.f32 0.0, %v4234
        %4236 = vmatmul.bf16.gmra.mxu0 %v3887
        %v4237 = vpop.f32.mrf.mxu0
        %v4238 = vadd.f32 0.0, %v4237
        %v4239 = vpop.f32.mrf.mxu0
        %v4240 = vadd.f32 0.0, %v4239
        %4241 = vmatmul.bf16.gmra.mxu0 %v3886
        %v4242 = vpop.f32.mrf.mxu0
        %v4243 = vadd.f32 0.0, %v4242
        %v4244 = vpop.f32.mrf.mxu0
        %v4245 = vadd.f32 0.0, %v4244
        %4246 = vdwg.mxu0
        %4247 = vmatpush.bf16.msra.mxu0 %v4037
        %4248 = vmatpush.bf16.msra.mxu0 %v4035
        %4249 = vmatpush.bf16.msra.mxu0 %v4033
        %4250 = vmatpush.bf16.msra.mxu0 %v4031
        %4251 = vmatpush.bf16.msra.mxu0 %v4029
        %4252 = vmatpush.bf16.msra.mxu0 %v4027
        %4253 = vmatpush.bf16.msra.mxu0 %v4025
        %4254 = vmatpush.bf16.msra.mxu0 %v4023
        %4255 = vmatmul.bf16.gmra.mxu0 %v3857
        %v4256 = vpop.f32.mrf.mxu0
        %v4257 = vadd.f32 %v4198, %v4256
        %v4258 = vpop.f32.mrf.mxu0
        %v4259 = vadd.f32 %v4200, %v4258
        %4260 = vmatmul.bf16.gmra.mxu0 %v3861
        %v4261 = vpop.f32.mrf.mxu0
        %v4262 = vadd.f32 %v4203, %v4261
        %v4263 = vpop.f32.mrf.mxu0
        %v4264 = vadd.f32 %v4205, %v4263
        %4265 = vmatmul.bf16.gmra.mxu0 %v3865
        %v4266 = vpop.f32.mrf.mxu0
        %v4267 = vadd.f32 %v4208, %v4266
        %v4268 = vpop.f32.mrf.mxu0
        %v4269 = vadd.f32 %v4210, %v4268
        %4270 = vmatmul.bf16.gmra.mxu0 %v3869
        %v4271 = vpop.f32.mrf.mxu0
        %v4272 = vadd.f32 %v4213, %v4271
        %v4273 = vpop.f32.mrf.mxu0
        %v4274 = vadd.f32 %v4215, %v4273
        %4275 = vmatmul.bf16.gmra.mxu0 %v3873
        %v4276 = vpop.f32.mrf.mxu0
        %v4277 = vadd.f32 %v4218, %v4276
        %v4278 = vpop.f32.mrf.mxu0
        %v4279 = vadd.f32 %v4220, %v4278
        %4280 = vmatmul.bf16.gmra.mxu0 %v3877
        %v4281 = vpop.f32.mrf.mxu0
        %v4282 = vadd.f32 %v4223, %v4281
        %v4283 = vpop.f32.mrf.mxu0
        %v4284 = vadd.f32 %v4225, %v4283
        %4285 = vmatmul.bf16.gmra.mxu0 %v3881
        %v4286 = vpop.f32.mrf.mxu0
        %v4287 = vadd.f32 %v4228, %v4286
        %v4288 = vpop.f32.mrf.mxu0
        %v4289 = vadd.f32 %v4230, %v4288
        %4290 = vmatmul.bf16.gmra.mxu0 %v3885
        %v4291 = vpop.f32.mrf.mxu0
        %v4292 = vadd.f32 %v4233, %v4291
        %v4293 = vpop.f32.mrf.mxu0
        %v4294 = vadd.f32 %v4235, %v4293
        %4295 = vmatmul.bf16.gmra.mxu0 %v3889
        %v4296 = vpop.f32.mrf.mxu0
        %v4297 = vadd.f32 %v4238, %v4296
        %v4298 = vpop.f32.mrf.mxu0
        %v4299 = vadd.f32 %v4240, %v4298
        %4300 = vmatmul.bf16.gmra.mxu0 %v3888
        %v4301 = vpop.f32.mrf.mxu0
        %v4302 = vadd.f32 %v4243, %v4301
        %v4303 = vpop.f32.mrf.mxu0
        %v4304 = vadd.f32 %v4245, %v4303
        %4305 = vdwg.mxu0
        %v4306 = vadd.f32 %v3645, %v4139
        %v4307 = vadd.f32 %v3763, %v4257
        %v4308 = vadd.f32 %v3647, %v4141
        %v4309 = vadd.f32 %v3765, %v4259
        %v4310 = vadd.f32 %v3650, %v4144
        %v4311 = vadd.f32 %v3768, %v4262
        %v4312 = vadd.f32 %v3652, %v4146
        %v4313 = vadd.f32 %v3770, %v4264
        %v4314 = vadd.f32 %v3655, %v4149
        %v4315 = vadd.f32 %v3773, %v4267
        %v4316 = vadd.f32 %v3657, %v4151
        %v4317 = vadd.f32 %v3775, %v4269
        %v4318 = vadd.f32 %v3660, %v4154
        %v4319 = vadd.f32 %v3778, %v4272
        %v4320 = vadd.f32 %v3662, %v4156
        %v4321 = vadd.f32 %v3780, %v4274
        %v4322 = vadd.f32 %v3665, %v4159
        %v4323 = vadd.f32 %v3783, %v4277
        %v4324 = vadd.f32 %v3667, %v4161
        %v4325 = vadd.f32 %v3785, %v4279
        %v4326 = vadd.f32 %v3670, %v4164
        %v4327 = vadd.f32 %v3788, %v4282
        %v4328 = vadd.f32 %v3672, %v4166
        %v4329 = vadd.f32 %v3790, %v4284
        %v4330 = vadd.f32 %v3675, %v4169
        %v4331 = vadd.f32 %v3793, %v4287
        %v4332 = vadd.f32 %v3677, %v4171
        %v4333 = vadd.f32 %v3795, %v4289
        %v4334 = vadd.f32 %v3680, %v4174
        %v4335 = vadd.f32 %v3798, %v4292
        %v4336 = vadd.f32 %v3682, %v4176
        %v4337 = vadd.f32 %v3800, %v4294
        %v4338 = vadd.f32 %v3685, %v4179
        %v4339 = vadd.f32 %v3803, %v4297
        %v4340 = vadd.f32 %v3687, %v4181
        %v4341 = vadd.f32 %v3805, %v4299
        %v4342 = vadd.f32 %v3690, %v4184
        %v4343 = vadd.f32 %v3808, %v4302
        %v4344 = vadd.f32 %v3692, %v4186
        %v4345 = vadd.f32 %v3810, %v4304
        %v4346 = vld [vmem:[%s902] sm:$0x3]
        %v4348 = vperm.slane %v4346, 0
        %v4349 = vperm.slane %v4346, 1
        %v4352 = vmul.f32 %v4306, %v4348
        %v4353 = vmul.f32 %v4307, %v4349
        %v4354 = vmul.f32 %v4308, %v4348
        %v4355 = vmul.f32 %v4309, %v4349
        %v4356 = vmul.f32 %v4310, %v4348
        %v4357 = vmul.f32 %v4311, %v4349
        %v4358 = vmul.f32 %v4312, %v4348
        %v4359 = vmul.f32 %v4313, %v4349
        %v4360 = vmul.f32 %v4314, %v4348
        %v4361 = vmul.f32 %v4315, %v4349
        %v4362 = vmul.f32 %v4316, %v4348
        %v4363 = vmul.f32 %v4317, %v4349
        %v4364 = vmul.f32 %v4318, %v4348
        %v4365 = vmul.f32 %v4319, %v4349
        %v4366 = vmul.f32 %v4320, %v4348
        %v4367 = vmul.f32 %v4321, %v4349
        %v4368 = vmul.f32 %v4322, %v4348
        %v4369 = vmul.f32 %v4323, %v4349
        %v4370 = vmul.f32 %v4324, %v4348
        %v4371 = vmul.f32 %v4325, %v4349
        %v4372 = vmul.f32 %v4326, %v4348
        %v4373 = vmul.f32 %v4327, %v4349
        %v4374 = vmul.f32 %v4328, %v4348
        %v4375 = vmul.f32 %v4329, %v4349
        %v4376 = vmul.f32 %v4330, %v4348
        %v4377 = vmul.f32 %v4331, %v4349
        %v4378 = vmul.f32 %v4332, %v4348
        %v4379 = vmul.f32 %v4333, %v4349
        %v4380 = vmul.f32 %v4334, %v4348
        %v4381 = vmul.f32 %v4335, %v4349
        %v4382 = vmul.f32 %v4336, %v4348
        %v4383 = vmul.f32 %v4337, %v4349
        %v4384 = vmul.f32 %v4338, %v4348
        %v4385 = vmul.f32 %v4339, %v4349
        %v4386 = vmul.f32 %v4340, %v4348
        %v4387 = vmul.f32 %v4341, %v4349
        %v4388 = vmul.f32 %v4342, %v4348
        %v4389 = vmul.f32 %v4343, %v4349
        %v4390 = vmul.f32 %v4344, %v4348
        %v4391 = vmul.f32 %v4345, %v4349
        %v4392 = vld [vmem:[%s776] sm:$0x3]
        %v4394 = vperm.slane %v4392, 0
        %v4395 = vperm.slane %v4392, 1
        %v4398 = vadd.f32 %v4352, %v4394
        %v4399 = vadd.f32 %v4353, %v4395
        %v4400 = vadd.f32 %v4354, %v4394
        %v4401 = vadd.f32 %v4355, %v4395
        %v4402 = vadd.f32 %v4356, %v4394
        %v4403 = vadd.f32 %v4357, %v4395
        %v4404 = vadd.f32 %v4358, %v4394
        %v4405 = vadd.f32 %v4359, %v4395
        %v4406 = vadd.f32 %v4360, %v4394
        %v4407 = vadd.f32 %v4361, %v4395
        %v4408 = vadd.f32 %v4362, %v4394
        %v4409 = vadd.f32 %v4363, %v4395
        %v4410 = vadd.f32 %v4364, %v4394
        %v4411 = vadd.f32 %v4365, %v4395
        %v4412 = vadd.f32 %v4366, %v4394
        %v4413 = vadd.f32 %v4367, %v4395
        %v4414 = vadd.f32 %v4368, %v4394
        %v4415 = vadd.f32 %v4369, %v4395
        %v4416 = vadd.f32 %v4370, %v4394
        %v4417 = vadd.f32 %v4371, %v4395
        %v4418 = vadd.f32 %v4372, %v4394
        %v4419 = vadd.f32 %v4373, %v4395
        %v4420 = vadd.f32 %v4374, %v4394
        %v4421 = vadd.f32 %v4375, %v4395
        %v4422 = vadd.f32 %v4376, %v4394
        %v4423 = vadd.f32 %v4377, %v4395
        %v4424 = vadd.f32 %v4378, %v4394
        %v4425 = vadd.f32 %v4379, %v4395
        %v4426 = vadd.f32 %v4380, %v4394
        %v4427 = vadd.f32 %v4381, %v4395
        %v4428 = vadd.f32 %v4382, %v4394
        %v4429 = vadd.f32 %v4383, %v4395
        %v4430 = vadd.f32 %v4384, %v4394
        %v4431 = vadd.f32 %v4385, %v4395
        %v4432 = vadd.f32 %v4386, %v4394
        %v4433 = vadd.f32 %v4387, %v4395
        %v4434 = vadd.f32 %v4388, %v4394
        %v4435 = vadd.f32 %v4389, %v4395
        %v4436 = vadd.f32 %v4390, %v4394
        %v4437 = vadd.f32 %v4391, %v4395
        %v4438 = vmax.f32 %v4398, 0.0
        %v4439 = vmax.f32 %v4399, 0.0
        %v4440 = vmax.f32 %v4400, 0.0
        %v4441 = vmax.f32 %v4401, 0.0
        %v4442 = vmax.f32 %v4402, 0.0
        %v4443 = vmax.f32 %v4403, 0.0
        %v4444 = vmax.f32 %v4404, 0.0
        %v4445 = vmax.f32 %v4405, 0.0
        %v4446 = vmax.f32 %v4406, 0.0
        %v4447 = vmax.f32 %v4407, 0.0
        %v4448 = vmax.f32 %v4408, 0.0
        %v4449 = vmax.f32 %v4409, 0.0
        %v4450 = vmax.f32 %v4410, 0.0
        %v4451 = vmax.f32 %v4411, 0.0
        %v4452 = vmax.f32 %v4412, 0.0
        %v4453 = vmax.f32 %v4413, 0.0
        %v4454 = vmax.f32 %v4414, 0.0
        %v4455 = vmax.f32 %v4415, 0.0
        %v4456 = vmax.f32 %v4416, 0.0
        %v4457 = vmax.f32 %v4417, 0.0
        %v4458 = vmax.f32 %v4418, 0.0
        %v4459 = vmax.f32 %v4419, 0.0
        %v4460 = vmax.f32 %v4420, 0.0
        %v4461 = vmax.f32 %v4421, 0.0
        %v4462 = vmax.f32 %v4422, 0.0
        %v4463 = vmax.f32 %v4423, 0.0
        %v4464 = vmax.f32 %v4424, 0.0
        %v4465 = vmax.f32 %v4425, 0.0
        %v4466 = vmax.f32 %v4426, 0.0
        %v4467 = vmax.f32 %v4427, 0.0
        %v4468 = vmax.f32 %v4428, 0.0
        %v4469 = vmax.f32 %v4429, 0.0
        %v4470 = vmax.f32 %v4430, 0.0
        %v4471 = vmax.f32 %v4431, 0.0
        %v4472 = vmax.f32 %v4432, 0.0
        %v4473 = vmax.f32 %v4433, 0.0
        %v4474 = vmax.f32 %v4434, 0.0
        %v4475 = vmax.f32 %v4435, 0.0
        %v4476 = vmax.f32 %v4436, 0.0
        %v4477 = vmax.f32 %v4437, 0.0
        %v4478 = vmul.f32 %v4438, %v2398
        %v4479 = vmul.f32 %v4439, %v2398
        %v4480 = vmul.f32 %v4440, %v2403
        %v4481 = vmul.f32 %v4441, %v2403
        %v4482 = vmul.f32 %v4442, %v2408
        %v4483 = vmul.f32 %v4443, %v2408
        %v4484 = vmul.f32 %v4444, %v2413
        %v4485 = vmul.f32 %v4445, %v2413
        %v4486 = vmul.f32 %v4446, %v2418
        %v4487 = vmul.f32 %v4447, %v2418
        %v4488 = vmul.f32 %v4448, %v2423
        %v4489 = vmul.f32 %v4449, %v2423
        %v4490 = vmul.f32 %v4450, %v2428
        %v4491 = vmul.f32 %v4451, %v2428
        %v4492 = vmul.f32 %v4452, %v2433
        %v4493 = vmul.f32 %v4453, %v2433
        %v4494 = vmul.f32 %v4454, %v2438
        %v4495 = vmul.f32 %v4455, %v2438
        %v4496 = vmul.f32 %v4456, %v2443
        %v4497 = vmul.f32 %v4457, %v2443
        %v4498 = vmul.f32 %v4458, %v2448
        %v4499 = vmul.f32 %v4459, %v2448
        %v4500 = vmul.f32 %v4460, %v2453
        %v4501 = vmul.f32 %v4461, %v2453
        %v4502 = vmul.f32 %v4462, %v2458
        %v4503 = vmul.f32 %v4463, %v2458
        %v4504 = vmul.f32 %v4464, %v2463
        %v4505 = vmul.f32 %v4465, %v2463
        %v4506 = vmul.f32 %v4466, %v2468
        %v4507 = vmul.f32 %v4467, %v2468
        %v4508 = vmul.f32 %v4468, %v2473
        %v4509 = vmul.f32 %v4469, %v2473
        %v4510 = vmul.f32 %v4470, %v2478
        %v4511 = vmul.f32 %v4471, %v2478
        %v4512 = vmul.f32 %v4472, %v2483
        %v4513 = vmul.f32 %v4473, %v2483
        %v4514 = vmul.f32 %v4474, %v2488
        %v4515 = vmul.f32 %v4475, %v2488
        %v4516 = vmul.f32 %v4476, %v2493
        %v4517 = vmul.f32 %v4477, %v2493
        %v4518 = vpack.c.bf16 %v4479, %v4478
        %v4519 = vpack.c.bf16 %v4481, %v4480
        %v4520 = vpack.c.bf16 %v4483, %v4482
        %v4521 = vpack.c.bf16 %v4485, %v4484
        %v4522 = vpack.c.bf16 %v4487, %v4486
        %v4523 = vpack.c.bf16 %v4489, %v4488
        %v4524 = vpack.c.bf16 %v4491, %v4490
        %v4525 = vpack.c.bf16 %v4493, %v4492
        %v4526 = vpack.c.bf16 %v4495, %v4494
        %v4527 = vpack.c.bf16 %v4497, %v4496
        %v4528 = vpack.c.bf16 %v4499, %v4498
        %v4529 = vpack.c.bf16 %v4501, %v4500
        %v4530 = vpack.c.bf16 %v4503, %v4502
        %v4531 = vpack.c.bf16 %v4505, %v4504
        %v4532 = vpack.c.bf16 %v4507, %v4506
        %v4533 = vpack.c.bf16 %v4509, %v4508
        %v4534 = vpack.c.bf16 %v4511, %v4510
        %v4535 = vpack.c.bf16 %v4513, %v4512
        %v4536 = vpack.c.bf16 %v4515, %v4514
        %v4537 = vpack.c.bf16 %v4517, %v4516
        %vm4538 = vsmask.f32 256
        %vm4539 = vsmask.f32 4368
        %vm4540 = vmor %vm4538, %vm4539
        %v4542 = vshrl.u32 %v4518, 16
        %v4544 = vrot.slane %v4542, 7
        %v4545 = vshll.u32 %v4518, 16
        %v4547 = vor.u32 %v4544, %v4545
        %v4548 = vrot.slane %v4544, 4
        %v4550 = vshrl.u32 %v4519, 16
        %v4552 = vrot.slane %v4550, 7
        %v4553 = vshll.u32 %v4519, 16
        %v4555 = vor.u32 %v4552, %v4553
        %v4556 = vsel %vm4540, %v4548, %v4555
        %v4557 = vrot.slane %v4552, 4
        %v4559 = vshrl.u32 %v4520, 16
        %v4561 = vrot.slane %v4559, 7
        %v4562 = vshll.u32 %v4520, 16
        %v4564 = vor.u32 %v4561, %v4562
        %v4565 = vsel %vm4540, %v4557, %v4564
        %v4566 = vrot.slane %v4561, 4
        %v4568 = vshrl.u32 %v4521, 16
        %v4570 = vrot.slane %v4568, 7
        %v4571 = vshll.u32 %v4521, 16
        %v4573 = vor.u32 %v4570, %v4571
        %v4574 = vsel %vm4540, %v4566, %v4573
        %v4575 = vrot.slane %v4570, 4
        %v4577 = vshrl.u32 %v4522, 16
        %v4579 = vrot.slane %v4577, 7
        %v4580 = vshll.u32 %v4522, 16
        %v4582 = vor.u32 %v4579, %v4580
        %v4583 = vsel %vm4540, %v4575, %v4582
        %v4584 = vrot.slane %v4579, 4
        %v4586 = vshrl.u32 %v4523, 16
        %v4588 = vrot.slane %v4586, 7
        %v4589 = vshll.u32 %v4523, 16
        %v4591 = vor.u32 %v4588, %v4589
        %v4592 = vsel %vm4540, %v4584, %v4591
        %v4593 = vrot.slane %v4588, 4
        %v4595 = vshrl.u32 %v4524, 16
        %v4597 = vrot.slane %v4595, 7
        %v4598 = vshll.u32 %v4524, 16
        %v4600 = vor.u32 %v4597, %v4598
        %v4601 = vsel %vm4540, %v4593, %v4600
        %v4602 = vrot.slane %v4597, 4
        %v4604 = vshrl.u32 %v4525, 16
        %v4606 = vrot.slane %v4604, 7
        %v4607 = vshll.u32 %v4525, 16
        %v4609 = vor.u32 %v4606, %v4607
        %v4610 = vsel %vm4540, %v4602, %v4609
        %v4611 = vrot.slane %v4606, 4
        %v4613 = vshrl.u32 %v4526, 16
        %v4615 = vrot.slane %v4613, 7
        %v4616 = vshll.u32 %v4526, 16
        %v4618 = vor.u32 %v4615, %v4616
        %v4619 = vsel %vm4540, %v4611, %v4618
        %v4620 = vrot.slane %v4615, 4
        %v4622 = vshrl.u32 %v4527, 16
        %v4624 = vrot.slane %v4622, 7
        %v4625 = vshll.u32 %v4527, 16
        %v4627 = vor.u32 %v4624, %v4625
        %v4628 = vsel %vm4540, %v4620, %v4627
        %v4629 = vrot.slane %v4624, 4
        %v4631 = vshrl.u32 %v4528, 16
        %v4633 = vrot.slane %v4631, 7
        %v4634 = vshll.u32 %v4528, 16
        %v4636 = vor.u32 %v4633, %v4634
        %v4637 = vsel %vm4540, %v4629, %v4636
        %v4638 = vrot.slane %v4633, 4
        %v4640 = vshrl.u32 %v4529, 16
        %v4642 = vrot.slane %v4640, 7
        %v4643 = vshll.u32 %v4529, 16
        %v4645 = vor.u32 %v4642, %v4643
        %v4646 = vsel %vm4540, %v4638, %v4645
        %v4647 = vrot.slane %v4642, 4
        %v4649 = vshrl.u32 %v4530, 16
        %v4651 = vrot.slane %v4649, 7
        %v4652 = vshll.u32 %v4530, 16
        %v4654 = vor.u32 %v4651, %v4652
        %v4655 = vsel %vm4540, %v4647, %v4654
        %v4656 = vrot.slane %v4651, 4
        %v4658 = vshrl.u32 %v4531, 16
        %v4660 = vrot.slane %v4658, 7
        %v4661 = vshll.u32 %v4531, 16
        %v4663 = vor.u32 %v4660, %v4661
        %v4664 = vsel %vm4540, %v4656, %v4663
        %v4665 = vrot.slane %v4660, 4
        %v4667 = vshrl.u32 %v4532, 16
        %v4669 = vrot.slane %v4667, 7
        %v4670 = vshll.u32 %v4532, 16
        %v4672 = vor.u32 %v4669, %v4670
        %v4673 = vsel %vm4540, %v4665, %v4672
        %v4674 = vrot.slane %v4669, 4
        %v4676 = vshrl.u32 %v4533, 16
        %v4678 = vrot.slane %v4676, 7
        %v4679 = vshll.u32 %v4533, 16
        %v4681 = vor.u32 %v4678, %v4679
        %v4682 = vsel %vm4540, %v4674, %v4681
        %v4683 = vrot.slane %v4678, 4
        %v4685 = vshrl.u32 %v4534, 16
        %v4687 = vrot.slane %v4685, 7
        %v4688 = vshll.u32 %v4534, 16
        %v4690 = vor.u32 %v4687, %v4688
        %v4691 = vsel %vm4540, %v4683, %v4690
        %v4692 = vrot.slane %v4687, 4
        %v4694 = vshrl.u32 %v4535, 16
        %v4696 = vrot.slane %v4694, 7
        %v4697 = vshll.u32 %v4535, 16
        %v4699 = vor.u32 %v4696, %v4697
        %v4700 = vsel %vm4540, %v4692, %v4699
        %v4701 = vrot.slane %v4696, 4
        %v4703 = vshrl.u32 %v4536, 16
        %v4705 = vrot.slane %v4703, 7
        %v4706 = vshll.u32 %v4536, 16
        %v4708 = vor.u32 %v4705, %v4706
        %v4709 = vsel %vm4540, %v4701, %v4708
        %v4710 = vrot.slane %v4705, 4
        %v4712 = vshrl.u32 %v4537, 16
        %v4714 = vrot.slane %v4712, 7
        %v4715 = vshll.u32 %v4537, 16
        %v4717 = vor.u32 %v4714, %v4715
        %v4718 = vsel %vm4540, %v4710, %v4717
        %v4739 = vsel %vm2621, %v4547, %v2651
        %4740 = vst [vmem:[#allocation3] sm:$0xff] %v4739
        %4741 = vst [vmem:[#allocation3 + $0x8] sm:$0xff] %v4556
        %4742 = vst [vmem:[#allocation3 + $0x10] sm:$0xff] %v4565
        %4743 = vst [vmem:[#allocation3 + $0x18] sm:$0xff] %v4574
        %4744 = vst [vmem:[#allocation3 + $0x20] sm:$0xff] %v4583
        %4745 = vst [vmem:[#allocation3 + $0x28] sm:$0xff] %v4592
        %4746 = vst [vmem:[#allocation3 + $0x30] sm:$0xff] %v4601
        %4747 = vst [vmem:[#allocation3 + $0x38] sm:$0xff] %v4610
        %4748 = vst [vmem:[#allocation3 + $0x40] sm:$0xff] %v4619
        %4749 = vst [vmem:[#allocation3 + $0x48] sm:$0xff] %v4628
        %4750 = vst [vmem:[#allocation3 + $0x50] sm:$0xff] %v4637
        %4751 = vst [vmem:[#allocation3 + $0x58] sm:$0xff] %v4646
        %4752 = vst [vmem:[#allocation3 + $0x60] sm:$0xff] %v4655
        %4753 = vst [vmem:[#allocation3 + $0x68] sm:$0xff] %v4664
        %4754 = vst [vmem:[#allocation3 + $0x70] sm:$0xff] %v4673
        %4755 = vst [vmem:[#allocation3 + $0x78] sm:$0xff] %v4682
        %4756 = vst [vmem:[#allocation3 + $0x80] sm:$0xff] %v4691
        %4757 = vst [vmem:[#allocation3 + $0x88] sm:$0xff] %v4700
        %4758 = vst [vmem:[#allocation3 + $0x90] sm:$0xff] %v4709
        %v4759 = vld [vmem:[#allocation3 + $0x98] sm:$0xff]
        %v4760 = vsel %vm2647, %v4718, %v4759
        %4761 = vst [vmem:[#allocation3 + $0x98] sm:$0xff] %v4760
        %v4762 = vld [vmem:[#allocation3] sm:$0xff]
        %v4763 = vld [vmem:[#allocation3 + $0x8] sm:$0xff]
        %v4764 = vld [vmem:[#allocation3 + $0x10] sm:$0xff]
        %v4765 = vld [vmem:[#allocation3 + $0x18] sm:$0xff]
        %v4766 = vld [vmem:[#allocation3 + $0x20] sm:$0xff]
        %v4767 = vld [vmem:[#allocation3 + $0x28] sm:$0xff]
        %v4768 = vld [vmem:[#allocation3 + $0x30] sm:$0xff]
        %v4769 = vld [vmem:[#allocation3 + $0x38] sm:$0xff]
        %v4770 = vld [vmem:[#allocation3 + $0x40] sm:$0xff]
        %v4771 = vld [vmem:[#allocation3 + $0x48] sm:$0xff]
        %v4772 = vld [vmem:[#allocation3 + $0x50] sm:$0xff]
        %v4773 = vld [vmem:[#allocation3 + $0x58] sm:$0xff]
        %v4774 = vld [vmem:[#allocation3 + $0x60] sm:$0xff]
        %v4775 = vld [vmem:[#allocation3 + $0x68] sm:$0xff]
        %v4776 = vld [vmem:[#allocation3 + $0x70] sm:$0xff]
        %v4777 = vld [vmem:[#allocation3 + $0x78] sm:$0xff]
        %v4778 = vld [vmem:[#allocation3 + $0x80] sm:$0xff]
        %v4779 = vld [vmem:[#allocation3 + $0x88] sm:$0xff]
        %v4780 = vld [vmem:[#allocation3 + $0x90] sm:$0xff]
        %v4781 = vld [vmem:[#allocation3 + $0x98] sm:$0x77]
        %v4782 = vld [vmem:[%s766] sm:$0xff]
        %v4783 = vld [vmem:[%s766 + $0x8] sm:$0xff]
        %v4784 = vld [vmem:[%s766 + $0x10] sm:$0xff]
        %v4785 = vld [vmem:[%s766 + $0x18] sm:$0xff]
        %v4786 = vld [vmem:[%s766 + $0x20] sm:$0xff]
        %v4787 = vld [vmem:[%s766 + $0x28] sm:$0xff]
        %v4788 = vld [vmem:[%s766 + $0x30] sm:$0xff]
        %v4789 = vld [vmem:[%s766 + $0x38] sm:$0xff]
        %v4790 = vld [vmem:[%s766 + $0x40] sm:$0xff]
        %v4791 = vld [vmem:[%s766 + $0x48] sm:$0xff]
        %v4792 = vld [vmem:[%s766 + $0x50] sm:$0xff]
        %v4793 = vld [vmem:[%s766 + $0x58] sm:$0xff]
        %v4794 = vld [vmem:[%s766 + $0x60] sm:$0xff]
        %v4795 = vld [vmem:[%s766 + $0x68] sm:$0xff]
        %v4796 = vld [vmem:[%s766 + $0x70] sm:$0xff]
        %v4797 = vld [vmem:[%s766 + $0x78] sm:$0xff]
        %v4798 = vld [vmem:[%s766 + $0x80] sm:$0xff]
        %v4799 = vld [vmem:[%s766 + $0x88] sm:$0xff]
        %v4800 = vld [vmem:[%s766 + $0x90] sm:$0xff]
        %v4801 = vld [vmem:[%s766 + $0x98] sm:$0xff]
        %v4802 = vld [vmem:[%s766 + $0xa0] sm:$0xff]
        %v4803 = vld [vmem:[%s766 + $0xa8] sm:$0xff]
        %v4804 = vld [vmem:[%s766 + $0xb0] sm:$0xff]
        %v4805 = vld [vmem:[%s766 + $0xb8] sm:$0xff]
        %v4806 = vld [vmem:[%s766 + $0xc0] sm:$0xff]
        %v4807 = vld [vmem:[%s766 + $0xc8] sm:$0xff]
        %v4808 = vld [vmem:[%s766 + $0xd0] sm:$0xff]
        %v4809 = vld [vmem:[%s766 + $0xd8] sm:$0xff]
        %v4810 = vld [vmem:[%s766 + $0xe0] sm:$0xff]
        %v4811 = vld [vmem:[%s766 + $0xe8] sm:$0xff]
        %v4812 = vld [vmem:[%s766 + $0xf0] sm:$0xff]
        %v4813 = vld [vmem:[%s766 + $0xf8] sm:$0xff]
        %v4814 = vld [vmem:[#allocation3 + $0x98] sm:$0xff]
        %s4815 = scalar_lea.vmem %s766, 256 [#allocation12]
        %v4816 = vld [vmem:[%s4815] sm:$0xff]
        %v4817 = vld [vmem:[%s4815 + $0x8] sm:$0xff]
        %v4818 = vld [vmem:[%s4815 + $0x10] sm:$0xff]
        %v4819 = vld [vmem:[%s4815 + $0x18] sm:$0xff]
        %v4820 = vld [vmem:[%s4815 + $0x20] sm:$0xff]
        %v4821 = vld [vmem:[%s4815 + $0x28] sm:$0xff]
        %v4822 = vld [vmem:[%s4815 + $0x30] sm:$0xff]
        %v4823 = vld [vmem:[%s4815 + $0x38] sm:$0xff]
        %v4824 = vld [vmem:[%s4815 + $0x40] sm:$0xff]
        %v4825 = vld [vmem:[%s4815 + $0x48] sm:$0xff]
        %v4826 = vld [vmem:[%s4815 + $0x50] sm:$0xff]
        %v4827 = vld [vmem:[%s4815 + $0x58] sm:$0xff]
        %v4828 = vld [vmem:[%s4815 + $0x60] sm:$0xff]
        %v4829 = vld [vmem:[%s4815 + $0x68] sm:$0xff]
        %v4830 = vld [vmem:[%s4815 + $0x70] sm:$0xff]
        %v4831 = vld [vmem:[%s4815 + $0x78] sm:$0xff]
        %v4832 = vld [vmem:[%s4815 + $0x80] sm:$0xff]
        %v4833 = vld [vmem:[%s4815 + $0x88] sm:$0xff]
        %v4834 = vld [vmem:[%s4815 + $0x90] sm:$0xff]
        %v4835 = vld [vmem:[%s4815 + $0x98] sm:$0xff]
        %v4836 = vld [vmem:[%s4815 + $0xa0] sm:$0xff]
        %v4837 = vld [vmem:[%s4815 + $0xa8] sm:$0xff]
        %v4838 = vld [vmem:[%s4815 + $0xb0] sm:$0xff]
        %v4839 = vld [vmem:[%s4815 + $0xb8] sm:$0xff]
        %v4840 = vld [vmem:[%s4815 + $0xc0] sm:$0xff]
        %v4841 = vld [vmem:[%s4815 + $0xc8] sm:$0xff]
        %v4842 = vld [vmem:[%s4815 + $0xd0] sm:$0xff]
        %v4843 = vld [vmem:[%s4815 + $0xd8] sm:$0xff]
        %v4844 = vld [vmem:[%s4815 + $0xe0] sm:$0xff]
        %v4845 = vld [vmem:[%s4815 + $0xe8] sm:$0xff]
        %v4846 = vld [vmem:[%s4815 + $0xf0] sm:$0xff]
        %v4847 = vld [vmem:[%s4815 + $0xf8] sm:$0xff]
        %v4868 = vunpack.c.l.b16 %v4762
        %v4869 = vunpack.c.h.b16 %v4762
        %v4870 = vunpack.c.l.b16 %v4763
        %v4871 = vunpack.c.h.b16 %v4763
        %v4872 = vunpack.c.l.b16 %v4764
        %v4873 = vunpack.c.h.b16 %v4764
        %v4874 = vunpack.c.l.b16 %v4765
        %v4875 = vunpack.c.h.b16 %v4765
        %v4876 = vunpack.c.l.b16 %v4766
        %v4877 = vunpack.c.h.b16 %v4766
        %v4878 = vunpack.c.l.b16 %v4767
        %v4879 = vunpack.c.h.b16 %v4767
        %v4880 = vunpack.c.l.b16 %v4768
        %v4881 = vunpack.c.h.b16 %v4768
        %v4882 = vunpack.c.l.b16 %v4769
        %v4883 = vunpack.c.h.b16 %v4769
        %v4884 = vunpack.c.l.b16 %v4770
        %v4885 = vunpack.c.h.b16 %v4770
        %v4886 = vunpack.c.l.b16 %v4771
        %v4887 = vunpack.c.h.b16 %v4771
        %v4888 = vunpack.c.l.b16 %v4772
        %v4889 = vunpack.c.h.b16 %v4772
        %v4890 = vunpack.c.l.b16 %v4773
        %v4891 = vunpack.c.h.b16 %v4773
        %v4892 = vunpack.c.l.b16 %v4774
        %v4893 = vunpack.c.h.b16 %v4774
        %v4894 = vunpack.c.l.b16 %v4775
        %v4895 = vunpack.c.h.b16 %v4775
        %v4896 = vunpack.c.l.b16 %v4776
        %v4897 = vunpack.c.h.b16 %v4776
        %v4898 = vunpack.c.l.b16 %v4777
        %v4899 = vunpack.c.h.b16 %v4777
        %v4900 = vunpack.c.l.b16 %v4778
        %v4901 = vunpack.c.h.b16 %v4778
        %v4902 = vunpack.c.l.b16 %v4779
        %v4903 = vunpack.c.h.b16 %v4779
        %v4904 = vunpack.c.l.b16 %v4780
        %v4905 = vunpack.c.h.b16 %v4780
        %v4906 = vunpack.c.l.b16 %v4814
        %v4907 = vunpack.c.h.b16 %v4814
        %v4908 = vpack.c.b16 %v4870, %v4868
        %v4909 = vpack.c.b16 %v4871, %v4869
        %v4910 = vpack.c.b16 %v4874, %v4872
        %v4911 = vpack.c.b16 %v4875, %v4873
        %v4912 = vpack.c.b16 %v4878, %v4876
        %v4913 = vpack.c.b16 %v4879, %v4877
        %v4914 = vpack.c.b16 %v4882, %v4880
        %v4915 = vpack.c.b16 %v4883, %v4881
        %v4916 = vpack.c.b16 %v4886, %v4884
        %v4917 = vpack.c.b16 %v4887, %v4885
        %v4918 = vpack.c.b16 %v4890, %v4888
        %v4919 = vpack.c.b16 %v4891, %v4889
        %v4920 = vpack.c.b16 %v4894, %v4892
        %v4921 = vpack.c.b16 %v4895, %v4893
        %v4922 = vpack.c.b16 %v4898, %v4896
        %v4923 = vpack.c.b16 %v4899, %v4897
        %v4924 = vpack.c.b16 %v4902, %v4900
        %v4925 = vpack.c.b16 %v4903, %v4901
        %v4926 = vpack.c.b16 %v4906, %v4904
        %v4927 = vpack.c.b16 %v4907, %v4905
        %v4929 = vshrl.u32 %v4908, 16
        %v4931 = vshll.u32 %v4908, 16
        %v4933 = vrot.slane %v4931, 1
        %v4934 = vor.u32 %v4929, %v4933
        %v4936 = vshll.u32 %v4910, 16
        %v4938 = vrot.slane %v4936, 1
        %v4939 = vsel %vm2645, %v4934, %v4938
        %v4941 = vshrl.u32 %v4909, 16
        %v4943 = vshll.u32 %v4909, 16
        %v4945 = vrot.slane %v4943, 1
        %v4946 = vor.u32 %v4941, %v4945
        %v4948 = vshll.u32 %v4911, 16
        %v4950 = vrot.slane %v4948, 1
        %v4951 = vsel %vm2645, %v4946, %v4950
        %v4952 = vshrl.u32 %v4910, 16
        %v4954 = vor.u32 %v4952, %v4938
        %v4956 = vshll.u32 %v4912, 16
        %v4958 = vrot.slane %v4956, 1
        %v4959 = vsel %vm2645, %v4954, %v4958
        %v4960 = vshrl.u32 %v4911, 16
        %v4962 = vor.u32 %v4960, %v4950
        %v4964 = vshll.u32 %v4913, 16
        %v4966 = vrot.slane %v4964, 1
        %v4967 = vsel %vm2645, %v4962, %v4966
        %v4968 = vshrl.u32 %v4912, 16
        %v4970 = vor.u32 %v4968, %v4958
        %v4972 = vshll.u32 %v4914, 16
        %v4974 = vrot.slane %v4972, 1
        %v4975 = vsel %vm2645, %v4970, %v4974
        %v4976 = vshrl.u32 %v4913, 16
        %v4978 = vor.u32 %v4976, %v4966
        %v4980 = vshll.u32 %v4915, 16
        %v4982 = vrot.slane %v4980, 1
        %v4983 = vsel %vm2645, %v4978, %v4982
        %v4984 = vshrl.u32 %v4914, 16
        %v4986 = vor.u32 %v4984, %v4974
        %v4988 = vshll.u32 %v4916, 16
        %v4990 = vrot.slane %v4988, 1
        %v4991 = vsel %vm2645, %v4986, %v4990
        %v4992 = vshrl.u32 %v4915, 16
        %v4994 = vor.u32 %v4992, %v4982
        %v4996 = vshll.u32 %v4917, 16
        %v4998 = vrot.slane %v4996, 1
        %v4999 = vsel %vm2645, %v4994, %v4998
        %v5000 = vshrl.u32 %v4916, 16
        %v5002 = vor.u32 %v5000, %v4990
        %v5004 = vshll.u32 %v4918, 16
        %v5006 = vrot.slane %v5004, 1
        %v5007 = vsel %vm2645, %v5002, %v5006
        %v5008 = vshrl.u32 %v4917, 16
        %v5010 = vor.u32 %v5008, %v4998
        %v5012 = vshll.u32 %v4919, 16
        %v5014 = vrot.slane %v5012, 1
        %v5015 = vsel %vm2645, %v5010, %v5014
        %v5016 = vshrl.u32 %v4918, 16
        %v5018 = vor.u32 %v5016, %v5006
        %v5020 = vshll.u32 %v4920, 16
        %v5022 = vrot.slane %v5020, 1
        %v5023 = vsel %vm2645, %v5018, %v5022
        %v5024 = vshrl.u32 %v4919, 16
        %v5026 = vor.u32 %v5024, %v5014
        %v5028 = vshll.u32 %v4921, 16
        %v5030 = vrot.slane %v5028, 1
        %v5031 = vsel %vm2645, %v5026, %v5030
        %v5032 = vshrl.u32 %v4920, 16
        %v5034 = vor.u32 %v5032, %v5022
        %v5036 = vshll.u32 %v4922, 16
        %v5038 = vrot.slane %v5036, 1
        %v5039 = vsel %vm2645, %v5034, %v5038
        %v5040 = vshrl.u32 %v4921, 16
        %v5042 = vor.u32 %v5040, %v5030
        %v5044 = vshll.u32 %v4923, 16
        %v5046 = vrot.slane %v5044, 1
        %v5047 = vsel %vm2645, %v5042, %v5046
        %v5048 = vshrl.u32 %v4922, 16
        %v5050 = vor.u32 %v5048, %v5038
        %v5052 = vshll.u32 %v4924, 16
        %v5054 = vrot.slane %v5052, 1
        %v5055 = vsel %vm2645, %v5050, %v5054
        %v5056 = vshrl.u32 %v4923, 16
        %v5058 = vor.u32 %v5056, %v5046
        %v5060 = vshll.u32 %v4925, 16
        %v5062 = vrot.slane %v5060, 1
        %v5063 = vsel %vm2645, %v5058, %v5062
        %v5064 = vshrl.u32 %v4924, 16
        %v5066 = vor.u32 %v5064, %v5054
        %v5068 = vshll.u32 %v4926, 16
        %v5070 = vrot.slane %v5068, 1
        %v5071 = vsel %vm2645, %v5066, %v5070
        %v5072 = vshrl.u32 %v4925, 16
        %v5074 = vor.u32 %v5072, %v5062
        %v5076 = vshll.u32 %v4927, 16
        %v5078 = vrot.slane %v5076, 1
        %v5079 = vsel %vm2645, %v5074, %v5078
        %v5080 = vshrl.u32 %v4926, 16
        %v5082 = vor.u32 %v5080, %v5070
        %v5083 = vshrl.u32 %v4927, 16
        %v5085 = vor.u32 %v5083, %v5078
        %v5138 = vunpack.c.l.b16 %v4816
        %v5139 = vunpack.c.h.b16 %v4816
        %v5140 = vunpack.c.l.b16 %v4817
        %v5141 = vunpack.c.h.b16 %v4817
        %v5142 = vunpack.c.l.b16 %v4818
        %v5143 = vunpack.c.h.b16 %v4818
        %v5144 = vunpack.c.l.b16 %v4819
        %v5145 = vunpack.c.h.b16 %v4819
        %v5146 = vunpack.c.l.b16 %v4820
        %v5147 = vunpack.c.h.b16 %v4820
        %v5148 = vunpack.c.l.b16 %v4821
        %v5149 = vunpack.c.h.b16 %v4821
        %v5150 = vunpack.c.l.b16 %v4822
        %v5151 = vunpack.c.h.b16 %v4822
        %v5152 = vunpack.c.l.b16 %v4823
        %v5153 = vunpack.c.h.b16 %v4823
        %v5154 = vunpack.c.l.b16 %v4824
        %v5155 = vunpack.c.h.b16 %v4824
        %v5156 = vunpack.c.l.b16 %v4825
        %v5157 = vunpack.c.h.b16 %v4825
        %v5158 = vunpack.c.l.b16 %v4826
        %v5159 = vunpack.c.h.b16 %v4826
        %v5160 = vunpack.c.l.b16 %v4827
        %v5161 = vunpack.c.h.b16 %v4827
        %v5162 = vunpack.c.l.b16 %v4828
        %v5163 = vunpack.c.h.b16 %v4828
        %v5164 = vunpack.c.l.b16 %v4829
        %v5165 = vunpack.c.h.b16 %v4829
        %v5166 = vunpack.c.l.b16 %v4830
        %v5167 = vunpack.c.h.b16 %v4830
        %v5168 = vunpack.c.l.b16 %v4831
        %v5169 = vunpack.c.h.b16 %v4831
        %v5170 = vunpack.c.l.b16 %v4832
        %v5171 = vunpack.c.h.b16 %v4832
        %v5172 = vunpack.c.l.b16 %v4833
        %v5173 = vunpack.c.h.b16 %v4833
        %v5174 = vunpack.c.l.b16 %v4834
        %v5175 = vunpack.c.h.b16 %v4834
        %v5176 = vunpack.c.l.b16 %v4835
        %v5177 = vunpack.c.h.b16 %v4835
        %v5178 = vunpack.c.l.b16 %v4836
        %v5179 = vunpack.c.h.b16 %v4836
        %v5180 = vunpack.c.l.b16 %v4837
        %v5181 = vunpack.c.h.b16 %v4837
        %v5182 = vunpack.c.l.b16 %v4838
        %v5183 = vunpack.c.h.b16 %v4838
        %v5184 = vunpack.c.l.b16 %v4839
        %v5185 = vunpack.c.h.b16 %v4839
        %v5186 = vunpack.c.l.b16 %v4840
        %v5187 = vunpack.c.h.b16 %v4840
        %v5188 = vunpack.c.l.b16 %v4841
        %v5189 = vunpack.c.h.b16 %v4841
        %v5190 = vunpack.c.l.b16 %v4842
        %v5191 = vunpack.c.h.b16 %v4842
        %v5192 = vunpack.c.l.b16 %v4843
        %v5193 = vunpack.c.h.b16 %v4843
        %v5194 = vunpack.c.l.b16 %v4844
        %v5195 = vunpack.c.h.b16 %v4844
        %v5196 = vunpack.c.l.b16 %v4845
        %v5197 = vunpack.c.h.b16 %v4845
        %v5198 = vunpack.c.l.b16 %v4846
        %v5199 = vunpack.c.h.b16 %v4846
        %v5200 = vunpack.c.l.b16 %v4847
        %v5201 = vunpack.c.h.b16 %v4847
        %v5202 = vpack.c.b16 %v5140, %v5138
        %v5203 = vpack.c.b16 %v5141, %v5139
        %v5204 = vpack.c.b16 %v5144, %v5142
        %v5205 = vpack.c.b16 %v5145, %v5143
        %v5206 = vpack.c.b16 %v5148, %v5146
        %v5207 = vpack.c.b16 %v5149, %v5147
        %v5208 = vpack.c.b16 %v5152, %v5150
        %v5209 = vpack.c.b16 %v5153, %v5151
        %v5210 = vpack.c.b16 %v5156, %v5154
        %v5211 = vpack.c.b16 %v5157, %v5155
        %v5212 = vpack.c.b16 %v5160, %v5158
        %v5213 = vpack.c.b16 %v5161, %v5159
        %v5214 = vpack.c.b16 %v5164, %v5162
        %v5215 = vpack.c.b16 %v5165, %v5163
        %v5216 = vpack.c.b16 %v5168, %v5166
        %v5217 = vpack.c.b16 %v5169, %v5167
        %v5218 = vpack.c.b16 %v5172, %v5170
        %v5219 = vpack.c.b16 %v5173, %v5171
        %v5220 = vpack.c.b16 %v5176, %v5174
        %v5221 = vpack.c.b16 %v5177, %v5175
        %v5222 = vpack.c.b16 %v5180, %v5178
        %v5223 = vpack.c.b16 %v5181, %v5179
        %v5224 = vpack.c.b16 %v5184, %v5182
        %v5225 = vpack.c.b16 %v5185, %v5183
        %v5226 = vpack.c.b16 %v5188, %v5186
        %v5227 = vpack.c.b16 %v5189, %v5187
        %v5228 = vpack.c.b16 %v5192, %v5190
        %v5229 = vpack.c.b16 %v5193, %v5191
        %v5230 = vpack.c.b16 %v5196, %v5194
        %v5231 = vpack.c.b16 %v5197, %v5195
        %v5232 = vpack.c.b16 %v5200, %v5198
        %v5233 = vpack.c.b16 %v5201, %v5199
        %5266 = vmatpush.bf16.msra.mxu0 %v5216
        %5267 = vmatpush.bf16.msra.mxu0 %v5214
        %5268 = vmatpush.bf16.msra.mxu0 %v5212
        %5269 = vmatpush.bf16.msra.mxu0 %v5210
        %5270 = vmatpush.bf16.msra.mxu0 %v5208
        %5271 = vmatpush.bf16.msra.mxu0 %v5206
        %5272 = vmatpush.bf16.msra.mxu0 %v5204
        %5273 = vmatpush.bf16.msra.mxu0 %v5202
        %5274 = vmatmul.bf16.gmra.mxu0 %v4939
        %v5275 = vpop.f32.mrf.mxu0
        %v5276 = vadd.f32 0.0, %v5275
        %v5277 = vpop.f32.mrf.mxu0
        %v5278 = vadd.f32 0.0, %v5277
        %5279 = vmatmul.bf16.gmra.mxu0 %v4959
        %v5280 = vpop.f32.mrf.mxu0
        %v5281 = vadd.f32 0.0, %v5280
        %v5282 = vpop.f32.mrf.mxu0
        %v5283 = vadd.f32 0.0, %v5282
        %5284 = vmatmul.bf16.gmra.mxu0 %v4975
        %v5285 = vpop.f32.mrf.mxu0
        %v5286 = vadd.f32 0.0, %v5285
        %v5287 = vpop.f32.mrf.mxu0
        %v5288 = vadd.f32 0.0, %v5287
        %5289 = vmatmul.bf16.gmra.mxu0 %v4991
        %v5290 = vpop.f32.mrf.mxu0
        %v5291 = vadd.f32 0.0, %v5290
        %v5292 = vpop.f32.mrf.mxu0
        %v5293 = vadd.f32 0.0, %v5292
        %5294 = vmatmul.bf16.gmra.mxu0 %v5007
        %v5295 = vpop.f32.mrf.mxu0
        %v5296 = vadd.f32 0.0, %v5295
        %v5297 = vpop.f32.mrf.mxu0
        %v5298 = vadd.f32 0.0, %v5297
        %5299 = vmatmul.bf16.gmra.mxu0 %v5023
        %v5300 = vpop.f32.mrf.mxu0
        %v5301 = vadd.f32 0.0, %v5300
        %v5302 = vpop.f32.mrf.mxu0
        %v5303 = vadd.f32 0.0, %v5302
        %5304 = vmatmul.bf16.gmra.mxu0 %v5039
        %v5305 = vpop.f32.mrf.mxu0
        %v5306 = vadd.f32 0.0, %v5305
        %v5307 = vpop.f32.mrf.mxu0
        %v5308 = vadd.f32 0.0, %v5307
        %5309 = vmatmul.bf16.gmra.mxu0 %v5055
        %v5310 = vpop.f32.mrf.mxu0
        %v5311 = vadd.f32 0.0, %v5310
        %v5312 = vpop.f32.mrf.mxu0
        %v5313 = vadd.f32 0.0, %v5312
        %5314 = vmatmul.bf16.gmra.mxu0 %v5071
        %v5315 = vpop.f32.mrf.mxu0
        %v5316 = vadd.f32 0.0, %v5315
        %v5317 = vpop.f32.mrf.mxu0
        %v5318 = vadd.f32 0.0, %v5317
        %5319 = vmatmul.bf16.gmra.mxu0 %v5082
        %v5320 = vpop.f32.mrf.mxu0
        %v5321 = vadd.f32 0.0, %v5320
        %v5322 = vpop.f32.mrf.mxu0
        %v5323 = vadd.f32 0.0, %v5322
        %5324 = vdwg.mxu0
        %5325 = vmatpush.bf16.msra.mxu0 %v5232
        %5326 = vmatpush.bf16.msra.mxu0 %v5230
        %5327 = vmatpush.bf16.msra.mxu0 %v5228
        %5328 = vmatpush.bf16.msra.mxu0 %v5226
        %5329 = vmatpush.bf16.msra.mxu0 %v5224
        %5330 = vmatpush.bf16.msra.mxu0 %v5222
        %5331 = vmatpush.bf16.msra.mxu0 %v5220
        %5332 = vmatpush.bf16.msra.mxu0 %v5218
        %5333 = vmatmul.bf16.gmra.mxu0 %v4951
        %v5334 = vpop.f32.mrf.mxu0
        %v5335 = vadd.f32 %v5276, %v5334
        %v5336 = vpop.f32.mrf.mxu0
        %v5337 = vadd.f32 %v5278, %v5336
        %5338 = vmatmul.bf16.gmra.mxu0 %v4967
        %v5339 = vpop.f32.mrf.mxu0
        %v5340 = vadd.f32 %v5281, %v5339
        %v5341 = vpop.f32.mrf.mxu0
        %v5342 = vadd.f32 %v5283, %v5341
        %5343 = vmatmul.bf16.gmra.mxu0 %v4983
        %v5344 = vpop.f32.mrf.mxu0
        %v5345 = vadd.f32 %v5286, %v5344
        %v5346 = vpop.f32.mrf.mxu0
        %v5347 = vadd.f32 %v5288, %v5346
        %5348 = vmatmul.bf16.gmra.mxu0 %v4999
        %v5349 = vpop.f32.mrf.mxu0
        %v5350 = vadd.f32 %v5291, %v5349
        %v5351 = vpop.f32.mrf.mxu0
        %v5352 = vadd.f32 %v5293, %v5351
        %5353 = vmatmul.bf16.gmra.mxu0 %v5015
        %v5354 = vpop.f32.mrf.mxu0
        %v5355 = vadd.f32 %v5296, %v5354
        %v5356 = vpop.f32.mrf.mxu0
        %v5357 = vadd.f32 %v5298, %v5356
        %5358 = vmatmul.bf16.gmra.mxu0 %v5031
        %v5359 = vpop.f32.mrf.mxu0
        %v5360 = vadd.f32 %v5301, %v5359
        %v5361 = vpop.f32.mrf.mxu0
        %v5362 = vadd.f32 %v5303, %v5361
        %5363 = vmatmul.bf16.gmra.mxu0 %v5047
        %v5364 = vpop.f32.mrf.mxu0
        %v5365 = vadd.f32 %v5306, %v5364
        %v5366 = vpop.f32.mrf.mxu0
        %v5367 = vadd.f32 %v5308, %v5366
        %5368 = vmatmul.bf16.gmra.mxu0 %v5063
        %v5369 = vpop.f32.mrf.mxu0
        %v5370 = vadd.f32 %v5311, %v5369
        %v5371 = vpop.f32.mrf.mxu0
        %v5372 = vadd.f32 %v5313, %v5371
        %5373 = vmatmul.bf16.gmra.mxu0 %v5079
        %v5374 = vpop.f32.mrf.mxu0
        %v5375 = vadd.f32 %v5316, %v5374
        %v5376 = vpop.f32.mrf.mxu0
        %v5377 = vadd.f32 %v5318, %v5376
        %5378 = vmatmul.bf16.gmra.mxu0 %v5085
        %v5379 = vpop.f32.mrf.mxu0
        %v5380 = vadd.f32 %v5321, %v5379
        %v5381 = vpop.f32.mrf.mxu0
        %v5382 = vadd.f32 %v5323, %v5381
        %5383 = vdwg.mxu0
        %5384 = vmatpush.bf16.msra.mxu0 %v5217
        %5385 = vmatpush.bf16.msra.mxu0 %v5215
        %5386 = vmatpush.bf16.msra.mxu0 %v5213
        %5387 = vmatpush.bf16.msra.mxu0 %v5211
        %5388 = vmatpush.bf16.msra.mxu0 %v5209
        %5389 = vmatpush.bf16.msra.mxu0 %v5207
        %5390 = vmatpush.bf16.msra.mxu0 %v5205
        %5391 = vmatpush.bf16.msra.mxu0 %v5203
        %5392 = vmatmul.bf16.gmra.mxu0 %v4939
        %v5393 = vpop.f32.mrf.mxu0
        %v5394 = vadd.f32 0.0, %v5393
        %v5395 = vpop.f32.mrf.mxu0
        %v5396 = vadd.f32 0.0, %v5395
        %5397 = vmatmul.bf16.gmra.mxu0 %v4959
        %v5398 = vpop.f32.mrf.mxu0
        %v5399 = vadd.f32 0.0, %v5398
        %v5400 = vpop.f32.mrf.mxu0
        %v5401 = vadd.f32 0.0, %v5400
        %5402 = vmatmul.bf16.gmra.mxu0 %v4975
        %v5403 = vpop.f32.mrf.mxu0
        %v5404 = vadd.f32 0.0, %v5403
        %v5405 = vpop.f32.mrf.mxu0
        %v5406 = vadd.f32 0.0, %v5405
        %5407 = vmatmul.bf16.gmra.mxu0 %v4991
        %v5408 = vpop.f32.mrf.mxu0
        %v5409 = vadd.f32 0.0, %v5408
        %v5410 = vpop.f32.mrf.mxu0
        %v5411 = vadd.f32 0.0, %v5410
        %5412 = vmatmul.bf16.gmra.mxu0 %v5007
        %v5413 = vpop.f32.mrf.mxu0
        %v5414 = vadd.f32 0.0, %v5413
        %v5415 = vpop.f32.mrf.mxu0
        %v5416 = vadd.f32 0.0, %v5415
        %5417 = vmatmul.bf16.gmra.mxu0 %v5023
        %v5418 = vpop.f32.mrf.mxu0
        %v5419 = vadd.f32 0.0, %v5418
        %v5420 = vpop.f32.mrf.mxu0
        %v5421 = vadd.f32 0.0, %v5420
        %5422 = vmatmul.bf16.gmra.mxu0 %v5039
        %v5423 = vpop.f32.mrf.mxu0
        %v5424 = vadd.f32 0.0, %v5423
        %v5425 = vpop.f32.mrf.mxu0
        %v5426 = vadd.f32 0.0, %v5425
        %5427 = vmatmul.bf16.gmra.mxu0 %v5055
        %v5428 = vpop.f32.mrf.mxu0
        %v5429 = vadd.f32 0.0, %v5428
        %v5430 = vpop.f32.mrf.mxu0
        %v5431 = vadd.f32 0.0, %v5430
        %5432 = vmatmul.bf16.gmra.mxu0 %v5071
        %v5433 = vpop.f32.mrf.mxu0
        %v5434 = vadd.f32 0.0, %v5433
        %v5435 = vpop.f32.mrf.mxu0
        %v5436 = vadd.f32 0.0, %v5435
        %5437 = vmatmul.bf16.gmra.mxu0 %v5082
        %v5438 = vpop.f32.mrf.mxu0
        %v5439 = vadd.f32 0.0, %v5438
        %v5440 = vpop.f32.mrf.mxu0
        %v5441 = vadd.f32 0.0, %v5440
        %5442 = vdwg.mxu0
        %5443 = vmatpush.bf16.msra.mxu0 %v5233
        %5444 = vmatpush.bf16.msra.mxu0 %v5231
        %5445 = vmatpush.bf16.msra.mxu0 %v5229
        %5446 = vmatpush.bf16.msra.mxu0 %v5227
        %5447 = vmatpush.bf16.msra.mxu0 %v5225
        %5448 = vmatpush.bf16.msra.mxu0 %v5223
        %5449 = vmatpush.bf16.msra.mxu0 %v5221
        %5450 = vmatpush.bf16.msra.mxu0 %v5219
        %5451 = vmatmul.bf16.gmra.mxu0 %v4951
        %v5452 = vpop.f32.mrf.mxu0
        %v5453 = vadd.f32 %v5394, %v5452
        %v5454 = vpop.f32.mrf.mxu0
        %v5455 = vadd.f32 %v5396, %v5454
        %5456 = vmatmul.bf16.gmra.mxu0 %v4967
        %v5457 = vpop.f32.mrf.mxu0
        %v5458 = vadd.f32 %v5399, %v5457
        %v5459 = vpop.f32.mrf.mxu0
        %v5460 = vadd.f32 %v5401, %v5459
        %5461 = vmatmul.bf16.gmra.mxu0 %v4983
        %v5462 = vpop.f32.mrf.mxu0
        %v5463 = vadd.f32 %v5404, %v5462
        %v5464 = vpop.f32.mrf.mxu0
        %v5465 = vadd.f32 %v5406, %v5464
        %5466 = vmatmul.bf16.gmra.mxu0 %v4999
        %v5467 = vpop.f32.mrf.mxu0
        %v5468 = vadd.f32 %v5409, %v5467
        %v5469 = vpop.f32.mrf.mxu0
        %v5470 = vadd.f32 %v5411, %v5469
        %5471 = vmatmul.bf16.gmra.mxu0 %v5015
        %v5472 = vpop.f32.mrf.mxu0
        %v5473 = vadd.f32 %v5414, %v5472
        %v5474 = vpop.f32.mrf.mxu0
        %v5475 = vadd.f32 %v5416, %v5474
        %5476 = vmatmul.bf16.gmra.mxu0 %v5031
        %v5477 = vpop.f32.mrf.mxu0
        %v5478 = vadd.f32 %v5419, %v5477
        %v5479 = vpop.f32.mrf.mxu0
        %v5480 = vadd.f32 %v5421, %v5479
        %5481 = vmatmul.bf16.gmra.mxu0 %v5047
        %v5482 = vpop.f32.mrf.mxu0
        %v5483 = vadd.f32 %v5424, %v5482
        %v5484 = vpop.f32.mrf.mxu0
        %v5485 = vadd.f32 %v5426, %v5484
        %5486 = vmatmul.bf16.gmra.mxu0 %v5063
        %v5487 = vpop.f32.mrf.mxu0
        %v5488 = vadd.f32 %v5429, %v5487
        %v5489 = vpop.f32.mrf.mxu0
        %v5490 = vadd.f32 %v5431, %v5489
        %5491 = vmatmul.bf16.gmra.mxu0 %v5079
        %v5492 = vpop.f32.mrf.mxu0
        %v5493 = vadd.f32 %v5434, %v5492
        %v5494 = vpop.f32.mrf.mxu0
        %v5495 = vadd.f32 %v5436, %v5494
        %5496 = vmatmul.bf16.gmra.mxu0 %v5085
        %v5497 = vpop.f32.mrf.mxu0
        %v5498 = vadd.f32 %v5439, %v5497
        %v5499 = vpop.f32.mrf.mxu0
        %v5500 = vadd.f32 %v5441, %v5499
        %5501 = vdwg.mxu0
        %v5503 = vunpack.c.l.b16 %v4781
        %v5504 = vunpack.c.h.b16 %v4781
        %v5505 = vpack.c.b16 %v5503, %v4904
        %v5506 = vpack.c.b16 %v5504, %v4905
        %v5559 = vunpack.c.l.b16 %v4782
        %v5560 = vunpack.c.h.b16 %v4782
        %v5561 = vunpack.c.l.b16 %v4783
        %v5562 = vunpack.c.h.b16 %v4783
        %v5563 = vunpack.c.l.b16 %v4784
        %v5564 = vunpack.c.h.b16 %v4784
        %v5565 = vunpack.c.l.b16 %v4785
        %v5566 = vunpack.c.h.b16 %v4785
        %v5567 = vunpack.c.l.b16 %v4786
        %v5568 = vunpack.c.h.b16 %v4786
        %v5569 = vunpack.c.l.b16 %v4787
        %v5570 = vunpack.c.h.b16 %v4787
        %v5571 = vunpack.c.l.b16 %v4788
        %v5572 = vunpack.c.h.b16 %v4788
        %v5573 = vunpack.c.l.b16 %v4789
        %v5574 = vunpack.c.h.b16 %v4789
        %v5575 = vunpack.c.l.b16 %v4790
        %v5576 = vunpack.c.h.b16 %v4790
        %v5577 = vunpack.c.l.b16 %v4791
        %v5578 = vunpack.c.h.b16 %v4791
        %v5579 = vunpack.c.l.b16 %v4792
        %v5580 = vunpack.c.h.b16 %v4792
        %v5581 = vunpack.c.l.b16 %v4793
        %v5582 = vunpack.c.h.b16 %v4793
        %v5583 = vunpack.c.l.b16 %v4794
        %v5584 = vunpack.c.h.b16 %v4794
        %v5585 = vunpack.c.l.b16 %v4795
        %v5586 = vunpack.c.h.b16 %v4795
        %v5587 = vunpack.c.l.b16 %v4796
        %v5588 = vunpack.c.h.b16 %v4796
        %v5589 = vunpack.c.l.b16 %v4797
        %v5590 = vunpack.c.h.b16 %v4797
        %v5591 = vunpack.c.l.b16 %v4798
        %v5592 = vunpack.c.h.b16 %v4798
        %v5593 = vunpack.c.l.b16 %v4799
        %v5594 = vunpack.c.h.b16 %v4799
        %v5595 = vunpack.c.l.b16 %v4800
        %v5596 = vunpack.c.h.b16 %v4800
        %v5597 = vunpack.c.l.b16 %v4801
        %v5598 = vunpack.c.h.b16 %v4801
        %v5599 = vunpack.c.l.b16 %v4802
        %v5600 = vunpack.c.h.b16 %v4802
        %v5601 = vunpack.c.l.b16 %v4803
        %v5602 = vunpack.c.h.b16 %v4803
        %v5603 = vunpack.c.l.b16 %v4804
        %v5604 = vunpack.c.h.b16 %v4804
        %v5605 = vunpack.c.l.b16 %v4805
        %v5606 = vunpack.c.h.b16 %v4805
        %v5607 = vunpack.c.l.b16 %v4806
        %v5608 = vunpack.c.h.b16 %v4806
        %v5609 = vunpack.c.l.b16 %v4807
        %v5610 = vunpack.c.h.b16 %v4807
        %v5611 = vunpack.c.l.b16 %v4808
        %v5612 = vunpack.c.h.b16 %v4808
        %v5613 = vunpack.c.l.b16 %v4809
        %v5614 = vunpack.c.h.b16 %v4809
        %v5615 = vunpack.c.l.b16 %v4810
        %v5616 = vunpack.c.h.b16 %v4810
        %v5617 = vunpack.c.l.b16 %v4811
        %v5618 = vunpack.c.h.b16 %v4811
        %v5619 = vunpack.c.l.b16 %v4812
        %v5620 = vunpack.c.h.b16 %v4812
        %v5621 = vunpack.c.l.b16 %v4813
        %v5622 = vunpack.c.h.b16 %v4813
        %v5623 = vpack.c.b16 %v5561, %v5559
        %v5624 = vpack.c.b16 %v5562, %v5560
        %v5625 = vpack.c.b16 %v5565, %v5563
        %v5626 = vpack.c.b16 %v5566, %v5564
        %v5627 = vpack.c.b16 %v5569, %v5567
        %v5628 = vpack.c.b16 %v5570, %v5568
        %v5629 = vpack.c.b16 %v5573, %v5571
        %v5630 = vpack.c.b16 %v5574, %v5572
        %v5631 = vpack.c.b16 %v5577, %v5575
        %v5632 = vpack.c.b16 %v5578, %v5576
        %v5633 = vpack.c.b16 %v5581, %v5579
        %v5634 = vpack.c.b16 %v5582, %v5580
        %v5635 = vpack.c.b16 %v5585, %v5583
        %v5636 = vpack.c.b16 %v5586, %v5584
        %v5637 = vpack.c.b16 %v5589, %v5587
        %v5638 = vpack.c.b16 %v5590, %v5588
        %v5639 = vpack.c.b16 %v5593, %v5591
        %v5640 = vpack.c.b16 %v5594, %v5592
        %v5641 = vpack.c.b16 %v5597, %v5595
        %v5642 = vpack.c.b16 %v5598, %v5596
        %v5643 = vpack.c.b16 %v5601, %v5599
        %v5644 = vpack.c.b16 %v5602, %v5600
        %v5645 = vpack.c.b16 %v5605, %v5603
        %v5646 = vpack.c.b16 %v5606, %v5604
        %v5647 = vpack.c.b16 %v5609, %v5607
        %v5648 = vpack.c.b16 %v5610, %v5608
        %v5649 = vpack.c.b16 %v5613, %v5611
        %v5650 = vpack.c.b16 %v5614, %v5612
        %v5651 = vpack.c.b16 %v5617, %v5615
        %v5652 = vpack.c.b16 %v5618, %v5616
        %v5653 = vpack.c.b16 %v5621, %v5619
        %v5654 = vpack.c.b16 %v5622, %v5620
        %5687 = vmatpush.bf16.msra.mxu0 %v5637
        %5688 = vmatpush.bf16.msra.mxu0 %v5635
        %5689 = vmatpush.bf16.msra.mxu0 %v5633
        %5690 = vmatpush.bf16.msra.mxu0 %v5631
        %5691 = vmatpush.bf16.msra.mxu0 %v5629
        %5692 = vmatpush.bf16.msra.mxu0 %v5627
        %5693 = vmatpush.bf16.msra.mxu0 %v5625
        %5694 = vmatpush.bf16.msra.mxu0 %v5623
        %5695 = vmatmul.bf16.gmra.mxu0 %v4908
        %v5696 = vpop.f32.mrf.mxu0
        %v5697 = vadd.f32 %v5335, %v5696
        %v5698 = vpop.f32.mrf.mxu0
        %v5699 = vadd.f32 %v5337, %v5698
        %5700 = vmatmul.bf16.gmra.mxu0 %v4910
        %v5701 = vpop.f32.mrf.mxu0
        %v5702 = vadd.f32 %v5340, %v5701
        %v5703 = vpop.f32.mrf.mxu0
        %v5704 = vadd.f32 %v5342, %v5703
        %5705 = vmatmul.bf16.gmra.mxu0 %v4912
        %v5706 = vpop.f32.mrf.mxu0
        %v5707 = vadd.f32 %v5345, %v5706
        %v5708 = vpop.f32.mrf.mxu0
        %v5709 = vadd.f32 %v5347, %v5708
        %5710 = vmatmul.bf16.gmra.mxu0 %v4914
        %v5711 = vpop.f32.mrf.mxu0
        %v5712 = vadd.f32 %v5350, %v5711
        %v5713 = vpop.f32.mrf.mxu0
        %v5714 = vadd.f32 %v5352, %v5713
        %5715 = vmatmul.bf16.gmra.mxu0 %v4916
        %v5716 = vpop.f32.mrf.mxu0
        %v5717 = vadd.f32 %v5355, %v5716
        %v5718 = vpop.f32.mrf.mxu0
        %v5719 = vadd.f32 %v5357, %v5718
        %5720 = vmatmul.bf16.gmra.mxu0 %v4918
        %v5721 = vpop.f32.mrf.mxu0
        %v5722 = vadd.f32 %v5360, %v5721
        %v5723 = vpop.f32.mrf.mxu0
        %v5724 = vadd.f32 %v5362, %v5723
        %5725 = vmatmul.bf16.gmra.mxu0 %v4920
        %v5726 = vpop.f32.mrf.mxu0
        %v5727 = vadd.f32 %v5365, %v5726
        %v5728 = vpop.f32.mrf.mxu0
        %v5729 = vadd.f32 %v5367, %v5728
        %5730 = vmatmul.bf16.gmra.mxu0 %v4922
        %v5731 = vpop.f32.mrf.mxu0
        %v5732 = vadd.f32 %v5370, %v5731
        %v5733 = vpop.f32.mrf.mxu0
        %v5734 = vadd.f32 %v5372, %v5733
        %5735 = vmatmul.bf16.gmra.mxu0 %v4924
        %v5736 = vpop.f32.mrf.mxu0
        %v5737 = vadd.f32 %v5375, %v5736
        %v5738 = vpop.f32.mrf.mxu0
        %v5739 = vadd.f32 %v5377, %v5738
        %5740 = vmatmul.bf16.gmra.mxu0 %v5505
        %v5741 = vpop.f32.mrf.mxu0
        %v5742 = vadd.f32 %v5380, %v5741
        %v5743 = vpop.f32.mrf.mxu0
        %v5744 = vadd.f32 %v5382, %v5743
        %5745 = vdwg.mxu0
        %5746 = vmatpush.bf16.msra.mxu0 %v5653
        %5747 = vmatpush.bf16.msra.mxu0 %v5651
        %5748 = vmatpush.bf16.msra.mxu0 %v5649
        %5749 = vmatpush.bf16.msra.mxu0 %v5647
        %5750 = vmatpush.bf16.msra.mxu0 %v5645
        %5751 = vmatpush.bf16.msra.mxu0 %v5643
        %5752 = vmatpush.bf16.msra.mxu0 %v5641
        %5753 = vmatpush.bf16.msra.mxu0 %v5639
        %5754 = vmatmul.bf16.gmra.mxu0 %v4909
        %v5755 = vpop.f32.mrf.mxu0
        %v5756 = vadd.f32 %v5697, %v5755
        %v5757 = vpop.f32.mrf.mxu0
        %v5758 = vadd.f32 %v5699, %v5757
        %5759 = vmatmul.bf16.gmra.mxu0 %v4911
        %v5760 = vpop.f32.mrf.mxu0
        %v5761 = vadd.f32 %v5702, %v5760
        %v5762 = vpop.f32.mrf.mxu0
        %v5763 = vadd.f32 %v5704, %v5762
        %5764 = vmatmul.bf16.gmra.mxu0 %v4913
        %v5765 = vpop.f32.mrf.mxu0
        %v5766 = vadd.f32 %v5707, %v5765
        %v5767 = vpop.f32.mrf.mxu0
        %v5768 = vadd.f32 %v5709, %v5767
        %5769 = vmatmul.bf16.gmra.mxu0 %v4915
        %v5770 = vpop.f32.mrf.mxu0
        %v5771 = vadd.f32 %v5712, %v5770
        %v5772 = vpop.f32.mrf.mxu0
        %v5773 = vadd.f32 %v5714, %v5772
        %5774 = vmatmul.bf16.gmra.mxu0 %v4917
        %v5775 = vpop.f32.mrf.mxu0
        %v5776 = vadd.f32 %v5717, %v5775
        %v5777 = vpop.f32.mrf.mxu0
        %v5778 = vadd.f32 %v5719, %v5777
        %5779 = vmatmul.bf16.gmra.mxu0 %v4919
        %v5780 = vpop.f32.mrf.mxu0
        %v5781 = vadd.f32 %v5722, %v5780
        %v5782 = vpop.f32.mrf.mxu0
        %v5783 = vadd.f32 %v5724, %v5782
        %5784 = vmatmul.bf16.gmra.mxu0 %v4921
        %v5785 = vpop.f32.mrf.mxu0
        %v5786 = vadd.f32 %v5727, %v5785
        %v5787 = vpop.f32.mrf.mxu0
        %v5788 = vadd.f32 %v5729, %v5787
        %5789 = vmatmul.bf16.gmra.mxu0 %v4923
        %v5790 = vpop.f32.mrf.mxu0
        %v5791 = vadd.f32 %v5732, %v5790
        %v5792 = vpop.f32.mrf.mxu0
        %v5793 = vadd.f32 %v5734, %v5792
        %5794 = vmatmul.bf16.gmra.mxu0 %v4925
        %v5795 = vpop.f32.mrf.mxu0
        %v5796 = vadd.f32 %v5737, %v5795
        %v5797 = vpop.f32.mrf.mxu0
        %v5798 = vadd.f32 %v5739, %v5797
        %5799 = vmatmul.bf16.gmra.mxu0 %v5506
        %v5800 = vpop.f32.mrf.mxu0
        %v5801 = vadd.f32 %v5742, %v5800
        %v5802 = vpop.f32.mrf.mxu0
        %v5803 = vadd.f32 %v5744, %v5802
        %5804 = vdwg.mxu0
        %5805 = vmatpush.bf16.msra.mxu0 %v5638
        %5806 = vmatpush.bf16.msra.mxu0 %v5636
        %5807 = vmatpush.bf16.msra.mxu0 %v5634
        %5808 = vmatpush.bf16.msra.mxu0 %v5632
        %5809 = vmatpush.bf16.msra.mxu0 %v5630
        %5810 = vmatpush.bf16.msra.mxu0 %v5628
        %5811 = vmatpush.bf16.msra.mxu0 %v5626
        %5812 = vmatpush.bf16.msra.mxu0 %v5624
        %5813 = vmatmul.bf16.gmra.mxu0 %v4908
        %v5814 = vpop.f32.mrf.mxu0
        %v5815 = vadd.f32 %v5453, %v5814
        %v5816 = vpop.f32.mrf.mxu0
        %v5817 = vadd.f32 %v5455, %v5816
        %5818 = vmatmul.bf16.gmra.mxu0 %v4910
        %v5819 = vpop.f32.mrf.mxu0
        %v5820 = vadd.f32 %v5458, %v5819
        %v5821 = vpop.f32.mrf.mxu0
        %v5822 = vadd.f32 %v5460, %v5821
        %5823 = vmatmul.bf16.gmra.mxu0 %v4912
        %v5824 = vpop.f32.mrf.mxu0
        %v5825 = vadd.f32 %v5463, %v5824
        %v5826 = vpop.f32.mrf.mxu0
        %v5827 = vadd.f32 %v5465, %v5826
        %5828 = vmatmul.bf16.gmra.mxu0 %v4914
        %v5829 = vpop.f32.mrf.mxu0
        %v5830 = vadd.f32 %v5468, %v5829
        %v5831 = vpop.f32.mrf.mxu0
        %v5832 = vadd.f32 %v5470, %v5831
        %5833 = vmatmul.bf16.gmra.mxu0 %v4916
        %v5834 = vpop.f32.mrf.mxu0
        %v5835 = vadd.f32 %v5473, %v5834
        %v5836 = vpop.f32.mrf.mxu0
        %v5837 = vadd.f32 %v5475, %v5836
        %5838 = vmatmul.bf16.gmra.mxu0 %v4918
        %v5839 = vpop.f32.mrf.mxu0
        %v5840 = vadd.f32 %v5478, %v5839
        %v5841 = vpop.f32.mrf.mxu0
        %v5842 = vadd.f32 %v5480, %v5841
        %5843 = vmatmul.bf16.gmra.mxu0 %v4920
        %v5844 = vpop.f32.mrf.mxu0
        %v5845 = vadd.f32 %v5483, %v5844
        %v5846 = vpop.f32.mrf.mxu0
        %v5847 = vadd.f32 %v5485, %v5846
        %5848 = vmatmul.bf16.gmra.mxu0 %v4922
        %v5849 = vpop.f32.mrf.mxu0
        %v5850 = vadd.f32 %v5488, %v5849
        %v5851 = vpop.f32.mrf.mxu0
        %v5852 = vadd.f32 %v5490, %v5851
        %5853 = vmatmul.bf16.gmra.mxu0 %v4924
        %v5854 = vpop.f32.mrf.mxu0
        %v5855 = vadd.f32 %v5493, %v5854
        %v5856 = vpop.f32.mrf.mxu0
        %v5857 = vadd.f32 %v5495, %v5856
        %5858 = vmatmul.bf16.gmra.mxu0 %v5505
        %v5859 = vpop.f32.mrf.mxu0
        %v5860 = vadd.f32 %v5498, %v5859
        %v5861 = vpop.f32.mrf.mxu0
        %v5862 = vadd.f32 %v5500, %v5861
        %5863 = vdwg.mxu0
        %5864 = vmatpush.bf16.msra.mxu0 %v5654
        %5865 = vmatpush.bf16.msra.mxu0 %v5652
        %5866 = vmatpush.bf16.msra.mxu0 %v5650
        %5867 = vmatpush.bf16.msra.mxu0 %v5648
        %5868 = vmatpush.bf16.msra.mxu0 %v5646
        %5869 = vmatpush.bf16.msra.mxu0 %v5644
        %5870 = vmatpush.bf16.msra.mxu0 %v5642
        %5871 = vmatpush.bf16.msra.mxu0 %v5640
        %5872 = vmatmul.bf16.gmra.mxu0 %v4909
        %v5873 = vpop.f32.mrf.mxu0
        %v5874 = vadd.f32 %v5815, %v5873
        %v5875 = vpop.f32.mrf.mxu0
        %v5876 = vadd.f32 %v5817, %v5875
        %5877 = vmatmul.bf16.gmra.mxu0 %v4911
        %v5878 = vpop.f32.mrf.mxu0
        %v5879 = vadd.f32 %v5820, %v5878
        %v5880 = vpop.f32.mrf.mxu0
        %v5881 = vadd.f32 %v5822, %v5880
        %5882 = vmatmul.bf16.gmra.mxu0 %v4913
        %v5883 = vpop.f32.mrf.mxu0
        %v5884 = vadd.f32 %v5825, %v5883
        %v5885 = vpop.f32.mrf.mxu0
        %v5886 = vadd.f32 %v5827, %v5885
        %5887 = vmatmul.bf16.gmra.mxu0 %v4915
        %v5888 = vpop.f32.mrf.mxu0
        %v5889 = vadd.f32 %v5830, %v5888
        %v5890 = vpop.f32.mrf.mxu0
        %v5891 = vadd.f32 %v5832, %v5890
        %5892 = vmatmul.bf16.gmra.mxu0 %v4917
        %v5893 = vpop.f32.mrf.mxu0
        %v5894 = vadd.f32 %v5835, %v5893
        %v5895 = vpop.f32.mrf.mxu0
        %v5896 = vadd.f32 %v5837, %v5895
        %5897 = vmatmul.bf16.gmra.mxu0 %v4919
        %v5898 = vpop.f32.mrf.mxu0
        %v5899 = vadd.f32 %v5840, %v5898
        %v5900 = vpop.f32.mrf.mxu0
        %v5901 = vadd.f32 %v5842, %v5900
        %5902 = vmatmul.bf16.gmra.mxu0 %v4921
        %v5903 = vpop.f32.mrf.mxu0
        %v5904 = vadd.f32 %v5845, %v5903
        %v5905 = vpop.f32.mrf.mxu0
        %v5906 = vadd.f32 %v5847, %v5905
        %5907 = vmatmul.bf16.gmra.mxu0 %v4923
        %v5908 = vpop.f32.mrf.mxu0
        %v5909 = vadd.f32 %v5850, %v5908
        %v5910 = vpop.f32.mrf.mxu0
        %v5911 = vadd.f32 %v5852, %v5910
        %5912 = vmatmul.bf16.gmra.mxu0 %v4925
        %v5913 = vpop.f32.mrf.mxu0
        %v5914 = vadd.f32 %v5855, %v5913
        %v5915 = vpop.f32.mrf.mxu0
        %v5916 = vadd.f32 %v5857, %v5915
        %5917 = vmatmul.bf16.gmra.mxu0 %v5506
        %v5918 = vpop.f32.mrf.mxu0
        %v5919 = vadd.f32 %v5860, %v5918
        %v5920 = vpop.f32.mrf.mxu0
        %v5921 = vadd.f32 %v5862, %v5920
        %5922 = vdwg.mxu0
        %v5923 = vld [vmem:[#allocation3] sm:$0xee]
        %s5924 = scalar_lea.vmem %s766, 512 [#allocation12]
        %v5925 = vld [vmem:[%s5924] sm:$0xff]
        %v5926 = vld [vmem:[%s5924 + $0x8] sm:$0xff]
        %v5927 = vld [vmem:[%s5924 + $0x10] sm:$0xff]
        %v5928 = vld [vmem:[%s5924 + $0x18] sm:$0xff]
        %v5929 = vld [vmem:[%s5924 + $0x20] sm:$0xff]
        %v5930 = vld [vmem:[%s5924 + $0x28] sm:$0xff]
        %v5931 = vld [vmem:[%s5924 + $0x30] sm:$0xff]
        %v5932 = vld [vmem:[%s5924 + $0x38] sm:$0xff]
        %v5933 = vld [vmem:[%s5924 + $0x40] sm:$0xff]
        %v5934 = vld [vmem:[%s5924 + $0x48] sm:$0xff]
        %v5935 = vld [vmem:[%s5924 + $0x50] sm:$0xff]
        %v5936 = vld [vmem:[%s5924 + $0x58] sm:$0xff]
        %v5937 = vld [vmem:[%s5924 + $0x60] sm:$0xff]
        %v5938 = vld [vmem:[%s5924 + $0x68] sm:$0xff]
        %v5939 = vld [vmem:[%s5924 + $0x70] sm:$0xff]
        %v5940 = vld [vmem:[%s5924 + $0x78] sm:$0xff]
        %v5941 = vld [vmem:[%s5924 + $0x80] sm:$0xff]
        %v5942 = vld [vmem:[%s5924 + $0x88] sm:$0xff]
        %v5943 = vld [vmem:[%s5924 + $0x90] sm:$0xff]
        %v5944 = vld [vmem:[%s5924 + $0x98] sm:$0xff]
        %v5945 = vld [vmem:[%s5924 + $0xa0] sm:$0xff]
        %v5946 = vld [vmem:[%s5924 + $0xa8] sm:$0xff]
        %v5947 = vld [vmem:[%s5924 + $0xb0] sm:$0xff]
        %v5948 = vld [vmem:[%s5924 + $0xb8] sm:$0xff]
        %v5949 = vld [vmem:[%s5924 + $0xc0] sm:$0xff]
        %v5950 = vld [vmem:[%s5924 + $0xc8] sm:$0xff]
        %v5951 = vld [vmem:[%s5924 + $0xd0] sm:$0xff]
        %v5952 = vld [vmem:[%s5924 + $0xd8] sm:$0xff]
        %v5953 = vld [vmem:[%s5924 + $0xe0] sm:$0xff]
        %v5954 = vld [vmem:[%s5924 + $0xe8] sm:$0xff]
        %v5955 = vld [vmem:[%s5924 + $0xf0] sm:$0xff]
        %v5956 = vld [vmem:[%s5924 + $0xf8] sm:$0xff]
        %v5958 = vunpack.c.l.b16 %v5923
        %v5959 = vunpack.c.h.b16 %v5923
        %v5960 = vpack.c.b16 %v4870, %v5958
        %v5961 = vpack.c.b16 %v4871, %v5959
        %v5962 = vrot.slane %v5960, 1
        %v5963 = vrot.slane %v4910, 1
        %v5964 = vsel %vm3851, %v5962, %v5963
        %v5965 = vrot.slane %v5961, 1
        %v5966 = vrot.slane %v4911, 1
        %v5967 = vsel %vm3851, %v5965, %v5966
        %v5968 = vrot.slane %v4912, 1
        %v5969 = vsel %vm3851, %v5963, %v5968
        %v5970 = vrot.slane %v4913, 1
        %v5971 = vsel %vm3851, %v5966, %v5970
        %v5972 = vrot.slane %v4914, 1
        %v5973 = vsel %vm3851, %v5968, %v5972
        %v5974 = vrot.slane %v4915, 1
        %v5975 = vsel %vm3851, %v5970, %v5974
        %v5976 = vrot.slane %v4916, 1
        %v5977 = vsel %vm3851, %v5972, %v5976
        %v5978 = vrot.slane %v4917, 1
        %v5979 = vsel %vm3851, %v5974, %v5978
        %v5980 = vrot.slane %v4918, 1
        %v5981 = vsel %vm3851, %v5976, %v5980
        %v5982 = vrot.slane %v4919, 1
        %v5983 = vsel %vm3851, %v5978, %v5982
        %v5984 = vrot.slane %v4920, 1
        %v5985 = vsel %vm3851, %v5980, %v5984
        %v5986 = vrot.slane %v4921, 1
        %v5987 = vsel %vm3851, %v5982, %v5986
        %v5988 = vrot.slane %v4922, 1
        %v5989 = vsel %vm3851, %v5984, %v5988
        %v5990 = vrot.slane %v4923, 1
        %v5991 = vsel %vm3851, %v5986, %v5990
        %v5992 = vrot.slane %v4924, 1
        %v5993 = vsel %vm3851, %v5988, %v5992
        %v5994 = vrot.slane %v4925, 1
        %v5995 = vsel %vm3851, %v5990, %v5994
        %v5996 = vrot.slane %v4926, 1
        %v5997 = vsel %vm3851, %v5992, %v5996
        %v5998 = vrot.slane %v4927, 1
        %v5999 = vsel %vm3851, %v5994, %v5998
        %v6052 = vunpack.c.l.b16 %v5925
        %v6053 = vunpack.c.h.b16 %v5925
        %v6054 = vunpack.c.l.b16 %v5926
        %v6055 = vunpack.c.h.b16 %v5926
        %v6056 = vunpack.c.l.b16 %v5927
        %v6057 = vunpack.c.h.b16 %v5927
        %v6058 = vunpack.c.l.b16 %v5928
        %v6059 = vunpack.c.h.b16 %v5928
        %v6060 = vunpack.c.l.b16 %v5929
        %v6061 = vunpack.c.h.b16 %v5929
        %v6062 = vunpack.c.l.b16 %v5930
        %v6063 = vunpack.c.h.b16 %v5930
        %v6064 = vunpack.c.l.b16 %v5931
        %v6065 = vunpack.c.h.b16 %v5931
        %v6066 = vunpack.c.l.b16 %v5932
        %v6067 = vunpack.c.h.b16 %v5932
        %v6068 = vunpack.c.l.b16 %v5933
        %v6069 = vunpack.c.h.b16 %v5933
        %v6070 = vunpack.c.l.b16 %v5934
        %v6071 = vunpack.c.h.b16 %v5934
        %v6072 = vunpack.c.l.b16 %v5935
        %v6073 = vunpack.c.h.b16 %v5935
        %v6074 = vunpack.c.l.b16 %v5936
        %v6075 = vunpack.c.h.b16 %v5936
        %v6076 = vunpack.c.l.b16 %v5937
        %v6077 = vunpack.c.h.b16 %v5937
        %v6078 = vunpack.c.l.b16 %v5938
        %v6079 = vunpack.c.h.b16 %v5938
        %v6080 = vunpack.c.l.b16 %v5939
        %v6081 = vunpack.c.h.b16 %v5939
        %v6082 = vunpack.c.l.b16 %v5940
        %v6083 = vunpack.c.h.b16 %v5940
        %v6084 = vunpack.c.l.b16 %v5941
        %v6085 = vunpack.c.h.b16 %v5941
        %v6086 = vunpack.c.l.b16 %v5942
        %v6087 = vunpack.c.h.b16 %v5942
        %v6088 = vunpack.c.l.b16 %v5943
        %v6089 = vunpack.c.h.b16 %v5943
        %v6090 = vunpack.c.l.b16 %v5944
        %v6091 = vunpack.c.h.b16 %v5944
        %v6092 = vunpack.c.l.b16 %v5945
        %v6093 = vunpack.c.h.b16 %v5945
        %v6094 = vunpack.c.l.b16 %v5946
        %v6095 = vunpack.c.h.b16 %v5946
        %v6096 = vunpack.c.l.b16 %v5947
        %v6097 = vunpack.c.h.b16 %v5947
        %v6098 = vunpack.c.l.b16 %v5948
        %v6099 = vunpack.c.h.b16 %v5948
        %v6100 = vunpack.c.l.b16 %v5949
        %v6101 = vunpack.c.h.b16 %v5949
        %v6102 = vunpack.c.l.b16 %v5950
        %v6103 = vunpack.c.h.b16 %v5950
        %v6104 = vunpack.c.l.b16 %v5951
        %v6105 = vunpack.c.h.b16 %v5951
        %v6106 = vunpack.c.l.b16 %v5952
        %v6107 = vunpack.c.h.b16 %v5952
        %v6108 = vunpack.c.l.b16 %v5953
        %v6109 = vunpack.c.h.b16 %v5953
        %v6110 = vunpack.c.l.b16 %v5954
        %v6111 = vunpack.c.h.b16 %v5954
        %v6112 = vunpack.c.l.b16 %v5955
        %v6113 = vunpack.c.h.b16 %v5955
        %v6114 = vunpack.c.l.b16 %v5956
        %v6115 = vunpack.c.h.b16 %v5956
        %v6116 = vpack.c.b16 %v6054, %v6052
        %v6117 = vpack.c.b16 %v6055, %v6053
        %v6118 = vpack.c.b16 %v6058, %v6056
        %v6119 = vpack.c.b16 %v6059, %v6057
        %v6120 = vpack.c.b16 %v6062, %v6060
        %v6121 = vpack.c.b16 %v6063, %v6061
        %v6122 = vpack.c.b16 %v6066, %v6064
        %v6123 = vpack.c.b16 %v6067, %v6065
        %v6124 = vpack.c.b16 %v6070, %v6068
        %v6125 = vpack.c.b16 %v6071, %v6069
        %v6126 = vpack.c.b16 %v6074, %v6072
        %v6127 = vpack.c.b16 %v6075, %v6073
        %v6128 = vpack.c.b16 %v6078, %v6076
        %v6129 = vpack.c.b16 %v6079, %v6077
        %v6130 = vpack.c.b16 %v6082, %v6080
        %v6131 = vpack.c.b16 %v6083, %v6081
        %v6132 = vpack.c.b16 %v6086, %v6084
        %v6133 = vpack.c.b16 %v6087, %v6085
        %v6134 = vpack.c.b16 %v6090, %v6088
        %v6135 = vpack.c.b16 %v6091, %v6089
        %v6136 = vpack.c.b16 %v6094, %v6092
        %v6137 = vpack.c.b16 %v6095, %v6093
        %v6138 = vpack.c.b16 %v6098, %v6096
        %v6139 = vpack.c.b16 %v6099, %v6097
        %v6140 = vpack.c.b16 %v6102, %v6100
        %v6141 = vpack.c.b16 %v6103, %v6101
        %v6142 = vpack.c.b16 %v6106, %v6104
        %v6143 = vpack.c.b16 %v6107, %v6105
        %v6144 = vpack.c.b16 %v6110, %v6108
        %v6145 = vpack.c.b16 %v6111, %v6109
        %v6146 = vpack.c.b16 %v6114, %v6112
        %v6147 = vpack.c.b16 %v6115, %v6113
        %6180 = vmatpush.bf16.msra.mxu0 %v6130
        %6181 = vmatpush.bf16.msra.mxu0 %v6128
        %6182 = vmatpush.bf16.msra.mxu0 %v6126
        %6183 = vmatpush.bf16.msra.mxu0 %v6124
        %6184 = vmatpush.bf16.msra.mxu0 %v6122
        %6185 = vmatpush.bf16.msra.mxu0 %v6120
        %6186 = vmatpush.bf16.msra.mxu0 %v6118
        %6187 = vmatpush.bf16.msra.mxu0 %v6116
        %6188 = vmatmul.bf16.gmra.mxu0 %v5964
        %v6189 = vpop.f32.mrf.mxu0
        %v6190 = vadd.f32 0.0, %v6189
        %v6191 = vpop.f32.mrf.mxu0
        %v6192 = vadd.f32 0.0, %v6191
        %6193 = vmatmul.bf16.gmra.mxu0 %v5969
        %v6194 = vpop.f32.mrf.mxu0
        %v6195 = vadd.f32 0.0, %v6194
        %v6196 = vpop.f32.mrf.mxu0
        %v6197 = vadd.f32 0.0, %v6196
        %6198 = vmatmul.bf16.gmra.mxu0 %v5973
        %v6199 = vpop.f32.mrf.mxu0
        %v6200 = vadd.f32 0.0, %v6199
        %v6201 = vpop.f32.mrf.mxu0
        %v6202 = vadd.f32 0.0, %v6201
        %6203 = vmatmul.bf16.gmra.mxu0 %v5977
        %v6204 = vpop.f32.mrf.mxu0
        %v6205 = vadd.f32 0.0, %v6204
        %v6206 = vpop.f32.mrf.mxu0
        %v6207 = vadd.f32 0.0, %v6206
        %6208 = vmatmul.bf16.gmra.mxu0 %v5981
        %v6209 = vpop.f32.mrf.mxu0
        %v6210 = vadd.f32 0.0, %v6209
        %v6211 = vpop.f32.mrf.mxu0
        %v6212 = vadd.f32 0.0, %v6211
        %6213 = vmatmul.bf16.gmra.mxu0 %v5985
        %v6214 = vpop.f32.mrf.mxu0
        %v6215 = vadd.f32 0.0, %v6214
        %v6216 = vpop.f32.mrf.mxu0
        %v6217 = vadd.f32 0.0, %v6216
        %6218 = vmatmul.bf16.gmra.mxu0 %v5989
        %v6219 = vpop.f32.mrf.mxu0
        %v6220 = vadd.f32 0.0, %v6219
        %v6221 = vpop.f32.mrf.mxu0
        %v6222 = vadd.f32 0.0, %v6221
        %6223 = vmatmul.bf16.gmra.mxu0 %v5993
        %v6224 = vpop.f32.mrf.mxu0
        %v6225 = vadd.f32 0.0, %v6224
        %v6226 = vpop.f32.mrf.mxu0
        %v6227 = vadd.f32 0.0, %v6226
        %6228 = vmatmul.bf16.gmra.mxu0 %v5997
        %v6229 = vpop.f32.mrf.mxu0
        %v6230 = vadd.f32 0.0, %v6229
        %v6231 = vpop.f32.mrf.mxu0
        %v6232 = vadd.f32 0.0, %v6231
        %6233 = vmatmul.bf16.gmra.mxu0 %v5996
        %v6234 = vpop.f32.mrf.mxu0
        %v6235 = vadd.f32 0.0, %v6234
        %v6236 = vpop.f32.mrf.mxu0
        %v6237 = vadd.f32 0.0, %v6236
        %6238 = vdwg.mxu0
        %6239 = vmatpush.bf16.msra.mxu0 %v6146
        %6240 = vmatpush.bf16.msra.mxu0 %v6144
        %6241 = vmatpush.bf16.msra.mxu0 %v6142
        %6242 = vmatpush.bf16.msra.mxu0 %v6140
        %6243 = vmatpush.bf16.msra.mxu0 %v6138
        %6244 = vmatpush.bf16.msra.mxu0 %v6136
        %6245 = vmatpush.bf16.msra.mxu0 %v6134
        %6246 = vmatpush.bf16.msra.mxu0 %v6132
        %6247 = vmatmul.bf16.gmra.mxu0 %v5967
        %v6248 = vpop.f32.mrf.mxu0
        %v6249 = vadd.f32 %v6190, %v6248
        %v6250 = vpop.f32.mrf.mxu0
        %v6251 = vadd.f32 %v6192, %v6250
        %6252 = vmatmul.bf16.gmra.mxu0 %v5971
        %v6253 = vpop.f32.mrf.mxu0
        %v6254 = vadd.f32 %v6195, %v6253
        %v6255 = vpop.f32.mrf.mxu0
        %v6256 = vadd.f32 %v6197, %v6255
        %6257 = vmatmul.bf16.gmra.mxu0 %v5975
        %v6258 = vpop.f32.mrf.mxu0
        %v6259 = vadd.f32 %v6200, %v6258
        %v6260 = vpop.f32.mrf.mxu0
        %v6261 = vadd.f32 %v6202, %v6260
        %6262 = vmatmul.bf16.gmra.mxu0 %v5979
        %v6263 = vpop.f32.mrf.mxu0
        %v6264 = vadd.f32 %v6205, %v6263
        %v6265 = vpop.f32.mrf.mxu0
        %v6266 = vadd.f32 %v6207, %v6265
        %6267 = vmatmul.bf16.gmra.mxu0 %v5983
        %v6268 = vpop.f32.mrf.mxu0
        %v6269 = vadd.f32 %v6210, %v6268
        %v6270 = vpop.f32.mrf.mxu0
        %v6271 = vadd.f32 %v6212, %v6270
        %6272 = vmatmul.bf16.gmra.mxu0 %v5987
        %v6273 = vpop.f32.mrf.mxu0
        %v6274 = vadd.f32 %v6215, %v6273
        %v6275 = vpop.f32.mrf.mxu0
        %v6276 = vadd.f32 %v6217, %v6275
        %6277 = vmatmul.bf16.gmra.mxu0 %v5991
        %v6278 = vpop.f32.mrf.mxu0
        %v6279 = vadd.f32 %v6220, %v6278
        %v6280 = vpop.f32.mrf.mxu0
        %v6281 = vadd.f32 %v6222, %v6280
        %6282 = vmatmul.bf16.gmra.mxu0 %v5995
        %v6283 = vpop.f32.mrf.mxu0
        %v6284 = vadd.f32 %v6225, %v6283
        %v6285 = vpop.f32.mrf.mxu0
        %v6286 = vadd.f32 %v6227, %v6285
        %6287 = vmatmul.bf16.gmra.mxu0 %v5999
        %v6288 = vpop.f32.mrf.mxu0
        %v6289 = vadd.f32 %v6230, %v6288
        %v6290 = vpop.f32.mrf.mxu0
        %v6291 = vadd.f32 %v6232, %v6290
        %6292 = vmatmul.bf16.gmra.mxu0 %v5998
        %v6293 = vpop.f32.mrf.mxu0
        %v6294 = vadd.f32 %v6235, %v6293
        %v6295 = vpop.f32.mrf.mxu0
        %v6296 = vadd.f32 %v6237, %v6295
        %6297 = vdwg.mxu0
        %6298 = vmatpush.bf16.msra.mxu0 %v6131
        %6299 = vmatpush.bf16.msra.mxu0 %v6129
        %6300 = vmatpush.bf16.msra.mxu0 %v6127
        %6301 = vmatpush.bf16.msra.mxu0 %v6125
        %6302 = vmatpush.bf16.msra.mxu0 %v6123
        %6303 = vmatpush.bf16.msra.mxu0 %v6121
        %6304 = vmatpush.bf16.msra.mxu0 %v6119
        %6305 = vmatpush.bf16.msra.mxu0 %v6117
        %6306 = vmatmul.bf16.gmra.mxu0 %v5964
        %v6307 = vpop.f32.mrf.mxu0
        %v6308 = vadd.f32 0.0, %v6307
        %v6309 = vpop.f32.mrf.mxu0
        %v6310 = vadd.f32 0.0, %v6309
        %6311 = vmatmul.bf16.gmra.mxu0 %v5969
        %v6312 = vpop.f32.mrf.mxu0
        %v6313 = vadd.f32 0.0, %v6312
        %v6314 = vpop.f32.mrf.mxu0
        %v6315 = vadd.f32 0.0, %v6314
        %6316 = vmatmul.bf16.gmra.mxu0 %v5973
        %v6317 = vpop.f32.mrf.mxu0
        %v6318 = vadd.f32 0.0, %v6317
        %v6319 = vpop.f32.mrf.mxu0
        %v6320 = vadd.f32 0.0, %v6319
        %6321 = vmatmul.bf16.gmra.mxu0 %v5977
        %v6322 = vpop.f32.mrf.mxu0
        %v6323 = vadd.f32 0.0, %v6322
        %v6324 = vpop.f32.mrf.mxu0
        %v6325 = vadd.f32 0.0, %v6324
        %6326 = vmatmul.bf16.gmra.mxu0 %v5981
        %v6327 = vpop.f32.mrf.mxu0
        %v6328 = vadd.f32 0.0, %v6327
        %v6329 = vpop.f32.mrf.mxu0
        %v6330 = vadd.f32 0.0, %v6329
        %6331 = vmatmul.bf16.gmra.mxu0 %v5985
        %v6332 = vpop.f32.mrf.mxu0
        %v6333 = vadd.f32 0.0, %v6332
        %v6334 = vpop.f32.mrf.mxu0
        %v6335 = vadd.f32 0.0, %v6334
        %6336 = vmatmul.bf16.gmra.mxu0 %v5989
        %v6337 = vpop.f32.mrf.mxu0
        %v6338 = vadd.f32 0.0, %v6337
        %v6339 = vpop.f32.mrf.mxu0
        %v6340 = vadd.f32 0.0, %v6339
        %6341 = vmatmul.bf16.gmra.mxu0 %v5993
        %v6342 = vpop.f32.mrf.mxu0
        %v6343 = vadd.f32 0.0, %v6342
        %v6344 = vpop.f32.mrf.mxu0
        %v6345 = vadd.f32 0.0, %v6344
        %6346 = vmatmul.bf16.gmra.mxu0 %v5997
        %v6347 = vpop.f32.mrf.mxu0
        %v6348 = vadd.f32 0.0, %v6347
        %v6349 = vpop.f32.mrf.mxu0
        %v6350 = vadd.f32 0.0, %v6349
        %6351 = vmatmul.bf16.gmra.mxu0 %v5996
        %v6352 = vpop.f32.mrf.mxu0
        %v6353 = vadd.f32 0.0, %v6352
        %v6354 = vpop.f32.mrf.mxu0
        %v6355 = vadd.f32 0.0, %v6354
        %6356 = vdwg.mxu0
        %6357 = vmatpush.bf16.msra.mxu0 %v6147
        %6358 = vmatpush.bf16.msra.mxu0 %v6145
        %6359 = vmatpush.bf16.msra.mxu0 %v6143
        %6360 = vmatpush.bf16.msra.mxu0 %v6141
        %6361 = vmatpush.bf16.msra.mxu0 %v6139
        %6362 = vmatpush.bf16.msra.mxu0 %v6137
        %6363 = vmatpush.bf16.msra.mxu0 %v6135
        %6364 = vmatpush.bf16.msra.mxu0 %v6133
        %6365 = vmatmul.bf16.gmra.mxu0 %v5967
        %v6366 = vpop.f32.mrf.mxu0
        %v6367 = vadd.f32 %v6308, %v6366
        %v6368 = vpop.f32.mrf.mxu0
        %v6369 = vadd.f32 %v6310, %v6368
        %6370 = vmatmul.bf16.gmra.mxu0 %v5971
        %v6371 = vpop.f32.mrf.mxu0
        %v6372 = vadd.f32 %v6313, %v6371
        %v6373 = vpop.f32.mrf.mxu0
        %v6374 = vadd.f32 %v6315, %v6373
        %6375 = vmatmul.bf16.gmra.mxu0 %v5975
        %v6376 = vpop.f32.mrf.mxu0
        %v6377 = vadd.f32 %v6318, %v6376
        %v6378 = vpop.f32.mrf.mxu0
        %v6379 = vadd.f32 %v6320, %v6378
        %6380 = vmatmul.bf16.gmra.mxu0 %v5979
        %v6381 = vpop.f32.mrf.mxu0
        %v6382 = vadd.f32 %v6323, %v6381
        %v6383 = vpop.f32.mrf.mxu0
        %v6384 = vadd.f32 %v6325, %v6383
        %6385 = vmatmul.bf16.gmra.mxu0 %v5983
        %v6386 = vpop.f32.mrf.mxu0
        %v6387 = vadd.f32 %v6328, %v6386
        %v6388 = vpop.f32.mrf.mxu0
        %v6389 = vadd.f32 %v6330, %v6388
        %6390 = vmatmul.bf16.gmra.mxu0 %v5987
        %v6391 = vpop.f32.mrf.mxu0
        %v6392 = vadd.f32 %v6333, %v6391
        %v6393 = vpop.f32.mrf.mxu0
        %v6394 = vadd.f32 %v6335, %v6393
        %6395 = vmatmul.bf16.gmra.mxu0 %v5991
        %v6396 = vpop.f32.mrf.mxu0
        %v6397 = vadd.f32 %v6338, %v6396
        %v6398 = vpop.f32.mrf.mxu0
        %v6399 = vadd.f32 %v6340, %v6398
        %6400 = vmatmul.bf16.gmra.mxu0 %v5995
        %v6401 = vpop.f32.mrf.mxu0
        %v6402 = vadd.f32 %v6343, %v6401
        %v6403 = vpop.f32.mrf.mxu0
        %v6404 = vadd.f32 %v6345, %v6403
        %6405 = vmatmul.bf16.gmra.mxu0 %v5999
        %v6406 = vpop.f32.mrf.mxu0
        %v6407 = vadd.f32 %v6348, %v6406
        %v6408 = vpop.f32.mrf.mxu0
        %v6409 = vadd.f32 %v6350, %v6408
        %6410 = vmatmul.bf16.gmra.mxu0 %v5998
        %v6411 = vpop.f32.mrf.mxu0
        %v6412 = vadd.f32 %v6353, %v6411
        %v6413 = vpop.f32.mrf.mxu0
        %v6414 = vadd.f32 %v6355, %v6413
        %6415 = vdwg.mxu0
        %v6416 = vadd.f32 %v5756, %v6249
        %v6417 = vadd.f32 %v5874, %v6367
        %v6418 = vadd.f32 %v5758, %v6251
        %v6419 = vadd.f32 %v5876, %v6369
        %v6420 = vadd.f32 %v5761, %v6254
        %v6421 = vadd.f32 %v5879, %v6372
        %v6422 = vadd.f32 %v5763, %v6256
        %v6423 = vadd.f32 %v5881, %v6374
        %v6424 = vadd.f32 %v5766, %v6259
        %v6425 = vadd.f32 %v5884, %v6377
        %v6426 = vadd.f32 %v5768, %v6261
        %v6427 = vadd.f32 %v5886, %v6379
        %v6428 = vadd.f32 %v5771, %v6264
        %v6429 = vadd.f32 %v5889, %v6382
        %v6430 = vadd.f32 %v5773, %v6266
        %v6431 = vadd.f32 %v5891, %v6384
        %v6432 = vadd.f32 %v5776, %v6269
        %v6433 = vadd.f32 %v5894, %v6387
        %v6434 = vadd.f32 %v5778, %v6271
        %v6435 = vadd.f32 %v5896, %v6389
        %v6436 = vadd.f32 %v5781, %v6274
        %v6437 = vadd.f32 %v5899, %v6392
        %v6438 = vadd.f32 %v5783, %v6276
        %v6439 = vadd.f32 %v5901, %v6394
        %v6440 = vadd.f32 %v5786, %v6279
        %v6441 = vadd.f32 %v5904, %v6397
        %v6442 = vadd.f32 %v5788, %v6281
        %v6443 = vadd.f32 %v5906, %v6399
        %v6444 = vadd.f32 %v5791, %v6284
        %v6445 = vadd.f32 %v5909, %v6402
        %v6446 = vadd.f32 %v5793, %v6286
        %v6447 = vadd.f32 %v5911, %v6404
        %v6448 = vadd.f32 %v5796, %v6289
        %v6449 = vadd.f32 %v5914, %v6407
        %v6450 = vadd.f32 %v5798, %v6291
        %v6451 = vadd.f32 %v5916, %v6409
        %v6452 = vadd.f32 %v5801, %v6294
        %v6453 = vadd.f32 %v5919, %v6412
        %v6454 = vadd.f32 %v5803, %v6296
        %v6455 = vadd.f32 %v5921, %v6414
        %v6456 = vld [vmem:[%s786] sm:$0x3]
        %v6458 = vperm.slane %v6456, 0
        %v6459 = vperm.slane %v6456, 1
        %v6462 = vadd.f32 %v6416, %v6458
        %v6463 = vadd.f32 %v6417, %v6459
        %v6464 = vadd.f32 %v6418, %v6458
        %v6465 = vadd.f32 %v6419, %v6459
        %v6466 = vadd.f32 %v6420, %v6458
        %v6467 = vadd.f32 %v6421, %v6459
        %v6468 = vadd.f32 %v6422, %v6458
        %v6469 = vadd.f32 %v6423, %v6459
        %v6470 = vadd.f32 %v6424, %v6458
        %v6471 = vadd.f32 %v6425, %v6459
        %v6472 = vadd.f32 %v6426, %v6458
        %v6473 = vadd.f32 %v6427, %v6459
        %v6474 = vadd.f32 %v6428, %v6458
        %v6475 = vadd.f32 %v6429, %v6459
        %v6476 = vadd.f32 %v6430, %v6458
        %v6477 = vadd.f32 %v6431, %v6459
        %v6478 = vadd.f32 %v6432, %v6458
        %v6479 = vadd.f32 %v6433, %v6459
        %v6480 = vadd.f32 %v6434, %v6458
        %v6481 = vadd.f32 %v6435, %v6459
        %v6482 = vadd.f32 %v6436, %v6458
        %v6483 = vadd.f32 %v6437, %v6459
        %v6484 = vadd.f32 %v6438, %v6458
        %v6485 = vadd.f32 %v6439, %v6459
        %v6486 = vadd.f32 %v6440, %v6458
        %v6487 = vadd.f32 %v6441, %v6459
        %v6488 = vadd.f32 %v6442, %v6458
        %v6489 = vadd.f32 %v6443, %v6459
        %v6490 = vadd.f32 %v6444, %v6458
        %v6491 = vadd.f32 %v6445, %v6459
        %v6492 = vadd.f32 %v6446, %v6458
        %v6493 = vadd.f32 %v6447, %v6459
        %v6494 = vadd.f32 %v6448, %v6458
        %v6495 = vadd.f32 %v6449, %v6459
        %v6496 = vadd.f32 %v6450, %v6458
        %v6497 = vadd.f32 %v6451, %v6459
        %v6498 = vadd.f32 %v6452, %v6458
        %v6499 = vadd.f32 %v6453, %v6459
        %v6500 = vadd.f32 %v6454, %v6458
        %v6501 = vadd.f32 %v6455, %v6459
        %v6502 = vld [vmem:[#allocation2] sm:$0xfe]
        %v6503 = vld [vmem:[#allocation2 + $0x8] sm:$0xfe]
        %v6504 = vld [vmem:[#allocation2 + $0x10] sm:$0xff]
        %v6505 = vld [vmem:[#allocation2 + $0x18] sm:$0xff]
        %v6506 = vld [vmem:[#allocation2 + $0x20] sm:$0xff]
        %v6507 = vld [vmem:[#allocation2 + $0x28] sm:$0xff]
        %v6508 = vld [vmem:[#allocation2 + $0x30] sm:$0xff]
        %v6509 = vld [vmem:[#allocation2 + $0x38] sm:$0xff]
        %v6510 = vld [vmem:[#allocation2 + $0x40] sm:$0xff]
        %v6511 = vld [vmem:[#allocation2 + $0x48] sm:$0xff]
        %v6512 = vld [vmem:[#allocation2 + $0x50] sm:$0xff]
        %v6513 = vld [vmem:[#allocation2 + $0x58] sm:$0xff]
        %v6514 = vld [vmem:[#allocation2 + $0x60] sm:$0xff]
        %v6515 = vld [vmem:[#allocation2 + $0x68] sm:$0xff]
        %v6516 = vld [vmem:[#allocation2 + $0x70] sm:$0xff]
        %v6517 = vld [vmem:[#allocation2 + $0x78] sm:$0xff]
        %v6518 = vld [vmem:[#allocation2 + $0x80] sm:$0xff]
        %v6519 = vld [vmem:[#allocation2 + $0x88] sm:$0xff]
        %v6520 = vld [vmem:[#allocation2 + $0x90] sm:$0xff]
        %v6521 = vld [vmem:[#allocation2 + $0x98] sm:$0xff]
        %v6522 = vld [vmem:[#allocation2 + $0xa0] sm:$0xff]
        %v6523 = vld [vmem:[#allocation2 + $0xa8] sm:$0xff]
        %v6524 = vld [vmem:[#allocation2 + $0xb0] sm:$0xff]
        %v6525 = vld [vmem:[#allocation2 + $0xb8] sm:$0xff]
        %v6526 = vld [vmem:[#allocation2 + $0xc0] sm:$0xff]
        %v6527 = vld [vmem:[#allocation2 + $0xc8] sm:$0xff]
        %v6528 = vld [vmem:[#allocation2 + $0xd0] sm:$0xff]
        %v6529 = vld [vmem:[#allocation2 + $0xd8] sm:$0xff]
        %v6530 = vld [vmem:[#allocation2 + $0xe0] sm:$0xff]
        %v6531 = vld [vmem:[#allocation2 + $0xe8] sm:$0xff]
        %v6532 = vld [vmem:[#allocation2 + $0xf0] sm:$0xff]
        %v6533 = vld [vmem:[#allocation2 + $0xf8] sm:$0xff]
        %v6534 = vld [vmem:[#allocation2 + $0x100] sm:$0xff]
        %v6535 = vld [vmem:[#allocation2 + $0x108] sm:$0xff]
        %v6536 = vld [vmem:[#allocation2 + $0x110] sm:$0xff]
        %v6537 = vld [vmem:[#allocation2 + $0x118] sm:$0xff]
        %v6538 = vld [vmem:[#allocation2 + $0x120] sm:$0xff]
        %v6539 = vld [vmem:[#allocation2 + $0x128] sm:$0xff]
        %v6540 = vld [vmem:[#allocation2 + $0x130] sm:$0x7f]
        %v6541 = vld [vmem:[#allocation2 + $0x138] sm:$0x7f]
        %vm6582 = vcmask 1046528
        %v6583 = vrot.slane %v6502, 1
        %v6584 = vrot.slane %v6504, 1
        %v6585 = vsel %vm6582, %v6583, %v6584
        %v6586 = vrot.slane %v6503, 1
        %v6587 = vrot.slane %v6505, 1
        %v6588 = vsel %vm6582, %v6586, %v6587
        %v6589 = vrot.slane %v6506, 1
        %v6590 = vsel %vm6582, %v6584, %v6589
        %v6591 = vrot.slane %v6507, 1
        %v6592 = vsel %vm6582, %v6587, %v6591
        %v6593 = vrot.slane %v6508, 1
        %v6594 = vsel %vm6582, %v6589, %v6593
        %v6595 = vrot.slane %v6509, 1
        %v6596 = vsel %vm6582, %v6591, %v6595
        %v6597 = vrot.slane %v6510, 1
        %v6598 = vsel %vm6582, %v6593, %v6597
        %v6599 = vrot.slane %v6511, 1
        %v6600 = vsel %vm6582, %v6595, %v6599
        %v6601 = vrot.slane %v6512, 1
        %v6602 = vsel %vm6582, %v6597, %v6601
        %v6603 = vrot.slane %v6513, 1
        %v6604 = vsel %vm6582, %v6599, %v6603
        %v6605 = vrot.slane %v6514, 1
        %v6606 = vsel %vm6582, %v6601, %v6605
        %v6607 = vrot.slane %v6515, 1
        %v6608 = vsel %vm6582, %v6603, %v6607
        %v6609 = vrot.slane %v6516, 1
        %v6610 = vsel %vm6582, %v6605, %v6609
        %v6611 = vrot.slane %v6517, 1
        %v6612 = vsel %vm6582, %v6607, %v6611
        %v6613 = vrot.slane %v6518, 1
        %v6614 = vsel %vm6582, %v6609, %v6613
        %v6615 = vrot.slane %v6519, 1
        %v6616 = vsel %vm6582, %v6611, %v6615
        %v6617 = vrot.slane %v6520, 1
        %v6618 = vsel %vm6582, %v6613, %v6617
        %v6619 = vrot.slane %v6521, 1
        %v6620 = vsel %vm6582, %v6615, %v6619
        %v6621 = vrot.slane %v6522, 1
        %v6622 = vsel %vm6582, %v6617, %v6621
        %v6623 = vrot.slane %v6523, 1
        %v6624 = vsel %vm6582, %v6619, %v6623
        %v6625 = vrot.slane %v6524, 1
        %v6626 = vsel %vm6582, %v6621, %v6625
        %v6627 = vrot.slane %v6525, 1
        %v6628 = vsel %vm6582, %v6623, %v6627
        %v6629 = vrot.slane %v6526, 1
        %v6630 = vsel %vm6582, %v6625, %v6629
        %v6631 = vrot.slane %v6527, 1
        %v6632 = vsel %vm6582, %v6627, %v6631
        %v6633 = vrot.slane %v6528, 1
        %v6634 = vsel %vm6582, %v6629, %v6633
        %v6635 = vrot.slane %v6529, 1
        %v6636 = vsel %vm6582, %v6631, %v6635
        %v6637 = vrot.slane %v6530, 1
        %v6638 = vsel %vm6582, %v6633, %v6637
        %v6639 = vrot.slane %v6531, 1
        %v6640 = vsel %vm6582, %v6635, %v6639
        %v6641 = vrot.slane %v6532, 1
        %v6642 = vsel %vm6582, %v6637, %v6641
        %v6643 = vrot.slane %v6533, 1
        %v6644 = vsel %vm6582, %v6639, %v6643
        %v6645 = vrot.slane %v6534, 1
        %v6646 = vsel %vm6582, %v6641, %v6645
        %v6647 = vrot.slane %v6535, 1
        %v6648 = vsel %vm6582, %v6643, %v6647
        %v6649 = vrot.slane %v6536, 1
        %v6650 = vsel %vm6582, %v6645, %v6649
        %v6651 = vrot.slane %v6537, 1
        %v6652 = vsel %vm6582, %v6647, %v6651
        %v6653 = vrot.slane %v6538, 1
        %v6654 = vsel %vm6582, %v6649, %v6653
        %v6655 = vrot.slane %v6539, 1
        %v6656 = vsel %vm6582, %v6651, %v6655
        %v6657 = vrot.slane %v6540, 1
        %v6658 = vsel %vm6582, %v6653, %v6657
        %v6659 = vrot.slane %v6541, 1
        %v6660 = vsel %vm6582, %v6655, %v6659
        %v6701 = vadd.f32 %v6462, %v6585
        %v6702 = vadd.f32 %v6463, %v6588
        %v6703 = vadd.f32 %v6464, %v6590
        %v6704 = vadd.f32 %v6465, %v6592
        %v6705 = vadd.f32 %v6466, %v6594
        %v6706 = vadd.f32 %v6467, %v6596
        %v6707 = vadd.f32 %v6468, %v6598
        %v6708 = vadd.f32 %v6469, %v6600
        %v6709 = vadd.f32 %v6470, %v6602
        %v6710 = vadd.f32 %v6471, %v6604
        %v6711 = vadd.f32 %v6472, %v6606
        %v6712 = vadd.f32 %v6473, %v6608
        %v6713 = vadd.f32 %v6474, %v6610
        %v6714 = vadd.f32 %v6475, %v6612
        %v6715 = vadd.f32 %v6476, %v6614
        %v6716 = vadd.f32 %v6477, %v6616
        %v6717 = vadd.f32 %v6478, %v6618
        %v6718 = vadd.f32 %v6479, %v6620
        %v6719 = vadd.f32 %v6480, %v6622
        %v6720 = vadd.f32 %v6481, %v6624
        %v6721 = vadd.f32 %v6482, %v6626
        %v6722 = vadd.f32 %v6483, %v6628
        %v6723 = vadd.f32 %v6484, %v6630
        %v6724 = vadd.f32 %v6485, %v6632
        %v6725 = vadd.f32 %v6486, %v6634
        %v6726 = vadd.f32 %v6487, %v6636
        %v6727 = vadd.f32 %v6488, %v6638
        %v6728 = vadd.f32 %v6489, %v6640
        %v6729 = vadd.f32 %v6490, %v6642
        %v6730 = vadd.f32 %v6491, %v6644
        %v6731 = vadd.f32 %v6492, %v6646
        %v6732 = vadd.f32 %v6493, %v6648
        %v6733 = vadd.f32 %v6494, %v6650
        %v6734 = vadd.f32 %v6495, %v6652
        %v6735 = vadd.f32 %v6496, %v6654
        %v6736 = vadd.f32 %v6497, %v6656
        %v6737 = vadd.f32 %v6498, %v6658
        %v6738 = vadd.f32 %v6499, %v6660
        %v6739 = vadd.f32 %v6500, %v6657
        %v6740 = vadd.f32 %v6501, %v6659
        %v6741 = vmul.f32 %v6701, %v2398
        %v6742 = vmul.f32 %v6702, %v2398
        %v6743 = vmul.f32 %v6703, %v2403
        %v6744 = vmul.f32 %v6704, %v2403
        %v6745 = vmul.f32 %v6705, %v2408
        %v6746 = vmul.f32 %v6706, %v2408
        %v6747 = vmul.f32 %v6707, %v2413
        %v6748 = vmul.f32 %v6708, %v2413
        %v6749 = vmul.f32 %v6709, %v2418
        %v6750 = vmul.f32 %v6710, %v2418
        %v6751 = vmul.f32 %v6711, %v2423
        %v6752 = vmul.f32 %v6712, %v2423
        %v6753 = vmul.f32 %v6713, %v2428
        %v6754 = vmul.f32 %v6714, %v2428
        %v6755 = vmul.f32 %v6715, %v2433
        %v6756 = vmul.f32 %v6716, %v2433
        %v6757 = vmul.f32 %v6717, %v2438
        %v6758 = vmul.f32 %v6718, %v2438
        %v6759 = vmul.f32 %v6719, %v2443
        %v6760 = vmul.f32 %v6720, %v2443
        %v6761 = vmul.f32 %v6721, %v2448
        %v6762 = vmul.f32 %v6722, %v2448
        %v6763 = vmul.f32 %v6723, %v2453
        %v6764 = vmul.f32 %v6724, %v2453
        %v6765 = vmul.f32 %v6725, %v2458
        %v6766 = vmul.f32 %v6726, %v2458
        %v6767 = vmul.f32 %v6727, %v2463
        %v6768 = vmul.f32 %v6728, %v2463
        %v6769 = vmul.f32 %v6729, %v2468
        %v6770 = vmul.f32 %v6730, %v2468
        %v6771 = vmul.f32 %v6731, %v2473
        %v6772 = vmul.f32 %v6732, %v2473
        %v6773 = vmul.f32 %v6733, %v2478
        %v6774 = vmul.f32 %v6734, %v2478
        %v6775 = vmul.f32 %v6735, %v2483
        %v6776 = vmul.f32 %v6736, %v2483
        %v6777 = vmul.f32 %v6737, %v2488
        %v6778 = vmul.f32 %v6738, %v2488
        %v6779 = vmul.f32 %v6739, %v2493
        %v6780 = vmul.f32 %v6740, %v2493
        %v6821 = vrot.slane %v6741, 7
        %v6822 = vrot.slane %v6742, 7
        %v6823 = vrot.slane %v6743, 7
        %v6824 = vsel %vm2495, %v6821, %v6823
        %v6825 = vrot.slane %v6744, 7
        %v6826 = vsel %vm2495, %v6822, %v6825
        %v6827 = vrot.slane %v6745, 7
        %v6828 = vsel %vm2495, %v6823, %v6827
        %v6829 = vrot.slane %v6746, 7
        %v6830 = vsel %vm2495, %v6825, %v6829
        %v6831 = vrot.slane %v6747, 7
        %v6832 = vsel %vm2495, %v6827, %v6831
        %v6833 = vrot.slane %v6748, 7
        %v6834 = vsel %vm2495, %v6829, %v6833
        %v6835 = vrot.slane %v6749, 7
        %v6836 = vsel %vm2495, %v6831, %v6835
        %v6837 = vrot.slane %v6750, 7
        %v6838 = vsel %vm2495, %v6833, %v6837
        %v6839 = vrot.slane %v6751, 7
        %v6840 = vsel %vm2495, %v6835, %v6839
        %v6841 = vrot.slane %v6752, 7
        %v6842 = vsel %vm2495, %v6837, %v6841
        %v6843 = vrot.slane %v6753, 7
        %v6844 = vsel %vm2495, %v6839, %v6843
        %v6845 = vrot.slane %v6754, 7
        %v6846 = vsel %vm2495, %v6841, %v6845
        %v6847 = vrot.slane %v6755, 7
        %v6848 = vsel %vm2495, %v6843, %v6847
        %v6849 = vrot.slane %v6756, 7
        %v6850 = vsel %vm2495, %v6845, %v6849
        %v6851 = vrot.slane %v6757, 7
        %v6852 = vsel %vm2495, %v6847, %v6851
        %v6853 = vrot.slane %v6758, 7
        %v6854 = vsel %vm2495, %v6849, %v6853
        %v6855 = vrot.slane %v6759, 7
        %v6856 = vsel %vm2495, %v6851, %v6855
        %v6857 = vrot.slane %v6760, 7
        %v6858 = vsel %vm2495, %v6853, %v6857
        %v6859 = vrot.slane %v6761, 7
        %v6860 = vsel %vm2495, %v6855, %v6859
        %v6861 = vrot.slane %v6762, 7
        %v6862 = vsel %vm2495, %v6857, %v6861
        %v6863 = vrot.slane %v6763, 7
        %v6864 = vsel %vm2495, %v6859, %v6863
        %v6865 = vrot.slane %v6764, 7
        %v6866 = vsel %vm2495, %v6861, %v6865
        %v6867 = vrot.slane %v6765, 7
        %v6868 = vsel %vm2495, %v6863, %v6867
        %v6869 = vrot.slane %v6766, 7
        %v6870 = vsel %vm2495, %v6865, %v6869
        %v6871 = vrot.slane %v6767, 7
        %v6872 = vsel %vm2495, %v6867, %v6871
        %v6873 = vrot.slane %v6768, 7
        %v6874 = vsel %vm2495, %v6869, %v6873
        %v6875 = vrot.slane %v6769, 7
        %v6876 = vsel %vm2495, %v6871, %v6875
        %v6877 = vrot.slane %v6770, 7
        %v6878 = vsel %vm2495, %v6873, %v6877
        %v6879 = vrot.slane %v6771, 7
        %v6880 = vsel %vm2495, %v6875, %v6879
        %v6881 = vrot.slane %v6772, 7
        %v6882 = vsel %vm2495, %v6877, %v6881
        %v6883 = vrot.slane %v6773, 7
        %v6884 = vsel %vm2495, %v6879, %v6883
        %v6885 = vrot.slane %v6774, 7
        %v6886 = vsel %vm2495, %v6881, %v6885
        %v6887 = vrot.slane %v6775, 7
        %v6888 = vsel %vm2495, %v6883, %v6887
        %v6889 = vrot.slane %v6776, 7
        %v6890 = vsel %vm2495, %v6885, %v6889
        %v6891 = vrot.slane %v6777, 7
        %v6892 = vsel %vm2495, %v6887, %v6891
        %v6893 = vrot.slane %v6778, 7
        %v6894 = vsel %vm2495, %v6889, %v6893
        %v6895 = vrot.slane %v6779, 7
        %v6896 = vsel %vm2495, %v6891, %v6895
        %v6897 = vrot.slane %v6780, 7
        %v6898 = vsel %vm2495, %v6893, %v6897
        %6939 = vst [vmem:[#allocation2] sm:$0xfe] %v6821
        %6940 = vst [vmem:[#allocation2 + $0x8] sm:$0xfe] %v6822
        %6941 = vst [vmem:[#allocation2 + $0x10] sm:$0xff] %v6824
        %6942 = vst [vmem:[#allocation2 + $0x18] sm:$0xff] %v6826
        %6943 = vst [vmem:[#allocation2 + $0x20] sm:$0xff] %v6828
        %6944 = vst [vmem:[#allocation2 + $0x28] sm:$0xff] %v6830
        %6945 = vst [vmem:[#allocation2 + $0x30] sm:$0xff] %v6832
        %6946 = vst [vmem:[#allocation2 + $0x38] sm:$0xff] %v6834
        %6947 = vst [vmem:[#allocation2 + $0x40] sm:$0xff] %v6836
        %6948 = vst [vmem:[#allocation2 + $0x48] sm:$0xff] %v6838
        %6949 = vst [vmem:[#allocation2 + $0x50] sm:$0xff] %v6840
        %6950 = vst [vmem:[#allocation2 + $0x58] sm:$0xff] %v6842
        %6951 = vst [vmem:[#allocation2 + $0x60] sm:$0xff] %v6844
        %6952 = vst [vmem:[#allocation2 + $0x68] sm:$0xff] %v6846
        %6953 = vst [vmem:[#allocation2 + $0x70] sm:$0xff] %v6848
        %6954 = vst [vmem:[#allocation2 + $0x78] sm:$0xff] %v6850
        %6955 = vst [vmem:[#allocation2 + $0x80] sm:$0xff] %v6852
        %6956 = vst [vmem:[#allocation2 + $0x88] sm:$0xff] %v6854
        %6957 = vst [vmem:[#allocation2 + $0x90] sm:$0xff] %v6856
        %6958 = vst [vmem:[#allocation2 + $0x98] sm:$0xff] %v6858
        %6959 = vst [vmem:[#allocation2 + $0xa0] sm:$0xff] %v6860
        %6960 = vst [vmem:[#allocation2 + $0xa8] sm:$0xff] %v6862
        %6961 = vst [vmem:[#allocation2 + $0xb0] sm:$0xff] %v6864
        %6962 = vst [vmem:[#allocation2 + $0xb8] sm:$0xff] %v6866
        %6963 = vst [vmem:[#allocation2 + $0xc0] sm:$0xff] %v6868
        %6964 = vst [vmem:[#allocation2 + $0xc8] sm:$0xff] %v6870
        %6965 = vst [vmem:[#allocation2 + $0xd0] sm:$0xff] %v6872
        %6966 = vst [vmem:[#allocation2 + $0xd8] sm:$0xff] %v6874
        %6967 = vst [vmem:[#allocation2 + $0xe0] sm:$0xff] %v6876
        %6968 = vst [vmem:[#allocation2 + $0xe8] sm:$0xff] %v6878
        %6969 = vst [vmem:[#allocation2 + $0xf0] sm:$0xff] %v6880
        %6970 = vst [vmem:[#allocation2 + $0xf8] sm:$0xff] %v6882
        %6971 = vst [vmem:[#allocation2 + $0x100] sm:$0xff] %v6884
        %6972 = vst [vmem:[#allocation2 + $0x108] sm:$0xff] %v6886
        %6973 = vst [vmem:[#allocation2 + $0x110] sm:$0xff] %v6888
        %6974 = vst [vmem:[#allocation2 + $0x118] sm:$0xff] %v6890
        %6975 = vst [vmem:[#allocation2 + $0x120] sm:$0xff] %v6892
        %6976 = vst [vmem:[#allocation2 + $0x128] sm:$0xff] %v6894
        %6977 = vst [vmem:[#allocation2 + $0x130] sm:$0x7f] %v6896
        %6978 = vst [vmem:[#allocation2 + $0x138] sm:$0x7f] %v6898
        %p6979 = scmp.eq.s32.totalorder %s37, 1
        // Predicated region
        $region149: #{forward_pallas.1} parent=99 // pred_check
          %p6980 = pneg %p6979
        $region150: #{forward_pallas.1} parent=99 // pred_check_branch
          %6982 = sbr.rel (%p6980) target = $region152
        $region151: #{forward_pallas.1} parent=99 // pred_region
          %v6983 = vld [vmem:[#allocation2] sm:$0xff]
          %v6984 = vld [vmem:[#allocation2 + $0x8] sm:$0xff]
          %v6985 = vld [vmem:[#allocation2 + $0x10] sm:$0xff]
          %v6986 = vld [vmem:[#allocation2 + $0x18] sm:$0xff]
          %v6987 = vld [vmem:[#allocation2 + $0x20] sm:$0xff]
          %v6988 = vld [vmem:[#allocation2 + $0x28] sm:$0xff]
          %v6989 = vld [vmem:[#allocation2 + $0x30] sm:$0xff]
          %v6990 = vld [vmem:[#allocation2 + $0x38] sm:$0xff]
          %v6991 = vld [vmem:[#allocation2 + $0x40] sm:$0xff]
          %v6992 = vld [vmem:[#allocation2 + $0x48] sm:$0xff]
          %v6993 = vld [vmem:[#allocation2 + $0x50] sm:$0xff]
          %v6994 = vld [vmem:[#allocation2 + $0x58] sm:$0xff]
          %v6995 = vld [vmem:[#allocation2 + $0x60] sm:$0xff]
          %v6996 = vld [vmem:[#allocation2 + $0x68] sm:$0xff]
          %v6997 = vld [vmem:[#allocation2 + $0x70] sm:$0xff]
          %v6998 = vld [vmem:[#allocation2 + $0x78] sm:$0xff]
          %v6999 = vld [vmem:[#allocation2 + $0x80] sm:$0xff]
          %v7000 = vld [vmem:[#allocation2 + $0x88] sm:$0xff]
          %v7001 = vld [vmem:[#allocation2 + $0x90] sm:$0xff]
          %v7002 = vld [vmem:[#allocation2 + $0x98] sm:$0xff]
          %v7003 = vld [vmem:[#allocation2 + $0xa0] sm:$0xff]
          %v7004 = vld [vmem:[#allocation2 + $0xa8] sm:$0xff]
          %v7005 = vld [vmem:[#allocation2 + $0xb0] sm:$0xff]
          %v7006 = vld [vmem:[#allocation2 + $0xb8] sm:$0xff]
          %v7007 = vld [vmem:[#allocation2 + $0xc0] sm:$0xff]
          %v7008 = vld [vmem:[#allocation2 + $0xc8] sm:$0xff]
          %v7009 = vld [vmem:[#allocation2 + $0xd0] sm:$0xff]
          %v7010 = vld [vmem:[#allocation2 + $0xd8] sm:$0xff]
          %v7011 = vld [vmem:[#allocation2 + $0xe0] sm:$0xff]
          %v7012 = vld [vmem:[#allocation2 + $0xe8] sm:$0xff]
          %v7013 = vld [vmem:[#allocation2 + $0xf0] sm:$0xff]
          %v7014 = vld [vmem:[#allocation2 + $0xf8] sm:$0xff]
          %v7015 = vld [vmem:[#allocation2 + $0x100] sm:$0xff]
          %v7016 = vld [vmem:[#allocation2 + $0x108] sm:$0xff]
          %v7017 = vld [vmem:[#allocation2 + $0x110] sm:$0xff]
          %v7018 = vld [vmem:[#allocation2 + $0x118] sm:$0xff]
          %v7019 = vld [vmem:[#allocation2 + $0x120] sm:$0xff]
          %v7020 = vld [vmem:[#allocation2 + $0x128] sm:$0xff]
          %v7021 = vld [vmem:[#allocation2 + $0x130] sm:$0xff]
          %v7022 = vld [vmem:[#allocation2 + $0x138] sm:$0xff]
          %v7023 = vpack.c.bf16 %v6985, %v6983
          %v7024 = vpack.c.bf16 %v6986, %v6984
          %v7025 = vpack.c.bf16 %v6989, %v6987
          %v7026 = vpack.c.bf16 %v6990, %v6988
          %v7027 = vpack.c.bf16 %v6993, %v6991
          %v7028 = vpack.c.bf16 %v6994, %v6992
          %v7029 = vpack.c.bf16 %v6997, %v6995
          %v7030 = vpack.c.bf16 %v6998, %v6996
          %v7031 = vpack.c.bf16 %v7001, %v6999
          %v7032 = vpack.c.bf16 %v7002, %v7000
          %v7033 = vpack.c.bf16 %v7005, %v7003
          %v7034 = vpack.c.bf16 %v7006, %v7004
          %v7035 = vpack.c.bf16 %v7009, %v7007
          %v7036 = vpack.c.bf16 %v7010, %v7008
          %v7037 = vpack.c.bf16 %v7013, %v7011
          %v7038 = vpack.c.bf16 %v7014, %v7012
          %v7039 = vpack.c.bf16 %v7017, %v7015
          %v7040 = vpack.c.bf16 %v7018, %v7016
          %v7041 = vpack.c.bf16 %v7021, %v7019
          %v7042 = vpack.c.bf16 %v7022, %v7020
          %v7043 = vld [vmem:[#allocation15] sm:$0xf]
          %v7044 = vld [vmem:[#allocation15 + $0x4] sm:$0xf]
          %v7045 = vld [vmem:[#allocation15 + $0x8] sm:$0xf]
          %v7046 = vld [vmem:[#allocation15 + $0xc] sm:$0xf]
          %v7047 = vld [vmem:[#allocation15 + $0x10] sm:$0xf]
          %v7048 = vld [vmem:[#allocation15 + $0x14] sm:$0xf]
          %v7049 = vld [vmem:[#allocation15 + $0x18] sm:$0xf]
          %v7050 = vld [vmem:[#allocation15 + $0x1c] sm:$0xf]
          %v7051 = vld [vmem:[#allocation15 + $0x20] sm:$0xf]
          %v7052 = vld [vmem:[#allocation15 + $0x24] sm:$0xf]
          %v7053 = vld [vmem:[#allocation15 + $0x28] sm:$0xf]
          %v7054 = vld [vmem:[#allocation15 + $0x2c] sm:$0xf]
          %v7055 = vld [vmem:[#allocation15 + $0x30] sm:$0xf]
          %v7056 = vld [vmem:[#allocation15 + $0x34] sm:$0xf]
          %v7057 = vld [vmem:[#allocation15 + $0x38] sm:$0xf]
          %v7058 = vld [vmem:[#allocation15 + $0x3c] sm:$0xf]
          %v7059 = vld [vmem:[#allocation15 + $0x40] sm:$0xf]
          %v7060 = vld [vmem:[#allocation15 + $0x44] sm:$0xf]
          %v7061 = vld [vmem:[#allocation15 + $0x48] sm:$0xf]
          %v7062 = vld [vmem:[#allocation15 + $0x4c] sm:$0xf]
          %v7063 = vld [vmem:[#allocation15 + $0x50] sm:$0xf]
          %v7064 = vld [vmem:[#allocation15 + $0x54] sm:$0xf]
          %v7065 = vld [vmem:[#allocation15 + $0x58] sm:$0xf]
          %v7066 = vld [vmem:[#allocation15 + $0x5c] sm:$0xf]
          %v7067 = vld [vmem:[#allocation15 + $0x60] sm:$0xf]
          %v7068 = vld [vmem:[#allocation15 + $0x64] sm:$0xf]
          %v7069 = vld [vmem:[#allocation15 + $0x68] sm:$0xf]
          %v7070 = vld [vmem:[#allocation15 + $0x6c] sm:$0xf]
          %v7071 = vld [vmem:[#allocation15 + $0x70] sm:$0xf]
          %v7072 = vld [vmem:[#allocation15 + $0x74] sm:$0xf]
          %v7073 = vld [vmem:[#allocation15 + $0x78] sm:$0xf]
          %v7074 = vld [vmem:[#allocation15 + $0x7c] sm:$0xf]
          %v7107 = vunpack.c.l.b16 %v7043
          %v7108 = vunpack.c.l.b16 %v7044
          %v7109 = vunpack.c.l.b16 %v7045
          %v7110 = vunpack.c.l.b16 %v7046
          %v7111 = vunpack.c.l.b16 %v7047
          %v7112 = vunpack.c.l.b16 %v7048
          %v7113 = vunpack.c.l.b16 %v7049
          %v7114 = vunpack.c.l.b16 %v7050
          %v7115 = vunpack.c.l.b16 %v7051
          %v7116 = vunpack.c.l.b16 %v7052
          %v7117 = vunpack.c.l.b16 %v7053
          %v7118 = vunpack.c.l.b16 %v7054
          %v7119 = vunpack.c.l.b16 %v7055
          %v7120 = vunpack.c.l.b16 %v7056
          %v7121 = vunpack.c.l.b16 %v7057
          %v7122 = vunpack.c.l.b16 %v7058
          %v7123 = vunpack.c.l.b16 %v7059
          %v7124 = vunpack.c.l.b16 %v7060
          %v7125 = vunpack.c.l.b16 %v7061
          %v7126 = vunpack.c.l.b16 %v7062
          %v7127 = vunpack.c.l.b16 %v7063
          %v7128 = vunpack.c.l.b16 %v7064
          %v7129 = vunpack.c.l.b16 %v7065
          %v7130 = vunpack.c.l.b16 %v7066
          %v7131 = vunpack.c.l.b16 %v7067
          %v7132 = vunpack.c.l.b16 %v7068
          %v7133 = vunpack.c.l.b16 %v7069
          %v7134 = vunpack.c.l.b16 %v7070
          %v7135 = vunpack.c.l.b16 %v7071
          %v7136 = vunpack.c.l.b16 %v7072
          %v7137 = vunpack.c.l.b16 %v7073
          %v7138 = vunpack.c.l.b16 %v7074
          %v7139 = vpack.c.b16 %v7108, %v7107
          %v7140 = vpack.c.b16 %v7110, %v7109
          %v7141 = vpack.c.b16 %v7112, %v7111
          %v7142 = vpack.c.b16 %v7114, %v7113
          %v7143 = vpack.c.b16 %v7116, %v7115
          %v7144 = vpack.c.b16 %v7118, %v7117
          %v7145 = vpack.c.b16 %v7120, %v7119
          %v7146 = vpack.c.b16 %v7122, %v7121
          %v7147 = vpack.c.b16 %v7124, %v7123
          %v7148 = vpack.c.b16 %v7126, %v7125
          %v7149 = vpack.c.b16 %v7128, %v7127
          %v7150 = vpack.c.b16 %v7130, %v7129
          %v7151 = vpack.c.b16 %v7132, %v7131
          %v7152 = vpack.c.b16 %v7134, %v7133
          %v7153 = vpack.c.b16 %v7136, %v7135
          %v7154 = vpack.c.b16 %v7138, %v7137
          %7171 = vmatpush.bf16.msra.mxu0 %v7146
          %7172 = vmatpush.bf16.msra.mxu0 %v7145
          %7173 = vmatpush.bf16.msra.mxu0 %v7144
          %7174 = vmatpush.bf16.msra.mxu0 %v7143
          %7175 = vmatpush.bf16.msra.mxu0 %v7142
          %7176 = vmatpush.bf16.msra.mxu0 %v7141
          %7177 = vmatpush.bf16.msra.mxu0 %v7140
          %7178 = vmatpush.bf16.msra.mxu0 %v7139
          %7179 = vmatmul.bf16.gmra.mxu0 %v7023
          %v7180 = vpop.f32.mrf.mxu0
          %v7181 = vadd.f32 0.0, %v7180
          %v7182 = vpop.f32.mrf.mxu0
          %v7183 = vadd.f32 0.0, %v7182
          %7184 = vmatmul.bf16.gmra.mxu0 %v7025
          %v7185 = vpop.f32.mrf.mxu0
          %v7186 = vadd.f32 0.0, %v7185
          %v7187 = vpop.f32.mrf.mxu0
          %v7188 = vadd.f32 0.0, %v7187
          %7189 = vmatmul.bf16.gmra.mxu0 %v7027
          %v7190 = vpop.f32.mrf.mxu0
          %v7191 = vadd.f32 0.0, %v7190
          %v7192 = vpop.f32.mrf.mxu0
          %v7193 = vadd.f32 0.0, %v7192
          %7194 = vmatmul.bf16.gmra.mxu0 %v7029
          %v7195 = vpop.f32.mrf.mxu0
          %v7196 = vadd.f32 0.0, %v7195
          %v7197 = vpop.f32.mrf.mxu0
          %v7198 = vadd.f32 0.0, %v7197
          %7199 = vmatmul.bf16.gmra.mxu0 %v7031
          %v7200 = vpop.f32.mrf.mxu0
          %v7201 = vadd.f32 0.0, %v7200
          %v7202 = vpop.f32.mrf.mxu0
          %v7203 = vadd.f32 0.0, %v7202
          %7204 = vmatmul.bf16.gmra.mxu0 %v7033
          %v7205 = vpop.f32.mrf.mxu0
          %v7206 = vadd.f32 0.0, %v7205
          %v7207 = vpop.f32.mrf.mxu0
          %v7208 = vadd.f32 0.0, %v7207
          %7209 = vmatmul.bf16.gmra.mxu0 %v7035
          %v7210 = vpop.f32.mrf.mxu0
          %v7211 = vadd.f32 0.0, %v7210
          %v7212 = vpop.f32.mrf.mxu0
          %v7213 = vadd.f32 0.0, %v7212
          %7214 = vmatmul.bf16.gmra.mxu0 %v7037
          %v7215 = vpop.f32.mrf.mxu0
          %v7216 = vadd.f32 0.0, %v7215
          %v7217 = vpop.f32.mrf.mxu0
          %v7218 = vadd.f32 0.0, %v7217
          %7219 = vmatmul.bf16.gmra.mxu0 %v7039
          %v7220 = vpop.f32.mrf.mxu0
          %v7221 = vadd.f32 0.0, %v7220
          %v7222 = vpop.f32.mrf.mxu0
          %v7223 = vadd.f32 0.0, %v7222
          %7224 = vmatmul.bf16.gmra.mxu0 %v7041
          %v7225 = vpop.f32.mrf.mxu0
          %v7226 = vadd.f32 0.0, %v7225
          %v7227 = vpop.f32.mrf.mxu0
          %v7228 = vadd.f32 0.0, %v7227
          %7229 = vdwg.mxu0
          %7230 = vmatpush.bf16.msra.mxu0 %v7154
          %7231 = vmatpush.bf16.msra.mxu0 %v7153
          %7232 = vmatpush.bf16.msra.mxu0 %v7152
          %7233 = vmatpush.bf16.msra.mxu0 %v7151
          %7234 = vmatpush.bf16.msra.mxu0 %v7150
          %7235 = vmatpush.bf16.msra.mxu0 %v7149
          %7236 = vmatpush.bf16.msra.mxu0 %v7148
          %7237 = vmatpush.bf16.msra.mxu0 %v7147
          %7238 = vmatmul.bf16.gmra.mxu0 %v7024
          %v7239 = vpop.f32.mrf.mxu0
          %v7240 = vadd.f32 %v7181, %v7239
          %v7241 = vpop.f32.mrf.mxu0
          %v7242 = vadd.f32 %v7183, %v7241
          %7243 = vmatmul.bf16.gmra.mxu0 %v7026
          %v7244 = vpop.f32.mrf.mxu0
          %v7245 = vadd.f32 %v7186, %v7244
          %v7246 = vpop.f32.mrf.mxu0
          %v7247 = vadd.f32 %v7188, %v7246
          %7248 = vmatmul.bf16.gmra.mxu0 %v7028
          %v7249 = vpop.f32.mrf.mxu0
          %v7250 = vadd.f32 %v7191, %v7249
          %v7251 = vpop.f32.mrf.mxu0
          %v7252 = vadd.f32 %v7193, %v7251
          %7253 = vmatmul.bf16.gmra.mxu0 %v7030
          %v7254 = vpop.f32.mrf.mxu0
          %v7255 = vadd.f32 %v7196, %v7254
          %v7256 = vpop.f32.mrf.mxu0
          %v7257 = vadd.f32 %v7198, %v7256
          %7258 = vmatmul.bf16.gmra.mxu0 %v7032
          %v7259 = vpop.f32.mrf.mxu0
          %v7260 = vadd.f32 %v7201, %v7259
          %v7261 = vpop.f32.mrf.mxu0
          %v7262 = vadd.f32 %v7203, %v7261
          %7263 = vmatmul.bf16.gmra.mxu0 %v7034
          %v7264 = vpop.f32.mrf.mxu0
          %v7265 = vadd.f32 %v7206, %v7264
          %v7266 = vpop.f32.mrf.mxu0
          %v7267 = vadd.f32 %v7208, %v7266
          %7268 = vmatmul.bf16.gmra.mxu0 %v7036
          %v7269 = vpop.f32.mrf.mxu0
          %v7270 = vadd.f32 %v7211, %v7269
          %v7271 = vpop.f32.mrf.mxu0
          %v7272 = vadd.f32 %v7213, %v7271
          %7273 = vmatmul.bf16.gmra.mxu0 %v7038
          %v7274 = vpop.f32.mrf.mxu0
          %v7275 = vadd.f32 %v7216, %v7274
          %v7276 = vpop.f32.mrf.mxu0
          %v7277 = vadd.f32 %v7218, %v7276
          %7278 = vmatmul.bf16.gmra.mxu0 %v7040
          %v7279 = vpop.f32.mrf.mxu0
          %v7280 = vadd.f32 %v7221, %v7279
          %v7281 = vpop.f32.mrf.mxu0
          %v7282 = vadd.f32 %v7223, %v7281
          %7283 = vmatmul.bf16.gmra.mxu0 %v7042
          %v7284 = vpop.f32.mrf.mxu0
          %v7285 = vadd.f32 %v7226, %v7284
          %v7286 = vpop.f32.mrf.mxu0
          %v7287 = vadd.f32 %v7228, %v7286
          %7288 = vdwg.mxu0
          %v7289 = vld [vmem:[%s15] sm:$0x1]
          %v7291 = vperm.slane %v7289, 0
          %v7293 = vmul.f32 %v7240, %v7291
          %v7294 = vmul.f32 %v7242, %v7291
          %v7295 = vmul.f32 %v7245, %v7291
          %v7296 = vmul.f32 %v7247, %v7291
          %v7297 = vmul.f32 %v7250, %v7291
          %v7298 = vmul.f32 %v7252, %v7291
          %v7299 = vmul.f32 %v7255, %v7291
          %v7300 = vmul.f32 %v7257, %v7291
          %v7301 = vmul.f32 %v7260, %v7291
          %v7302 = vmul.f32 %v7262, %v7291
          %v7303 = vmul.f32 %v7265, %v7291
          %v7304 = vmul.f32 %v7267, %v7291
          %v7305 = vmul.f32 %v7270, %v7291
          %v7306 = vmul.f32 %v7272, %v7291
          %v7307 = vmul.f32 %v7275, %v7291
          %v7308 = vmul.f32 %v7277, %v7291
          %v7309 = vmul.f32 %v7280, %v7291
          %v7310 = vmul.f32 %v7282, %v7291
          %v7311 = vmul.f32 %v7285, %v7291
          %v7312 = vmul.f32 %v7287, %v7291
          %v7313 = vld [vmem:[#allocation16] sm:$0x1]
          %v7315 = vperm.slane %v7313, 0
          %v7317 = vadd.f32 %v7293, %v7315
          %v7318 = vadd.f32 %v7294, %v7315
          %v7319 = vadd.f32 %v7295, %v7315
          %v7320 = vadd.f32 %v7296, %v7315
          %v7321 = vadd.f32 %v7297, %v7315
          %v7322 = vadd.f32 %v7298, %v7315
          %v7323 = vadd.f32 %v7299, %v7315
          %v7324 = vadd.f32 %v7300, %v7315
          %v7325 = vadd.f32 %v7301, %v7315
          %v7326 = vadd.f32 %v7302, %v7315
          %v7327 = vadd.f32 %v7303, %v7315
          %v7328 = vadd.f32 %v7304, %v7315
          %v7329 = vadd.f32 %v7305, %v7315
          %v7330 = vadd.f32 %v7306, %v7315
          %v7331 = vadd.f32 %v7307, %v7315
          %v7332 = vadd.f32 %v7308, %v7315
          %v7333 = vadd.f32 %v7309, %v7315
          %v7334 = vadd.f32 %v7310, %v7315
          %v7335 = vadd.f32 %v7311, %v7315
          %v7336 = vadd.f32 %v7312, %v7315
          %v7337 = vmax.f32 %v7317, 0.0
          %v7338 = vmax.f32 %v7318, 0.0
          %v7339 = vmax.f32 %v7319, 0.0
          %v7340 = vmax.f32 %v7320, 0.0
          %v7341 = vmax.f32 %v7321, 0.0
          %v7342 = vmax.f32 %v7322, 0.0
          %v7343 = vmax.f32 %v7323, 0.0
          %v7344 = vmax.f32 %v7324, 0.0
          %v7345 = vmax.f32 %v7325, 0.0
          %v7346 = vmax.f32 %v7326, 0.0
          %v7347 = vmax.f32 %v7327, 0.0
          %v7348 = vmax.f32 %v7328, 0.0
          %v7349 = vmax.f32 %v7329, 0.0
          %v7350 = vmax.f32 %v7330, 0.0
          %v7351 = vmax.f32 %v7331, 0.0
          %v7352 = vmax.f32 %v7332, 0.0
          %v7353 = vmax.f32 %v7333, 0.0
          %v7354 = vmax.f32 %v7334, 0.0
          %v7355 = vmax.f32 %v7335, 0.0
          %v7356 = vmax.f32 %v7336, 0.0
          %v7357 = vpack.c.bf16 %v7337, %v7337
          %v7358 = vpack.c.bf16 %v7338, %v7338
          %v7359 = vpack.c.bf16 %v7339, %v7339
          %v7360 = vpack.c.bf16 %v7340, %v7340
          %v7361 = vpack.c.bf16 %v7341, %v7341
          %v7362 = vpack.c.bf16 %v7342, %v7342
          %v7363 = vpack.c.bf16 %v7343, %v7343
          %v7364 = vpack.c.bf16 %v7344, %v7344
          %v7365 = vpack.c.bf16 %v7345, %v7345
          %v7366 = vpack.c.bf16 %v7346, %v7346
          %v7367 = vpack.c.bf16 %v7347, %v7347
          %v7368 = vpack.c.bf16 %v7348, %v7348
          %v7369 = vpack.c.bf16 %v7349, %v7349
          %v7370 = vpack.c.bf16 %v7350, %v7350
          %v7371 = vpack.c.bf16 %v7351, %v7351
          %v7372 = vpack.c.bf16 %v7352, %v7352
          %v7373 = vpack.c.bf16 %v7353, %v7353
          %v7374 = vpack.c.bf16 %v7354, %v7354
          %v7375 = vpack.c.bf16 %v7355, %v7355
          %v7376 = vpack.c.bf16 %v7356, %v7356
          %v7377 = vld [vmem:[#allocation17] sm:$0xf]
          %v7378 = vld [vmem:[#allocation17 + $0x4] sm:$0xf]
          %v7379 = vld [vmem:[#allocation17 + $0x8] sm:$0xf]
          %v7380 = vld [vmem:[#allocation17 + $0xc] sm:$0xf]
          %v7381 = vld [vmem:[#allocation17 + $0x10] sm:$0xf]
          %v7382 = vld [vmem:[#allocation17 + $0x14] sm:$0xf]
          %v7383 = vld [vmem:[#allocation17 + $0x18] sm:$0xf]
          %v7384 = vld [vmem:[#allocation17 + $0x1c] sm:$0xf]
          %v7385 = vld [vmem:[#allocation17 + $0x20] sm:$0xf]
          %v7386 = vld [vmem:[#allocation17 + $0x24] sm:$0xf]
          %v7387 = vld [vmem:[#allocation17 + $0x28] sm:$0xf]
          %v7388 = vld [vmem:[#allocation17 + $0x2c] sm:$0xf]
          %v7389 = vld [vmem:[#allocation17 + $0x30] sm:$0xf]
          %v7390 = vld [vmem:[#allocation17 + $0x34] sm:$0xf]
          %v7391 = vld [vmem:[#allocation17 + $0x38] sm:$0xf]
          %v7392 = vld [vmem:[#allocation17 + $0x3c] sm:$0xf]
          %s7393 = scalar_lea.vmem [#allocation17], 64
          %v7394 = vld [vmem:[%s7393] sm:$0xf]
          %v7395 = vld [vmem:[%s7393 + $0x4] sm:$0xf]
          %v7396 = vld [vmem:[%s7393 + $0x8] sm:$0xf]
          %v7397 = vld [vmem:[%s7393 + $0xc] sm:$0xf]
          %v7398 = vld [vmem:[%s7393 + $0x10] sm:$0xf]
          %v7399 = vld [vmem:[%s7393 + $0x14] sm:$0xf]
          %v7400 = vld [vmem:[%s7393 + $0x18] sm:$0xf]
          %v7401 = vld [vmem:[%s7393 + $0x1c] sm:$0xf]
          %v7402 = vld [vmem:[%s7393 + $0x20] sm:$0xf]
          %v7403 = vld [vmem:[%s7393 + $0x24] sm:$0xf]
          %v7404 = vld [vmem:[%s7393 + $0x28] sm:$0xf]
          %v7405 = vld [vmem:[%s7393 + $0x2c] sm:$0xf]
          %v7406 = vld [vmem:[%s7393 + $0x30] sm:$0xf]
          %v7407 = vld [vmem:[%s7393 + $0x34] sm:$0xf]
          %v7408 = vld [vmem:[%s7393 + $0x38] sm:$0xf]
          %v7409 = vld [vmem:[%s7393 + $0x3c] sm:$0xf]
          %v7430 = vunpack.c.l.b16 %v7357
          %v7431 = vunpack.c.l.b16 %v7358
          %v7432 = vunpack.c.l.b16 %v7359
          %v7433 = vunpack.c.l.b16 %v7360
          %v7434 = vunpack.c.l.b16 %v7361
          %v7435 = vunpack.c.l.b16 %v7362
          %v7436 = vunpack.c.l.b16 %v7363
          %v7437 = vunpack.c.l.b16 %v7364
          %v7438 = vunpack.c.l.b16 %v7365
          %v7439 = vunpack.c.l.b16 %v7366
          %v7440 = vunpack.c.l.b16 %v7367
          %v7441 = vunpack.c.l.b16 %v7368
          %v7442 = vunpack.c.l.b16 %v7369
          %v7443 = vunpack.c.l.b16 %v7370
          %v7444 = vunpack.c.l.b16 %v7371
          %v7445 = vunpack.c.l.b16 %v7372
          %v7446 = vunpack.c.l.b16 %v7373
          %v7447 = vunpack.c.l.b16 %v7374
          %v7448 = vunpack.c.l.b16 %v7375
          %v7449 = vunpack.c.l.b16 %v7376
          %v7450 = vpack.c.b16 %v7431, %v7430
          %v7451 = vpack.c.b16 %v7433, %v7432
          %v7452 = vpack.c.b16 %v7435, %v7434
          %v7453 = vpack.c.b16 %v7437, %v7436
          %v7454 = vpack.c.b16 %v7439, %v7438
          %v7455 = vpack.c.b16 %v7441, %v7440
          %v7456 = vpack.c.b16 %v7443, %v7442
          %v7457 = vpack.c.b16 %v7445, %v7444
          %v7458 = vpack.c.b16 %v7447, %v7446
          %v7459 = vpack.c.b16 %v7449, %v7448
          %v7461 = vshrl.u32 %v7450, 16
          %v7463 = vshll.u32 %v7450, 16
          %v7465 = vrot.slane %v7463, 1
          %v7466 = vor.u32 %v7461, %v7465
          %v7468 = vshll.u32 %v7451, 16
          %v7470 = vrot.slane %v7468, 1
          %v7471 = vsel %vm2645, %v7466, %v7470
          %v7472 = vshrl.u32 %v7451, 16
          %v7474 = vor.u32 %v7472, %v7470
          %v7476 = vshll.u32 %v7452, 16
          %v7478 = vrot.slane %v7476, 1
          %v7479 = vsel %vm2645, %v7474, %v7478
          %v7480 = vshrl.u32 %v7452, 16
          %v7482 = vor.u32 %v7480, %v7478
          %v7484 = vshll.u32 %v7453, 16
          %v7486 = vrot.slane %v7484, 1
          %v7487 = vsel %vm2645, %v7482, %v7486
          %v7488 = vshrl.u32 %v7453, 16
          %v7490 = vor.u32 %v7488, %v7486
          %v7492 = vshll.u32 %v7454, 16
          %v7494 = vrot.slane %v7492, 1
          %v7495 = vsel %vm2645, %v7490, %v7494
          %v7496 = vshrl.u32 %v7454, 16
          %v7498 = vor.u32 %v7496, %v7494
          %v7500 = vshll.u32 %v7455, 16
          %v7502 = vrot.slane %v7500, 1
          %v7503 = vsel %vm2645, %v7498, %v7502
          %v7504 = vshrl.u32 %v7455, 16
          %v7506 = vor.u32 %v7504, %v7502
          %v7508 = vshll.u32 %v7456, 16
          %v7510 = vrot.slane %v7508, 1
          %v7511 = vsel %vm2645, %v7506, %v7510
          %v7512 = vshrl.u32 %v7456, 16
          %v7514 = vor.u32 %v7512, %v7510
          %v7516 = vshll.u32 %v7457, 16
          %v7518 = vrot.slane %v7516, 1
          %v7519 = vsel %vm2645, %v7514, %v7518
          %v7520 = vshrl.u32 %v7457, 16
          %v7522 = vor.u32 %v7520, %v7518
          %v7524 = vshll.u32 %v7458, 16
          %v7526 = vrot.slane %v7524, 1
          %v7527 = vsel %vm2645, %v7522, %v7526
          %v7528 = vshrl.u32 %v7458, 16
          %v7530 = vor.u32 %v7528, %v7526
          %v7532 = vshll.u32 %v7459, 16
          %v7534 = vrot.slane %v7532, 1
          %v7535 = vsel %vm2645, %v7530, %v7534
          %v7536 = vshrl.u32 %v7459, 16
          %v7538 = vor.u32 %v7536, %v7534
          %v7565 = vunpack.c.l.b16 %v7394
          %v7566 = vunpack.c.l.b16 %v7395
          %v7567 = vunpack.c.l.b16 %v7396
          %v7568 = vunpack.c.l.b16 %v7397
          %v7569 = vunpack.c.l.b16 %v7398
          %v7570 = vunpack.c.l.b16 %v7399
          %v7571 = vunpack.c.l.b16 %v7400
          %v7572 = vunpack.c.l.b16 %v7401
          %v7573 = vunpack.c.l.b16 %v7402
          %v7574 = vunpack.c.l.b16 %v7403
          %v7575 = vunpack.c.l.b16 %v7404
          %v7576 = vunpack.c.l.b16 %v7405
          %v7577 = vunpack.c.l.b16 %v7406
          %v7578 = vunpack.c.l.b16 %v7407
          %v7579 = vunpack.c.l.b16 %v7408
          %v7580 = vunpack.c.l.b16 %v7409
          %v7581 = vpack.c.b16 %v7566, %v7565
          %v7582 = vpack.c.b16 %v7568, %v7567
          %v7583 = vpack.c.b16 %v7570, %v7569
          %v7584 = vpack.c.b16 %v7572, %v7571
          %v7585 = vpack.c.b16 %v7574, %v7573
          %v7586 = vpack.c.b16 %v7576, %v7575
          %v7587 = vpack.c.b16 %v7578, %v7577
          %v7588 = vpack.c.b16 %v7580, %v7579
          %7597 = vmatpush.bf16.msra.mxu0 %v7588
          %7598 = vmatpush.bf16.msra.mxu0 %v7587
          %7599 = vmatpush.bf16.msra.mxu0 %v7586
          %7600 = vmatpush.bf16.msra.mxu0 %v7585
          %7601 = vmatpush.bf16.msra.mxu0 %v7584
          %7602 = vmatpush.bf16.msra.mxu0 %v7583
          %7603 = vmatpush.bf16.msra.mxu0 %v7582
          %7604 = vmatpush.bf16.msra.mxu0 %v7581
          %7605 = vmatmul.bf16.gmra.mxu0 %v7471
          %v7606 = vpop.f32.mrf.mxu0
          %v7607 = vadd.f32 0.0, %v7606
          %v7608 = vpop.f32.mrf.mxu0
          %v7609 = vadd.f32 0.0, %v7608
          %7610 = vmatmul.bf16.gmra.mxu0 %v7479
          %v7611 = vpop.f32.mrf.mxu0
          %v7612 = vadd.f32 0.0, %v7611
          %v7613 = vpop.f32.mrf.mxu0
          %v7614 = vadd.f32 0.0, %v7613
          %7615 = vmatmul.bf16.gmra.mxu0 %v7487
          %v7616 = vpop.f32.mrf.mxu0
          %v7617 = vadd.f32 0.0, %v7616
          %v7618 = vpop.f32.mrf.mxu0
          %v7619 = vadd.f32 0.0, %v7618
          %7620 = vmatmul.bf16.gmra.mxu0 %v7495
          %v7621 = vpop.f32.mrf.mxu0
          %v7622 = vadd.f32 0.0, %v7621
          %v7623 = vpop.f32.mrf.mxu0
          %v7624 = vadd.f32 0.0, %v7623
          %7625 = vmatmul.bf16.gmra.mxu0 %v7503
          %v7626 = vpop.f32.mrf.mxu0
          %v7627 = vadd.f32 0.0, %v7626
          %v7628 = vpop.f32.mrf.mxu0
          %v7629 = vadd.f32 0.0, %v7628
          %7630 = vmatmul.bf16.gmra.mxu0 %v7511
          %v7631 = vpop.f32.mrf.mxu0
          %v7632 = vadd.f32 0.0, %v7631
          %v7633 = vpop.f32.mrf.mxu0
          %v7634 = vadd.f32 0.0, %v7633
          %7635 = vmatmul.bf16.gmra.mxu0 %v7519
          %v7636 = vpop.f32.mrf.mxu0
          %v7637 = vadd.f32 0.0, %v7636
          %v7638 = vpop.f32.mrf.mxu0
          %v7639 = vadd.f32 0.0, %v7638
          %7640 = vmatmul.bf16.gmra.mxu0 %v7527
          %v7641 = vpop.f32.mrf.mxu0
          %v7642 = vadd.f32 0.0, %v7641
          %v7643 = vpop.f32.mrf.mxu0
          %v7644 = vadd.f32 0.0, %v7643
          %7645 = vmatmul.bf16.gmra.mxu0 %v7535
          %v7646 = vpop.f32.mrf.mxu0
          %v7647 = vadd.f32 0.0, %v7646
          %v7648 = vpop.f32.mrf.mxu0
          %v7649 = vadd.f32 0.0, %v7648
          %7650 = vmatmul.bf16.gmra.mxu0 %v7538
          %v7651 = vpop.f32.mrf.mxu0
          %v7652 = vadd.f32 0.0, %v7651
          %v7653 = vpop.f32.mrf.mxu0
          %v7654 = vadd.f32 0.0, %v7653
          %7655 = vdwg.mxu0
          %v7682 = vunpack.c.l.b16 %v7377
          %v7683 = vunpack.c.l.b16 %v7378
          %v7684 = vunpack.c.l.b16 %v7379
          %v7685 = vunpack.c.l.b16 %v7380
          %v7686 = vunpack.c.l.b16 %v7381
          %v7687 = vunpack.c.l.b16 %v7382
          %v7688 = vunpack.c.l.b16 %v7383
          %v7689 = vunpack.c.l.b16 %v7384
          %v7690 = vunpack.c.l.b16 %v7385
          %v7691 = vunpack.c.l.b16 %v7386
          %v7692 = vunpack.c.l.b16 %v7387
          %v7693 = vunpack.c.l.b16 %v7388
          %v7694 = vunpack.c.l.b16 %v7389
          %v7695 = vunpack.c.l.b16 %v7390
          %v7696 = vunpack.c.l.b16 %v7391
          %v7697 = vunpack.c.l.b16 %v7392
          %v7698 = vpack.c.b16 %v7683, %v7682
          %v7699 = vpack.c.b16 %v7685, %v7684
          %v7700 = vpack.c.b16 %v7687, %v7686
          %v7701 = vpack.c.b16 %v7689, %v7688
          %v7702 = vpack.c.b16 %v7691, %v7690
          %v7703 = vpack.c.b16 %v7693, %v7692
          %v7704 = vpack.c.b16 %v7695, %v7694
          %v7705 = vpack.c.b16 %v7697, %v7696
          %7714 = vmatpush.bf16.msra.mxu0 %v7705
          %7715 = vmatpush.bf16.msra.mxu0 %v7704
          %7716 = vmatpush.bf16.msra.mxu0 %v7703
          %7717 = vmatpush.bf16.msra.mxu0 %v7702
          %7718 = vmatpush.bf16.msra.mxu0 %v7701
          %7719 = vmatpush.bf16.msra.mxu0 %v7700
          %7720 = vmatpush.bf16.msra.mxu0 %v7699
          %7721 = vmatpush.bf16.msra.mxu0 %v7698
          %7722 = vmatmul.bf16.gmra.mxu0 %v7450
          %v7723 = vpop.f32.mrf.mxu0
          %v7724 = vadd.f32 %v7607, %v7723
          %v7725 = vpop.f32.mrf.mxu0
          %v7726 = vadd.f32 %v7609, %v7725
          %7727 = vmatmul.bf16.gmra.mxu0 %v7451
          %v7728 = vpop.f32.mrf.mxu0
          %v7729 = vadd.f32 %v7612, %v7728
          %v7730 = vpop.f32.mrf.mxu0
          %v7731 = vadd.f32 %v7614, %v7730
          %7732 = vmatmul.bf16.gmra.mxu0 %v7452
          %v7733 = vpop.f32.mrf.mxu0
          %v7734 = vadd.f32 %v7617, %v7733
          %v7735 = vpop.f32.mrf.mxu0
          %v7736 = vadd.f32 %v7619, %v7735
          %7737 = vmatmul.bf16.gmra.mxu0 %v7453
          %v7738 = vpop.f32.mrf.mxu0
          %v7739 = vadd.f32 %v7622, %v7738
          %v7740 = vpop.f32.mrf.mxu0
          %v7741 = vadd.f32 %v7624, %v7740
          %7742 = vmatmul.bf16.gmra.mxu0 %v7454
          %v7743 = vpop.f32.mrf.mxu0
          %v7744 = vadd.f32 %v7627, %v7743
          %v7745 = vpop.f32.mrf.mxu0
          %v7746 = vadd.f32 %v7629, %v7745
          %7747 = vmatmul.bf16.gmra.mxu0 %v7455
          %v7748 = vpop.f32.mrf.mxu0
          %v7749 = vadd.f32 %v7632, %v7748
          %v7750 = vpop.f32.mrf.mxu0
          %v7751 = vadd.f32 %v7634, %v7750
          %7752 = vmatmul.bf16.gmra.mxu0 %v7456
          %v7753 = vpop.f32.mrf.mxu0
          %v7754 = vadd.f32 %v7637, %v7753
          %v7755 = vpop.f32.mrf.mxu0
          %v7756 = vadd.f32 %v7639, %v7755
          %7757 = vmatmul.bf16.gmra.mxu0 %v7457
          %v7758 = vpop.f32.mrf.mxu0
          %v7759 = vadd.f32 %v7642, %v7758
          %v7760 = vpop.f32.mrf.mxu0
          %v7761 = vadd.f32 %v7644, %v7760
          %7762 = vmatmul.bf16.gmra.mxu0 %v7458
          %v7763 = vpop.f32.mrf.mxu0
          %v7764 = vadd.f32 %v7647, %v7763
          %v7765 = vpop.f32.mrf.mxu0
          %v7766 = vadd.f32 %v7649, %v7765
          %7767 = vmatmul.bf16.gmra.mxu0 %v7459
          %v7768 = vpop.f32.mrf.mxu0
          %v7769 = vadd.f32 %v7652, %v7768
          %v7770 = vpop.f32.mrf.mxu0
          %v7771 = vadd.f32 %v7654, %v7770
          %7772 = vdwg.mxu0
          %s7773 = scalar_lea.vmem [#allocation17], 128
          %v7774 = vld [vmem:[%s7773] sm:$0xf]
          %v7775 = vld [vmem:[%s7773 + $0x4] sm:$0xf]
          %v7776 = vld [vmem:[%s7773 + $0x8] sm:$0xf]
          %v7777 = vld [vmem:[%s7773 + $0xc] sm:$0xf]
          %v7778 = vld [vmem:[%s7773 + $0x10] sm:$0xf]
          %v7779 = vld [vmem:[%s7773 + $0x14] sm:$0xf]
          %v7780 = vld [vmem:[%s7773 + $0x18] sm:$0xf]
          %v7781 = vld [vmem:[%s7773 + $0x1c] sm:$0xf]
          %v7782 = vld [vmem:[%s7773 + $0x20] sm:$0xf]
          %v7783 = vld [vmem:[%s7773 + $0x24] sm:$0xf]
          %v7784 = vld [vmem:[%s7773 + $0x28] sm:$0xf]
          %v7785 = vld [vmem:[%s7773 + $0x2c] sm:$0xf]
          %v7786 = vld [vmem:[%s7773 + $0x30] sm:$0xf]
          %v7787 = vld [vmem:[%s7773 + $0x34] sm:$0xf]
          %v7788 = vld [vmem:[%s7773 + $0x38] sm:$0xf]
          %v7789 = vld [vmem:[%s7773 + $0x3c] sm:$0xf]
          %v7790 = vrot.slane %v7450, 1
          %v7791 = vrot.slane %v7451, 1
          %v7792 = vsel %vm3851, %v7790, %v7791
          %v7793 = vrot.slane %v7452, 1
          %v7794 = vsel %vm3851, %v7791, %v7793
          %v7795 = vrot.slane %v7453, 1
          %v7796 = vsel %vm3851, %v7793, %v7795
          %v7797 = vrot.slane %v7454, 1
          %v7798 = vsel %vm3851, %v7795, %v7797
          %v7799 = vrot.slane %v7455, 1
          %v7800 = vsel %vm3851, %v7797, %v7799
          %v7801 = vrot.slane %v7456, 1
          %v7802 = vsel %vm3851, %v7799, %v7801
          %v7803 = vrot.slane %v7457, 1
          %v7804 = vsel %vm3851, %v7801, %v7803
          %v7805 = vrot.slane %v7458, 1
          %v7806 = vsel %vm3851, %v7803, %v7805
          %v7807 = vrot.slane %v7459, 1
          %v7808 = vsel %vm3851, %v7805, %v7807
          %v7835 = vunpack.c.l.b16 %v7774
          %v7836 = vunpack.c.l.b16 %v7775
          %v7837 = vunpack.c.l.b16 %v7776
          %v7838 = vunpack.c.l.b16 %v7777
          %v7839 = vunpack.c.l.b16 %v7778
          %v7840 = vunpack.c.l.b16 %v7779
          %v7841 = vunpack.c.l.b16 %v7780
          %v7842 = vunpack.c.l.b16 %v7781
          %v7843 = vunpack.c.l.b16 %v7782
          %v7844 = vunpack.c.l.b16 %v7783
          %v7845 = vunpack.c.l.b16 %v7784
          %v7846 = vunpack.c.l.b16 %v7785
          %v7847 = vunpack.c.l.b16 %v7786
          %v7848 = vunpack.c.l.b16 %v7787
          %v7849 = vunpack.c.l.b16 %v7788
          %v7850 = vunpack.c.l.b16 %v7789
          %v7851 = vpack.c.b16 %v7836, %v7835
          %v7852 = vpack.c.b16 %v7838, %v7837
          %v7853 = vpack.c.b16 %v7840, %v7839
          %v7854 = vpack.c.b16 %v7842, %v7841
          %v7855 = vpack.c.b16 %v7844, %v7843
          %v7856 = vpack.c.b16 %v7846, %v7845
          %v7857 = vpack.c.b16 %v7848, %v7847
          %v7858 = vpack.c.b16 %v7850, %v7849
          %7867 = vmatpush.bf16.msra.mxu0 %v7858
          %7868 = vmatpush.bf16.msra.mxu0 %v7857
          %7869 = vmatpush.bf16.msra.mxu0 %v7856
          %7870 = vmatpush.bf16.msra.mxu0 %v7855
          %7871 = vmatpush.bf16.msra.mxu0 %v7854
          %7872 = vmatpush.bf16.msra.mxu0 %v7853
          %7873 = vmatpush.bf16.msra.mxu0 %v7852
          %7874 = vmatpush.bf16.msra.mxu0 %v7851
          %7875 = vmatmul.bf16.gmra.mxu0 %v7792
          %v7876 = vpop.f32.mrf.mxu0
          %v7877 = vadd.f32 0.0, %v7876
          %v7878 = vpop.f32.mrf.mxu0
          %v7879 = vadd.f32 0.0, %v7878
          %7880 = vmatmul.bf16.gmra.mxu0 %v7794
          %v7881 = vpop.f32.mrf.mxu0
          %v7882 = vadd.f32 0.0, %v7881
          %v7883 = vpop.f32.mrf.mxu0
          %v7884 = vadd.f32 0.0, %v7883
          %7885 = vmatmul.bf16.gmra.mxu0 %v7796
          %v7886 = vpop.f32.mrf.mxu0
          %v7887 = vadd.f32 0.0, %v7886
          %v7888 = vpop.f32.mrf.mxu0
          %v7889 = vadd.f32 0.0, %v7888
          %7890 = vmatmul.bf16.gmra.mxu0 %v7798
          %v7891 = vpop.f32.mrf.mxu0
          %v7892 = vadd.f32 0.0, %v7891
          %v7893 = vpop.f32.mrf.mxu0
          %v7894 = vadd.f32 0.0, %v7893
          %7895 = vmatmul.bf16.gmra.mxu0 %v7800
          %v7896 = vpop.f32.mrf.mxu0
          %v7897 = vadd.f32 0.0, %v7896
          %v7898 = vpop.f32.mrf.mxu0
          %v7899 = vadd.f32 0.0, %v7898
          %7900 = vmatmul.bf16.gmra.mxu0 %v7802
          %v7901 = vpop.f32.mrf.mxu0
          %v7902 = vadd.f32 0.0, %v7901
          %v7903 = vpop.f32.mrf.mxu0
          %v7904 = vadd.f32 0.0, %v7903
          %7905 = vmatmul.bf16.gmra.mxu0 %v7804
          %v7906 = vpop.f32.mrf.mxu0
          %v7907 = vadd.f32 0.0, %v7906
          %v7908 = vpop.f32.mrf.mxu0
          %v7909 = vadd.f32 0.0, %v7908
          %7910 = vmatmul.bf16.gmra.mxu0 %v7806
          %v7911 = vpop.f32.mrf.mxu0
          %v7912 = vadd.f32 0.0, %v7911
          %v7913 = vpop.f32.mrf.mxu0
          %v7914 = vadd.f32 0.0, %v7913
          %7915 = vmatmul.bf16.gmra.mxu0 %v7808
          %v7916 = vpop.f32.mrf.mxu0
          %v7917 = vadd.f32 0.0, %v7916
          %v7918 = vpop.f32.mrf.mxu0
          %v7919 = vadd.f32 0.0, %v7918
          %7920 = vmatmul.bf16.gmra.mxu0 %v7807
          %v7921 = vpop.f32.mrf.mxu0
          %v7922 = vadd.f32 0.0, %v7921
          %v7923 = vpop.f32.mrf.mxu0
          %v7924 = vadd.f32 0.0, %v7923
          %7925 = vdwg.mxu0
          %v7926 = vadd.f32 %v7724, %v7877
          %v7927 = vadd.f32 %v7726, %v7879
          %v7928 = vadd.f32 %v7729, %v7882
          %v7929 = vadd.f32 %v7731, %v7884
          %v7930 = vadd.f32 %v7734, %v7887
          %v7931 = vadd.f32 %v7736, %v7889
          %v7932 = vadd.f32 %v7739, %v7892
          %v7933 = vadd.f32 %v7741, %v7894
          %v7934 = vadd.f32 %v7744, %v7897
          %v7935 = vadd.f32 %v7746, %v7899
          %v7936 = vadd.f32 %v7749, %v7902
          %v7937 = vadd.f32 %v7751, %v7904
          %v7938 = vadd.f32 %v7754, %v7907
          %v7939 = vadd.f32 %v7756, %v7909
          %v7940 = vadd.f32 %v7759, %v7912
          %v7941 = vadd.f32 %v7761, %v7914
          %v7942 = vadd.f32 %v7764, %v7917
          %v7943 = vadd.f32 %v7766, %v7919
          %v7944 = vadd.f32 %v7769, %v7922
          %v7945 = vadd.f32 %v7771, %v7924
          %s7946 = scalar_lea.vmem [#allocation17], 192
          %v7947 = vld [vmem:[%s7946] sm:$0xf]
          %v7948 = vld [vmem:[%s7946 + $0x4] sm:$0xf]
          %v7949 = vld [vmem:[%s7946 + $0x8] sm:$0xf]
          %v7950 = vld [vmem:[%s7946 + $0xc] sm:$0xf]
          %v7951 = vld [vmem:[%s7946 + $0x10] sm:$0xf]
          %v7952 = vld [vmem:[%s7946 + $0x14] sm:$0xf]
          %v7953 = vld [vmem:[%s7946 + $0x18] sm:$0xf]
          %v7954 = vld [vmem:[%s7946 + $0x1c] sm:$0xf]
          %v7955 = vld [vmem:[%s7946 + $0x20] sm:$0xf]
          %v7956 = vld [vmem:[%s7946 + $0x24] sm:$0xf]
          %v7957 = vld [vmem:[%s7946 + $0x28] sm:$0xf]
          %v7958 = vld [vmem:[%s7946 + $0x2c] sm:$0xf]
          %v7959 = vld [vmem:[%s7946 + $0x30] sm:$0xf]
          %v7960 = vld [vmem:[%s7946 + $0x34] sm:$0xf]
          %v7961 = vld [vmem:[%s7946 + $0x38] sm:$0xf]
          %v7962 = vld [vmem:[%s7946 + $0x3c] sm:$0xf]
          %vm7963 = vsmask.f32 6400
          %v7964 = vrot.slane %v7461, 1
          %v7965 = vrot.slane %v7463, 2
          %v7966 = vor.u32 %v7964, %v7965
          %v7967 = vrot.slane %v7472, 1
          %v7968 = vrot.slane %v7468, 2
          %v7969 = vor.u32 %v7967, %v7968
          %v7970 = vsel %vm7963, %v7966, %v7969
          %v7971 = vrot.slane %v7480, 1
          %v7972 = vrot.slane %v7476, 2
          %v7973 = vor.u32 %v7971, %v7972
          %v7974 = vsel %vm7963, %v7969, %v7973
          %v7975 = vrot.slane %v7488, 1
          %v7976 = vrot.slane %v7484, 2
          %v7977 = vor.u32 %v7975, %v7976
          %v7978 = vsel %vm7963, %v7973, %v7977
          %v7979 = vrot.slane %v7496, 1
          %v7980 = vrot.slane %v7492, 2
          %v7981 = vor.u32 %v7979, %v7980
          %v7982 = vsel %vm7963, %v7977, %v7981
          %v7983 = vrot.slane %v7504, 1
          %v7984 = vrot.slane %v7500, 2
          %v7985 = vor.u32 %v7983, %v7984
          %v7986 = vsel %vm7963, %v7981, %v7985
          %v7987 = vrot.slane %v7512, 1
          %v7988 = vrot.slane %v7508, 2
          %v7989 = vor.u32 %v7987, %v7988
          %v7990 = vsel %vm7963, %v7985, %v7989
          %v7991 = vrot.slane %v7520, 1
          %v7992 = vrot.slane %v7516, 2
          %v7993 = vor.u32 %v7991, %v7992
          %v7994 = vsel %vm7963, %v7989, %v7993
          %v7995 = vrot.slane %v7528, 1
          %v7996 = vrot.slane %v7524, 2
          %v7997 = vor.u32 %v7995, %v7996
          %v7998 = vsel %vm7963, %v7993, %v7997
          %v7999 = vrot.slane %v7536, 1
          %v8000 = vrot.slane %v7532, 2
          %v8001 = vor.u32 %v7999, %v8000
          %v8002 = vsel %vm7963, %v7997, %v8001
          %v8029 = vunpack.c.l.b16 %v7947
          %v8030 = vunpack.c.l.b16 %v7948
          %v8031 = vunpack.c.l.b16 %v7949
          %v8032 = vunpack.c.l.b16 %v7950
          %v8033 = vunpack.c.l.b16 %v7951
          %v8034 = vunpack.c.l.b16 %v7952
          %v8035 = vunpack.c.l.b16 %v7953
          %v8036 = vunpack.c.l.b16 %v7954
          %v8037 = vunpack.c.l.b16 %v7955
          %v8038 = vunpack.c.l.b16 %v7956
          %v8039 = vunpack.c.l.b16 %v7957
          %v8040 = vunpack.c.l.b16 %v7958
          %v8041 = vunpack.c.l.b16 %v7959
          %v8042 = vunpack.c.l.b16 %v7960
          %v8043 = vunpack.c.l.b16 %v7961
          %v8044 = vunpack.c.l.b16 %v7962
          %v8045 = vpack.c.b16 %v8030, %v8029
          %v8046 = vpack.c.b16 %v8032, %v8031
          %v8047 = vpack.c.b16 %v8034, %v8033
          %v8048 = vpack.c.b16 %v8036, %v8035
          %v8049 = vpack.c.b16 %v8038, %v8037
          %v8050 = vpack.c.b16 %v8040, %v8039
          %v8051 = vpack.c.b16 %v8042, %v8041
          %v8052 = vpack.c.b16 %v8044, %v8043
          %8061 = vmatpush.bf16.msra.mxu0 %v8052
          %8062 = vmatpush.bf16.msra.mxu0 %v8051
          %8063 = vmatpush.bf16.msra.mxu0 %v8050
          %8064 = vmatpush.bf16.msra.mxu0 %v8049
          %8065 = vmatpush.bf16.msra.mxu0 %v8048
          %8066 = vmatpush.bf16.msra.mxu0 %v8047
          %8067 = vmatpush.bf16.msra.mxu0 %v8046
          %8068 = vmatpush.bf16.msra.mxu0 %v8045
          %8069 = vmatmul.bf16.gmra.mxu0 %v7970
          %v8070 = vpop.f32.mrf.mxu0
          %v8071 = vadd.f32 0.0, %v8070
          %v8072 = vpop.f32.mrf.mxu0
          %v8073 = vadd.f32 0.0, %v8072
          %8074 = vmatmul.bf16.gmra.mxu0 %v7974
          %v8075 = vpop.f32.mrf.mxu0
          %v8076 = vadd.f32 0.0, %v8075
          %v8077 = vpop.f32.mrf.mxu0
          %v8078 = vadd.f32 0.0, %v8077
          %8079 = vmatmul.bf16.gmra.mxu0 %v7978
          %v8080 = vpop.f32.mrf.mxu0
          %v8081 = vadd.f32 0.0, %v8080
          %v8082 = vpop.f32.mrf.mxu0
          %v8083 = vadd.f32 0.0, %v8082
          %8084 = vmatmul.bf16.gmra.mxu0 %v7982
          %v8085 = vpop.f32.mrf.mxu0
          %v8086 = vadd.f32 0.0, %v8085
          %v8087 = vpop.f32.mrf.mxu0
          %v8088 = vadd.f32 0.0, %v8087
          %8089 = vmatmul.bf16.gmra.mxu0 %v7986
          %v8090 = vpop.f32.mrf.mxu0
          %v8091 = vadd.f32 0.0, %v8090
          %v8092 = vpop.f32.mrf.mxu0
          %v8093 = vadd.f32 0.0, %v8092
          %8094 = vmatmul.bf16.gmra.mxu0 %v7990
          %v8095 = vpop.f32.mrf.mxu0
          %v8096 = vadd.f32 0.0, %v8095
          %v8097 = vpop.f32.mrf.mxu0
          %v8098 = vadd.f32 0.0, %v8097
          %8099 = vmatmul.bf16.gmra.mxu0 %v7994
          %v8100 = vpop.f32.mrf.mxu0
          %v8101 = vadd.f32 0.0, %v8100
          %v8102 = vpop.f32.mrf.mxu0
          %v8103 = vadd.f32 0.0, %v8102
          %8104 = vmatmul.bf16.gmra.mxu0 %v7998
          %v8105 = vpop.f32.mrf.mxu0
          %v8106 = vadd.f32 0.0, %v8105
          %v8107 = vpop.f32.mrf.mxu0
          %v8108 = vadd.f32 0.0, %v8107
          %8109 = vmatmul.bf16.gmra.mxu0 %v8002
          %v8110 = vpop.f32.mrf.mxu0
          %v8111 = vadd.f32 0.0, %v8110
          %v8112 = vpop.f32.mrf.mxu0
          %v8113 = vadd.f32 0.0, %v8112
          %8114 = vmatmul.bf16.gmra.mxu0 %v8001
          %v8115 = vpop.f32.mrf.mxu0
          %v8116 = vadd.f32 0.0, %v8115
          %v8117 = vpop.f32.mrf.mxu0
          %v8118 = vadd.f32 0.0, %v8117
          %8119 = vdwg.mxu0
          %v8120 = vadd.f32 %v7926, %v8071
          %v8121 = vadd.f32 %v7927, %v8073
          %v8122 = vadd.f32 %v7928, %v8076
          %v8123 = vadd.f32 %v7929, %v8078
          %v8124 = vadd.f32 %v7930, %v8081
          %v8125 = vadd.f32 %v7931, %v8083
          %v8126 = vadd.f32 %v7932, %v8086
          %v8127 = vadd.f32 %v7933, %v8088
          %v8128 = vadd.f32 %v7934, %v8091
          %v8129 = vadd.f32 %v7935, %v8093
          %v8130 = vadd.f32 %v7936, %v8096
          %v8131 = vadd.f32 %v7937, %v8098
          %v8132 = vadd.f32 %v7938, %v8101
          %v8133 = vadd.f32 %v7939, %v8103
          %v8134 = vadd.f32 %v7940, %v8106
          %v8135 = vadd.f32 %v7941, %v8108
          %v8136 = vadd.f32 %v7942, %v8111
          %v8137 = vadd.f32 %v7943, %v8113
          %v8138 = vadd.f32 %v7944, %v8116
          %v8139 = vadd.f32 %v7945, %v8118
          %s8140 = scalar_lea.vmem [#allocation17], 256
          %v8141 = vld [vmem:[%s8140] sm:$0xf]
          %v8142 = vld [vmem:[%s8140 + $0x4] sm:$0xf]
          %v8143 = vld [vmem:[%s8140 + $0x8] sm:$0xf]
          %v8144 = vld [vmem:[%s8140 + $0xc] sm:$0xf]
          %v8145 = vld [vmem:[%s8140 + $0x10] sm:$0xf]
          %v8146 = vld [vmem:[%s8140 + $0x14] sm:$0xf]
          %v8147 = vld [vmem:[%s8140 + $0x18] sm:$0xf]
          %v8148 = vld [vmem:[%s8140 + $0x1c] sm:$0xf]
          %v8149 = vld [vmem:[%s8140 + $0x20] sm:$0xf]
          %v8150 = vld [vmem:[%s8140 + $0x24] sm:$0xf]
          %v8151 = vld [vmem:[%s8140 + $0x28] sm:$0xf]
          %v8152 = vld [vmem:[%s8140 + $0x2c] sm:$0xf]
          %v8153 = vld [vmem:[%s8140 + $0x30] sm:$0xf]
          %v8154 = vld [vmem:[%s8140 + $0x34] sm:$0xf]
          %v8155 = vld [vmem:[%s8140 + $0x38] sm:$0xf]
          %v8156 = vld [vmem:[%s8140 + $0x3c] sm:$0xf]
          %vm8157 = vcmask 1045504
          %v8158 = vrot.slane %v7450, 2
          %v8159 = vrot.slane %v7451, 2
          %v8160 = vsel %vm8157, %v8158, %v8159
          %v8161 = vrot.slane %v7452, 2
          %v8162 = vsel %vm8157, %v8159, %v8161
          %v8163 = vrot.slane %v7453, 2
          %v8164 = vsel %vm8157, %v8161, %v8163
          %v8165 = vrot.slane %v7454, 2
          %v8166 = vsel %vm8157, %v8163, %v8165
          %v8167 = vrot.slane %v7455, 2
          %v8168 = vsel %vm8157, %v8165, %v8167
          %v8169 = vrot.slane %v7456, 2
          %v8170 = vsel %vm8157, %v8167, %v8169
          %v8171 = vrot.slane %v7457, 2
          %v8172 = vsel %vm8157, %v8169, %v8171
          %v8173 = vrot.slane %v7458, 2
          %v8174 = vsel %vm8157, %v8171, %v8173
          %v8175 = vrot.slane %v7459, 2
          %v8176 = vsel %vm8157, %v8173, %v8175
          %v8203 = vunpack.c.l.b16 %v8141
          %v8204 = vunpack.c.l.b16 %v8142
          %v8205 = vunpack.c.l.b16 %v8143
          %v8206 = vunpack.c.l.b16 %v8144
          %v8207 = vunpack.c.l.b16 %v8145
          %v8208 = vunpack.c.l.b16 %v8146
          %v8209 = vunpack.c.l.b16 %v8147
          %v8210 = vunpack.c.l.b16 %v8148
          %v8211 = vunpack.c.l.b16 %v8149
          %v8212 = vunpack.c.l.b16 %v8150
          %v8213 = vunpack.c.l.b16 %v8151
          %v8214 = vunpack.c.l.b16 %v8152
          %v8215 = vunpack.c.l.b16 %v8153
          %v8216 = vunpack.c.l.b16 %v8154
          %v8217 = vunpack.c.l.b16 %v8155
          %v8218 = vunpack.c.l.b16 %v8156
          %v8219 = vpack.c.b16 %v8204, %v8203
          %v8220 = vpack.c.b16 %v8206, %v8205
          %v8221 = vpack.c.b16 %v8208, %v8207
          %v8222 = vpack.c.b16 %v8210, %v8209
          %v8223 = vpack.c.b16 %v8212, %v8211
          %v8224 = vpack.c.b16 %v8214, %v8213
          %v8225 = vpack.c.b16 %v8216, %v8215
          %v8226 = vpack.c.b16 %v8218, %v8217
          %8235 = vmatpush.bf16.msra.mxu0 %v8226
          %8236 = vmatpush.bf16.msra.mxu0 %v8225
          %8237 = vmatpush.bf16.msra.mxu0 %v8224
          %8238 = vmatpush.bf16.msra.mxu0 %v8223
          %8239 = vmatpush.bf16.msra.mxu0 %v8222
          %8240 = vmatpush.bf16.msra.mxu0 %v8221
          %8241 = vmatpush.bf16.msra.mxu0 %v8220
          %8242 = vmatpush.bf16.msra.mxu0 %v8219
          %8243 = vmatmul.bf16.gmra.mxu0 %v8160
          %v8244 = vpop.f32.mrf.mxu0
          %v8245 = vadd.f32 0.0, %v8244
          %v8246 = vpop.f32.mrf.mxu0
          %v8247 = vadd.f32 0.0, %v8246
          %8248 = vmatmul.bf16.gmra.mxu0 %v8162
          %v8249 = vpop.f32.mrf.mxu0
          %v8250 = vadd.f32 0.0, %v8249
          %v8251 = vpop.f32.mrf.mxu0
          %v8252 = vadd.f32 0.0, %v8251
          %8253 = vmatmul.bf16.gmra.mxu0 %v8164
          %v8254 = vpop.f32.mrf.mxu0
          %v8255 = vadd.f32 0.0, %v8254
          %v8256 = vpop.f32.mrf.mxu0
          %v8257 = vadd.f32 0.0, %v8256
          %8258 = vmatmul.bf16.gmra.mxu0 %v8166
          %v8259 = vpop.f32.mrf.mxu0
          %v8260 = vadd.f32 0.0, %v8259
          %v8261 = vpop.f32.mrf.mxu0
          %v8262 = vadd.f32 0.0, %v8261
          %8263 = vmatmul.bf16.gmra.mxu0 %v8168
          %v8264 = vpop.f32.mrf.mxu0
          %v8265 = vadd.f32 0.0, %v8264
          %v8266 = vpop.f32.mrf.mxu0
          %v8267 = vadd.f32 0.0, %v8266
          %8268 = vmatmul.bf16.gmra.mxu0 %v8170
          %v8269 = vpop.f32.mrf.mxu0
          %v8270 = vadd.f32 0.0, %v8269
          %v8271 = vpop.f32.mrf.mxu0
          %v8272 = vadd.f32 0.0, %v8271
          %8273 = vmatmul.bf16.gmra.mxu0 %v8172
          %v8274 = vpop.f32.mrf.mxu0
          %v8275 = vadd.f32 0.0, %v8274
          %v8276 = vpop.f32.mrf.mxu0
          %v8277 = vadd.f32 0.0, %v8276
          %8278 = vmatmul.bf16.gmra.mxu0 %v8174
          %v8279 = vpop.f32.mrf.mxu0
          %v8280 = vadd.f32 0.0, %v8279
          %v8281 = vpop.f32.mrf.mxu0
          %v8282 = vadd.f32 0.0, %v8281
          %8283 = vmatmul.bf16.gmra.mxu0 %v8176
          %v8284 = vpop.f32.mrf.mxu0
          %v8285 = vadd.f32 0.0, %v8284
          %v8286 = vpop.f32.mrf.mxu0
          %v8287 = vadd.f32 0.0, %v8286
          %8288 = vmatmul.bf16.gmra.mxu0 %v8175
          %v8289 = vpop.f32.mrf.mxu0
          %v8290 = vadd.f32 0.0, %v8289
          %v8291 = vpop.f32.mrf.mxu0
          %v8292 = vadd.f32 0.0, %v8291
          %8293 = vdwg.mxu0
          %v8294 = vadd.f32 %v8120, %v8245
          %v8295 = vadd.f32 %v8121, %v8247
          %v8296 = vadd.f32 %v8122, %v8250
          %v8297 = vadd.f32 %v8123, %v8252
          %v8298 = vadd.f32 %v8124, %v8255
          %v8299 = vadd.f32 %v8125, %v8257
          %v8300 = vadd.f32 %v8126, %v8260
          %v8301 = vadd.f32 %v8127, %v8262
          %v8302 = vadd.f32 %v8128, %v8265
          %v8303 = vadd.f32 %v8129, %v8267
          %v8304 = vadd.f32 %v8130, %v8270
          %v8305 = vadd.f32 %v8131, %v8272
          %v8306 = vadd.f32 %v8132, %v8275
          %v8307 = vadd.f32 %v8133, %v8277
          %v8308 = vadd.f32 %v8134, %v8280
          %v8309 = vadd.f32 %v8135, %v8282
          %v8310 = vadd.f32 %v8136, %v8285
          %v8311 = vadd.f32 %v8137, %v8287
          %v8312 = vadd.f32 %v8138, %v8290
          %v8313 = vadd.f32 %v8139, %v8292
          %s8314 = scalar_lea.vmem [#allocation17], 320
          %v8315 = vld [vmem:[%s8314] sm:$0xf]
          %v8316 = vld [vmem:[%s8314 + $0x4] sm:$0xf]
          %v8317 = vld [vmem:[%s8314 + $0x8] sm:$0xf]
          %v8318 = vld [vmem:[%s8314 + $0xc] sm:$0xf]
          %v8319 = vld [vmem:[%s8314 + $0x10] sm:$0xf]
          %v8320 = vld [vmem:[%s8314 + $0x14] sm:$0xf]
          %v8321 = vld [vmem:[%s8314 + $0x18] sm:$0xf]
          %v8322 = vld [vmem:[%s8314 + $0x1c] sm:$0xf]
          %v8323 = vld [vmem:[%s8314 + $0x20] sm:$0xf]
          %v8324 = vld [vmem:[%s8314 + $0x24] sm:$0xf]
          %v8325 = vld [vmem:[%s8314 + $0x28] sm:$0xf]
          %v8326 = vld [vmem:[%s8314 + $0x2c] sm:$0xf]
          %v8327 = vld [vmem:[%s8314 + $0x30] sm:$0xf]
          %v8328 = vld [vmem:[%s8314 + $0x34] sm:$0xf]
          %v8329 = vld [vmem:[%s8314 + $0x38] sm:$0xf]
          %v8330 = vld [vmem:[%s8314 + $0x3c] sm:$0xf]
          %vm8331 = vsmask.f32 5376
          %v8332 = vrot.slane %v7461, 2
          %v8333 = vrot.slane %v7463, 3
          %v8334 = vor.u32 %v8332, %v8333
          %v8335 = vrot.slane %v7472, 2
          %v8336 = vrot.slane %v7468, 3
          %v8337 = vor.u32 %v8335, %v8336
          %v8338 = vsel %vm8331, %v8334, %v8337
          %v8339 = vrot.slane %v7480, 2
          %v8340 = vrot.slane %v7476, 3
          %v8341 = vor.u32 %v8339, %v8340
          %v8342 = vsel %vm8331, %v8337, %v8341
          %v8343 = vrot.slane %v7488, 2
          %v8344 = vrot.slane %v7484, 3
          %v8345 = vor.u32 %v8343, %v8344
          %v8346 = vsel %vm8331, %v8341, %v8345
          %v8347 = vrot.slane %v7496, 2
          %v8348 = vrot.slane %v7492, 3
          %v8349 = vor.u32 %v8347, %v8348
          %v8350 = vsel %vm8331, %v8345, %v8349
          %v8351 = vrot.slane %v7504, 2
          %v8352 = vrot.slane %v7500, 3
          %v8353 = vor.u32 %v8351, %v8352
          %v8354 = vsel %vm8331, %v8349, %v8353
          %v8355 = vrot.slane %v7512, 2
          %v8356 = vrot.slane %v7508, 3
          %v8357 = vor.u32 %v8355, %v8356
          %v8358 = vsel %vm8331, %v8353, %v8357
          %v8359 = vrot.slane %v7520, 2
          %v8360 = vrot.slane %v7516, 3
          %v8361 = vor.u32 %v8359, %v8360
          %v8362 = vsel %vm8331, %v8357, %v8361
          %v8363 = vrot.slane %v7528, 2
          %v8364 = vrot.slane %v7524, 3
          %v8365 = vor.u32 %v8363, %v8364
          %v8366 = vsel %vm8331, %v8361, %v8365
          %v8367 = vrot.slane %v7536, 2
          %v8368 = vrot.slane %v7532, 3
          %v8369 = vor.u32 %v8367, %v8368
          %v8370 = vsel %vm8331, %v8365, %v8369
          %v8397 = vunpack.c.l.b16 %v8315
          %v8398 = vunpack.c.l.b16 %v8316
          %v8399 = vunpack.c.l.b16 %v8317
          %v8400 = vunpack.c.l.b16 %v8318
          %v8401 = vunpack.c.l.b16 %v8319
          %v8402 = vunpack.c.l.b16 %v8320
          %v8403 = vunpack.c.l.b16 %v8321
          %v8404 = vunpack.c.l.b16 %v8322
          %v8405 = vunpack.c.l.b16 %v8323
          %v8406 = vunpack.c.l.b16 %v8324
          %v8407 = vunpack.c.l.b16 %v8325
          %v8408 = vunpack.c.l.b16 %v8326
          %v8409 = vunpack.c.l.b16 %v8327
          %v8410 = vunpack.c.l.b16 %v8328
          %v8411 = vunpack.c.l.b16 %v8329
          %v8412 = vunpack.c.l.b16 %v8330
          %v8413 = vpack.c.b16 %v8398, %v8397
          %v8414 = vpack.c.b16 %v8400, %v8399
          %v8415 = vpack.c.b16 %v8402, %v8401
          %v8416 = vpack.c.b16 %v8404, %v8403
          %v8417 = vpack.c.b16 %v8406, %v8405
          %v8418 = vpack.c.b16 %v8408, %v8407
          %v8419 = vpack.c.b16 %v8410, %v8409
          %v8420 = vpack.c.b16 %v8412, %v8411
          %8429 = vmatpush.bf16.msra.mxu0 %v8420
          %8430 = vmatpush.bf16.msra.mxu0 %v8419
          %8431 = vmatpush.bf16.msra.mxu0 %v8418
          %8432 = vmatpush.bf16.msra.mxu0 %v8417
          %8433 = vmatpush.bf16.msra.mxu0 %v8416
          %8434 = vmatpush.bf16.msra.mxu0 %v8415
          %8435 = vmatpush.bf16.msra.mxu0 %v8414
          %8436 = vmatpush.bf16.msra.mxu0 %v8413
          %8437 = vmatmul.bf16.gmra.mxu0 %v8338
          %v8438 = vpop.f32.mrf.mxu0
          %v8439 = vadd.f32 0.0, %v8438
          %v8440 = vpop.f32.mrf.mxu0
          %v8441 = vadd.f32 0.0, %v8440
          %8442 = vmatmul.bf16.gmra.mxu0 %v8342
          %v8443 = vpop.f32.mrf.mxu0
          %v8444 = vadd.f32 0.0, %v8443
          %v8445 = vpop.f32.mrf.mxu0
          %v8446 = vadd.f32 0.0, %v8445
          %8447 = vmatmul.bf16.gmra.mxu0 %v8346
          %v8448 = vpop.f32.mrf.mxu0
          %v8449 = vadd.f32 0.0, %v8448
          %v8450 = vpop.f32.mrf.mxu0
          %v8451 = vadd.f32 0.0, %v8450
          %8452 = vmatmul.bf16.gmra.mxu0 %v8350
          %v8453 = vpop.f32.mrf.mxu0
          %v8454 = vadd.f32 0.0, %v8453
          %v8455 = vpop.f32.mrf.mxu0
          %v8456 = vadd.f32 0.0, %v8455
          %8457 = vmatmul.bf16.gmra.mxu0 %v8354
          %v8458 = vpop.f32.mrf.mxu0
          %v8459 = vadd.f32 0.0, %v8458
          %v8460 = vpop.f32.mrf.mxu0
          %v8461 = vadd.f32 0.0, %v8460
          %8462 = vmatmul.bf16.gmra.mxu0 %v8358
          %v8463 = vpop.f32.mrf.mxu0
          %v8464 = vadd.f32 0.0, %v8463
          %v8465 = vpop.f32.mrf.mxu0
          %v8466 = vadd.f32 0.0, %v8465
          %8467 = vmatmul.bf16.gmra.mxu0 %v8362
          %v8468 = vpop.f32.mrf.mxu0
          %v8469 = vadd.f32 0.0, %v8468
          %v8470 = vpop.f32.mrf.mxu0
          %v8471 = vadd.f32 0.0, %v8470
          %8472 = vmatmul.bf16.gmra.mxu0 %v8366
          %v8473 = vpop.f32.mrf.mxu0
          %v8474 = vadd.f32 0.0, %v8473
          %v8475 = vpop.f32.mrf.mxu0
          %v8476 = vadd.f32 0.0, %v8475
          %8477 = vmatmul.bf16.gmra.mxu0 %v8370
          %v8478 = vpop.f32.mrf.mxu0
          %v8479 = vadd.f32 0.0, %v8478
          %v8480 = vpop.f32.mrf.mxu0
          %v8481 = vadd.f32 0.0, %v8480
          %8482 = vmatmul.bf16.gmra.mxu0 %v8369
          %v8483 = vpop.f32.mrf.mxu0
          %v8484 = vadd.f32 0.0, %v8483
          %v8485 = vpop.f32.mrf.mxu0
          %v8486 = vadd.f32 0.0, %v8485
          %8487 = vdwg.mxu0
          %v8488 = vadd.f32 %v8294, %v8439
          %v8489 = vadd.f32 %v8295, %v8441
          %v8490 = vadd.f32 %v8296, %v8444
          %v8491 = vadd.f32 %v8297, %v8446
          %v8492 = vadd.f32 %v8298, %v8449
          %v8493 = vadd.f32 %v8299, %v8451
          %v8494 = vadd.f32 %v8300, %v8454
          %v8495 = vadd.f32 %v8301, %v8456
          %v8496 = vadd.f32 %v8302, %v8459
          %v8497 = vadd.f32 %v8303, %v8461
          %v8498 = vadd.f32 %v8304, %v8464
          %v8499 = vadd.f32 %v8305, %v8466
          %v8500 = vadd.f32 %v8306, %v8469
          %v8501 = vadd.f32 %v8307, %v8471
          %v8502 = vadd.f32 %v8308, %v8474
          %v8503 = vadd.f32 %v8309, %v8476
          %v8504 = vadd.f32 %v8310, %v8479
          %v8505 = vadd.f32 %v8311, %v8481
          %v8506 = vadd.f32 %v8312, %v8484
          %v8507 = vadd.f32 %v8313, %v8486
          %s8508 = scalar_lea.vmem [#allocation17], 384
          %v8509 = vld [vmem:[%s8508] sm:$0xf]
          %v8510 = vld [vmem:[%s8508 + $0x4] sm:$0xf]
          %v8511 = vld [vmem:[%s8508 + $0x8] sm:$0xf]
          %v8512 = vld [vmem:[%s8508 + $0xc] sm:$0xf]
          %v8513 = vld [vmem:[%s8508 + $0x10] sm:$0xf]
          %v8514 = vld [vmem:[%s8508 + $0x14] sm:$0xf]
          %v8515 = vld [vmem:[%s8508 + $0x18] sm:$0xf]
          %v8516 = vld [vmem:[%s8508 + $0x1c] sm:$0xf]
          %v8517 = vld [vmem:[%s8508 + $0x20] sm:$0xf]
          %v8518 = vld [vmem:[%s8508 + $0x24] sm:$0xf]
          %v8519 = vld [vmem:[%s8508 + $0x28] sm:$0xf]
          %v8520 = vld [vmem:[%s8508 + $0x2c] sm:$0xf]
          %v8521 = vld [vmem:[%s8508 + $0x30] sm:$0xf]
          %v8522 = vld [vmem:[%s8508 + $0x34] sm:$0xf]
          %v8523 = vld [vmem:[%s8508 + $0x38] sm:$0xf]
          %v8524 = vld [vmem:[%s8508 + $0x3c] sm:$0xf]
          %vm8525 = vcmask 1044480
          %v8526 = vrot.slane %v7450, 3
          %v8527 = vrot.slane %v7451, 3
          %v8528 = vsel %vm8525, %v8526, %v8527
          %v8529 = vrot.slane %v7452, 3
          %v8530 = vsel %vm8525, %v8527, %v8529
          %v8531 = vrot.slane %v7453, 3
          %v8532 = vsel %vm8525, %v8529, %v8531
          %v8533 = vrot.slane %v7454, 3
          %v8534 = vsel %vm8525, %v8531, %v8533
          %v8535 = vrot.slane %v7455, 3
          %v8536 = vsel %vm8525, %v8533, %v8535
          %v8537 = vrot.slane %v7456, 3
          %v8538 = vsel %vm8525, %v8535, %v8537
          %v8539 = vrot.slane %v7457, 3
          %v8540 = vsel %vm8525, %v8537, %v8539
          %v8541 = vrot.slane %v7458, 3
          %v8542 = vsel %vm8525, %v8539, %v8541
          %v8543 = vrot.slane %v7459, 3
          %v8544 = vsel %vm8525, %v8541, %v8543
          %v8571 = vunpack.c.l.b16 %v8509
          %v8572 = vunpack.c.l.b16 %v8510
          %v8573 = vunpack.c.l.b16 %v8511
          %v8574 = vunpack.c.l.b16 %v8512
          %v8575 = vunpack.c.l.b16 %v8513
          %v8576 = vunpack.c.l.b16 %v8514
          %v8577 = vunpack.c.l.b16 %v8515
          %v8578 = vunpack.c.l.b16 %v8516
          %v8579 = vunpack.c.l.b16 %v8517
          %v8580 = vunpack.c.l.b16 %v8518
          %v8581 = vunpack.c.l.b16 %v8519
          %v8582 = vunpack.c.l.b16 %v8520
          %v8583 = vunpack.c.l.b16 %v8521
          %v8584 = vunpack.c.l.b16 %v8522
          %v8585 = vunpack.c.l.b16 %v8523
          %v8586 = vunpack.c.l.b16 %v8524
          %v8587 = vpack.c.b16 %v8572, %v8571
          %v8588 = vpack.c.b16 %v8574, %v8573
          %v8589 = vpack.c.b16 %v8576, %v8575
          %v8590 = vpack.c.b16 %v8578, %v8577
          %v8591 = vpack.c.b16 %v8580, %v8579
          %v8592 = vpack.c.b16 %v8582, %v8581
          %v8593 = vpack.c.b16 %v8584, %v8583
          %v8594 = vpack.c.b16 %v8586, %v8585
          %8603 = vmatpush.bf16.msra.mxu0 %v8594
          %8604 = vmatpush.bf16.msra.mxu0 %v8593
          %8605 = vmatpush.bf16.msra.mxu0 %v8592
          %8606 = vmatpush.bf16.msra.mxu0 %v8591
          %8607 = vmatpush.bf16.msra.mxu0 %v8590
          %8608 = vmatpush.bf16.msra.mxu0 %v8589
          %8609 = vmatpush.bf16.msra.mxu0 %v8588
          %8610 = vmatpush.bf16.msra.mxu0 %v8587
          %8611 = vmatmul.bf16.gmra.mxu0 %v8528
          %v8612 = vpop.f32.mrf.mxu0
          %v8613 = vadd.f32 0.0, %v8612
          %v8614 = vpop.f32.mrf.mxu0
          %v8615 = vadd.f32 0.0, %v8614
          %8616 = vmatmul.bf16.gmra.mxu0 %v8530
          %v8617 = vpop.f32.mrf.mxu0
          %v8618 = vadd.f32 0.0, %v8617
          %v8619 = vpop.f32.mrf.mxu0
          %v8620 = vadd.f32 0.0, %v8619
          %8621 = vmatmul.bf16.gmra.mxu0 %v8532
          %v8622 = vpop.f32.mrf.mxu0
          %v8623 = vadd.f32 0.0, %v8622
          %v8624 = vpop.f32.mrf.mxu0
          %v8625 = vadd.f32 0.0, %v8624
          %8626 = vmatmul.bf16.gmra.mxu0 %v8534
          %v8627 = vpop.f32.mrf.mxu0
          %v8628 = vadd.f32 0.0, %v8627
          %v8629 = vpop.f32.mrf.mxu0
          %v8630 = vadd.f32 0.0, %v8629
          %8631 = vmatmul.bf16.gmra.mxu0 %v8536
          %v8632 = vpop.f32.mrf.mxu0
          %v8633 = vadd.f32 0.0, %v8632
          %v8634 = vpop.f32.mrf.mxu0
          %v8635 = vadd.f32 0.0, %v8634
          %8636 = vmatmul.bf16.gmra.mxu0 %v8538
          %v8637 = vpop.f32.mrf.mxu0
          %v8638 = vadd.f32 0.0, %v8637
          %v8639 = vpop.f32.mrf.mxu0
          %v8640 = vadd.f32 0.0, %v8639
          %8641 = vmatmul.bf16.gmra.mxu0 %v8540
          %v8642 = vpop.f32.mrf.mxu0
          %v8643 = vadd.f32 0.0, %v8642
          %v8644 = vpop.f32.mrf.mxu0
          %v8645 = vadd.f32 0.0, %v8644
          %8646 = vmatmul.bf16.gmra.mxu0 %v8542
          %v8647 = vpop.f32.mrf.mxu0
          %v8648 = vadd.f32 0.0, %v8647
          %v8649 = vpop.f32.mrf.mxu0
          %v8650 = vadd.f32 0.0, %v8649
          %8651 = vmatmul.bf16.gmra.mxu0 %v8544
          %v8652 = vpop.f32.mrf.mxu0
          %v8653 = vadd.f32 0.0, %v8652
          %v8654 = vpop.f32.mrf.mxu0
          %v8655 = vadd.f32 0.0, %v8654
          %8656 = vmatmul.bf16.gmra.mxu0 %v8543
          %v8657 = vpop.f32.mrf.mxu0
          %v8658 = vadd.f32 0.0, %v8657
          %v8659 = vpop.f32.mrf.mxu0
          %v8660 = vadd.f32 0.0, %v8659
          %8661 = vdwg.mxu0
          %v8662 = vadd.f32 %v8488, %v8613
          %v8663 = vadd.f32 %v8489, %v8615
          %v8664 = vadd.f32 %v8490, %v8618
          %v8665 = vadd.f32 %v8491, %v8620
          %v8666 = vadd.f32 %v8492, %v8623
          %v8667 = vadd.f32 %v8493, %v8625
          %v8668 = vadd.f32 %v8494, %v8628
          %v8669 = vadd.f32 %v8495, %v8630
          %v8670 = vadd.f32 %v8496, %v8633
          %v8671 = vadd.f32 %v8497, %v8635
          %v8672 = vadd.f32 %v8498, %v8638
          %v8673 = vadd.f32 %v8499, %v8640
          %v8674 = vadd.f32 %v8500, %v8643
          %v8675 = vadd.f32 %v8501, %v8645
          %v8676 = vadd.f32 %v8502, %v8648
          %v8677 = vadd.f32 %v8503, %v8650
          %v8678 = vadd.f32 %v8504, %v8653
          %v8679 = vadd.f32 %v8505, %v8655
          %v8680 = vadd.f32 %v8506, %v8658
          %v8681 = vadd.f32 %v8507, %v8660
          %s8682 = scalar_lea.vmem [#allocation17], 448
          %v8683 = vld [vmem:[%s8682] sm:$0xf]
          %v8684 = vld [vmem:[%s8682 + $0x4] sm:$0xf]
          %v8685 = vld [vmem:[%s8682 + $0x8] sm:$0xf]
          %v8686 = vld [vmem:[%s8682 + $0xc] sm:$0xf]
          %v8687 = vld [vmem:[%s8682 + $0x10] sm:$0xf]
          %v8688 = vld [vmem:[%s8682 + $0x14] sm:$0xf]
          %v8689 = vld [vmem:[%s8682 + $0x18] sm:$0xf]
          %v8690 = vld [vmem:[%s8682 + $0x1c] sm:$0xf]
          %v8691 = vld [vmem:[%s8682 + $0x20] sm:$0xf]
          %v8692 = vld [vmem:[%s8682 + $0x24] sm:$0xf]
          %v8693 = vld [vmem:[%s8682 + $0x28] sm:$0xf]
          %v8694 = vld [vmem:[%s8682 + $0x2c] sm:$0xf]
          %v8695 = vld [vmem:[%s8682 + $0x30] sm:$0xf]
          %v8696 = vld [vmem:[%s8682 + $0x34] sm:$0xf]
          %v8697 = vld [vmem:[%s8682 + $0x38] sm:$0xf]
          %v8698 = vld [vmem:[%s8682 + $0x3c] sm:$0xf]
          %vm8699 = vsmask.f32 4352
          %v8700 = vrot.slane %v7461, 3
          %v8701 = vrot.slane %v7463, 4
          %v8702 = vor.u32 %v8700, %v8701
          %v8703 = vrot.slane %v7472, 3
          %v8704 = vrot.slane %v7468, 4
          %v8705 = vor.u32 %v8703, %v8704
          %v8706 = vsel %vm8699, %v8702, %v8705
          %v8707 = vrot.slane %v7480, 3
          %v8708 = vrot.slane %v7476, 4
          %v8709 = vor.u32 %v8707, %v8708
          %v8710 = vsel %vm8699, %v8705, %v8709
          %v8711 = vrot.slane %v7488, 3
          %v8712 = vrot.slane %v7484, 4
          %v8713 = vor.u32 %v8711, %v8712
          %v8714 = vsel %vm8699, %v8709, %v8713
          %v8715 = vrot.slane %v7496, 3
          %v8716 = vrot.slane %v7492, 4
          %v8717 = vor.u32 %v8715, %v8716
          %v8718 = vsel %vm8699, %v8713, %v8717
          %v8719 = vrot.slane %v7504, 3
          %v8720 = vrot.slane %v7500, 4
          %v8721 = vor.u32 %v8719, %v8720
          %v8722 = vsel %vm8699, %v8717, %v8721
          %v8723 = vrot.slane %v7512, 3
          %v8724 = vrot.slane %v7508, 4
          %v8725 = vor.u32 %v8723, %v8724
          %v8726 = vsel %vm8699, %v8721, %v8725
          %v8727 = vrot.slane %v7520, 3
          %v8728 = vrot.slane %v7516, 4
          %v8729 = vor.u32 %v8727, %v8728
          %v8730 = vsel %vm8699, %v8725, %v8729
          %v8731 = vrot.slane %v7528, 3
          %v8732 = vrot.slane %v7524, 4
          %v8733 = vor.u32 %v8731, %v8732
          %v8734 = vsel %vm8699, %v8729, %v8733
          %v8735 = vrot.slane %v7536, 3
          %v8736 = vrot.slane %v7532, 4
          %v8737 = vor.u32 %v8735, %v8736
          %v8738 = vsel %vm8699, %v8733, %v8737
          %v8765 = vunpack.c.l.b16 %v8683
          %v8766 = vunpack.c.l.b16 %v8684
          %v8767 = vunpack.c.l.b16 %v8685
          %v8768 = vunpack.c.l.b16 %v8686
          %v8769 = vunpack.c.l.b16 %v8687
          %v8770 = vunpack.c.l.b16 %v8688
          %v8771 = vunpack.c.l.b16 %v8689
          %v8772 = vunpack.c.l.b16 %v8690
          %v8773 = vunpack.c.l.b16 %v8691
          %v8774 = vunpack.c.l.b16 %v8692
          %v8775 = vunpack.c.l.b16 %v8693
          %v8776 = vunpack.c.l.b16 %v8694
          %v8777 = vunpack.c.l.b16 %v8695
          %v8778 = vunpack.c.l.b16 %v8696
          %v8779 = vunpack.c.l.b16 %v8697
          %v8780 = vunpack.c.l.b16 %v8698
          %v8781 = vpack.c.b16 %v8766, %v8765
          %v8782 = vpack.c.b16 %v8768, %v8767
          %v8783 = vpack.c.b16 %v8770, %v8769
          %v8784 = vpack.c.b16 %v8772, %v8771
          %v8785 = vpack.c.b16 %v8774, %v8773
          %v8786 = vpack.c.b16 %v8776, %v8775
          %v8787 = vpack.c.b16 %v8778, %v8777
          %v8788 = vpack.c.b16 %v8780, %v8779
          %8797 = vmatpush.bf16.msra.mxu0 %v8788
          %8798 = vmatpush.bf16.msra.mxu0 %v8787
          %8799 = vmatpush.bf16.msra.mxu0 %v8786
          %8800 = vmatpush.bf16.msra.mxu0 %v8785
          %8801 = vmatpush.bf16.msra.mxu0 %v8784
          %8802 = vmatpush.bf16.msra.mxu0 %v8783
          %8803 = vmatpush.bf16.msra.mxu0 %v8782
          %8804 = vmatpush.bf16.msra.mxu0 %v8781
          %8805 = vmatmul.bf16.gmra.mxu0 %v8706
          %v8806 = vpop.f32.mrf.mxu0
          %v8807 = vadd.f32 0.0, %v8806
          %v8808 = vpop.f32.mrf.mxu0
          %v8809 = vadd.f32 0.0, %v8808
          %8810 = vmatmul.bf16.gmra.mxu0 %v8710
          %v8811 = vpop.f32.mrf.mxu0
          %v8812 = vadd.f32 0.0, %v8811
          %v8813 = vpop.f32.mrf.mxu0
          %v8814 = vadd.f32 0.0, %v8813
          %8815 = vmatmul.bf16.gmra.mxu0 %v8714
          %v8816 = vpop.f32.mrf.mxu0
          %v8817 = vadd.f32 0.0, %v8816
          %v8818 = vpop.f32.mrf.mxu0
          %v8819 = vadd.f32 0.0, %v8818
          %8820 = vmatmul.bf16.gmra.mxu0 %v8718
          %v8821 = vpop.f32.mrf.mxu0
          %v8822 = vadd.f32 0.0, %v8821
          %v8823 = vpop.f32.mrf.mxu0
          %v8824 = vadd.f32 0.0, %v8823
          %8825 = vmatmul.bf16.gmra.mxu0 %v8722
          %v8826 = vpop.f32.mrf.mxu0
          %v8827 = vadd.f32 0.0, %v8826
          %v8828 = vpop.f32.mrf.mxu0
          %v8829 = vadd.f32 0.0, %v8828
          %8830 = vmatmul.bf16.gmra.mxu0 %v8726
          %v8831 = vpop.f32.mrf.mxu0
          %v8832 = vadd.f32 0.0, %v8831
          %v8833 = vpop.f32.mrf.mxu0
          %v8834 = vadd.f32 0.0, %v8833
          %8835 = vmatmul.bf16.gmra.mxu0 %v8730
          %v8836 = vpop.f32.mrf.mxu0
          %v8837 = vadd.f32 0.0, %v8836
          %v8838 = vpop.f32.mrf.mxu0
          %v8839 = vadd.f32 0.0, %v8838
          %8840 = vmatmul.bf16.gmra.mxu0 %v8734
          %v8841 = vpop.f32.mrf.mxu0
          %v8842 = vadd.f32 0.0, %v8841
          %v8843 = vpop.f32.mrf.mxu0
          %v8844 = vadd.f32 0.0, %v8843
          %8845 = vmatmul.bf16.gmra.mxu0 %v8738
          %v8846 = vpop.f32.mrf.mxu0
          %v8847 = vadd.f32 0.0, %v8846
          %v8848 = vpop.f32.mrf.mxu0
          %v8849 = vadd.f32 0.0, %v8848
          %8850 = vmatmul.bf16.gmra.mxu0 %v8737
          %v8851 = vpop.f32.mrf.mxu0
          %v8852 = vadd.f32 0.0, %v8851
          %v8853 = vpop.f32.mrf.mxu0
          %v8854 = vadd.f32 0.0, %v8853
          %8855 = vdwg.mxu0
          %v8856 = vadd.f32 %v8662, %v8807
          %v8857 = vadd.f32 %v8663, %v8809
          %v8858 = vadd.f32 %v8664, %v8812
          %v8859 = vadd.f32 %v8665, %v8814
          %v8860 = vadd.f32 %v8666, %v8817
          %v8861 = vadd.f32 %v8667, %v8819
          %v8862 = vadd.f32 %v8668, %v8822
          %v8863 = vadd.f32 %v8669, %v8824
          %v8864 = vadd.f32 %v8670, %v8827
          %v8865 = vadd.f32 %v8671, %v8829
          %v8866 = vadd.f32 %v8672, %v8832
          %v8867 = vadd.f32 %v8673, %v8834
          %v8868 = vadd.f32 %v8674, %v8837
          %v8869 = vadd.f32 %v8675, %v8839
          %v8870 = vadd.f32 %v8676, %v8842
          %v8871 = vadd.f32 %v8677, %v8844
          %v8872 = vadd.f32 %v8678, %v8847
          %v8873 = vadd.f32 %v8679, %v8849
          %v8874 = vadd.f32 %v8680, %v8852
          %v8875 = vadd.f32 %v8681, %v8854
          %v8876 = vld [vmem:[#allocation5] sm:$0xff]
          %v8877 = vld [vmem:[#allocation5 + $0x8] sm:$0xff]
          %v8878 = vld [vmem:[#allocation5 + $0x10] sm:$0xff]
          %v8879 = vld [vmem:[#allocation5 + $0x18] sm:$0xff]
          %v8880 = vld [vmem:[%s3] sm:$0xff]
          %v8881 = vld [vmem:[%s3 + $0x8] sm:$0xff]
          %vm8882 = vcmask 203776
          %v8884 = vsel %vm8882, %v8877, 0
          %v8887 = vsel %vm8882, %v8879, 0
          %v8890 = vsel %vm2495, %v8875, 0
          %8892 = vmatpush.msra.mxu0 %v8871
          %8893 = vmatpush.msra.mxu0 %v8870
          %8894 = vmatpush.msra.mxu0 %v8869
          %8895 = vmatpush.msra.mxu0 %v8868
          %8896 = vmatpush.msra.mxu0 %v8867
          %8897 = vmatpush.msra.mxu0 %v8866
          %8898 = vmatpush.msra.mxu0 %v8865
          %8899 = vmatpush.msra.mxu0 %v8864
          %8900 = vmatpush.msra.mxu0 %v8863
          %8901 = vmatpush.msra.mxu0 %v8862
          %8902 = vmatpush.msra.mxu0 %v8861
          %8903 = vmatpush.msra.mxu0 %v8860
          %8904 = vmatpush.msra.mxu0 %v8859
          %8905 = vmatpush.msra.mxu0 %v8858
          %8906 = vmatpush.msra.mxu0 %v8857
          %8907 = vmatpush.msra.mxu0 %v8856
          %8908 = vmatmul.f32.gmra.mxu0 %v8876
          %v8909 = vpop.f32.mrf.mxu0
          %v8910 = vadd.f32 %v8880, %v8909
          %8911 = vmatmul.f32.gmra.mxu0 %v8878
          %v8912 = vpop.f32.mrf.mxu0
          %v8913 = vadd.f32 %v8881, %v8912
          %8914 = vdwg.mxu0
          %8915 = vmatpush.msra.mxu0 0.0
          %8916 = vmatpush.msra.mxu0 0.0
          %8917 = vmatpush.msra.mxu0 0.0
          %8918 = vmatpush.msra.mxu0 0.0
          %8919 = vmatpush.msra.mxu0 0.0
          %8920 = vmatpush.msra.mxu0 0.0
          %8921 = vmatpush.msra.mxu0 0.0
          %8922 = vmatpush.msra.mxu0 0.0
          %8923 = vmatpush.msra.mxu0 0.0
          %8924 = vmatpush.msra.mxu0 0.0
          %8925 = vmatpush.msra.mxu0 0.0
          %8926 = vmatpush.msra.mxu0 0.0
          %8927 = vmatpush.msra.mxu0 %v8890
          %8928 = vmatpush.msra.mxu0 %v8874
          %8929 = vmatpush.msra.mxu0 %v8873
          %8930 = vmatpush.msra.mxu0 %v8872
          %8931 = vmatmul.f32.gmra.mxu0 %v8884
          %v8932 = vpop.f32.mrf.mxu0
          %v8933 = vadd.f32 %v8910, %v8932
          %8934 = vmatmul.f32.gmra.mxu0 %v8887
          %v8935 = vpop.f32.mrf.mxu0
          %v8936 = vadd.f32 %v8913, %v8935
          %8937 = vdwg.mxu0
          %vm8938 = vcmask 523264
          %v8939 = vsel %vm8938, %v8933, -inf
          %8940 = vmax.xlane.f32.xlu0 %v8939
          %v8941 = vpop.xlane.xlu0 %8940
          %v8942 = vsel %vm8938, %v8936, -inf
          %8943 = vmax.xlane.f32.xlu0 %v8942
          %v8944 = vpop.xlane.xlu0 %8943
          %v8945 = vsub.f32 %v8933, %v8941
          %v8946 = vsub.f32 %v8936, %v8944
          %v8947 = vmul.f32 %v8945, 1.442695
          %v8948 = vpow.pop %v8947
          %v8949 = vmul.f32 %v8946, 1.442695
          %v8950 = vpow.pop %v8949
          %v8951 = vsel %vm8938, %v8948, 0.0
          %8952 = vadd.xlane.f32.xlu0 %v8951
          %v8953 = vpop.xlane.xlu0 %8952
          %v8954 = vsel %vm8938, %v8950, 0.0
          %8955 = vadd.xlane.f32.xlu0 %v8954
          %v8956 = vpop.xlane.xlu0 %8955
          %v8957 = vlog2.pop %v8953
          %v8958 = vmul.f32 %v8957, 0.6931472
          %v8959 = vlog2.pop %v8956
          %v8960 = vmul.f32 %v8959, 0.6931472
          %v8961 = vadd.f32 %v8941, %v8958
          %v8962 = vadd.f32 %v8944, %v8960
          %v8963 = vsub.f32 %v8933, %v8961
          %v8964 = vsub.f32 %v8936, %v8962
          %v8965 = vmax.f32 %v8933, 0.0
          %v8966 = vmax.f32 %v8936, 0.0
          %v8967 = vld [vmem:[#allocation19] sm:$0x1]
          %v8969 = vperm.slane %v8967, 0
          %8970 = vrot.lane.b32.xlu0 %v8969, 64
          %v8971 = vpop.permute.xlu0 %8970
          %v8973 = vmul.f32 %v8965, %v8971
          %v8974 = vmul.f32 %v8966, %v8971
          %8977 = vrot.lane.b32.xlu0 %v8973, 64
          %v8978 = vpop.permute.xlu0 %8977
          %8979 = vrot.lane.b32.xlu0 %v8974, 64
          %v8980 = vpop.permute.xlu0 %8979
          %vm8983 = vcmask 261120
          %v8984 = vsel %vm8983, %v8978, 0.0
          %8985 = vadd.xlane.f32.xlu0 %v8984
          %v8986 = vpop.xlane.xlu0 %8985
          %v8987 = vsel %vm8983, %v8980, 0.0
          %8988 = vadd.xlane.f32.xlu0 %v8987
          %v8989 = vpop.xlane.xlu0 %8988
          %v8990 = vld [vmem:[#allocation4] sm:$0x1]
          %v8992 = vperm.slane %v8990, 0
          %v8994 = vadd.f32 %v8986, %v8992
          %v8995 = vadd.f32 %v8989, %v8992
          %v8996 = vtanh.pop %v8994
          %v8997 = vtanh.pop %v8995
          %8999 = vset.pattern.permute.xlu0 0
          %9000 = vperm.xlu0 %8999, %v8996
          %v9001 = vpop.permute.xlu0 %9000
          %9004 = vset.pattern.permute.xlu0 0
          %9005 = vperm.xlu0 %9004, %v8997
          %v9006 = vpop.permute.xlu0 %9005
          %v9008 = vsel %vm8938, %v8963, %v9001
          %v9009 = vsel %vm8938, %v8964, %v9006
          %9010 = vst [vmem:[%s20] sm:$0xff] %v9008
          %9011 = vst [vmem:[%s20 + $0x8] sm:$0xff] %v9009
        $region152: #{forward_pallas.1} parent=99 // pred_fallthru
          _
        // Predicated region
        $region153: #{forward_pallas.1} parent=99 // pred_check
          %p9012 = pneg %p505
        $region154: #{forward_pallas.1} parent=99 // pred_check_branch
          %9014 = sbr.rel (%p9012) target = $region156
        $region155: #{forward_pallas.1} parent=99 // pred_region
          _
        $region156: #{forward_pallas.1} parent=99 // pred_fallthru
          _
        // Predicated region
        $region157: #{forward_pallas.1} parent=99 // pred_check
          %p9015 = pneg %p505
        $region158: #{forward_pallas.1} parent=99 // pred_check_branch
          %9017 = sbr.rel (%p9015) target = $region160
        $region159: #{forward_pallas.1} parent=99 // pred_region
          _
        $region160: #{forward_pallas.1} parent=99 // pred_fallthru
          _
      $region100: #{forward_pallas.1} parent=5 // pred_fallthru
        _
      %p9018 = scmp.le.s32.totalorder 2, %s32
      // Predicated region
      $region161: #{forward_pallas.1} parent=5 // pred_check
        %p9019 = pneg %p9018
      $region162: #{forward_pallas.1} parent=5 // pred_check_branch
        %9021 = sbr.rel (%p9019) target = $region164
      $region163: #{forward_pallas.1} parent=5 // pred_region
        %s9022 = ssub.s32 %s32, 2
      $region164: #{forward_pallas.1} parent=5 // pred_fallthru
        _
    $region6: #{forward_pallas.1} parent=1 // loop_footer
      %s36 = sadd.s32 1, %s32
    $region7: #{forward_pallas.1} parent=1 // loop_footer_branch
      %31 = sbr.rel target = $region3
    $region8: #{forward_pallas.1} parent=1 // loop_exit
      _
    %9023 = vsyncpa [#allocation6], 1
    %s9024 = scalar_lea.sflag [#allocation6], 1
    %9025 = vsyncpa %s9024, 1
    %9026 = vsyncpa [#allocation8], 1
    %9027 = vsyncpa [#allocation11], 1
    %9028 = vsyncpa [#allocation18], 1

</llo_original>
